<compile_context>
chip_gen: v5e
topology: v5e:2x2
jax: 0.10.0
libtpu: 0.0.40
codegen_flags: <defaults>
</compile_context>

<pallas_src>
import functools

import jax
import jax.numpy as jnp
from jax.experimental import pallas as pl
from jax.experimental.pallas import tpu as pltpu

MXU_DTYPE = jnp.bfloat16           # MXU operand dtype (accumulation stays f32)
VMEM_LIMIT = 32 * 1024 * 1024      # per-step working set ~1 MiB -> safe on v5e/v6e/v7x


# --------------------------- in-kernel conv helper ---------------------------

def _wrap_masks(W, L, k):
    """Lane masks that kill the column wrap-around of the flat spatial shifts."""
    p = (k - 1) // 2
    col = jax.lax.broadcasted_iota(jnp.int32, (1, L), 1)
    if W & (W - 1) == 0:                       # power of two: cheap bitwise mod
        col = jnp.bitwise_and(col, W - 1)
    else:
        col = col % W
    return {dw: jnp.logical_and(col + dw >= 0, col + dw < W)
            for dw in range(-p, p + 1) if dw != 0}


def _conv_lane(xb, w_taps, wmasks, *, Cin, Cout, H, W, k):
    """k x k 'same' convolution of one image held lane-dense as (Cin, H*W).

    Row shifts come from a 128-lane-aligned zero halo (value concat -> no
    scratch, no per-step zeroing of a padded buffer); the column wrap is
    removed with precomputed lane masks.  Each tap is one small MXU matmul
    accumulated in f32 -- no im2col matrix is ever materialised.
    """
    L = H * W
    p = (k - 1) // 2
    halo = ((p * W + p + 127) // 128) * 128    # 128-aligned -> trivial concat
    zpad = jnp.zeros((Cin, halo), xb.dtype)
    xp = jnp.concatenate([zpad, xb, zpad], axis=1)        # (Cin, L + 2*halo)
    acc = jnp.zeros((Cout, L), jnp.float32)
    for dh in range(-p, p + 1):
        for dw in range(-p, p + 1):
            off = halo + dh * W + dw
            sl = xp[:, off:off + L]                       # static lane slice
            if dw != 0:
                sl = jnp.where(wmasks[dw], sl, jnp.zeros_like(sl))
            tap = (dh + p) * k + (dw + p)
            acc = acc + jnp.dot(w_taps[tap], sl.astype(MXU_DTYPE),
                                preferred_element_type=jnp.float32)
    return acc                                            # (Cout, L) f32


# --------------------------------- kernels -----------------------------------

def _first_conv_kernel(x_ref, w_ref, o_ref, *, B, Cin, Cout, H, W, k):
    masks = _wrap_masks(W, H * W, k)
    w = w_ref[...]
    for i in range(B):
        y = _conv_lane(x_ref[i], w, masks, Cin=Cin, Cout=Cout, H=H, W=W, k=k)
        o_ref[i] = y.astype(o_ref.dtype)


def _block_kernel(h_ref, w1_ref, s1_ref, b1_ref, w2_ref, s2_ref, b2_ref, o_ref,
                  *, B, Cbig, Csmall, H, W, k):
    """Fused residual Block: BN1+ReLU -> conv1 -> BN2+ReLU -> conv2 -> + h."""
    L = H * W
    masks = _wrap_masks(W, L, k)
    w1 = w1_ref[...]
    w2 = w2_ref[...]
    # hoist per-channel BN broadcasts out of the image loop
    s1 = jnp.broadcast_to(s1_ref[...], (Cbig, L))
    bb1 = jnp.broadcast_to(b1_ref[...], (Cbig, L))
    s2 = jnp.broadcast_to(s2_ref[...], (Csmall, L))
    bb2 = jnp.broadcast_to(b2_ref[...], (Csmall, L))
    for i in range(B):
        hb = h_ref[i]                                         # (Cbig, L) f32
        t = jnp.maximum(hb * s1 + bb1, 0.0)                   # BN1 + ReLU (f32)
        t = _conv_lane(t, w1, masks, Cin=Cbig, Cout=Csmall, H=H, W=W, k=k)
        t = jnp.maximum(t * s2 + bb2, 0.0)                    # BN2 + ReLU (f32)
        y = _conv_lane(t, w2, masks, Cin=Csmall, Cout=Cbig, H=H, W=W, k=k)
        o_ref[i] = (hb + y).astype(o_ref.dtype)               # residual add


def _tail_kernel(h_ref, w_ref, s1_ref, b1_ref, s2_ref, b2_ref, o_ref,
                 *, B, Cbig, Csmall, H, W, k):
    """Tail: BN+ReLU -> conv(big->small) -> BN+ReLU, stored bf16 for the fc MXU."""
    L = H * W
    masks = _wrap_masks(W, L, k)
    w = w_ref[...]
    s1 = jnp.broadcast_to(s1_ref[...], (Cbig, L))
    bb1 = jnp.broadcast_to(b1_ref[...], (Cbig, L))
    s2 = jnp.broadcast_to(s2_ref[...], (Csmall, L))
    bb2 = jnp.broadcast_to(b2_ref[...], (Csmall, L))
    for i in range(B):
        t = jnp.maximum(h_ref[i] * s1 + bb1, 0.0)
        y = _conv_lane(t, w, masks, Cin=Cbig, Cout=Csmall, H=H, W=W, k=k)
        y = jnp.maximum(y * s2 + bb2, 0.0)
        o_ref[i] = y.astype(o_ref.dtype)


def _dual_fc_kernel(x_ref, w_ref, b_ref, z1_ref, z2_ref, *, latent):
    """fc1|fc2 with concatenated weights: one MXU matmul, split at the end."""
    acc = jnp.dot(x_ref[...], w_ref[...],
                  preferred_element_type=jnp.float32) + b_ref[...]
    z1_ref[...] = acc[:, :latent]
    # TODO(synk): ScaledTanh definition is not provided in the source; using
    # plain tanh (scale = 1).
    z2_ref[...] = jnp.tanh(acc[:, latent:])


# -------------------------------- wrappers -----------------------------------

def _batch_block(n):
    """Images per conv grid step: divisor of n, prefer >=2 grid steps (v7x TCs)."""
    for b in (8, 4, 2, 1):
        if n % b == 0 and n // b >= 2:
            return b
    for b in (8, 4, 2, 1):
        if n % b == 0:
            return b
    return 1


def _conv_compiler_params():
    return pltpu.CompilerParams(
        dimension_semantics=("parallel",),     # v7x: both TensorCores split the batch
        vmem_limit_bytes=VMEM_LIMIT)


def first_conv(x, w_taps, *, H, W, k):
    N, Cin, L = x.shape
    Cout = w_taps.shape[1]
    B = _batch_block(N)
    kernel = functools.partial(_first_conv_kernel,
                               B=B, Cin=Cin, Cout=Cout, H=H, W=W, k=k)
    return pl.pallas_call(
        kernel,
        out_shape=jax.ShapeDtypeStruct((N, Cout, L), jnp.float32),
        grid_spec=pltpu.PrefetchScalarGridSpec(
            num_scalar_prefetch=0,
            grid=(N // B,),
            in_specs=[
                pl.BlockSpec((B, Cin, L), lambda n: (n, 0, 0)),
                pl.BlockSpec((k * k, Cout, Cin), lambda n: (0, 0, 0)),
            ],
            out_specs=pl.BlockSpec((B, Cout, L), lambda n: (n, 0, 0))),
        compiler_params=_conv_compiler_params(),
    )(x, w_taps)


def block_fused(h, blk, *, H, W, k):
    N, Cbig, L = h.shape
    Csmall = blk['conv1_taps'].shape[1]
    B = _batch_block(N)
    kernel = functools.partial(_block_kernel,
                               B=B, Cbig=Cbig, Csmall=Csmall, H=H, W=W, k=k)
    return pl.pallas_call(
        kernel,
        out_shape=jax.ShapeDtypeStruct((N, Cbig, L), jnp.float32),
        grid_spec=pltpu.PrefetchScalarGridSpec(
            num_scalar_prefetch=0,
            grid=(N // B,),
            in_specs=[
                pl.BlockSpec((B, Cbig, L), lambda n: (n, 0, 0)),
                pl.BlockSpec((k * k, Csmall, Cbig), lambda n: (0, 0, 0)),
                pl.BlockSpec((Cbig, 1), lambda n: (0, 0)),
                pl.BlockSpec((Cbig, 1), lambda n: (0, 0)),
                pl.BlockSpec((k * k, Cbig, Csmall), lambda n: (0, 0, 0)),
                pl.BlockSpec((Csmall, 1), lambda n: (0, 0)),
                pl.BlockSpec((Csmall, 1), lambda n: (0, 0)),
            ],
            out_specs=pl.BlockSpec((B, Cbig, L), lambda n: (n, 0, 0))),
        compiler_params=_conv_compiler_params(),
    )(h, blk['conv1_taps'], blk['bn1_s'], blk['bn1_b'],
      blk['conv2_taps'], blk['bn2_s'], blk['bn2_b'])


def tail_fused(h, params, *, H, W, k):
    N, Cbig, L = h.shape
    Csmall = params['conv_t_taps'].shape[1]
    B = _batch_block(N)
    kernel = functools.partial(_tail_kernel,
                               B=B, Cbig=Cbig, Csmall=Csmall, H=H, W=W, k=k)
    return pl.pallas_call(
        kernel,
        out_shape=jax.ShapeDtypeStruct((N, Csmall, L), MXU_DTYPE),  # bf16 fc slab
        grid_spec=pltpu.PrefetchScalarGridSpec(
            num_scalar_prefetch=0,
            grid=(N // B,),
            in_specs=[
                pl.BlockSpec((B, Cbig, L), lambda n: (n, 0, 0)),
                pl.BlockSpec((k * k, Csmall, Cbig), lambda n: (0, 0, 0)),
                pl.BlockSpec((Cbig, 1), lambda n: (0, 0)),
                pl.BlockSpec((Cbig, 1), lambda n: (0, 0)),
                pl.BlockSpec((Csmall, 1), lambda n: (0, 0)),
                pl.BlockSpec((Csmall, 1), lambda n: (0, 0)),
            ],
            out_specs=pl.BlockSpec((B, Csmall, L), lambda n: (n, 0, 0))),
        compiler_params=_conv_compiler_params(),
    )(h, params['conv_t_taps'], params['bn_t1_s'], params['bn_t1_b'],
      params['bn_t2_s'], params['bn_t2_b'])


def dual_linear(feat, w_cat, b_cat):
    N, F = feat.shape
    two_latent = w_cat.shape[1]
    latent = two_latent // 2
    R = 8 if N % 8 == 0 else N        # row block: multiple of 8 or the full batch
    kernel = functools.partial(_dual_fc_kernel, latent=latent)
    return pl.pallas_call(
        kernel,
        out_shape=(jax.ShapeDtypeStruct((N, latent), jnp.float32),
                   jax.ShapeDtypeStruct((N, latent), jnp.float32)),
        grid_spec=pltpu.PrefetchScalarGridSpec(
            num_scalar_prefetch=0,
            grid=(N // R,),
            in_specs=[
                pl.BlockSpec((R, F), lambda n: (n, 0)),
                pl.BlockSpec((F, two_latent), lambda n: (0, 0)),
                pl.BlockSpec((1, two_latent), lambda n: (0, 0)),
            ],
            out_specs=(pl.BlockSpec((R, latent), lambda n: (n, 0)),
                       pl.BlockSpec((R, latent), lambda n: (n, 0)))),
        compiler_params=pltpu.CompilerParams(
            dimension_semantics=("parallel",),   # rows, not contraction
            vmem_limit_bytes=VMEM_LIMIT),
    )(feat, w_cat, b_cat)


# -------------------------- parameter construction ---------------------------

def _bn_fold(key, c, eps=1e-5):
    k1, k2, k3, k4 = jax.random.split(key, 4)
    gamma = 1.0 + 0.1 * jax.random.normal(k1, (c,))
    beta = 0.1 * jax.random.normal(k2, (c,))
    mean = 0.1 * jax.random.normal(k3, (c,))
    var = jnp.abs(jax.random.normal(k4, (c,))) + 0.5
    scale = gamma / jnp.sqrt(var + eps)
    bias = beta - mean * scale
    return (scale.reshape(c, 1).astype(jnp.float32),
            bias.reshape(c, 1).astype(jnp.float32))


def _conv_w(key, cin, cout, k):
    fan_in = cin * k * k
    w = (jax.random.normal(key, (cout, cin, k, k)) /
         jnp.sqrt(float(fan_in))).astype(jnp.float32)            # OIHW (PyTorch)
    # (Cout, Cin, kh, kw) -> (kh*k + kw, Cout, Cin) bf16 for per-tap MXU matmuls
    w_taps = jnp.transpose(w, (2, 3, 0, 1)).reshape(k * k, cout, cin).astype(MXU_DTYPE)
    return w, w_taps


def init_params(key, input_ch, big_ch, small_ch, latent_dim, nblocks, k, H, W):
    keys = iter(jax.random.split(key, 16 + 4 * nblocks))
    nk = lambda: next(keys)
    P = {}
    P['conv0_w'], P['conv0_taps'] = _conv_w(nk(), input_ch, big_ch, k)
    blocks = []
    for _ in range(nblocks):
        blk = {}
        blk['bn1_s'], blk['bn1_b'] = _bn_fold(nk(), big_ch)
        blk['conv1_w'], blk['conv1_taps'] = _conv_w(nk(), big_ch, small_ch, k)
        blk['bn2_s'], blk['bn2_b'] = _bn_fold(nk(), small_ch)
        blk['conv2_w'], blk['conv2_taps'] = _conv_w(nk(), small_ch, big_ch, k)
        blocks.append(blk)
    P['blocks'] = blocks
    P['bn_t1_s'], P['bn_t1_b'] = _bn_fold(nk(), big_ch)
    P['conv_t_w'], P['conv_t_taps'] = _conv_w(nk(), big_ch, small_ch, k)
    P['bn_t2_s'], P['bn_t2_b'] = _bn_fold(nk(), small_ch)

    feat = small_ch * H * W
    bound = 1.0 / (feat ** 0.5)
    fc1_w = jax.random.uniform(nk(), (feat, latent_dim), jnp.float32, -bound, bound)
    fc1_b = jax.random.uniform(nk(), (1, latent_dim), jnp.float32, -bound, bound)
    fc2_w = jax.random.uniform(nk(), (feat, latent_dim), jnp.float32, -bound, bound)
    fc2_b = jax.random.uniform(nk(), (1, latent_dim), jnp.float32, -bound, bound)
    # fc1 | fc2 concatenated along the output dim -> one matmul, split in-kernel.
    # Feature order is NCHW flatten, exactly PyTorch's .view(N, -1): no permute.
    P['fc_w_cat'] = jnp.concatenate([fc1_w, fc2_w], axis=1).astype(MXU_DTYPE)
    P['fc_b_cat'] = jnp.concatenate([fc1_b, fc2_b], axis=1)
    return P


# -------------------------------- forward pass --------------------------------

def base_encoder_forward(params, x_nchw, k=3, p=1):
    assert p == (k - 1) // 2, "lane-dense conv assumes 'same' padding"
    N, Cin, H, W = x_nchw.shape
    x = x_nchw.reshape(N, Cin, H * W)                   # lane-dense (N, C, H*W)
    h = first_conv(x, params['conv0_taps'], H=H, W=W, k=k)
    for blk in params['blocks']:
        h = block_fused(h, blk, H=H, W=W, k=k)          # whole Block in one kernel
    h = tail_fused(h, params, H=H, W=W, k=k)            # (N, small_ch, H*W) bf16
    feat = h.reshape(N, -1)                             # == PyTorch .view(N, -1)
    return dual_linear(feat, params['fc_w_cat'], params['fc_b_cat'])


# ---------------------------- pure-JAX reference ------------------------------

def ref_forward(params, x_nchw, k=3, p=1):
    bf = MXU_DTYPE

    def conv(x, w):
        return jax.lax.conv_general_dilated(
            x.astype(bf), w.astype(bf), (1, 1), [(p, p), (p, p)],
            dimension_numbers=('NCHW', 'OIHW', 'NCHW'),
            preferred_element_type=jnp.float32)

    def bnrelu(x, s, b):
        return jnp.maximum(x * s.reshape(1, -1, 1, 1) + b.reshape(1, -1, 1, 1), 0.0)

    h = conv(x_nchw, params['conv0_w'])
    for blk in params['blocks']:
        t = bnrelu(h, blk['bn1_s'], blk['bn1_b'])
        t = bnrelu(conv(t, blk['conv1_w']), blk['bn2_s'], blk['bn2_b'])
        h = h + conv(t, blk['conv2_w'])
    h = bnrelu(h, params['bn_t1_s'], params['bn_t1_b'])
    h = bnrelu(conv(h, params['conv_t_w']), params['bn_t2_s'], params['bn_t2_b'])
    feat = h.reshape(h.shape[0], -1).astype(bf)         # NCHW .view(N, -1)
    z = jnp.dot(feat, params['fc_w_cat'],
                preferred_element_type=jnp.float32) + params['fc_b_cat']
    latent = params['fc_b_cat'].shape[-1] // 2
    return z[:, :latent], jnp.tanh(z[:, latent:])


# ------------------------------------ main ------------------------------------

if __name__ == "__main__":
    key = jax.random.PRNGKey(0)
    # spatial must be 32x32: the fc layers take small_ch * 32 * 32 features.
    N, input_ch, HW = 2, 3, 32
    big_ch, small_ch, latent_dim = 8, 4, 16
    nblocks, k, p = 1, 3, 1

    kp, kx = jax.random.split(key)
    params = init_params(kp, input_ch, big_ch, small_ch, latent_dim,
                         nblocks, k, HW, HW)
    x = jax.random.normal(kx, (N, input_ch, HW, HW), jnp.float32)

    fwd = jax.jit(functools.partial(base_encoder_forward, k=k, p=p))
    z1, z2 = fwd(params, x)
    jax.block_until_ready((z1, z2))

    r1, r2 = ref_forward(params, x, k=k, p=p)
    assert z1.shape == (N, latent_dim) and z2.shape == (N, latent_dim)
    err1 = float(jnp.max(jnp.abs(z1 - r1)))
    err2 = float(jnp.max(jnp.abs(z2 - r2)))
    assert err1 < 2e-2, f"z1 mismatch, max err {err1}"
    assert err2 < 2e-2, f"z2 mismatch, max err {err2}"
    print("KERNEL_OK")
</pallas_src>

<mosaic_0001>
module attributes {stable_mosaic.version = 11 : i64} {
  func.func @_first_conv_kernel(%arg0: i32, %arg1: memref<1x3x1024xf32, #tpu.memory_space<vmem>>, %arg2: memref<9x8x3xbf16, #tpu.memory_space<vmem>>, %arg3: memref<1x8x1024xf32, #tpu.memory_space<vmem>>) attributes {dimension_semantics = [#tpu.dimension_semantics<parallel>], iteration_bounds = array<i64: 2>, scalar_prefetch = 0 : i64, scratch_operands = 0 : i64, tpu.core_type = #tpu.core_type<tc>, window_params = [{transform_indices = @transform_0, window_bounds = array<i64: 1, 3, 1024>}, {pipeline_mode = #tpu.pipeline_mode<synchronous>, transform_indices = @transform_1, window_bounds = array<i64: 9, 8, 3>}, {transform_indices = @transform_2, window_bounds = array<i64: 1, 8, 1024>}]} {
    %0 = tpu.iota {dimensions = array<i32: 1>} : vector<1x1024xi32>
    %c31_i32 = arith.constant 31 : i32
    %1 = vector.broadcast %c31_i32 : i32 to vector<1x1024xi32>
    %2 = arith.andi %0, %1 : vector<1x1024xi32>
    %c-1_i32 = arith.constant -1 : i32
    %3 = vector.broadcast %c-1_i32 : i32 to vector<1x1024xi32>
    %4 = arith.addi %2, %3 : vector<1x1024xi32>
    %c0_i32 = arith.constant 0 : i32
    %5 = vector.broadcast %c0_i32 : i32 to vector<1x1024xi32>
    %6 = arith.cmpi sge, %4, %5 : vector<1x1024xi32>
    %c-1_i32_0 = arith.constant -1 : i32
    %7 = vector.broadcast %c-1_i32_0 : i32 to vector<1x1024xi32>
    %8 = arith.addi %2, %7 : vector<1x1024xi32>
    %c32_i32 = arith.constant 32 : i32
    %9 = vector.broadcast %c32_i32 : i32 to vector<1x1024xi32>
    %10 = arith.cmpi slt, %8, %9 : vector<1x1024xi32>
    %11 = arith.andi %6, %10 : vector<1x1024xi1>
    %c1_i32 = arith.constant 1 : i32
    %12 = vector.broadcast %c1_i32 : i32 to vector<1x1024xi32>
    %13 = arith.addi %2, %12 : vector<1x1024xi32>
    %c0_i32_1 = arith.constant 0 : i32
    %14 = vector.broadcast %c0_i32_1 : i32 to vector<1x1024xi32>
    %15 = arith.cmpi sge, %13, %14 : vector<1x1024xi32>
    %c1_i32_2 = arith.constant 1 : i32
    %16 = vector.broadcast %c1_i32_2 : i32 to vector<1x1024xi32>
    %17 = arith.addi %2, %16 : vector<1x1024xi32>
    %c32_i32_3 = arith.constant 32 : i32
    %18 = vector.broadcast %c32_i32_3 : i32 to vector<1x1024xi32>
    %19 = arith.cmpi slt, %17, %18 : vector<1x1024xi32>
    %20 = arith.andi %15, %19 : vector<1x1024xi1>
    %c0 = arith.constant 0 : index
    %c0_4 = arith.constant 0 : index
    %c0_5 = arith.constant 0 : index
    %21 = vector.load %arg2[%c0, %c0_4, %c0_5] : memref<9x8x3xbf16, #tpu.memory_space<vmem>>, vector<9x8x3xbf16>
    %c0_6 = arith.constant 0 : index
    %c0_7 = arith.constant 0 : index
    %c0_8 = arith.constant 0 : index
    %22 = vector.load %arg1[%c0_6, %c0_7, %c0_8] : memref<1x3x1024xf32, #tpu.memory_space<vmem>>, vector<1x3x1024xf32>
    %23 = vector.shape_cast %22 : vector<1x3x1024xf32> to vector<3x1024xf32>
    %cst = arith.constant 0.000000e+00 : f32
    %24 = vector.broadcast %cst : f32 to vector<3x128xf32>
    %25 = tpu.concatenate %24, %23, %24 in 1 : vector<3x128xf32>, vector<3x1024xf32>, vector<3x128xf32> -> vector<3x1280xf32>
    %cst_9 = arith.constant 0.000000e+00 : f32
    %26 = vector.broadcast %cst_9 : f32 to vector<8x1024xf32>
    %27 = vector.extract_strided_slice %25 {offsets = [0, 95], sizes = [3, 1024], strides = [1, 1]} : vector<3x1280xf32> to vector<3x1024xf32>
    %cst_10 = arith.constant 0.000000e+00 : f32
    %28 = vector.broadcast %cst_10 : f32 to vector<3x1024xf32>
    %29 = vector.shape_cast %11 : vector<1x1024xi1> to vector<1x1024xi1>
    %30 = vector.broadcast %29 : vector<1x1024xi1> to vector<3x1024xi1>
    %31 = arith.select %30, %27, %28 : vector<3x1024xi1>, vector<3x1024xf32>
    %32 = vector.extract_strided_slice %21 {offsets = [0, 0, 0], sizes = [1, 8, 3], strides = [1, 1, 1]} : vector<9x8x3xbf16> to vector<1x8x3xbf16>
    %33 = vector.shape_cast %32 : vector<1x8x3xbf16> to vector<8x3xbf16>
    %34 = arith.truncf %31 : vector<3x1024xf32> to vector<3x1024xbf16>
    %cst_11 = arith.constant dense<0.000000e+00> : vector<8x1024xf32>
    %35 = tpu.matmul %33, %34, %cst_11 {dimension_numbers = #tpu.dot_dimension_numbers<[1], [0], [0], [1], [0, 0, 1, 1], [], []>} : vector<8x3xbf16>, vector<3x1024xbf16>, vector<8x1024xf32> -> vector<8x1024xf32>
    %36 = arith.addf %26, %35 : vector<8x1024xf32>
    %37 = vector.extract_strided_slice %25 {offsets = [0, 96], sizes = [3, 1024], strides = [1, 1]} : vector<3x1280xf32> to vector<3x1024xf32>
    %38 = vector.extract_strided_slice %21 {offsets = [1, 0, 0], sizes = [1, 8, 3], strides = [1, 1, 1]} : vector<9x8x3xbf16> to vector<1x8x3xbf16>
    %39 = vector.shape_cast %38 : vector<1x8x3xbf16> to vector<8x3xbf16>
    %40 = arith.truncf %37 : vector<3x1024xf32> to vector<3x1024xbf16>
    %cst_12 = arith.constant dense<0.000000e+00> : vector<8x1024xf32>
    %41 = tpu.matmul %39, %40, %cst_12 {dimension_numbers = #tpu.dot_dimension_numbers<[1], [0], [0], [1], [0, 0, 1, 1], [], []>} : vector<8x3xbf16>, vector<3x1024xbf16>, vector<8x1024xf32> -> vector<8x1024xf32>
    %42 = arith.addf %36, %41 : vector<8x1024xf32>
    %43 = vector.extract_strided_slice %25 {offsets = [0, 97], sizes = [3, 1024], strides = [1, 1]} : vector<3x1280xf32> to vector<3x1024xf32>
    %cst_13 = arith.constant 0.000000e+00 : f32
    %44 = vector.broadcast %cst_13 : f32 to vector<3x1024xf32>
    %45 = vector.shape_cast %20 : vector<1x1024xi1> to vector<1x1024xi1>
    %46 = vector.broadcast %45 : vector<1x1024xi1> to vector<3x1024xi1>
    %47 = arith.select %46, %43, %44 : vector<3x1024xi1>, vector<3x1024xf32>
    %48 = vector.extract_strided_slice %21 {offsets = [2, 0, 0], sizes = [1, 8, 3], strides = [1, 1, 1]} : vector<9x8x3xbf16> to vector<1x8x3xbf16>
    %49 = vector.shape_cast %48 : vector<1x8x3xbf16> to vector<8x3xbf16>
    %50 = arith.truncf %47 : vector<3x1024xf32> to vector<3x1024xbf16>
    %cst_14 = arith.constant dense<0.000000e+00> : vector<8x1024xf32>
    %51 = tpu.matmul %49, %50, %cst_14 {dimension_numbers = #tpu.dot_dimension_numbers<[1], [0], [0], [1], [0, 0, 1, 1], [], []>} : vector<8x3xbf16>, vector<3x1024xbf16>, vector<8x1024xf32> -> vector<8x1024xf32>
    %52 = arith.addf %42, %51 : vector<8x1024xf32>
    %53 = vector.extract_strided_slice %25 {offsets = [0, 127], sizes = [3, 1024], strides = [1, 1]} : vector<3x1280xf32> to vector<3x1024xf32>
    %cst_15 = arith.constant 0.000000e+00 : f32
    %54 = vector.broadcast %cst_15 : f32 to vector<3x1024xf32>
    %55 = vector.shape_cast %11 : vector<1x1024xi1> to vector<1x1024xi1>
    %56 = vector.broadcast %55 : vector<1x1024xi1> to vector<3x1024xi1>
    %57 = arith.select %56, %53, %54 : vector<3x1024xi1>, vector<3x1024xf32>
    %58 = vector.extract_strided_slice %21 {offsets = [3, 0, 0], sizes = [1, 8, 3], strides = [1, 1, 1]} : vector<9x8x3xbf16> to vector<1x8x3xbf16>
    %59 = vector.shape_cast %58 : vector<1x8x3xbf16> to vector<8x3xbf16>
    %60 = arith.truncf %57 : vector<3x1024xf32> to vector<3x1024xbf16>
    %cst_16 = arith.constant dense<0.000000e+00> : vector<8x1024xf32>
    %61 = tpu.matmul %59, %60, %cst_16 {dimension_numbers = #tpu.dot_dimension_numbers<[1], [0], [0], [1], [0, 0, 1, 1], [], []>} : vector<8x3xbf16>, vector<3x1024xbf16>, vector<8x1024xf32> -> vector<8x1024xf32>
    %62 = arith.addf %52, %61 : vector<8x1024xf32>
    %63 = vector.extract_strided_slice %25 {offsets = [0, 128], sizes = [3, 1024], strides = [1, 1]} : vector<3x1280xf32> to vector<3x1024xf32>
    %64 = vector.extract_strided_slice %21 {offsets = [4, 0, 0], sizes = [1, 8, 3], strides = [1, 1, 1]} : vector<9x8x3xbf16> to vector<1x8x3xbf16>
    %65 = vector.shape_cast %64 : vector<1x8x3xbf16> to vector<8x3xbf16>
    %66 = arith.truncf %63 : vector<3x1024xf32> to vector<3x1024xbf16>
    %cst_17 = arith.constant dense<0.000000e+00> : vector<8x1024xf32>
    %67 = tpu.matmul %65, %66, %cst_17 {dimension_numbers = #tpu.dot_dimension_numbers<[1], [0], [0], [1], [0, 0, 1, 1], [], []>} : vector<8x3xbf16>, vector<3x1024xbf16>, vector<8x1024xf32> -> vector<8x1024xf32>
    %68 = arith.addf %62, %67 : vector<8x1024xf32>
    %69 = vector.extract_strided_slice %25 {offsets = [0, 129], sizes = [3, 1024], strides = [1, 1]} : vector<3x1280xf32> to vector<3x1024xf32>
    %cst_18 = arith.constant 0.000000e+00 : f32
    %70 = vector.broadcast %cst_18 : f32 to vector<3x1024xf32>
    %71 = vector.shape_cast %20 : vector<1x1024xi1> to vector<1x1024xi1>
    %72 = vector.broadcast %71 : vector<1x1024xi1> to vector<3x1024xi1>
    %73 = arith.select %72, %69, %70 : vector<3x1024xi1>, vector<3x1024xf32>
    %74 = vector.extract_strided_slice %21 {offsets = [5, 0, 0], sizes = [1, 8, 3], strides = [1, 1, 1]} : vector<9x8x3xbf16> to vector<1x8x3xbf16>
    %75 = vector.shape_cast %74 : vector<1x8x3xbf16> to vector<8x3xbf16>
    %76 = arith.truncf %73 : vector<3x1024xf32> to vector<3x1024xbf16>
    %cst_19 = arith.constant dense<0.000000e+00> : vector<8x1024xf32>
    %77 = tpu.matmul %75, %76, %cst_19 {dimension_numbers = #tpu.dot_dimension_numbers<[1], [0], [0], [1], [0, 0, 1, 1], [], []>} : vector<8x3xbf16>, vector<3x1024xbf16>, vector<8x1024xf32> -> vector<8x1024xf32>
    %78 = arith.addf %68, %77 : vector<8x1024xf32>
    %79 = vector.extract_strided_slice %25 {offsets = [0, 159], sizes = [3, 1024], strides = [1, 1]} : vector<3x1280xf32> to vector<3x1024xf32>
    %cst_20 = arith.constant 0.000000e+00 : f32
    %80 = vector.broadcast %cst_20 : f32 to vector<3x1024xf32>
    %81 = vector.shape_cast %11 : vector<1x1024xi1> to vector<1x1024xi1>
    %82 = vector.broadcast %81 : vector<1x1024xi1> to vector<3x1024xi1>
    %83 = arith.select %82, %79, %80 : vector<3x1024xi1>, vector<3x1024xf32>
    %84 = vector.extract_strided_slice %21 {offsets = [6, 0, 0], sizes = [1, 8, 3], strides = [1, 1, 1]} : vector<9x8x3xbf16> to vector<1x8x3xbf16>
    %85 = vector.shape_cast %84 : vector<1x8x3xbf16> to vector<8x3xbf16>
    %86 = arith.truncf %83 : vector<3x1024xf32> to vector<3x1024xbf16>
    %cst_21 = arith.constant dense<0.000000e+00> : vector<8x1024xf32>
    %87 = tpu.matmul %85, %86, %cst_21 {dimension_numbers = #tpu.dot_dimension_numbers<[1], [0], [0], [1], [0, 0, 1, 1], [], []>} : vector<8x3xbf16>, vector<3x1024xbf16>, vector<8x1024xf32> -> vector<8x1024xf32>
    %88 = arith.addf %78, %87 : vector<8x1024xf32>
    %89 = vector.extract_strided_slice %25 {offsets = [0, 160], sizes = [3, 1024], strides = [1, 1]} : vector<3x1280xf32> to vector<3x1024xf32>
    %90 = vector.extract_strided_slice %21 {offsets = [7, 0, 0], sizes = [1, 8, 3], strides = [1, 1, 1]} : vector<9x8x3xbf16> to vector<1x8x3xbf16>
    %91 = vector.shape_cast %90 : vector<1x8x3xbf16> to vector<8x3xbf16>
    %92 = arith.truncf %89 : vector<3x1024xf32> to vector<3x1024xbf16>
    %cst_22 = arith.constant dense<0.000000e+00> : vector<8x1024xf32>
    %93 = tpu.matmul %91, %92, %cst_22 {dimension_numbers = #tpu.dot_dimension_numbers<[1], [0], [0], [1], [0, 0, 1, 1], [], []>} : vector<8x3xbf16>, vector<3x1024xbf16>, vector<8x1024xf32> -> vector<8x1024xf32>
    %94 = arith.addf %88, %93 : vector<8x1024xf32>
    %95 = vector.extract_strided_slice %25 {offsets = [0, 161], sizes = [3, 1024], strides = [1, 1]} : vector<3x1280xf32> to vector<3x1024xf32>
    %cst_23 = arith.constant 0.000000e+00 : f32
    %96 = vector.broadcast %cst_23 : f32 to vector<3x1024xf32>
    %97 = vector.shape_cast %20 : vector<1x1024xi1> to vector<1x1024xi1>
    %98 = vector.broadcast %97 : vector<1x1024xi1> to vector<3x1024xi1>
    %99 = arith.select %98, %95, %96 : vector<3x1024xi1>, vector<3x1024xf32>
    %100 = vector.extract_strided_slice %21 {offsets = [8, 0, 0], sizes = [1, 8, 3], strides = [1, 1, 1]} : vector<9x8x3xbf16> to vector<1x8x3xbf16>
    %101 = vector.shape_cast %100 : vector<1x8x3xbf16> to vector<8x3xbf16>
    %102 = arith.truncf %99 : vector<3x1024xf32> to vector<3x1024xbf16>
    %cst_24 = arith.constant dense<0.000000e+00> : vector<8x1024xf32>
    %103 = tpu.matmul %101, %102, %cst_24 {dimension_numbers = #tpu.dot_dimension_numbers<[1], [0], [0], [1], [0, 0, 1, 1], [], []>} : vector<8x3xbf16>, vector<3x1024xbf16>, vector<8x1024xf32> -> vector<8x1024xf32>
    %104 = arith.addf %94, %103 : vector<8x1024xf32>
    %c0_25 = arith.constant 0 : index
    %c0_26 = arith.constant 0 : index
    %c0_27 = arith.constant 0 : index
    %105 = vector.load %arg3[%c0_25, %c0_26, %c0_27] : memref<1x8x1024xf32, #tpu.memory_space<vmem>>, vector<1x8x1024xf32>
    %106 = vector.shape_cast %105 : vector<1x8x1024xf32> to vector<8x1024xf32>
    %107 = vector.shape_cast %104 : vector<8x1024xf32> to vector<1x8x1024xf32>
    tpu.vector_store %arg3[%c0_25, %c0_26, %c0_27], %107 {strides = array<i32>} : memref<1x8x1024xf32, #tpu.memory_space<vmem>>, vector<1x8x1024xf32>,
    return
  }
  func.func @transform_0(%arg0: i32) -> (i32, i32, i32) {
    %c0_i32 = arith.constant 0 : i32
    %c0_i32_0 = arith.constant 0 : i32
    %c0_i32_1 = arith.constant 0 : i32
    return %arg0, %c0_i32, %c0_i32_0 : i32, i32, i32
  }
  func.func @transform_1(%arg0: i32) -> (i32, i32, i32) {
    %c0_i32 = arith.constant 0 : i32
    %c0_i32_0 = arith.constant 0 : i32
    %c0_i32_1 = arith.constant 0 : i32
    %c0_i32_2 = arith.constant 0 : i32
    return %c0_i32, %c0_i32_0, %c0_i32_1 : i32, i32, i32
  }
  func.func @transform_2(%arg0: i32) -> (i32, i32, i32) {
    %c0_i32 = arith.constant 0 : i32
    %c0_i32_0 = arith.constant 0 : i32
    %c0_i32_1 = arith.constant 0 : i32
    return %arg0, %c0_i32, %c0_i32_0 : i32, i32, i32
  }
}

module attributes {stable_mosaic.version = 11 : i64} {
  func.func @_block_kernel(%arg0: i32, %arg1: memref<1x8x1024xf32, #tpu.memory_space<vmem>>, %arg2: memref<9x4x8xbf16, #tpu.memory_space<vmem>>, %arg3: memref<8x1xf32, #tpu.memory_space<vmem>>, %arg4: memref<8x1xf32, #tpu.memory_space<vmem>>, %arg5: memref<9x8x4xbf16, #tpu.memory_space<vmem>>, %arg6: memref<4x1xf32, #tpu.memory_space<vmem>>, %arg7: memref<4x1xf32, #tpu.memory_space<vmem>>, %arg8: memref<1x8x1024xf32, #tpu.memory_space<vmem>>) attributes {dimension_semantics = [#tpu.dimension_semantics<parallel>], iteration_bounds = array<i64: 2>, scalar_prefetch = 0 : i64, scratch_operands = 0 : i64, tpu.core_type = #tpu.core_type<tc>, window_params = [{transform_indices = @transform_0, window_bounds = array<i64: 1, 8, 1024>}, {pipeline_mode = #tpu.pipeline_mode<synchronous>, transform_indices = @transform_1, window_bounds = array<i64: 9, 4, 8>}, {pipeline_mode = #tpu.pipeline_mode<synchronous>, transform_indices = @transform_2, window_bounds = array<i64: 8, 1>}, {pipeline_mode = #tpu.pipeline_mode<synchronous>, transform_indices = @transform_3, window_bounds = array<i64: 8, 1>}, {pipeline_mode = #tpu.pipeline_mode<synchronous>, transform_indices = @transform_4, window_bounds = array<i64: 9, 8, 4>}, {pipeline_mode = #tpu.pipeline_mode<synchronous>, transform_indices = @transform_5, window_bounds = array<i64: 4, 1>}, {pipeline_mode = #tpu.pipeline_mode<synchronous>, transform_indices = @transform_6, window_bounds = array<i64: 4, 1>}, {transform_indices = @transform_7, window_bounds = array<i64: 1, 8, 1024>}]} {
    %0 = tpu.iota {dimensions = array<i32: 1>} : vector<1x1024xi32>
    %c31_i32 = arith.constant 31 : i32
    %1 = vector.broadcast %c31_i32 : i32 to vector<1x1024xi32>
    %2 = arith.andi %0, %1 : vector<1x1024xi32>
    %c-1_i32 = arith.constant -1 : i32
    %3 = vector.broadcast %c-1_i32 : i32 to vector<1x1024xi32>
    %4 = arith.addi %2, %3 : vector<1x1024xi32>
    %c0_i32 = arith.constant 0 : i32
    %5 = vector.broadcast %c0_i32 : i32 to vector<1x1024xi32>
    %6 = arith.cmpi sge, %4, %5 : vector<1x1024xi32>
    %c-1_i32_0 = arith.constant -1 : i32
    %7 = vector.broadcast %c-1_i32_0 : i32 to vector<1x1024xi32>
    %8 = arith.addi %2, %7 : vector<1x1024xi32>
    %c32_i32 = arith.constant 32 : i32
    %9 = vector.broadcast %c32_i32 : i32 to vector<1x1024xi32>
    %10 = arith.cmpi slt, %8, %9 : vector<1x1024xi32>
    %11 = arith.andi %6, %10 : vector<1x1024xi1>
    %c1_i32 = arith.constant 1 : i32
    %12 = vector.broadcast %c1_i32 : i32 to vector<1x1024xi32>
    %13 = arith.addi %2, %12 : vector<1x1024xi32>
    %c0_i32_1 = arith.constant 0 : i32
    %14 = vector.broadcast %c0_i32_1 : i32 to vector<1x1024xi32>
    %15 = arith.cmpi sge, %13, %14 : vector<1x1024xi32>
    %c1_i32_2 = arith.constant 1 : i32
    %16 = vector.broadcast %c1_i32_2 : i32 to vector<1x1024xi32>
    %17 = arith.addi %2, %16 : vector<1x1024xi32>
    %c32_i32_3 = arith.constant 32 : i32
    %18 = vector.broadcast %c32_i32_3 : i32 to vector<1x1024xi32>
    %19 = arith.cmpi slt, %17, %18 : vector<1x1024xi32>
    %20 = arith.andi %15, %19 : vector<1x1024xi1>
    %c0 = arith.constant 0 : index
    %c0_4 = arith.constant 0 : index
    %c0_5 = arith.constant 0 : index
    %21 = vector.load %arg2[%c0, %c0_4, %c0_5] : memref<9x4x8xbf16, #tpu.memory_space<vmem>>, vector<9x4x8xbf16>
    %c0_6 = arith.constant 0 : index
    %c0_7 = arith.constant 0 : index
    %c0_8 = arith.constant 0 : index
    %22 = vector.load %arg5[%c0_6, %c0_7, %c0_8] : memref<9x8x4xbf16, #tpu.memory_space<vmem>>, vector<9x8x4xbf16>
    %c0_9 = arith.constant 0 : index
    %c0_10 = arith.constant 0 : index
    %23 = vector.load %arg3[%c0_9, %c0_10] : memref<8x1xf32, #tpu.memory_space<vmem>>, vector<8x1xf32>
    %24 = vector.shape_cast %23 : vector<8x1xf32> to vector<8x1xf32>
    %25 = vector.broadcast %24 : vector<8x1xf32> to vector<8x1024xf32>
    %c0_11 = arith.constant 0 : index
    %c0_12 = arith.constant 0 : index
    %26 = vector.load %arg4[%c0_11, %c0_12] : memref<8x1xf32, #tpu.memory_space<vmem>>, vector<8x1xf32>
    %27 = vector.shape_cast %26 : vector<8x1xf32> to vector<8x1xf32>
    %28 = vector.broadcast %27 : vector<8x1xf32> to vector<8x1024xf32>
    %c0_13 = arith.constant 0 : index
    %c0_14 = arith.constant 0 : index
    %29 = vector.load %arg6[%c0_13, %c0_14] : memref<4x1xf32, #tpu.memory_space<vmem>>, vector<4x1xf32>
    %30 = vector.shape_cast %29 : vector<4x1xf32> to vector<4x1xf32>
    %31 = vector.broadcast %30 : vector<4x1xf32> to vector<4x1024xf32>
    %c0_15 = arith.constant 0 : index
    %c0_16 = arith.constant 0 : index
    %32 = vector.load %arg7[%c0_15, %c0_16] : memref<4x1xf32, #tpu.memory_space<vmem>>, vector<4x1xf32>
    %33 = vector.shape_cast %32 : vector<4x1xf32> to vector<4x1xf32>
    %34 = vector.broadcast %33 : vector<4x1xf32> to vector<4x1024xf32>
    %c0_17 = arith.constant 0 : index
    %c0_18 = arith.constant 0 : index
    %c0_19 = arith.constant 0 : index
    %35 = vector.load %arg1[%c0_17, %c0_18, %c0_19] : memref<1x8x1024xf32, #tpu.memory_space<vmem>>, vector<1x8x1024xf32>
    %36 = vector.shape_cast %35 : vector<1x8x1024xf32> to vector<8x1024xf32>
    %37 = arith.mulf %36, %25 : vector<8x1024xf32>
    %38 = arith.addf %37, %28 : vector<8x1024xf32>
    %cst = arith.constant 0.000000e+00 : f32
    %39 = vector.broadcast %cst : f32 to vector<8x1024xf32>
    %40 = arith.maximumf %38, %39 : vector<8x1024xf32>
    %cst_20 = arith.constant 0.000000e+00 : f32
    %41 = vector.broadcast %cst_20 : f32 to vector<8x128xf32>
    %42 = tpu.concatenate %41, %40, %41 in 1 : vector<8x128xf32>, vector<8x1024xf32>, vector<8x128xf32> -> vector<8x1280xf32>
    %cst_21 = arith.constant 0.000000e+00 : f32
    %43 = vector.broadcast %cst_21 : f32 to vector<4x1024xf32>
    %44 = vector.extract_strided_slice %42 {offsets = [0, 95], sizes = [8, 1024], strides = [1, 1]} : vector<8x1280xf32> to vector<8x1024xf32>
    %cst_22 = arith.constant 0.000000e+00 : f32
    %45 = vector.broadcast %cst_22 : f32 to vector<8x1024xf32>
    %46 = vector.shape_cast %11 : vector<1x1024xi1> to vector<1x1024xi1>
    %47 = vector.broadcast %46 : vector<1x1024xi1> to vector<8x1024xi1>
    %48 = arith.select %47, %44, %45 : vector<8x1024xi1>, vector<8x1024xf32>
    %49 = vector.extract_strided_slice %21 {offsets = [0, 0, 0], sizes = [1, 4, 8], strides = [1, 1, 1]} : vector<9x4x8xbf16> to vector<1x4x8xbf16>
    %50 = vector.shape_cast %49 : vector<1x4x8xbf16> to vector<4x8xbf16>
    %51 = arith.truncf %48 : vector<8x1024xf32> to vector<8x1024xbf16>
    %cst_23 = arith.constant dense<0.000000e+00> : vector<4x1024xf32>
    %52 = tpu.matmul %50, %51, %cst_23 {dimension_numbers = #tpu.dot_dimension_numbers<[1], [0], [0], [1], [0, 0, 1, 1], [], []>} : vector<4x8xbf16>, vector<8x1024xbf16>, vector<4x1024xf32> -> vector<4x1024xf32>
    %53 = arith.addf %43, %52 : vector<4x1024xf32>
    %54 = vector.extract_strided_slice %42 {offsets = [0, 96], sizes = [8, 1024], strides = [1, 1]} : vector<8x1280xf32> to vector<8x1024xf32>
    %55 = vector.extract_strided_slice %21 {offsets = [1, 0, 0], sizes = [1, 4, 8], strides = [1, 1, 1]} : vector<9x4x8xbf16> to vector<1x4x8xbf16>
    %56 = vector.shape_cast %55 : vector<1x4x8xbf16> to vector<4x8xbf16>
    %57 = arith.truncf %54 : vector<8x1024xf32> to vector<8x1024xbf16>
    %cst_24 = arith.constant dense<0.000000e+00> : vector<4x1024xf32>
    %58 = tpu.matmul %56, %57, %cst_24 {dimension_numbers = #tpu.dot_dimension_numbers<[1], [0], [0], [1], [0, 0, 1, 1], [], []>} : vector<4x8xbf16>, vector<8x1024xbf16>, vector<4x1024xf32> -> vector<4x1024xf32>
    %59 = arith.addf %53, %58 : vector<4x1024xf32>
    %60 = vector.extract_strided_slice %42 {offsets = [0, 97], sizes = [8, 1024], strides = [1, 1]} : vector<8x1280xf32> to vector<8x1024xf32>
    %cst_25 = arith.constant 0.000000e+00 : f32
    %61 = vector.broadcast %cst_25 : f32 to vector<8x1024xf32>
    %62 = vector.shape_cast %20 : vector<1x1024xi1> to vector<1x1024xi1>
    %63 = vector.broadcast %62 : vector<1x1024xi1> to vector<8x1024xi1>
    %64 = arith.select %63, %60, %61 : vector<8x1024xi1>, vector<8x1024xf32>
    %65 = vector.extract_strided_slice %21 {offsets = [2, 0, 0], sizes = [1, 4, 8], strides = [1, 1, 1]} : vector<9x4x8xbf16> to vector<1x4x8xbf16>
    %66 = vector.shape_cast %65 : vector<1x4x8xbf16> to vector<4x8xbf16>
    %67 = arith.truncf %64 : vector<8x1024xf32> to vector<8x1024xbf16>
    %cst_26 = arith.constant dense<0.000000e+00> : vector<4x1024xf32>
    %68 = tpu.matmul %66, %67, %cst_26 {dimension_numbers = #tpu.dot_dimension_numbers<[1], [0], [0], [1], [0, 0, 1, 1], [], []>} : vector<4x8xbf16>, vector<8x1024xbf16>, vector<4x1024xf32> -> vector<4x1024xf32>
    %69 = arith.addf %59, %68 : vector<4x1024xf32>
    %70 = vector.extract_strided_slice %42 {offsets = [0, 127], sizes = [8, 1024], strides = [1, 1]} : vector<8x1280xf32> to vector<8x1024xf32>
    %cst_27 = arith.constant 0.000000e+00 : f32
    %71 = vector.broadcast %cst_27 : f32 to vector<8x1024xf32>
    %72 = vector.shape_cast %11 : vector<1x1024xi1> to vector<1x1024xi1>
    %73 = vector.broadcast %72 : vector<1x1024xi1> to vector<8x1024xi1>
    %74 = arith.select %73, %70, %71 : vector<8x1024xi1>, vector<8x1024xf32>
    %75 = vector.extract_strided_slice %21 {offsets = [3, 0, 0], sizes = [1, 4, 8], strides = [1, 1, 1]} : vector<9x4x8xbf16> to vector<1x4x8xbf16>
    %76 = vector.shape_cast %75 : vector<1x4x8xbf16> to vector<4x8xbf16>
    %77 = arith.truncf %74 : vector<8x1024xf32> to vector<8x1024xbf16>
    %cst_28 = arith.constant dense<0.000000e+00> : vector<4x1024xf32>
    %78 = tpu.matmul %76, %77, %cst_28 {dimension_numbers = #tpu.dot_dimension_numbers<[1], [0], [0], [1], [0, 0, 1, 1], [], []>} : vector<4x8xbf16>, vector<8x1024xbf16>, vector<4x1024xf32> -> vector<4x1024xf32>
    %79 = arith.addf %69, %78 : vector<4x1024xf32>
    %80 = vector.extract_strided_slice %42 {offsets = [0, 128], sizes = [8, 1024], strides = [1, 1]} : vector<8x1280xf32> to vector<8x1024xf32>
    %81 = vector.extract_strided_slice %21 {offsets = [4, 0, 0], sizes = [1, 4, 8], strides = [1, 1, 1]} : vector<9x4x8xbf16> to vector<1x4x8xbf16>
    %82 = vector.shape_cast %81 : vector<1x4x8xbf16> to vector<4x8xbf16>
    %83 = arith.truncf %80 : vector<8x1024xf32> to vector<8x1024xbf16>
    %cst_29 = arith.constant dense<0.000000e+00> : vector<4x1024xf32>
    %84 = tpu.matmul %82, %83, %cst_29 {dimension_numbers = #tpu.dot_dimension_numbers<[1], [0], [0], [1], [0, 0, 1, 1], [], []>} : vector<4x8xbf16>, vector<8x1024xbf16>, vector<4x1024xf32> -> vector<4x1024xf32>
    %85 = arith.addf %79, %84 : vector<4x1024xf32>
    %86 = vector.extract_strided_slice %42 {offsets = [0, 129], sizes = [8, 1024], strides = [1, 1]} : vector<8x1280xf32> to vector<8x1024xf32>
    %cst_30 = arith.constant 0.000000e+00 : f32
    %87 = vector.broadcast %cst_30 : f32 to vector<8x1024xf32>
    %88 = vector.shape_cast %20 : vector<1x1024xi1> to vector<1x1024xi1>
    %89 = vector.broadcast %88 : vector<1x1024xi1> to vector<8x1024xi1>
    %90 = arith.select %89, %86, %87 : vector<8x1024xi1>, vector<8x1024xf32>
    %91 = vector.extract_strided_slice %21 {offsets = [5, 0, 0], sizes = [1, 4, 8], strides = [1, 1, 1]} : vector<9x4x8xbf16> to vector<1x4x8xbf16>
    %92 = vector.shape_cast %91 : vector<1x4x8xbf16> to vector<4x8xbf16>
    %93 = arith.truncf %90 : vector<8x1024xf32> to vector<8x1024xbf16>
    %cst_31 = arith.constant dense<0.000000e+00> : vector<4x1024xf32>
    %94 = tpu.matmul %92, %93, %cst_31 {dimension_numbers = #tpu.dot_dimension_numbers<[1], [0], [0], [1], [0, 0, 1, 1], [], []>} : vector<4x8xbf16>, vector<8x1024xbf16>, vector<4x1024xf32> -> vector<4x1024xf32>
    %95 = arith.addf %85, %94 : vector<4x1024xf32>
    %96 = vector.extract_strided_slice %42 {offsets = [0, 159], sizes = [8, 1024], strides = [1, 1]} : vector<8x1280xf32> to vector<8x1024xf32>
    %cst_32 = arith.constant 0.000000e+00 : f32
    %97 = vector.broadcast %cst_32 : f32 to vector<8x1024xf32>
    %98 = vector.shape_cast %11 : vector<1x1024xi1> to vector<1x1024xi1>
    %99 = vector.broadcast %98 : vector<1x1024xi1> to vector<8x1024xi1>
    %100 = arith.select %99, %96, %97 : vector<8x1024xi1>, vector<8x1024xf32>
    %101 = vector.extract_strided_slice %21 {offsets = [6, 0, 0], sizes = [1, 4, 8], strides = [1, 1, 1]} : vector<9x4x8xbf16> to vector<1x4x8xbf16>
    %102 = vector.shape_cast %101 : vector<1x4x8xbf16> to vector<4x8xbf16>
    %103 = arith.truncf %100 : vector<8x1024xf32> to vector<8x1024xbf16>
    %cst_33 = arith.constant dense<0.000000e+00> : vector<4x1024xf32>
    %104 = tpu.matmul %102, %103, %cst_33 {dimension_numbers = #tpu.dot_dimension_numbers<[1], [0], [0], [1], [0, 0, 1, 1], [], []>} : vector<4x8xbf16>, vector<8x1024xbf16>, vector<4x1024xf32> -> vector<4x1024xf32>
    %105 = arith.addf %95, %104 : vector<4x1024xf32>
    %106 = vector.extract_strided_slice %42 {offsets = [0, 160], sizes = [8, 1024], strides = [1, 1]} : vector<8x1280xf32> to vector<8x1024xf32>
    %107 = vector.extract_strided_slice %21 {offsets = [7, 0, 0], sizes = [1, 4, 8], strides = [1, 1, 1]} : vector<9x4x8xbf16> to vector<1x4x8xbf16>
    %108 = vector.shape_cast %107 : vector<1x4x8xbf16> to vector<4x8xbf16>
    %109 = arith.truncf %106 : vector<8x1024xf32> to vector<8x1024xbf16>
    %cst_34 = arith.constant dense<0.000000e+00> : vector<4x1024xf32>
    %110 = tpu.matmul %108, %109, %cst_34 {dimension_numbers = #tpu.dot_dimension_numbers<[1], [0], [0], [1], [0, 0, 1, 1], [], []>} : vector<4x8xbf16>, vector<8x1024xbf16>, vector<4x1024xf32> -> vector<4x1024xf32>
    %111 = arith.addf %105, %110 : vector<4x1024xf32>
    %112 = vector.extract_strided_slice %42 {offsets = [0, 161], sizes = [8, 1024], strides = [1, 1]} : vector<8x1280xf32> to vector<8x1024xf32>
    %cst_35 = arith.constant 0.000000e+00 : f32
    %113 = vector.broadcast %cst_35 : f32 to vector<8x1024xf32>
    %114 = vector.shape_cast %20 : vector<1x1024xi1> to vector<1x1024xi1>
    %115 = vector.broadcast %114 : vector<1x1024xi1> to vector<8x1024xi1>
    %116 = arith.select %115, %112, %113 : vector<8x1024xi1>, vector<8x1024xf32>
    %117 = vector.extract_strided_slice %21 {offsets = [8, 0, 0], sizes = [1, 4, 8], strides = [1, 1, 1]} : vector<9x4x8xbf16> to vector<1x4x8xbf16>
    %118 = vector.shape_cast %117 : vector<1x4x8xbf16> to vector<4x8xbf16>
    %119 = arith.truncf %116 : vector<8x1024xf32> to vector<8x1024xbf16>
    %cst_36 = arith.constant dense<0.000000e+00> : vector<4x1024xf32>
    %120 = tpu.matmul %118, %119, %cst_36 {dimension_numbers = #tpu.dot_dimension_numbers<[1], [0], [0], [1], [0, 0, 1, 1], [], []>} : vector<4x8xbf16>, vector<8x1024xbf16>, vector<4x1024xf32> -> vector<4x1024xf32>
    %121 = arith.addf %111, %120 : vector<4x1024xf32>
    %122 = arith.mulf %121, %31 : vector<4x1024xf32>
    %123 = arith.addf %122, %34 : vector<4x1024xf32>
    %cst_37 = arith.constant 0.000000e+00 : f32
    %124 = vector.broadcast %cst_37 : f32 to vector<4x1024xf32>
    %125 = arith.maximumf %123, %124 : vector<4x1024xf32>
    %cst_38 = arith.constant 0.000000e+00 : f32
    %126 = vector.broadcast %cst_38 : f32 to vector<4x128xf32>
    %127 = tpu.concatenate %126, %125, %126 in 1 : vector<4x128xf32>, vector<4x1024xf32>, vector<4x128xf32> -> vector<4x1280xf32>
    %cst_39 = arith.constant 0.000000e+00 : f32
    %128 = vector.broadcast %cst_39 : f32 to vector<8x1024xf32>
    %129 = vector.extract_strided_slice %127 {offsets = [0, 95], sizes = [4, 1024], strides = [1, 1]} : vector<4x1280xf32> to vector<4x1024xf32>
    %cst_40 = arith.constant 0.000000e+00 : f32
    %130 = vector.broadcast %cst_40 : f32 to vector<4x1024xf32>
    %131 = vector.shape_cast %11 : vector<1x1024xi1> to vector<1x1024xi1>
    %132 = vector.broadcast %131 : vector<1x1024xi1> to vector<4x1024xi1>
    %133 = arith.select %132, %129, %130 : vector<4x1024xi1>, vector<4x1024xf32>
    %134 = vector.extract_strided_slice %22 {offsets = [0, 0, 0], sizes = [1, 8, 4], strides = [1, 1, 1]} : vector<9x8x4xbf16> to vector<1x8x4xbf16>
    %135 = vector.shape_cast %134 : vector<1x8x4xbf16> to vector<8x4xbf16>
    %136 = arith.truncf %133 : vector<4x1024xf32> to vector<4x1024xbf16>
    %cst_41 = arith.constant dense<0.000000e+00> : vector<8x1024xf32>
    %137 = tpu.matmul %135, %136, %cst_41 {dimension_numbers = #tpu.dot_dimension_numbers<[1], [0], [0], [1], [0, 0, 1, 1], [], []>} : vector<8x4xbf16>, vector<4x1024xbf16>, vector<8x1024xf32> -> vector<8x1024xf32>
    %138 = arith.addf %128, %137 : vector<8x1024xf32>
    %139 = vector.extract_strided_slice %127 {offsets = [0, 96], sizes = [4, 1024], strides = [1, 1]} : vector<4x1280xf32> to vector<4x1024xf32>
    %140 = vector.extract_strided_slice %22 {offsets = [1, 0, 0], sizes = [1, 8, 4], strides = [1, 1, 1]} : vector<9x8x4xbf16> to vector<1x8x4xbf16>
    %141 = vector.shape_cast %140 : vector<1x8x4xbf16> to vector<8x4xbf16>
    %142 = arith.truncf %139 : vector<4x1024xf32> to vector<4x1024xbf16>
    %cst_42 = arith.constant dense<0.000000e+00> : vector<8x1024xf32>
    %143 = tpu.matmul %141, %142, %cst_42 {dimension_numbers = #tpu.dot_dimension_numbers<[1], [0], [0], [1], [0, 0, 1, 1], [], []>} : vector<8x4xbf16>, vector<4x1024xbf16>, vector<8x1024xf32> -> vector<8x1024xf32>
    %144 = arith.addf %138, %143 : vector<8x1024xf32>
    %145 = vector.extract_strided_slice %127 {offsets = [0, 97], sizes = [4, 1024], strides = [1, 1]} : vector<4x1280xf32> to vector<4x1024xf32>
    %cst_43 = arith.constant 0.000000e+00 : f32
    %146 = vector.broadcast %cst_43 : f32 to vector<4x1024xf32>
    %147 = vector.shape_cast %20 : vector<1x1024xi1> to vector<1x1024xi1>
    %148 = vector.broadcast %147 : vector<1x1024xi1> to vector<4x1024xi1>
    %149 = arith.select %148, %145, %146 : vector<4x1024xi1>, vector<4x1024xf32>
    %150 = vector.extract_strided_slice %22 {offsets = [2, 0, 0], sizes = [1, 8, 4], strides = [1, 1, 1]} : vector<9x8x4xbf16> to vector<1x8x4xbf16>
    %151 = vector.shape_cast %150 : vector<1x8x4xbf16> to vector<8x4xbf16>
    %152 = arith.truncf %149 : vector<4x1024xf32> to vector<4x1024xbf16>
    %cst_44 = arith.constant dense<0.000000e+00> : vector<8x1024xf32>
    %153 = tpu.matmul %151, %152, %cst_44 {dimension_numbers = #tpu.dot_dimension_numbers<[1], [0], [0], [1], [0, 0, 1, 1], [], []>} : vector<8x4xbf16>, vector<4x1024xbf16>, vector<8x1024xf32> -> vector<8x1024xf32>
    %154 = arith.addf %144, %153 : vector<8x1024xf32>
    %155 = vector.extract_strided_slice %127 {offsets = [0, 127], sizes = [4, 1024], strides = [1, 1]} : vector<4x1280xf32> to vector<4x1024xf32>
    %cst_45 = arith.constant 0.000000e+00 : f32
    %156 = vector.broadcast %cst_45 : f32 to vector<4x1024xf32>
    %157 = vector.shape_cast %11 : vector<1x1024xi1> to vector<1x1024xi1>
    %158 = vector.broadcast %157 : vector<1x1024xi1> to vector<4x1024xi1>
    %159 = arith.select %158, %155, %156 : vector<4x1024xi1>, vector<4x1024xf32>
    %160 = vector.extract_strided_slice %22 {offsets = [3, 0, 0], sizes = [1, 8, 4], strides = [1, 1, 1]} : vector<9x8x4xbf16> to vector<1x8x4xbf16>
    %161 = vector.shape_cast %160 : vector<1x8x4xbf16> to vector<8x4xbf16>
    %162 = arith.truncf %159 : vector<4x1024xf32> to vector<4x1024xbf16>
    %cst_46 = arith.constant dense<0.000000e+00> : vector<8x1024xf32>
    %163 = tpu.matmul %161, %162, %cst_46 {dimension_numbers = #tpu.dot_dimension_numbers<[1], [0], [0], [1], [0, 0, 1, 1], [], []>} : vector<8x4xbf16>, vector<4x1024xbf16>, vector<8x1024xf32> -> vector<8x1024xf32>
    %164 = arith.addf %154, %163 : vector<8x1024xf32>
    %165 = vector.extract_strided_slice %127 {offsets = [0, 128], sizes = [4, 1024], strides = [1, 1]} : vector<4x1280xf32> to vector<4x1024xf32>
    %166 = vector.extract_strided_slice %22 {offsets = [4, 0, 0], sizes = [1, 8, 4], strides = [1, 1, 1]} : vector<9x8x4xbf16> to vector<1x8x4xbf16>
    %167 = vector.shape_cast %166 : vector<1x8x4xbf16> to vector<8x4xbf16>
    %168 = arith.truncf %165 : vector<4x1024xf32> to vector<4x1024xbf16>
    %cst_47 = arith.constant dense<0.000000e+00> : vector<8x1024xf32>
    %169 = tpu.matmul %167, %168, %cst_47 {dimension_numbers = #tpu.dot_dimension_numbers<[1], [0], [0], [1], [0, 0, 1, 1], [], []>} : vector<8x4xbf16>, vector<4x1024xbf16>, vector<8x1024xf32> -> vector<8x1024xf32>
    %170 = arith.addf %164, %169 : vector<8x1024xf32>
    %171 = vector.extract_strided_slice %127 {offsets = [0, 129], sizes = [4, 1024], strides = [1, 1]} : vector<4x1280xf32> to vector<4x1024xf32>
    %cst_48 = arith.constant 0.000000e+00 : f32
    %172 = vector.broadcast %cst_48 : f32 to vector<4x1024xf32>
    %173 = vector.shape_cast %20 : vector<1x1024xi1> to vector<1x1024xi1>
    %174 = vector.broadcast %173 : vector<1x1024xi1> to vector<4x1024xi1>
    %175 = arith.select %174, %171, %172 : vector<4x1024xi1>, vector<4x1024xf32>
    %176 = vector.extract_strided_slice %22 {offsets = [5, 0, 0], sizes = [1, 8, 4], strides = [1, 1, 1]} : vector<9x8x4xbf16> to vector<1x8x4xbf16>
    %177 = vector.shape_cast %176 : vector<1x8x4xbf16> to vector<8x4xbf16>
    %178 = arith.truncf %175 : vector<4x1024xf32> to vector<4x1024xbf16>
    %cst_49 = arith.constant dense<0.000000e+00> : vector<8x1024xf32>
    %179 = tpu.matmul %177, %178, %cst_49 {dimension_numbers = #tpu.dot_dimension_numbers<[1], [0], [0], [1], [0, 0, 1, 1], [], []>} : vector<8x4xbf16>, vector<4x1024xbf16>, vector<8x1024xf32> -> vector<8x1024xf32>
    %180 = arith.addf %170, %179 : vector<8x1024xf32>
    %181 = vector.extract_strided_slice %127 {offsets = [0, 159], sizes = [4, 1024], strides = [1, 1]} : vector<4x1280xf32> to vector<4x1024xf32>
    %cst_50 = arith.constant 0.000000e+00 : f32
    %182 = vector.broadcast %cst_50 : f32 to vector<4x1024xf32>
    %183 = vector.shape_cast %11 : vector<1x1024xi1> to vector<1x1024xi1>
    %184 = vector.broadcast %183 : vector<1x1024xi1> to vector<4x1024xi1>
    %185 = arith.select %184, %181, %182 : vector<4x1024xi1>, vector<4x1024xf32>
    %186 = vector.extract_strided_slice %22 {offsets = [6, 0, 0], sizes = [1, 8, 4], strides = [1, 1, 1]} : vector<9x8x4xbf16> to vector<1x8x4xbf16>
    %187 = vector.shape_cast %186 : vector<1x8x4xbf16> to vector<8x4xbf16>
    %188 = arith.truncf %185 : vector<4x1024xf32> to vector<4x1024xbf16>
    %cst_51 = arith.constant dense<0.000000e+00> : vector<8x1024xf32>
    %189 = tpu.matmul %187, %188, %cst_51 {dimension_numbers = #tpu.dot_dimension_numbers<[1], [0], [0], [1], [0, 0, 1, 1], [], []>} : vector<8x4xbf16>, vector<4x1024xbf16>, vector<8x1024xf32> -> vector<8x1024xf32>
    %190 = arith.addf %180, %189 : vector<8x1024xf32>
    %191 = vector.extract_strided_slice %127 {offsets = [0, 160], sizes = [4, 1024], strides = [1, 1]} : vector<4x1280xf32> to vector<4x1024xf32>
    %192 = vector.extract_strided_slice %22 {offsets = [7, 0, 0], sizes = [1, 8, 4], strides = [1, 1, 1]} : vector<9x8x4xbf16> to vector<1x8x4xbf16>
    %193 = vector.shape_cast %192 : vector<1x8x4xbf16> to vector<8x4xbf16>
    %194 = arith.truncf %191 : vector<4x1024xf32> to vector<4x1024xbf16>
    %cst_52 = arith.constant dense<0.000000e+00> : vector<8x1024xf32>
    %195 = tpu.matmul %193, %194, %cst_52 {dimension_numbers = #tpu.dot_dimension_numbers<[1], [0], [0], [1], [0, 0, 1, 1], [], []>} : vector<8x4xbf16>, vector<4x1024xbf16>, vector<8x1024xf32> -> vector<8x1024xf32>
    %196 = arith.addf %190, %195 : vector<8x1024xf32>
    %197 = vector.extract_strided_slice %127 {offsets = [0, 161], sizes = [4, 1024], strides = [1, 1]} : vector<4x1280xf32> to vector<4x1024xf32>
    %cst_53 = arith.constant 0.000000e+00 : f32
    %198 = vector.broadcast %cst_53 : f32 to vector<4x1024xf32>
    %199 = vector.shape_cast %20 : vector<1x1024xi1> to vector<1x1024xi1>
    %200 = vector.broadcast %199 : vector<1x1024xi1> to vector<4x1024xi1>
    %201 = arith.select %200, %197, %198 : vector<4x1024xi1>, vector<4x1024xf32>
    %202 = vector.extract_strided_slice %22 {offsets = [8, 0, 0], sizes = [1, 8, 4], strides = [1, 1, 1]} : vector<9x8x4xbf16> to vector<1x8x4xbf16>
    %203 = vector.shape_cast %202 : vector<1x8x4xbf16> to vector<8x4xbf16>
    %204 = arith.truncf %201 : vector<4x1024xf32> to vector<4x1024xbf16>
    %cst_54 = arith.constant dense<0.000000e+00> : vector<8x1024xf32>
    %205 = tpu.matmul %203, %204, %cst_54 {dimension_numbers = #tpu.dot_dimension_numbers<[1], [0], [0], [1], [0, 0, 1, 1], [], []>} : vector<8x4xbf16>, vector<4x1024xbf16>, vector<8x1024xf32> -> vector<8x1024xf32>
    %206 = arith.addf %196, %205 : vector<8x1024xf32>
    %207 = arith.addf %36, %206 : vector<8x1024xf32>
    %c0_55 = arith.constant 0 : index
    %c0_56 = arith.constant 0 : index
    %c0_57 = arith.constant 0 : index
    %208 = vector.load %arg8[%c0_55, %c0_56, %c0_57] : memref<1x8x1024xf32, #tpu.memory_space<vmem>>, vector<1x8x1024xf32>
    %209 = vector.shape_cast %208 : vector<1x8x1024xf32> to vector<8x1024xf32>
    %210 = vector.shape_cast %207 : vector<8x1024xf32> to vector<1x8x1024xf32>
    tpu.vector_store %arg8[%c0_55, %c0_56, %c0_57], %210 {strides = array<i32>} : memref<1x8x1024xf32, #tpu.memory_space<vmem>>, vector<1x8x1024xf32>,
    return
  }
  func.func @transform_0(%arg0: i32) -> (i32, i32, i32) {
    %c0_i32 = arith.constant 0 : i32
    %c0_i32_0 = arith.constant 0 : i32
    %c0_i32_1 = arith.constant 0 : i32
    return %arg0, %c0_i32, %c0_i32_0 : i32, i32, i32
  }
  func.func @transform_1(%arg0: i32) -> (i32, i32, i32) {
    %c0_i32 = arith.constant 0 : i32
    %c0_i32_0 = arith.constant 0 : i32
    %c0_i32_1 = arith.constant 0 : i32
    %c0_i32_2 = arith.constant 0 : i32
    return %c0_i32, %c0_i32_0, %c0_i32_1 : i32, i32, i32
  }
  func.func @transform_2(%arg0: i32) -> (i32, i32) {
    %c0_i32 = arith.constant 0 : i32
    %c0_i32_0 = arith.constant 0 : i32
    %c0_i32_1 = arith.constant 0 : i32
    return %c0_i32, %c0_i32_0 : i32, i32
  }
  func.func @transform_3(%arg0: i32) -> (i32, i32) {
    %c0_i32 = arith.constant 0 : i32
    %c0_i32_0 = arith.constant 0 : i32
    %c0_i32_1 = arith.constant 0 : i32
    return %c0_i32, %c0_i32_0 : i32, i32
  }
  func.func @transform_4(%arg0: i32) -> (i32, i32, i32) {
    %c0_i32 = arith.constant 0 : i32
    %c0_i32_0 = arith.constant 0 : i32
    %c0_i32_1 = arith.constant 0 : i32
    %c0_i32_2 = arith.constant 0 : i32
    return %c0_i32, %c0_i32_0, %c0_i32_1 : i32, i32, i32
  }
  func.func @transform_5(%arg0: i32) -> (i32, i32) {
    %c0_i32 = arith.constant 0 : i32
    %c0_i32_0 = arith.constant 0 : i32
    %c0_i32_1 = arith.constant 0 : i32
    return %c0_i32, %c0_i32_0 : i32, i32
  }
  func.func @transform_6(%arg0: i32) -> (i32, i32) {
    %c0_i32 = arith.constant 0 : i32
    %c0_i32_0 = arith.constant 0 : i32
    %c0_i32_1 = arith.constant 0 : i32
    return %c0_i32, %c0_i32_0 : i32, i32
  }
  func.func @transform_7(%arg0: i32) -> (i32, i32, i32) {
    %c0_i32 = arith.constant 0 : i32
    %c0_i32_0 = arith.constant 0 : i32
    %c0_i32_1 = arith.constant 0 : i32
    return %arg0, %c0_i32, %c0_i32_0 : i32, i32, i32
  }
}

module attributes {stable_mosaic.version = 11 : i64} {
  func.func @_tail_kernel(%arg0: i32, %arg1: memref<1x8x1024xf32, #tpu.memory_space<vmem>>, %arg2: memref<9x4x8xbf16, #tpu.memory_space<vmem>>, %arg3: memref<8x1xf32, #tpu.memory_space<vmem>>, %arg4: memref<8x1xf32, #tpu.memory_space<vmem>>, %arg5: memref<4x1xf32, #tpu.memory_space<vmem>>, %arg6: memref<4x1xf32, #tpu.memory_space<vmem>>, %arg7: memref<1x4x1024xbf16, #tpu.memory_space<vmem>>) attributes {dimension_semantics = [#tpu.dimension_semantics<parallel>], iteration_bounds = array<i64: 2>, scalar_prefetch = 0 : i64, scratch_operands = 0 : i64, tpu.core_type = #tpu.core_type<tc>, window_params = [{transform_indices = @transform_0, window_bounds = array<i64: 1, 8, 1024>}, {pipeline_mode = #tpu.pipeline_mode<synchronous>, transform_indices = @transform_1, window_bounds = array<i64: 9, 4, 8>}, {pipeline_mode = #tpu.pipeline_mode<synchronous>, transform_indices = @transform_2, window_bounds = array<i64: 8, 1>}, {pipeline_mode = #tpu.pipeline_mode<synchronous>, transform_indices = @transform_3, window_bounds = array<i64: 8, 1>}, {pipeline_mode = #tpu.pipeline_mode<synchronous>, transform_indices = @transform_4, window_bounds = array<i64: 4, 1>}, {pipeline_mode = #tpu.pipeline_mode<synchronous>, transform_indices = @transform_5, window_bounds = array<i64: 4, 1>}, {transform_indices = @transform_6, window_bounds = array<i64: 1, 4, 1024>}]} {
    %0 = tpu.iota {dimensions = array<i32: 1>} : vector<1x1024xi32>
    %c31_i32 = arith.constant 31 : i32
    %1 = vector.broadcast %c31_i32 : i32 to vector<1x1024xi32>
    %2 = arith.andi %0, %1 : vector<1x1024xi32>
    %c-1_i32 = arith.constant -1 : i32
    %3 = vector.broadcast %c-1_i32 : i32 to vector<1x1024xi32>
    %4 = arith.addi %2, %3 : vector<1x1024xi32>
    %c0_i32 = arith.constant 0 : i32
    %5 = vector.broadcast %c0_i32 : i32 to vector<1x1024xi32>
    %6 = arith.cmpi sge, %4, %5 : vector<1x1024xi32>
    %c-1_i32_0 = arith.constant -1 : i32
    %7 = vector.broadcast %c-1_i32_0 : i32 to vector<1x1024xi32>
    %8 = arith.addi %2, %7 : vector<1x1024xi32>
    %c32_i32 = arith.constant 32 : i32
    %9 = vector.broadcast %c32_i32 : i32 to vector<1x1024xi32>
    %10 = arith.cmpi slt, %8, %9 : vector<1x1024xi32>
    %11 = arith.andi %6, %10 : vector<1x1024xi1>
    %c1_i32 = arith.constant 1 : i32
    %12 = vector.broadcast %c1_i32 : i32 to vector<1x1024xi32>
    %13 = arith.addi %2, %12 : vector<1x1024xi32>
    %c0_i32_1 = arith.constant 0 : i32
    %14 = vector.broadcast %c0_i32_1 : i32 to vector<1x1024xi32>
    %15 = arith.cmpi sge, %13, %14 : vector<1x1024xi32>
    %c1_i32_2 = arith.constant 1 : i32
    %16 = vector.broadcast %c1_i32_2 : i32 to vector<1x1024xi32>
    %17 = arith.addi %2, %16 : vector<1x1024xi32>
    %c32_i32_3 = arith.constant 32 : i32
    %18 = vector.broadcast %c32_i32_3 : i32 to vector<1x1024xi32>
    %19 = arith.cmpi slt, %17, %18 : vector<1x1024xi32>
    %20 = arith.andi %15, %19 : vector<1x1024xi1>
    %c0 = arith.constant 0 : index
    %c0_4 = arith.constant 0 : index
    %c0_5 = arith.constant 0 : index
    %21 = vector.load %arg2[%c0, %c0_4, %c0_5] : memref<9x4x8xbf16, #tpu.memory_space<vmem>>, vector<9x4x8xbf16>
    %c0_6 = arith.constant 0 : index
    %c0_7 = arith.constant 0 : index
    %22 = vector.load %arg3[%c0_6, %c0_7] : memref<8x1xf32, #tpu.memory_space<vmem>>, vector<8x1xf32>
    %23 = vector.shape_cast %22 : vector<8x1xf32> to vector<8x1xf32>
    %24 = vector.broadcast %23 : vector<8x1xf32> to vector<8x1024xf32>
    %c0_8 = arith.constant 0 : index
    %c0_9 = arith.constant 0 : index
    %25 = vector.load %arg4[%c0_8, %c0_9] : memref<8x1xf32, #tpu.memory_space<vmem>>, vector<8x1xf32>
    %26 = vector.shape_cast %25 : vector<8x1xf32> to vector<8x1xf32>
    %27 = vector.broadcast %26 : vector<8x1xf32> to vector<8x1024xf32>
    %c0_10 = arith.constant 0 : index
    %c0_11 = arith.constant 0 : index
    %28 = vector.load %arg5[%c0_10, %c0_11] : memref<4x1xf32, #tpu.memory_space<vmem>>, vector<4x1xf32>
    %29 = vector.shape_cast %28 : vector<4x1xf32> to vector<4x1xf32>
    %30 = vector.broadcast %29 : vector<4x1xf32> to vector<4x1024xf32>
    %c0_12 = arith.constant 0 : index
    %c0_13 = arith.constant 0 : index
    %31 = vector.load %arg6[%c0_12, %c0_13] : memref<4x1xf32, #tpu.memory_space<vmem>>, vector<4x1xf32>
    %32 = vector.shape_cast %31 : vector<4x1xf32> to vector<4x1xf32>
    %33 = vector.broadcast %32 : vector<4x1xf32> to vector<4x1024xf32>
    %c0_14 = arith.constant 0 : index
    %c0_15 = arith.constant 0 : index
    %c0_16 = arith.constant 0 : index
    %34 = vector.load %arg1[%c0_14, %c0_15, %c0_16] : memref<1x8x1024xf32, #tpu.memory_space<vmem>>, vector<1x8x1024xf32>
    %35 = vector.shape_cast %34 : vector<1x8x1024xf32> to vector<8x1024xf32>
    %36 = arith.mulf %35, %24 : vector<8x1024xf32>
    %37 = arith.addf %36, %27 : vector<8x1024xf32>
    %cst = arith.constant 0.000000e+00 : f32
    %38 = vector.broadcast %cst : f32 to vector<8x1024xf32>
    %39 = arith.maximumf %37, %38 : vector<8x1024xf32>
    %cst_17 = arith.constant 0.000000e+00 : f32
    %40 = vector.broadcast %cst_17 : f32 to vector<8x128xf32>
    %41 = tpu.concatenate %40, %39, %40 in 1 : vector<8x128xf32>, vector<8x1024xf32>, vector<8x128xf32> -> vector<8x1280xf32>
    %cst_18 = arith.constant 0.000000e+00 : f32
    %42 = vector.broadcast %cst_18 : f32 to vector<4x1024xf32>
    %43 = vector.extract_strided_slice %41 {offsets = [0, 95], sizes = [8, 1024], strides = [1, 1]} : vector<8x1280xf32> to vector<8x1024xf32>
    %cst_19 = arith.constant 0.000000e+00 : f32
    %44 = vector.broadcast %cst_19 : f32 to vector<8x1024xf32>
    %45 = vector.shape_cast %11 : vector<1x1024xi1> to vector<1x1024xi1>
    %46 = vector.broadcast %45 : vector<1x1024xi1> to vector<8x1024xi1>
    %47 = arith.select %46, %43, %44 : vector<8x1024xi1>, vector<8x1024xf32>
    %48 = vector.extract_strided_slice %21 {offsets = [0, 0, 0], sizes = [1, 4, 8], strides = [1, 1, 1]} : vector<9x4x8xbf16> to vector<1x4x8xbf16>
    %49 = vector.shape_cast %48 : vector<1x4x8xbf16> to vector<4x8xbf16>
    %50 = arith.truncf %47 : vector<8x1024xf32> to vector<8x1024xbf16>
    %cst_20 = arith.constant dense<0.000000e+00> : vector<4x1024xf32>
    %51 = tpu.matmul %49, %50, %cst_20 {dimension_numbers = #tpu.dot_dimension_numbers<[1], [0], [0], [1], [0, 0, 1, 1], [], []>} : vector<4x8xbf16>, vector<8x1024xbf16>, vector<4x1024xf32> -> vector<4x1024xf32>
    %52 = arith.addf %42, %51 : vector<4x1024xf32>
    %53 = vector.extract_strided_slice %41 {offsets = [0, 96], sizes = [8, 1024], strides = [1, 1]} : vector<8x1280xf32> to vector<8x1024xf32>
    %54 = vector.extract_strided_slice %21 {offsets = [1, 0, 0], sizes = [1, 4, 8], strides = [1, 1, 1]} : vector<9x4x8xbf16> to vector<1x4x8xbf16>
    %55 = vector.shape_cast %54 : vector<1x4x8xbf16> to vector<4x8xbf16>
    %56 = arith.truncf %53 : vector<8x1024xf32> to vector<8x1024xbf16>
    %cst_21 = arith.constant dense<0.000000e+00> : vector<4x1024xf32>
    %57 = tpu.matmul %55, %56, %cst_21 {dimension_numbers = #tpu.dot_dimension_numbers<[1], [0], [0], [1], [0, 0, 1, 1], [], []>} : vector<4x8xbf16>, vector<8x1024xbf16>, vector<4x1024xf32> -> vector<4x1024xf32>
    %58 = arith.addf %52, %57 : vector<4x1024xf32>
    %59 = vector.extract_strided_slice %41 {offsets = [0, 97], sizes = [8, 1024], strides = [1, 1]} : vector<8x1280xf32> to vector<8x1024xf32>
    %cst_22 = arith.constant 0.000000e+00 : f32
    %60 = vector.broadcast %cst_22 : f32 to vector<8x1024xf32>
    %61 = vector.shape_cast %20 : vector<1x1024xi1> to vector<1x1024xi1>
    %62 = vector.broadcast %61 : vector<1x1024xi1> to vector<8x1024xi1>
    %63 = arith.select %62, %59, %60 : vector<8x1024xi1>, vector<8x1024xf32>
    %64 = vector.extract_strided_slice %21 {offsets = [2, 0, 0], sizes = [1, 4, 8], strides = [1, 1, 1]} : vector<9x4x8xbf16> to vector<1x4x8xbf16>
    %65 = vector.shape_cast %64 : vector<1x4x8xbf16> to vector<4x8xbf16>
    %66 = arith.truncf %63 : vector<8x1024xf32> to vector<8x1024xbf16>
    %cst_23 = arith.constant dense<0.000000e+00> : vector<4x1024xf32>
    %67 = tpu.matmul %65, %66, %cst_23 {dimension_numbers = #tpu.dot_dimension_numbers<[1], [0], [0], [1], [0, 0, 1, 1], [], []>} : vector<4x8xbf16>, vector<8x1024xbf16>, vector<4x1024xf32> -> vector<4x1024xf32>
    %68 = arith.addf %58, %67 : vector<4x1024xf32>
    %69 = vector.extract_strided_slice %41 {offsets = [0, 127], sizes = [8, 1024], strides = [1, 1]} : vector<8x1280xf32> to vector<8x1024xf32>
    %cst_24 = arith.constant 0.000000e+00 : f32
    %70 = vector.broadcast %cst_24 : f32 to vector<8x1024xf32>
    %71 = vector.shape_cast %11 : vector<1x1024xi1> to vector<1x1024xi1>
    %72 = vector.broadcast %71 : vector<1x1024xi1> to vector<8x1024xi1>
    %73 = arith.select %72, %69, %70 : vector<8x1024xi1>, vector<8x1024xf32>
    %74 = vector.extract_strided_slice %21 {offsets = [3, 0, 0], sizes = [1, 4, 8], strides = [1, 1, 1]} : vector<9x4x8xbf16> to vector<1x4x8xbf16>
    %75 = vector.shape_cast %74 : vector<1x4x8xbf16> to vector<4x8xbf16>
    %76 = arith.truncf %73 : vector<8x1024xf32> to vector<8x1024xbf16>
    %cst_25 = arith.constant dense<0.000000e+00> : vector<4x1024xf32>
    %77 = tpu.matmul %75, %76, %cst_25 {dimension_numbers = #tpu.dot_dimension_numbers<[1], [0], [0], [1], [0, 0, 1, 1], [], []>} : vector<4x8xbf16>, vector<8x1024xbf16>, vector<4x1024xf32> -> vector<4x1024xf32>
    %78 = arith.addf %68, %77 : vector<4x1024xf32>
    %79 = vector.extract_strided_slice %41 {offsets = [0, 128], sizes = [8, 1024], strides = [1, 1]} : vector<8x1280xf32> to vector<8x1024xf32>
    %80 = vector.extract_strided_slice %21 {offsets = [4, 0, 0], sizes = [1, 4, 8], strides = [1, 1, 1]} : vector<9x4x8xbf16> to vector<1x4x8xbf16>
    %81 = vector.shape_cast %80 : vector<1x4x8xbf16> to vector<4x8xbf16>
    %82 = arith.truncf %79 : vector<8x1024xf32> to vector<8x1024xbf16>
    %cst_26 = arith.constant dense<0.000000e+00> : vector<4x1024xf32>
    %83 = tpu.matmul %81, %82, %cst_26 {dimension_numbers = #tpu.dot_dimension_numbers<[1], [0], [0], [1], [0, 0, 1, 1], [], []>} : vector<4x8xbf16>, vector<8x1024xbf16>, vector<4x1024xf32> -> vector<4x1024xf32>
    %84 = arith.addf %78, %83 : vector<4x1024xf32>
    %85 = vector.extract_strided_slice %41 {offsets = [0, 129], sizes = [8, 1024], strides = [1, 1]} : vector<8x1280xf32> to vector<8x1024xf32>
    %cst_27 = arith.constant 0.000000e+00 : f32
    %86 = vector.broadcast %cst_27 : f32 to vector<8x1024xf32>
    %87 = vector.shape_cast %20 : vector<1x1024xi1> to vector<1x1024xi1>
    %88 = vector.broadcast %87 : vector<1x1024xi1> to vector<8x1024xi1>
    %89 = arith.select %88, %85, %86 : vector<8x1024xi1>, vector<8x1024xf32>
    %90 = vector.extract_strided_slice %21 {offsets = [5, 0, 0], sizes = [1, 4, 8], strides = [1, 1, 1]} : vector<9x4x8xbf16> to vector<1x4x8xbf16>
    %91 = vector.shape_cast %90 : vector<1x4x8xbf16> to vector<4x8xbf16>
    %92 = arith.truncf %89 : vector<8x1024xf32> to vector<8x1024xbf16>
    %cst_28 = arith.constant dense<0.000000e+00> : vector<4x1024xf32>
    %93 = tpu.matmul %91, %92, %cst_28 {dimension_numbers = #tpu.dot_dimension_numbers<[1], [0], [0], [1], [0, 0, 1, 1], [], []>} : vector<4x8xbf16>, vector<8x1024xbf16>, vector<4x1024xf32> -> vector<4x1024xf32>
    %94 = arith.addf %84, %93 : vector<4x1024xf32>
    %95 = vector.extract_strided_slice %41 {offsets = [0, 159], sizes = [8, 1024], strides = [1, 1]} : vector<8x1280xf32> to vector<8x1024xf32>
    %cst_29 = arith.constant 0.000000e+00 : f32
    %96 = vector.broadcast %cst_29 : f32 to vector<8x1024xf32>
    %97 = vector.shape_cast %11 : vector<1x1024xi1> to vector<1x1024xi1>
    %98 = vector.broadcast %97 : vector<1x1024xi1> to vector<8x1024xi1>
    %99 = arith.select %98, %95, %96 : vector<8x1024xi1>, vector<8x1024xf32>
    %100 = vector.extract_strided_slice %21 {offsets = [6, 0, 0], sizes = [1, 4, 8], strides = [1, 1, 1]} : vector<9x4x8xbf16> to vector<1x4x8xbf16>
    %101 = vector.shape_cast %100 : vector<1x4x8xbf16> to vector<4x8xbf16>
    %102 = arith.truncf %99 : vector<8x1024xf32> to vector<8x1024xbf16>
    %cst_30 = arith.constant dense<0.000000e+00> : vector<4x1024xf32>
    %103 = tpu.matmul %101, %102, %cst_30 {dimension_numbers = #tpu.dot_dimension_numbers<[1], [0], [0], [1], [0, 0, 1, 1], [], []>} : vector<4x8xbf16>, vector<8x1024xbf16>, vector<4x1024xf32> -> vector<4x1024xf32>
    %104 = arith.addf %94, %103 : vector<4x1024xf32>
    %105 = vector.extract_strided_slice %41 {offsets = [0, 160], sizes = [8, 1024], strides = [1, 1]} : vector<8x1280xf32> to vector<8x1024xf32>
    %106 = vector.extract_strided_slice %21 {offsets = [7, 0, 0], sizes = [1, 4, 8], strides = [1, 1, 1]} : vector<9x4x8xbf16> to vector<1x4x8xbf16>
    %107 = vector.shape_cast %106 : vector<1x4x8xbf16> to vector<4x8xbf16>
    %108 = arith.truncf %105 : vector<8x1024xf32> to vector<8x1024xbf16>
    %cst_31 = arith.constant dense<0.000000e+00> : vector<4x1024xf32>
    %109 = tpu.matmul %107, %108, %cst_31 {dimension_numbers = #tpu.dot_dimension_numbers<[1], [0], [0], [1], [0, 0, 1, 1], [], []>} : vector<4x8xbf16>, vector<8x1024xbf16>, vector<4x1024xf32> -> vector<4x1024xf32>
    %110 = arith.addf %104, %109 : vector<4x1024xf32>
    %111 = vector.extract_strided_slice %41 {offsets = [0, 161], sizes = [8, 1024], strides = [1, 1]} : vector<8x1280xf32> to vector<8x1024xf32>
    %cst_32 = arith.constant 0.000000e+00 : f32
    %112 = vector.broadcast %cst_32 : f32 to vector<8x1024xf32>
    %113 = vector.shape_cast %20 : vector<1x1024xi1> to vector<1x1024xi1>
    %114 = vector.broadcast %113 : vector<1x1024xi1> to vector<8x1024xi1>
    %115 = arith.select %114, %111, %112 : vector<8x1024xi1>, vector<8x1024xf32>
    %116 = vector.extract_strided_slice %21 {offsets = [8, 0, 0], sizes = [1, 4, 8], strides = [1, 1, 1]} : vector<9x4x8xbf16> to vector<1x4x8xbf16>
    %117 = vector.shape_cast %116 : vector<1x4x8xbf16> to vector<4x8xbf16>
    %118 = arith.truncf %115 : vector<8x1024xf32> to vector<8x1024xbf16>
    %cst_33 = arith.constant dense<0.000000e+00> : vector<4x1024xf32>
    %119 = tpu.matmul %117, %118, %cst_33 {dimension_numbers = #tpu.dot_dimension_numbers<[1], [0], [0], [1], [0, 0, 1, 1], [], []>} : vector<4x8xbf16>, vector<8x1024xbf16>, vector<4x1024xf32> -> vector<4x1024xf32>
    %120 = arith.addf %110, %119 : vector<4x1024xf32>
    %121 = arith.mulf %120, %30 : vector<4x1024xf32>
    %122 = arith.addf %121, %33 : vector<4x1024xf32>
    %cst_34 = arith.constant 0.000000e+00 : f32
    %123 = vector.broadcast %cst_34 : f32 to vector<4x1024xf32>
    %124 = arith.maximumf %122, %123 : vector<4x1024xf32>
    %125 = arith.truncf %124 : vector<4x1024xf32> to vector<4x1024xbf16>
    %c0_35 = arith.constant 0 : index
    %c0_36 = arith.constant 0 : index
    %c0_37 = arith.constant 0 : index
    %126 = vector.load %arg7[%c0_35, %c0_36, %c0_37] : memref<1x4x1024xbf16, #tpu.memory_space<vmem>>, vector<1x4x1024xbf16>
    %127 = vector.shape_cast %126 : vector<1x4x1024xbf16> to vector<4x1024xbf16>
    %128 = vector.shape_cast %125 : vector<4x1024xbf16> to vector<1x4x1024xbf16>
    tpu.vector_store %arg7[%c0_35, %c0_36, %c0_37], %128 {strides = array<i32>} : memref<1x4x1024xbf16, #tpu.memory_space<vmem>>, vector<1x4x1024xbf16>,
    return
  }
  func.func @transform_0(%arg0: i32) -> (i32, i32, i32) {
    %c0_i32 = arith.constant 0 : i32
    %c0_i32_0 = arith.constant 0 : i32
    %c0_i32_1 = arith.constant 0 : i32
    return %arg0, %c0_i32, %c0_i32_0 : i32, i32, i32
  }
  func.func @transform_1(%arg0: i32) -> (i32, i32, i32) {
    %c0_i32 = arith.constant 0 : i32
    %c0_i32_0 = arith.constant 0 : i32
    %c0_i32_1 = arith.constant 0 : i32
    %c0_i32_2 = arith.constant 0 : i32
    return %c0_i32, %c0_i32_0, %c0_i32_1 : i32, i32, i32
  }
  func.func @transform_2(%arg0: i32) -> (i32, i32) {
    %c0_i32 = arith.constant 0 : i32
    %c0_i32_0 = arith.constant 0 : i32
    %c0_i32_1 = arith.constant 0 : i32
    return %c0_i32, %c0_i32_0 : i32, i32
  }
  func.func @transform_3(%arg0: i32) -> (i32, i32) {
    %c0_i32 = arith.constant 0 : i32
    %c0_i32_0 = arith.constant 0 : i32
    %c0_i32_1 = arith.constant 0 : i32
    return %c0_i32, %c0_i32_0 : i32, i32
  }
  func.func @transform_4(%arg0: i32) -> (i32, i32) {
    %c0_i32 = arith.constant 0 : i32
    %c0_i32_0 = arith.constant 0 : i32
    %c0_i32_1 = arith.constant 0 : i32
    return %c0_i32, %c0_i32_0 : i32, i32
  }
  func.func @transform_5(%arg0: i32) -> (i32, i32) {
    %c0_i32 = arith.constant 0 : i32
    %c0_i32_0 = arith.constant 0 : i32
    %c0_i32_1 = arith.constant 0 : i32
    return %c0_i32, %c0_i32_0 : i32, i32
  }
  func.func @transform_6(%arg0: i32) -> (i32, i32, i32) {
    %c0_i32 = arith.constant 0 : i32
    %c0_i32_0 = arith.constant 0 : i32
    %c0_i32_1 = arith.constant 0 : i32
    return %arg0, %c0_i32, %c0_i32_0 : i32, i32, i32
  }
}

module attributes {stable_mosaic.version = 11 : i64} {
  func.func @_dual_fc_kernel(%arg0: i32, %arg1: memref<2x4096xbf16, #tpu.memory_space<vmem>>, %arg2: memref<4096x32xbf16, #tpu.memory_space<vmem>>, %arg3: memref<1x32xf32, #tpu.memory_space<vmem>>, %arg4: memref<2x16xf32, #tpu.memory_space<vmem>>, %arg5: memref<2x16xf32, #tpu.memory_space<vmem>>) attributes {dimension_semantics = [#tpu.dimension_semantics<parallel>], iteration_bounds = array<i64: 1>, scalar_prefetch = 0 : i64, scratch_operands = 0 : i64, tpu.core_type = #tpu.core_type<tc>, window_params = [{transform_indices = @transform_0, window_bounds = array<i64: 2, 4096>}, {pipeline_mode = #tpu.pipeline_mode<synchronous>, transform_indices = @transform_1, window_bounds = array<i64: 4096, 32>}, {pipeline_mode = #tpu.pipeline_mode<synchronous>, transform_indices = @transform_2, window_bounds = array<i64: 1, 32>}, {transform_indices = @transform_3, window_bounds = array<i64: 2, 16>}, {transform_indices = @transform_4, window_bounds = array<i64: 2, 16>}]} {
    %c0 = arith.constant 0 : index
    %c0_0 = arith.constant 0 : index
    %0 = vector.load %arg1[%c0, %c0_0] : memref<2x4096xbf16, #tpu.memory_space<vmem>>, vector<2x4096xbf16>
    %c0_1 = arith.constant 0 : index
    %c0_2 = arith.constant 0 : index
    %1 = vector.load %arg2[%c0_1, %c0_2] : memref<4096x32xbf16, #tpu.memory_space<vmem>>, vector<4096x32xbf16>
    %cst = arith.constant dense<0.000000e+00> : vector<2x32xf32>
    %2 = tpu.matmul %0, %1, %cst {dimension_numbers = #tpu.dot_dimension_numbers<[1], [0], [0], [1], [0, 0, 1, 1], [], []>} : vector<2x4096xbf16>, vector<4096x32xbf16>, vector<2x32xf32> -> vector<2x32xf32>
    %c0_3 = arith.constant 0 : index
    %c0_4 = arith.constant 0 : index
    %3 = vector.load %arg3[%c0_3, %c0_4] : memref<1x32xf32, #tpu.memory_space<vmem>>, vector<1x32xf32>
    %4 = vector.broadcast %3 : vector<1x32xf32> to vector<2x32xf32>
    %5 = arith.addf %2, %4 : vector<2x32xf32>
    %6 = vector.extract_strided_slice %5 {offsets = [0, 0], sizes = [2, 16], strides = [1, 1]} : vector<2x32xf32> to vector<2x16xf32>
    %c0_5 = arith.constant 0 : index
    %c0_6 = arith.constant 0 : index
    %7 = vector.load %arg4[%c0_5, %c0_6] : memref<2x16xf32, #tpu.memory_space<vmem>>, vector<2x16xf32>
    tpu.vector_store %arg4[%c0_5, %c0_6], %6 {strides = array<i32>} : memref<2x16xf32, #tpu.memory_space<vmem>>, vector<2x16xf32>,
    %8 = vector.extract_strided_slice %5 {offsets = [0, 16], sizes = [2, 16], strides = [1, 1]} : vector<2x32xf32> to vector<2x16xf32>
    %9 = math.tanh %8 : vector<2x16xf32>
    %c0_7 = arith.constant 0 : index
    %c0_8 = arith.constant 0 : index
    %10 = vector.load %arg5[%c0_7, %c0_8] : memref<2x16xf32, #tpu.memory_space<vmem>>, vector<2x16xf32>
    tpu.vector_store %arg5[%c0_7, %c0_8], %9 {strides = array<i32>} : memref<2x16xf32, #tpu.memory_space<vmem>>, vector<2x16xf32>,
    return
  }
  func.func @transform_0(%arg0: i32) -> (i32, i32) {
    %c0_i32 = arith.constant 0 : i32
    %c0_i32_0 = arith.constant 0 : i32
    return %arg0, %c0_i32 : i32, i32
  }
  func.func @transform_1(%arg0: i32) -> (i32, i32) {
    %c0_i32 = arith.constant 0 : i32
    %c0_i32_0 = arith.constant 0 : i32
    %c0_i32_1 = arith.constant 0 : i32
    return %c0_i32, %c0_i32_0 : i32, i32
  }
  func.func @transform_2(%arg0: i32) -> (i32, i32) {
    %c0_i32 = arith.constant 0 : i32
    %c0_i32_0 = arith.constant 0 : i32
    %c0_i32_1 = arith.constant 0 : i32
    return %c0_i32, %c0_i32_0 : i32, i32
  }
  func.func @transform_3(%arg0: i32) -> (i32, i32) {
    %c0_i32 = arith.constant 0 : i32
    %c0_i32_0 = arith.constant 0 : i32
    return %arg0, %c0_i32 : i32, i32
  }
  func.func @transform_4(%arg0: i32) -> (i32, i32) {
    %c0_i32 = arith.constant 0 : i32
    %c0_i32_0 = arith.constant 0 : i32
    return %arg0, %c0_i32 : i32, i32
  }
}

</mosaic_0001>

<llo_original>
// kernel: base_encoder_forward.6
$region0: #{base_encoder_forward.6}
  #allocation0 [shape = 'u32[]', space=smem, size = 0x4, offset = 0x4, fixed_abs, tag = 'smem constant byte address 0x4 - core index']
  #allocation1 [shape = 'u32[72,128]{1,0:T(1,128)}', space=vmem, size = 0x9000, scoped, tag = 'internal scratch']
  %s0 = inlined_call_operand.vmem [shape: f32[2,8,1024], index: 0, kind: input, shape index: {}]
  %s1 = inlined_call_operand.vmem [shape: bf16[9,4,8], index: 1, kind: input, shape index: {}]
  %s2 = inlined_call_operand.vmem [shape: f32[8,1], index: 2, kind: input, shape index: {}]
  %s3 = inlined_call_operand.vmem [shape: f32[8,1], index: 3, kind: input, shape index: {}]
  %s4 = inlined_call_operand.vmem [shape: f32[4,1], index: 4, kind: input, shape index: {}]
  %s5 = inlined_call_operand.vmem [shape: f32[4,1], index: 5, kind: input, shape index: {}]
  %s6 = inlined_call_operand.vmem [shape: bf16[2,4,1024], index: 6, kind: output, shape index: {}]
  %s7 = sld [smem:[#allocation0]]
  $region57: #{base_encoder_forward.6} parent=0
    _
  %s9 = ssub.s32 1, %s7
  %s10 = scalar_select 0, %s9, %s7
  loop: start=0, step=1, limit=4
  $region2: #{base_encoder_forward.6} parent=0 // loop_pre_header
    _
  $region3: #{base_encoder_forward.6} parent=0 // loop_header
    %s12 = sphi 0, %s16
    %p13 = scmp.ge.s32.totalorder %s12, 4
    %s22 = sphi 0, %s24
    %s25 = sphi 0, %s22
    %s26 = sphi 0, %s25
    %s42 = sphi 0, %s26
    %s46 = sphi 0, %s46
    %s48 = sphi 0, %s46
    %s49 = sphi 0, %s48
    %s63 = sphi 0, %s49
    %s67 = sphi 0, %s67
    %s69 = sphi 0, %s67
    %s70 = sphi 0, %s69
    %s84 = sphi 0, %s70
    %s88 = sphi 0, %s88
    %s90 = sphi 0, %s88
    %s91 = sphi 0, %s90
    %s105 = sphi 0, %s91
    %s109 = sphi 0, %s109
    %s111 = sphi 0, %s109
    %s112 = sphi 0, %s111
    %s126 = sphi 0, %s112
    %s130 = sphi 0, %s130
    %s132 = sphi 0, %s130
    %s133 = sphi 0, %s132
    %s147 = sphi 0, %s133
    %s153 = sphi 0, %s155
    %s156 = sphi 0, %s153
    %s157 = sphi 0, %s156
    %s173 = sphi 0, %s157
  $region4: #{base_encoder_forward.6} parent=0 // loop_header_branch
    %15 = sbr.rel (%p13) target = $region8
  $region5: #{base_encoder_forward.6} parent=0 // loop_body
    %s17 = ssub.s32 %s12, 1
    %s18 = ssub.s32 %s12, 2
    %s19 = sadd.s32 %s12, 1
    %s20 = ssub.s32 %s12, %s19
    %p21 = scmp.eq.s32.totalorder %s20, 0
    %s23 = sadd.s32 %s22, 1
    %s24 = scalar_select %p21, %s22, %s23
    %p27 = pneg %p21
    %p28 = scmp.eq.s32.totalorder %s12, 1
    %p29 = por %p27, %p28
    %p30 = scmp.ne.s32.totalorder %s22, %s25
    %p31 = scmp.eq.s32.totalorder %s12, 0
    %p32 = por %p30, %p31
    %p33 = scmp.ne.s32.totalorder %s22, %s25
    %p34 = scmp.eq.s32.totalorder %s17, 1
    %p35 = por %p33, %p34
    %p36 = scmp.ne.s32.totalorder %s25, %s26
    %p37 = scmp.eq.s32.totalorder %s17, 0
    %p38 = por %p36, %p37
    %p39 = scmp.ne.s32.totalorder %s25, %s26
    %p40 = scmp.eq.s32.totalorder %s18, 1
    %p41 = por %p39, %p40
    %p43 = scmp.ne.s32.totalorder %s26, %s42
    %p44 = scmp.eq.s32.totalorder %s18, 0
    %p45 = por %p43, %p44
    %s47 = sadd.s32 %s46, 1
    %p50 = scmp.eq.s32.totalorder %s12, 1
    %p51 = scmp.ne.s32.totalorder %s46, %s48
    %p52 = scmp.eq.s32.totalorder %s12, 0
    %p53 = por %p51, %p52
    %p54 = scmp.ne.s32.totalorder %s46, %s48
    %p55 = scmp.eq.s32.totalorder %s17, 1
    %p56 = por %p54, %p55
    %p57 = scmp.ne.s32.totalorder %s48, %s49
    %p58 = scmp.eq.s32.totalorder %s17, 0
    %p59 = por %p57, %p58
    %p60 = scmp.ne.s32.totalorder %s48, %s49
    %p61 = scmp.eq.s32.totalorder %s18, 1
    %p62 = por %p60, %p61
    %p64 = scmp.ne.s32.totalorder %s49, %s63
    %p65 = scmp.eq.s32.totalorder %s18, 0
    %p66 = por %p64, %p65
    %s68 = sadd.s32 %s67, 1
    %p71 = scmp.eq.s32.totalorder %s12, 1
    %p72 = scmp.ne.s32.totalorder %s67, %s69
    %p73 = scmp.eq.s32.totalorder %s12, 0
    %p74 = por %p72, %p73
    %p75 = scmp.ne.s32.totalorder %s67, %s69
    %p76 = scmp.eq.s32.totalorder %s17, 1
    %p77 = por %p75, %p76
    %p78 = scmp.ne.s32.totalorder %s69, %s70
    %p79 = scmp.eq.s32.totalorder %s17, 0
    %p80 = por %p78, %p79
    %p81 = scmp.ne.s32.totalorder %s69, %s70
    %p82 = scmp.eq.s32.totalorder %s18, 1
    %p83 = por %p81, %p82
    %p85 = scmp.ne.s32.totalorder %s70, %s84
    %p86 = scmp.eq.s32.totalorder %s18, 0
    %p87 = por %p85, %p86
    %s89 = sadd.s32 %s88, 1
    %p92 = scmp.eq.s32.totalorder %s12, 1
    %p93 = scmp.ne.s32.totalorder %s88, %s90
    %p94 = scmp.eq.s32.totalorder %s12, 0
    %p95 = por %p93, %p94
    %p96 = scmp.ne.s32.totalorder %s88, %s90
    %p97 = scmp.eq.s32.totalorder %s17, 1
    %p98 = por %p96, %p97
    %p99 = scmp.ne.s32.totalorder %s90, %s91
    %p100 = scmp.eq.s32.totalorder %s17, 0
    %p101 = por %p99, %p100
    %p102 = scmp.ne.s32.totalorder %s90, %s91
    %p103 = scmp.eq.s32.totalorder %s18, 1
    %p104 = por %p102, %p103
    %p106 = scmp.ne.s32.totalorder %s91, %s105
    %p107 = scmp.eq.s32.totalorder %s18, 0
    %p108 = por %p106, %p107
    %s110 = sadd.s32 %s109, 1
    %p113 = scmp.eq.s32.totalorder %s12, 1
    %p114 = scmp.ne.s32.totalorder %s109, %s111
    %p115 = scmp.eq.s32.totalorder %s12, 0
    %p116 = por %p114, %p115
    %p117 = scmp.ne.s32.totalorder %s109, %s111
    %p118 = scmp.eq.s32.totalorder %s17, 1
    %p119 = por %p117, %p118
    %p120 = scmp.ne.s32.totalorder %s111, %s112
    %p121 = scmp.eq.s32.totalorder %s17, 0
    %p122 = por %p120, %p121
    %p123 = scmp.ne.s32.totalorder %s111, %s112
    %p124 = scmp.eq.s32.totalorder %s18, 1
    %p125 = por %p123, %p124
    %p127 = scmp.ne.s32.totalorder %s112, %s126
    %p128 = scmp.eq.s32.totalorder %s18, 0
    %p129 = por %p127, %p128
    %s131 = sadd.s32 %s130, 1
    %p134 = scmp.eq.s32.totalorder %s12, 1
    %p135 = scmp.ne.s32.totalorder %s130, %s132
    %p136 = scmp.eq.s32.totalorder %s12, 0
    %p137 = por %p135, %p136
    %p138 = scmp.ne.s32.totalorder %s130, %s132
    %p139 = scmp.eq.s32.totalorder %s17, 1
    %p140 = por %p138, %p139
    %p141 = scmp.ne.s32.totalorder %s132, %s133
    %p142 = scmp.eq.s32.totalorder %s17, 0
    %p143 = por %p141, %p142
    %p144 = scmp.ne.s32.totalorder %s132, %s133
    %p145 = scmp.eq.s32.totalorder %s18, 1
    %p146 = por %p144, %p145
    %p148 = scmp.ne.s32.totalorder %s133, %s147
    %p149 = scmp.eq.s32.totalorder %s18, 0
    %p150 = por %p148, %p149
    %s151 = ssub.s32 %s12, %s19
    %p152 = scmp.eq.s32.totalorder %s151, 0
    %s154 = sadd.s32 %s153, 1
    %s155 = scalar_select %p152, %s153, %s154
    %p158 = pneg %p152
    %p159 = scmp.eq.s32.totalorder %s12, 1
    %p160 = por %p158, %p159
    %p161 = scmp.ne.s32.totalorder %s153, %s156
    %p162 = scmp.eq.s32.totalorder %s12, 0
    %p163 = por %p161, %p162
    %p164 = scmp.ne.s32.totalorder %s153, %s156
    %p165 = scmp.eq.s32.totalorder %s17, 1
    %p166 = por %p164, %p165
    %p167 = scmp.ne.s32.totalorder %s156, %s157
    %p168 = scmp.eq.s32.totalorder %s17, 0
    %p169 = por %p167, %p168
    %p170 = scmp.ne.s32.totalorder %s156, %s157
    %p171 = scmp.eq.s32.totalorder %s18, 1
    %p172 = por %p170, %p171
    %p174 = scmp.ne.s32.totalorder %s157, %s173
    %p175 = scmp.eq.s32.totalorder %s18, 0
    %p176 = por %p174, %p175
    %p177 = scmp.le.s32.totalorder 1, %s12
    %p178 = scmp.lt.s32.totalorder %s12, 3
    %p179 = pnand %p177, %p178
    %p180 = pneg %p179
    // Predicated region
    $region9: #{base_encoder_forward.6} parent=5 // pred_check
      _
    $region10: #{base_encoder_forward.6} parent=5 // pred_check_branch
      %182 = sbr.rel (%p179) target = $region12
    $region11: #{base_encoder_forward.6} parent=5 // pred_region
      %s183 = ssub.s32 %s12, 1
      // Predicated region
      $region13: #{base_encoder_forward.6} parent=11 // pred_check
        %p184 = pneg %p59
      $region14: #{base_encoder_forward.6} parent=11 // pred_check_branch
        %186 = sbr.rel (%p184) target = $region16
      $region15: #{base_encoder_forward.6} parent=11 // pred_region
        _
      $region16: #{base_encoder_forward.6} parent=11 // pred_fallthru
        _
      // Predicated region
      $region17: #{base_encoder_forward.6} parent=11 // pred_check
        %p187 = pneg %p80
      $region18: #{base_encoder_forward.6} parent=11 // pred_check_branch
        %189 = sbr.rel (%p187) target = $region20
      $region19: #{base_encoder_forward.6} parent=11 // pred_region
        _
      $region20: #{base_encoder_forward.6} parent=11 // pred_fallthru
        _
      // Predicated region
      $region21: #{base_encoder_forward.6} parent=11 // pred_check
        %p190 = pneg %p101
      $region22: #{base_encoder_forward.6} parent=11 // pred_check_branch
        %192 = sbr.rel (%p190) target = $region24
      $region23: #{base_encoder_forward.6} parent=11 // pred_region
        _
      $region24: #{base_encoder_forward.6} parent=11 // pred_fallthru
        _
      // Predicated region
      $region25: #{base_encoder_forward.6} parent=11 // pred_check
        %p193 = pneg %p122
      $region26: #{base_encoder_forward.6} parent=11 // pred_check_branch
        %195 = sbr.rel (%p193) target = $region28
      $region27: #{base_encoder_forward.6} parent=11 // pred_region
        _
      $region28: #{base_encoder_forward.6} parent=11 // pred_fallthru
        _
      // Predicated region
      $region29: #{base_encoder_forward.6} parent=11 // pred_check
        %p196 = pneg %p143
      $region30: #{base_encoder_forward.6} parent=11 // pred_check_branch
        %198 = sbr.rel (%p196) target = $region32
      $region31: #{base_encoder_forward.6} parent=11 // pred_region
        _
      $region32: #{base_encoder_forward.6} parent=11 // pred_fallthru
        _
    $region12: #{base_encoder_forward.6} parent=5 // pred_fallthru
      _
    %p199 = scmp.lt.s32.totalorder %s12, 2
    // Predicated region
    $region33: #{base_encoder_forward.6} parent=5 // pred_check
      %p200 = pneg %p199
    $region34: #{base_encoder_forward.6} parent=5 // pred_check_branch
      %202 = sbr.rel (%p200) target = $region36
    $region35: #{base_encoder_forward.6} parent=5 // pred_region
      // Predicated region
      $region37: #{base_encoder_forward.6} parent=35 // pred_check
        %p203 = pneg %p32
      $region38: #{base_encoder_forward.6} parent=35 // pred_check_branch
        %205 = sbr.rel (%p203) target = $region40
      $region39: #{base_encoder_forward.6} parent=35 // pred_region
        %p206 = scmp.lt.s32.totalorder %s12, 1
        %s207 = scalar_select %p206, %s12, 1
        %s208 = smul.addr %s207, 8
        %s209 = smul.addr %s208, 8
        %s210 = scalar_lea.vmem %s0, %s209
      $region40: #{base_encoder_forward.6} parent=35 // pred_fallthru
        _
    $region36: #{base_encoder_forward.6} parent=5 // pred_fallthru
      _
    %p211 = scmp.le.s32.totalorder 1, %s12
    %p212 = scmp.lt.s32.totalorder %s12, 3
    %p213 = pnand %p211, %p212
    %p214 = pneg %p213
    // Predicated region
    $region41: #{base_encoder_forward.6} parent=5 // pred_check
      _
    $region42: #{base_encoder_forward.6} parent=5 // pred_check_branch
      %216 = sbr.rel (%p213) target = $region44
    $region43: #{base_encoder_forward.6} parent=5 // pred_region
      %s217 = ssub.s32 %s12, 1
      %p218 = scmp.lt.s32.totalorder %s17, 1
      %s219 = scalar_select %p218, %s17, 1
      %s220 = smul.addr %s219, 8
      %s221 = smul.addr %s220, 8
      %s222 = scalar_lea.vmem %s0, %s221
      %p223 = pneg %p38
      %p224 = pneg %p35
      %p225 = pneg %p59
      %p226 = pneg %p56
      %p227 = pneg %p80
      %p228 = pneg %p77
      %p229 = pneg %p101
      %p230 = pneg %p98
      %p231 = pneg %p122
      %p232 = pneg %p119
      %p233 = pneg %p143
      %p234 = pneg %p140
      %p235 = pneg %p169
      %p236 = pneg %p166
      %p237 = scmp.lt.s32.totalorder %s17, 1
      %s238 = scalar_select %p237, %s17, 1
      %s239 = smul.addr %s238, 8
      %s240 = smul.addr %s239, 2
      %s241 = scalar_lea.vmem %s6, %s240
      %p242 = scmp.lt.s32.totalorder %s17, 1
      %s243 = scalar_select %p242, %s17, 1
      %s244 = smul.addr %s243, 8
      %s245 = smul.addr %s244, 8
      %s246 = scalar_lea.vmem %s0, %s245
      %p247 = scmp.lt.s32.totalorder %s17, 1
      %s248 = scalar_select %p247, %s17, 1
      %s249 = smul.addr %s248, 8
      %s250 = smul.addr %s249, 2
      %s251 = scalar_lea.vmem %s6, %s250
      %v253 = vlaneseq
      %v254 = vand.u32 %v253, 127
      %v255 = vadd.s32 %v254, 128
      %v256 = vadd.s32 %v254, 256
      %v257 = vadd.s32 %v254, 384
      %v258 = vadd.s32 %v254, 512
      %v259 = vadd.s32 %v254, 640
      %v260 = vadd.s32 %v254, 768
      %v261 = vadd.s32 %v254, 896
      %v262 = vand.u32 %v254, 31
      %v263 = vand.u32 %v255, 31
      %v264 = vand.u32 %v256, 31
      %v265 = vand.u32 %v257, 31
      %v266 = vand.u32 %v258, 31
      %v267 = vand.u32 %v259, 31
      %v268 = vand.u32 %v260, 31
      %v269 = vand.u32 %v261, 31
      %v270 = vadd.s32 %v262, 4294967295
      %v271 = vadd.s32 %v263, 4294967295
      %v272 = vadd.s32 %v264, 4294967295
      %v273 = vadd.s32 %v265, 4294967295
      %v274 = vadd.s32 %v266, 4294967295
      %v275 = vadd.s32 %v267, 4294967295
      %v276 = vadd.s32 %v268, 4294967295
      %v277 = vadd.s32 %v269, 4294967295
      %vm278 = vcmp.ge.s32.totalorder %v270, 0
      %vm279 = vcmp.ge.s32.totalorder %v271, 0
      %vm280 = vcmp.ge.s32.totalorder %v272, 0
      %vm281 = vcmp.ge.s32.totalorder %v273, 0
      %vm282 = vcmp.ge.s32.totalorder %v274, 0
      %vm283 = vcmp.ge.s32.totalorder %v275, 0
      %vm284 = vcmp.ge.s32.totalorder %v276, 0
      %vm285 = vcmp.ge.s32.totalorder %v277, 0
      %vm286 = vcmp.lt.s32.totalorder %v270, 32
      %vm287 = vcmp.lt.s32.totalorder %v271, 32
      %vm288 = vcmp.lt.s32.totalorder %v272, 32
      %vm289 = vcmp.lt.s32.totalorder %v273, 32
      %vm290 = vcmp.lt.s32.totalorder %v274, 32
      %vm291 = vcmp.lt.s32.totalorder %v275, 32
      %vm292 = vcmp.lt.s32.totalorder %v276, 32
      %vm293 = vcmp.lt.s32.totalorder %v277, 32
      %vm294 = vmand %vm278, %vm286
      %vm295 = vmand %vm279, %vm287
      %vm296 = vmand %vm280, %vm288
      %vm297 = vmand %vm281, %vm289
      %vm298 = vmand %vm282, %vm290
      %vm299 = vmand %vm283, %vm291
      %vm300 = vmand %vm284, %vm292
      %vm301 = vmand %vm285, %vm293
      %v302 = vadd.s32 %v262, 1
      %v303 = vadd.s32 %v263, 1
      %v304 = vadd.s32 %v264, 1
      %v305 = vadd.s32 %v265, 1
      %v306 = vadd.s32 %v266, 1
      %v307 = vadd.s32 %v267, 1
      %v308 = vadd.s32 %v268, 1
      %v309 = vadd.s32 %v269, 1
      %vm310 = vcmp.ge.s32.totalorder %v302, 0
      %vm311 = vcmp.ge.s32.totalorder %v303, 0
      %vm312 = vcmp.ge.s32.totalorder %v304, 0
      %vm313 = vcmp.ge.s32.totalorder %v305, 0
      %vm314 = vcmp.ge.s32.totalorder %v306, 0
      %vm315 = vcmp.ge.s32.totalorder %v307, 0
      %vm316 = vcmp.ge.s32.totalorder %v308, 0
      %vm317 = vcmp.ge.s32.totalorder %v309, 0
      %vm318 = vcmp.lt.s32.totalorder %v302, 32
      %vm319 = vcmp.lt.s32.totalorder %v303, 32
      %vm320 = vcmp.lt.s32.totalorder %v304, 32
      %vm321 = vcmp.lt.s32.totalorder %v305, 32
      %vm322 = vcmp.lt.s32.totalorder %v306, 32
      %vm323 = vcmp.lt.s32.totalorder %v307, 32
      %vm324 = vcmp.lt.s32.totalorder %v308, 32
      %vm325 = vcmp.lt.s32.totalorder %v309, 32
      %vm326 = vmand %vm310, %vm318
      %vm327 = vmand %vm311, %vm319
      %vm328 = vmand %vm312, %vm320
      %vm329 = vmand %vm313, %vm321
      %vm330 = vmand %vm314, %vm322
      %vm331 = vmand %vm315, %vm323
      %vm332 = vmand %vm316, %vm324
      %vm333 = vmand %vm317, %vm325
      %v334 = vld [vmem:[%s1] sm:$0x3]
      %v335 = vld [vmem:[%s1 + $0x2] sm:$0x3]
      %v336 = vld [vmem:[%s1 + $0x4] sm:$0x3]
      %v337 = vld [vmem:[%s1 + $0x6] sm:$0x3]
      %v338 = vld [vmem:[%s1 + $0x8] sm:$0x3]
      %v339 = vld [vmem:[%s1 + $0xa] sm:$0x3]
      %v340 = vld [vmem:[%s1 + $0xc] sm:$0x3]
      %v341 = vld [vmem:[%s1 + $0xe] sm:$0x3]
      %v342 = vld [vmem:[%s1 + $0x10] sm:$0x3]
      %v343 = vld [vmem:[%s2] sm:$0xff]
      %345 = vset.pattern.permute.xlu0 0
      %346 = vperm.xlu0 %345, %v343
      %v347 = vpop.permute.xlu0 %346
      %v349 = vld [vmem:[%s3] sm:$0xff]
      %351 = vset.pattern.permute.xlu0 0
      %352 = vperm.xlu0 %351, %v349
      %v353 = vpop.permute.xlu0 %352
      %v355 = vld [vmem:[%s4] sm:$0xf]
      %357 = vset.pattern.permute.xlu0 0
      %358 = vperm.xlu0 %357, %v355
      %v359 = vpop.permute.xlu0 %358
      %v361 = vld [vmem:[%s5] sm:$0xf]
      %363 = vset.pattern.permute.xlu0 0
      %364 = vperm.xlu0 %363, %v361
      %v365 = vpop.permute.xlu0 %364
      %v367 = vld [vmem:[%s246] sm:$0xff]
      %v368 = vld [vmem:[%s246 + $0x8] sm:$0xff]
      %v369 = vld [vmem:[%s246 + $0x10] sm:$0xff]
      %v370 = vld [vmem:[%s246 + $0x18] sm:$0xff]
      %v371 = vld [vmem:[%s246 + $0x20] sm:$0xff]
      %v372 = vld [vmem:[%s246 + $0x28] sm:$0xff]
      %v373 = vld [vmem:[%s246 + $0x30] sm:$0xff]
      %v374 = vld [vmem:[%s246 + $0x38] sm:$0xff]
      %v375 = vmul.f32 %v367, %v347
      %v376 = vmul.f32 %v368, %v347
      %v377 = vmul.f32 %v369, %v347
      %v378 = vmul.f32 %v370, %v347
      %v379 = vmul.f32 %v371, %v347
      %v380 = vmul.f32 %v372, %v347
      %v381 = vmul.f32 %v373, %v347
      %v382 = vmul.f32 %v374, %v347
      %v383 = vadd.f32 %v375, %v353
      %v384 = vadd.f32 %v376, %v353
      %v385 = vadd.f32 %v377, %v353
      %v386 = vadd.f32 %v378, %v353
      %v387 = vadd.f32 %v379, %v353
      %v388 = vadd.f32 %v380, %v353
      %v389 = vadd.f32 %v381, %v353
      %v390 = vadd.f32 %v382, %v353
      %v391 = vmax.f32 %v383, 0.0
      %v392 = vmax.f32 %v384, 0.0
      %v393 = vmax.f32 %v385, 0.0
      %v394 = vmax.f32 %v386, 0.0
      %v395 = vmax.f32 %v387, 0.0
      %v396 = vmax.f32 %v388, 0.0
      %v397 = vmax.f32 %v389, 0.0
      %v398 = vmax.f32 %v390, 0.0
      %v399 = vsel %vm294, 1, 0
      %v400 = vsel %vm295, 1, 0
      %v401 = vsel %vm296, 1, 0
      %v402 = vsel %vm297, 1, 0
      %v403 = vsel %vm298, 1, 0
      %v404 = vsel %vm299, 1, 0
      %v405 = vsel %vm300, 1, 0
      %v406 = vsel %vm301, 1, 0
      %vm407 = vcmp.eq.s32.totalorder %v399, 1
      %vm408 = vcmp.eq.s32.totalorder %v400, 1
      %vm409 = vcmp.eq.s32.totalorder %v401, 1
      %vm410 = vcmp.eq.s32.totalorder %v402, 1
      %vm411 = vcmp.eq.s32.totalorder %v403, 1
      %vm412 = vcmp.eq.s32.totalorder %v404, 1
      %vm413 = vcmp.eq.s32.totalorder %v405, 1
      %vm414 = vcmp.eq.s32.totalorder %v406, 1
      %424 = vrot.lane.b32.xlu0 0.0, 33
      %v425 = vpop.permute.xlu0 %424
      %426 = vrot.lane.b32.xlu0 %v391, 33
      %v427 = vpop.permute.xlu0 %426
      %428 = vrot.lane.b32.xlu0 %v392, 33
      %v429 = vpop.permute.xlu0 %428
      %430 = vrot.lane.b32.xlu0 %v393, 33
      %v431 = vpop.permute.xlu0 %430
      %432 = vrot.lane.b32.xlu0 %v394, 33
      %v433 = vpop.permute.xlu0 %432
      %434 = vrot.lane.b32.xlu0 %v395, 33
      %v435 = vpop.permute.xlu0 %434
      %436 = vrot.lane.b32.xlu0 %v396, 33
      %v437 = vpop.permute.xlu0 %436
      %438 = vrot.lane.b32.xlu0 %v397, 33
      %v439 = vpop.permute.xlu0 %438
      %440 = vrot.lane.b32.xlu0 %v398, 33
      %v441 = vpop.permute.xlu0 %440
      %vm442 = vcmask 269312
      %v443 = vsel %vm442, %v425, %v427
      %v444 = vsel %vm442, %v427, %v429
      %v445 = vsel %vm442, %v429, %v431
      %v446 = vsel %vm442, %v431, %v433
      %v447 = vsel %vm442, %v433, %v435
      %v448 = vsel %vm442, %v435, %v437
      %v449 = vsel %vm442, %v437, %v439
      %v450 = vsel %vm442, %v439, %v441
      %v459 = vsel %vm407, %v443, 0.0
      %v460 = vsel %vm408, %v444, 0.0
      %v461 = vsel %vm409, %v445, 0.0
      %v462 = vsel %vm410, %v446, 0.0
      %v463 = vsel %vm411, %v447, 0.0
      %v464 = vsel %vm412, %v448, 0.0
      %v465 = vsel %vm413, %v449, 0.0
      %v466 = vsel %vm414, %v450, 0.0
      %v467 = vpack.c.bf16 %v459, %v459
      %v468 = vpack.c.bf16 %v460, %v460
      %v469 = vpack.c.bf16 %v461, %v461
      %v470 = vpack.c.bf16 %v462, %v462
      %v471 = vpack.c.bf16 %v463, %v463
      %v472 = vpack.c.bf16 %v464, %v464
      %v473 = vpack.c.bf16 %v465, %v465
      %v474 = vpack.c.bf16 %v466, %v466
      %v475 = vpack.c.bf16 0.0, 0.0
      %v476 = vpack.c.bf16 %v391, %v391
      %v477 = vpack.c.bf16 %v392, %v392
      %v478 = vpack.c.bf16 %v393, %v393
      %v479 = vpack.c.bf16 %v394, %v394
      %v480 = vpack.c.bf16 %v395, %v395
      %v481 = vpack.c.bf16 %v396, %v396
      %v482 = vpack.c.bf16 %v397, %v397
      %v483 = vpack.c.bf16 %v398, %v398
      %493 = vrot.lane.b32.xlu0 %v475, 32
      %v494 = vpop.permute.xlu0 %493
      %495 = vrot.lane.b32.xlu0 %v476, 32
      %v496 = vpop.permute.xlu0 %495
      %497 = vrot.lane.b32.xlu0 %v477, 32
      %v498 = vpop.permute.xlu0 %497
      %499 = vrot.lane.b32.xlu0 %v478, 32
      %v500 = vpop.permute.xlu0 %499
      %501 = vrot.lane.b32.xlu0 %v479, 32
      %v502 = vpop.permute.xlu0 %501
      %503 = vrot.lane.b32.xlu0 %v480, 32
      %v504 = vpop.permute.xlu0 %503
      %505 = vrot.lane.b32.xlu0 %v481, 32
      %v506 = vpop.permute.xlu0 %505
      %507 = vrot.lane.b32.xlu0 %v482, 32
      %v508 = vpop.permute.xlu0 %507
      %509 = vrot.lane.b32.xlu0 %v483, 32
      %v510 = vpop.permute.xlu0 %509
      %vm511 = vcmask 261120
      %v512 = vsel %vm511, %v494, %v496
      %v513 = vsel %vm511, %v496, %v498
      %v514 = vsel %vm511, %v498, %v500
      %v515 = vsel %vm511, %v500, %v502
      %v516 = vsel %vm511, %v502, %v504
      %v517 = vsel %vm511, %v504, %v506
      %v518 = vsel %vm511, %v506, %v508
      %v519 = vsel %vm511, %v508, %v510
      %vm520 = vcmask 64512
      %v522 = vsel %vm520, %v335, 0
      %vm524 = vcmask 1043456
      %v526 = vsel %vm524, %v512, 0
      %v529 = vsel %vm524, %v513, 0
      %v532 = vsel %vm524, %v514, 0
      %v535 = vsel %vm524, %v515, 0
      %v538 = vsel %vm524, %v516, 0
      %v541 = vsel %vm524, %v517, 0
      %v544 = vsel %vm524, %v518, 0
      %v547 = vsel %vm524, %v519, 0
      %549 = vmatpush.bf16.msra.mxu0 0
      %550 = vmatpush.bf16.msra.mxu0 0
      %551 = vmatpush.bf16.msra.mxu0 0
      %552 = vmatpush.bf16.msra.mxu0 0
      %553 = vmatpush.bf16.msra.mxu0 0
      %554 = vmatpush.bf16.msra.mxu0 0
      %555 = vmatpush.bf16.msra.mxu0 0
      %556 = vmatpush.bf16.msra.mxu0 %v526
      %557 = vmatmul.bf16.gmra.mxu0 %v522
      %v558 = vpop.f32.mrf.mxu0
      %v559 = vadd.f32 0.0, %v558
      %v560 = vpop.f32.mrf.mxu0
      %561 = vdwg.mxu0
      %562 = vmatpush.bf16.msra.mxu0 0
      %563 = vmatpush.bf16.msra.mxu0 0
      %564 = vmatpush.bf16.msra.mxu0 0
      %565 = vmatpush.bf16.msra.mxu0 0
      %566 = vmatpush.bf16.msra.mxu0 0
      %567 = vmatpush.bf16.msra.mxu0 0
      %568 = vmatpush.bf16.msra.mxu0 0
      %569 = vmatpush.bf16.msra.mxu0 %v529
      %570 = vmatmul.bf16.gmra.mxu0 %v522
      %v571 = vpop.f32.mrf.mxu0
      %v572 = vadd.f32 0.0, %v571
      %v573 = vpop.f32.mrf.mxu0
      %574 = vdwg.mxu0
      %575 = vmatpush.bf16.msra.mxu0 0
      %576 = vmatpush.bf16.msra.mxu0 0
      %577 = vmatpush.bf16.msra.mxu0 0
      %578 = vmatpush.bf16.msra.mxu0 0
      %579 = vmatpush.bf16.msra.mxu0 0
      %580 = vmatpush.bf16.msra.mxu0 0
      %581 = vmatpush.bf16.msra.mxu0 0
      %582 = vmatpush.bf16.msra.mxu0 %v532
      %583 = vmatmul.bf16.gmra.mxu0 %v522
      %v584 = vpop.f32.mrf.mxu0
      %v585 = vadd.f32 0.0, %v584
      %v586 = vpop.f32.mrf.mxu0
      %587 = vdwg.mxu0
      %588 = vmatpush.bf16.msra.mxu0 0
      %589 = vmatpush.bf16.msra.mxu0 0
      %590 = vmatpush.bf16.msra.mxu0 0
      %591 = vmatpush.bf16.msra.mxu0 0
      %592 = vmatpush.bf16.msra.mxu0 0
      %593 = vmatpush.bf16.msra.mxu0 0
      %594 = vmatpush.bf16.msra.mxu0 0
      %595 = vmatpush.bf16.msra.mxu0 %v535
      %596 = vmatmul.bf16.gmra.mxu0 %v522
      %v597 = vpop.f32.mrf.mxu0
      %v598 = vadd.f32 0.0, %v597
      %v599 = vpop.f32.mrf.mxu0
      %600 = vdwg.mxu0
      %601 = vmatpush.bf16.msra.mxu0 0
      %602 = vmatpush.bf16.msra.mxu0 0
      %603 = vmatpush.bf16.msra.mxu0 0
      %604 = vmatpush.bf16.msra.mxu0 0
      %605 = vmatpush.bf16.msra.mxu0 0
      %606 = vmatpush.bf16.msra.mxu0 0
      %607 = vmatpush.bf16.msra.mxu0 0
      %608 = vmatpush.bf16.msra.mxu0 %v538
      %609 = vmatmul.bf16.gmra.mxu0 %v522
      %v610 = vpop.f32.mrf.mxu0
      %v611 = vadd.f32 0.0, %v610
      %v612 = vpop.f32.mrf.mxu0
      %613 = vdwg.mxu0
      %614 = vmatpush.bf16.msra.mxu0 0
      %615 = vmatpush.bf16.msra.mxu0 0
      %616 = vmatpush.bf16.msra.mxu0 0
      %617 = vmatpush.bf16.msra.mxu0 0
      %618 = vmatpush.bf16.msra.mxu0 0
      %619 = vmatpush.bf16.msra.mxu0 0
      %620 = vmatpush.bf16.msra.mxu0 0
      %621 = vmatpush.bf16.msra.mxu0 %v541
      %622 = vmatmul.bf16.gmra.mxu0 %v522
      %v623 = vpop.f32.mrf.mxu0
      %v624 = vadd.f32 0.0, %v623
      %v625 = vpop.f32.mrf.mxu0
      %626 = vdwg.mxu0
      %627 = vmatpush.bf16.msra.mxu0 0
      %628 = vmatpush.bf16.msra.mxu0 0
      %629 = vmatpush.bf16.msra.mxu0 0
      %630 = vmatpush.bf16.msra.mxu0 0
      %631 = vmatpush.bf16.msra.mxu0 0
      %632 = vmatpush.bf16.msra.mxu0 0
      %633 = vmatpush.bf16.msra.mxu0 0
      %634 = vmatpush.bf16.msra.mxu0 %v544
      %635 = vmatmul.bf16.gmra.mxu0 %v522
      %v636 = vpop.f32.mrf.mxu0
      %v637 = vadd.f32 0.0, %v636
      %v638 = vpop.f32.mrf.mxu0
      %639 = vdwg.mxu0
      %640 = vmatpush.bf16.msra.mxu0 0
      %641 = vmatpush.bf16.msra.mxu0 0
      %642 = vmatpush.bf16.msra.mxu0 0
      %643 = vmatpush.bf16.msra.mxu0 0
      %644 = vmatpush.bf16.msra.mxu0 0
      %645 = vmatpush.bf16.msra.mxu0 0
      %646 = vmatpush.bf16.msra.mxu0 0
      %647 = vmatpush.bf16.msra.mxu0 %v547
      %648 = vmatmul.bf16.gmra.mxu0 %v522
      %v649 = vpop.f32.mrf.mxu0
      %v650 = vadd.f32 0.0, %v649
      %v651 = vpop.f32.mrf.mxu0
      %652 = vdwg.mxu0
      %v654 = vsel %vm520, %v334, 0
      %v657 = vsel %vm524, %v467, 0
      %v660 = vsel %vm524, %v468, 0
      %v663 = vsel %vm524, %v469, 0
      %v666 = vsel %vm524, %v470, 0
      %v669 = vsel %vm524, %v471, 0
      %v672 = vsel %vm524, %v472, 0
      %v675 = vsel %vm524, %v473, 0
      %v678 = vsel %vm524, %v474, 0
      %680 = vmatpush.bf16.msra.mxu0 0
      %681 = vmatpush.bf16.msra.mxu0 0
      %682 = vmatpush.bf16.msra.mxu0 0
      %683 = vmatpush.bf16.msra.mxu0 0
      %684 = vmatpush.bf16.msra.mxu0 0
      %685 = vmatpush.bf16.msra.mxu0 0
      %686 = vmatpush.bf16.msra.mxu0 0
      %687 = vmatpush.bf16.msra.mxu0 %v657
      %688 = vmatmul.bf16.gmra.mxu0 %v654
      %v689 = vpop.f32.mrf.mxu0
      %v690 = vadd.f32 %v559, %v689
      %v691 = vpop.f32.mrf.mxu0
      %692 = vdwg.mxu0
      %693 = vmatpush.bf16.msra.mxu0 0
      %694 = vmatpush.bf16.msra.mxu0 0
      %695 = vmatpush.bf16.msra.mxu0 0
      %696 = vmatpush.bf16.msra.mxu0 0
      %697 = vmatpush.bf16.msra.mxu0 0
      %698 = vmatpush.bf16.msra.mxu0 0
      %699 = vmatpush.bf16.msra.mxu0 0
      %700 = vmatpush.bf16.msra.mxu0 %v660
      %701 = vmatmul.bf16.gmra.mxu0 %v654
      %v702 = vpop.f32.mrf.mxu0
      %v703 = vadd.f32 %v572, %v702
      %v704 = vpop.f32.mrf.mxu0
      %705 = vdwg.mxu0
      %706 = vmatpush.bf16.msra.mxu0 0
      %707 = vmatpush.bf16.msra.mxu0 0
      %708 = vmatpush.bf16.msra.mxu0 0
      %709 = vmatpush.bf16.msra.mxu0 0
      %710 = vmatpush.bf16.msra.mxu0 0
      %711 = vmatpush.bf16.msra.mxu0 0
      %712 = vmatpush.bf16.msra.mxu0 0
      %713 = vmatpush.bf16.msra.mxu0 %v663
      %714 = vmatmul.bf16.gmra.mxu0 %v654
      %v715 = vpop.f32.mrf.mxu0
      %v716 = vadd.f32 %v585, %v715
      %v717 = vpop.f32.mrf.mxu0
      %718 = vdwg.mxu0
      %719 = vmatpush.bf16.msra.mxu0 0
      %720 = vmatpush.bf16.msra.mxu0 0
      %721 = vmatpush.bf16.msra.mxu0 0
      %722 = vmatpush.bf16.msra.mxu0 0
      %723 = vmatpush.bf16.msra.mxu0 0
      %724 = vmatpush.bf16.msra.mxu0 0
      %725 = vmatpush.bf16.msra.mxu0 0
      %726 = vmatpush.bf16.msra.mxu0 %v666
      %727 = vmatmul.bf16.gmra.mxu0 %v654
      %v728 = vpop.f32.mrf.mxu0
      %v729 = vadd.f32 %v598, %v728
      %v730 = vpop.f32.mrf.mxu0
      %731 = vdwg.mxu0
      %732 = vmatpush.bf16.msra.mxu0 0
      %733 = vmatpush.bf16.msra.mxu0 0
      %734 = vmatpush.bf16.msra.mxu0 0
      %735 = vmatpush.bf16.msra.mxu0 0
      %736 = vmatpush.bf16.msra.mxu0 0
      %737 = vmatpush.bf16.msra.mxu0 0
      %738 = vmatpush.bf16.msra.mxu0 0
      %739 = vmatpush.bf16.msra.mxu0 %v669
      %740 = vmatmul.bf16.gmra.mxu0 %v654
      %v741 = vpop.f32.mrf.mxu0
      %v742 = vadd.f32 %v611, %v741
      %v743 = vpop.f32.mrf.mxu0
      %744 = vdwg.mxu0
      %745 = vmatpush.bf16.msra.mxu0 0
      %746 = vmatpush.bf16.msra.mxu0 0
      %747 = vmatpush.bf16.msra.mxu0 0
      %748 = vmatpush.bf16.msra.mxu0 0
      %749 = vmatpush.bf16.msra.mxu0 0
      %750 = vmatpush.bf16.msra.mxu0 0
      %751 = vmatpush.bf16.msra.mxu0 0
      %752 = vmatpush.bf16.msra.mxu0 %v672
      %753 = vmatmul.bf16.gmra.mxu0 %v654
      %v754 = vpop.f32.mrf.mxu0
      %v755 = vadd.f32 %v624, %v754
      %v756 = vpop.f32.mrf.mxu0
      %757 = vdwg.mxu0
      %758 = vmatpush.bf16.msra.mxu0 0
      %759 = vmatpush.bf16.msra.mxu0 0
      %760 = vmatpush.bf16.msra.mxu0 0
      %761 = vmatpush.bf16.msra.mxu0 0
      %762 = vmatpush.bf16.msra.mxu0 0
      %763 = vmatpush.bf16.msra.mxu0 0
      %764 = vmatpush.bf16.msra.mxu0 0
      %765 = vmatpush.bf16.msra.mxu0 %v675
      %766 = vmatmul.bf16.gmra.mxu0 %v654
      %v767 = vpop.f32.mrf.mxu0
      %v768 = vadd.f32 %v637, %v767
      %v769 = vpop.f32.mrf.mxu0
      %770 = vdwg.mxu0
      %771 = vmatpush.bf16.msra.mxu0 0
      %772 = vmatpush.bf16.msra.mxu0 0
      %773 = vmatpush.bf16.msra.mxu0 0
      %774 = vmatpush.bf16.msra.mxu0 0
      %775 = vmatpush.bf16.msra.mxu0 0
      %776 = vmatpush.bf16.msra.mxu0 0
      %777 = vmatpush.bf16.msra.mxu0 0
      %778 = vmatpush.bf16.msra.mxu0 %v678
      %779 = vmatmul.bf16.gmra.mxu0 %v654
      %v780 = vpop.f32.mrf.mxu0
      %v781 = vadd.f32 %v650, %v780
      %v782 = vpop.f32.mrf.mxu0
      %783 = vdwg.mxu0
      %v784 = vsel %vm326, 1, 0
      %v785 = vsel %vm327, 1, 0
      %v786 = vsel %vm328, 1, 0
      %v787 = vsel %vm329, 1, 0
      %v788 = vsel %vm330, 1, 0
      %v789 = vsel %vm331, 1, 0
      %v790 = vsel %vm332, 1, 0
      %v791 = vsel %vm333, 1, 0
      %vm792 = vcmp.eq.s32.totalorder %v784, 1
      %vm793 = vcmp.eq.s32.totalorder %v785, 1
      %vm794 = vcmp.eq.s32.totalorder %v786, 1
      %vm795 = vcmp.eq.s32.totalorder %v787, 1
      %vm796 = vcmp.eq.s32.totalorder %v788, 1
      %vm797 = vcmp.eq.s32.totalorder %v789, 1
      %vm798 = vcmp.eq.s32.totalorder %v790, 1
      %vm799 = vcmp.eq.s32.totalorder %v791, 1
      %800 = vrot.lane.b32.xlu0 0.0, 31
      %v801 = vpop.permute.xlu0 %800
      %802 = vrot.lane.b32.xlu0 %v391, 31
      %v803 = vpop.permute.xlu0 %802
      %804 = vrot.lane.b32.xlu0 %v392, 31
      %v805 = vpop.permute.xlu0 %804
      %806 = vrot.lane.b32.xlu0 %v393, 31
      %v807 = vpop.permute.xlu0 %806
      %808 = vrot.lane.b32.xlu0 %v394, 31
      %v809 = vpop.permute.xlu0 %808
      %810 = vrot.lane.b32.xlu0 %v395, 31
      %v811 = vpop.permute.xlu0 %810
      %812 = vrot.lane.b32.xlu0 %v396, 31
      %v813 = vpop.permute.xlu0 %812
      %814 = vrot.lane.b32.xlu0 %v397, 31
      %v815 = vpop.permute.xlu0 %814
      %816 = vrot.lane.b32.xlu0 %v398, 31
      %v817 = vpop.permute.xlu0 %816
      %vm818 = vcmask 252928
      %v819 = vsel %vm818, %v801, %v803
      %v820 = vsel %vm818, %v803, %v805
      %v821 = vsel %vm818, %v805, %v807
      %v822 = vsel %vm818, %v807, %v809
      %v823 = vsel %vm818, %v809, %v811
      %v824 = vsel %vm818, %v811, %v813
      %v825 = vsel %vm818, %v813, %v815
      %v826 = vsel %vm818, %v815, %v817
      %v835 = vsel %vm792, %v819, 0.0
      %v836 = vsel %vm793, %v820, 0.0
      %v837 = vsel %vm794, %v821, 0.0
      %v838 = vsel %vm795, %v822, 0.0
      %v839 = vsel %vm796, %v823, 0.0
      %v840 = vsel %vm797, %v824, 0.0
      %v841 = vsel %vm798, %v825, 0.0
      %v842 = vsel %vm799, %v826, 0.0
      %v843 = vpack.c.bf16 %v835, %v835
      %v844 = vpack.c.bf16 %v836, %v836
      %v845 = vpack.c.bf16 %v837, %v837
      %v846 = vpack.c.bf16 %v838, %v838
      %v847 = vpack.c.bf16 %v839, %v839
      %v848 = vpack.c.bf16 %v840, %v840
      %v849 = vpack.c.bf16 %v841, %v841
      %v850 = vpack.c.bf16 %v842, %v842
      %v852 = vsel %vm520, %v336, 0
      %v855 = vsel %vm524, %v843, 0
      %v858 = vsel %vm524, %v844, 0
      %v861 = vsel %vm524, %v845, 0
      %v864 = vsel %vm524, %v846, 0
      %v867 = vsel %vm524, %v847, 0
      %v870 = vsel %vm524, %v848, 0
      %v873 = vsel %vm524, %v849, 0
      %v876 = vsel %vm524, %v850, 0
      %878 = vmatpush.bf16.msra.mxu0 0
      %879 = vmatpush.bf16.msra.mxu0 0
      %880 = vmatpush.bf16.msra.mxu0 0
      %881 = vmatpush.bf16.msra.mxu0 0
      %882 = vmatpush.bf16.msra.mxu0 0
      %883 = vmatpush.bf16.msra.mxu0 0
      %884 = vmatpush.bf16.msra.mxu0 0
      %885 = vmatpush.bf16.msra.mxu0 %v855
      %886 = vmatmul.bf16.gmra.mxu0 %v852
      %v887 = vpop.f32.mrf.mxu0
      %v888 = vadd.f32 0.0, %v887
      %v889 = vpop.f32.mrf.mxu0
      %890 = vdwg.mxu0
      %891 = vmatpush.bf16.msra.mxu0 0
      %892 = vmatpush.bf16.msra.mxu0 0
      %893 = vmatpush.bf16.msra.mxu0 0
      %894 = vmatpush.bf16.msra.mxu0 0
      %895 = vmatpush.bf16.msra.mxu0 0
      %896 = vmatpush.bf16.msra.mxu0 0
      %897 = vmatpush.bf16.msra.mxu0 0
      %898 = vmatpush.bf16.msra.mxu0 %v858
      %899 = vmatmul.bf16.gmra.mxu0 %v852
      %v900 = vpop.f32.mrf.mxu0
      %v901 = vadd.f32 0.0, %v900
      %v902 = vpop.f32.mrf.mxu0
      %903 = vdwg.mxu0
      %904 = vmatpush.bf16.msra.mxu0 0
      %905 = vmatpush.bf16.msra.mxu0 0
      %906 = vmatpush.bf16.msra.mxu0 0
      %907 = vmatpush.bf16.msra.mxu0 0
      %908 = vmatpush.bf16.msra.mxu0 0
      %909 = vmatpush.bf16.msra.mxu0 0
      %910 = vmatpush.bf16.msra.mxu0 0
      %911 = vmatpush.bf16.msra.mxu0 %v861
      %912 = vmatmul.bf16.gmra.mxu0 %v852
      %v913 = vpop.f32.mrf.mxu0
      %v914 = vadd.f32 0.0, %v913
      %v915 = vpop.f32.mrf.mxu0
      %916 = vdwg.mxu0
      %917 = vmatpush.bf16.msra.mxu0 0
      %918 = vmatpush.bf16.msra.mxu0 0
      %919 = vmatpush.bf16.msra.mxu0 0
      %920 = vmatpush.bf16.msra.mxu0 0
      %921 = vmatpush.bf16.msra.mxu0 0
      %922 = vmatpush.bf16.msra.mxu0 0
      %923 = vmatpush.bf16.msra.mxu0 0
      %924 = vmatpush.bf16.msra.mxu0 %v864
      %925 = vmatmul.bf16.gmra.mxu0 %v852
      %v926 = vpop.f32.mrf.mxu0
      %v927 = vadd.f32 0.0, %v926
      %v928 = vpop.f32.mrf.mxu0
      %929 = vdwg.mxu0
      %930 = vmatpush.bf16.msra.mxu0 0
      %931 = vmatpush.bf16.msra.mxu0 0
      %932 = vmatpush.bf16.msra.mxu0 0
      %933 = vmatpush.bf16.msra.mxu0 0
      %934 = vmatpush.bf16.msra.mxu0 0
      %935 = vmatpush.bf16.msra.mxu0 0
      %936 = vmatpush.bf16.msra.mxu0 0
      %937 = vmatpush.bf16.msra.mxu0 %v867
      %938 = vmatmul.bf16.gmra.mxu0 %v852
      %v939 = vpop.f32.mrf.mxu0
      %v940 = vadd.f32 0.0, %v939
      %v941 = vpop.f32.mrf.mxu0
      %942 = vdwg.mxu0
      %943 = vmatpush.bf16.msra.mxu0 0
      %944 = vmatpush.bf16.msra.mxu0 0
      %945 = vmatpush.bf16.msra.mxu0 0
      %946 = vmatpush.bf16.msra.mxu0 0
      %947 = vmatpush.bf16.msra.mxu0 0
      %948 = vmatpush.bf16.msra.mxu0 0
      %949 = vmatpush.bf16.msra.mxu0 0
      %950 = vmatpush.bf16.msra.mxu0 %v870
      %951 = vmatmul.bf16.gmra.mxu0 %v852
      %v952 = vpop.f32.mrf.mxu0
      %v953 = vadd.f32 0.0, %v952
      %v954 = vpop.f32.mrf.mxu0
      %955 = vdwg.mxu0
      %956 = vmatpush.bf16.msra.mxu0 0
      %957 = vmatpush.bf16.msra.mxu0 0
      %958 = vmatpush.bf16.msra.mxu0 0
      %959 = vmatpush.bf16.msra.mxu0 0
      %960 = vmatpush.bf16.msra.mxu0 0
      %961 = vmatpush.bf16.msra.mxu0 0
      %962 = vmatpush.bf16.msra.mxu0 0
      %963 = vmatpush.bf16.msra.mxu0 %v873
      %964 = vmatmul.bf16.gmra.mxu0 %v852
      %v965 = vpop.f32.mrf.mxu0
      %v966 = vadd.f32 0.0, %v965
      %v967 = vpop.f32.mrf.mxu0
      %968 = vdwg.mxu0
      %969 = vmatpush.bf16.msra.mxu0 0
      %970 = vmatpush.bf16.msra.mxu0 0
      %971 = vmatpush.bf16.msra.mxu0 0
      %972 = vmatpush.bf16.msra.mxu0 0
      %973 = vmatpush.bf16.msra.mxu0 0
      %974 = vmatpush.bf16.msra.mxu0 0
      %975 = vmatpush.bf16.msra.mxu0 0
      %976 = vmatpush.bf16.msra.mxu0 %v876
      %977 = vmatmul.bf16.gmra.mxu0 %v852
      %v978 = vpop.f32.mrf.mxu0
      %v979 = vadd.f32 0.0, %v978
      %v980 = vpop.f32.mrf.mxu0
      %981 = vdwg.mxu0
      %v982 = vadd.f32 %v690, %v888
      %v983 = vadd.f32 %v703, %v901
      %v984 = vadd.f32 %v716, %v914
      %v985 = vadd.f32 %v729, %v927
      %v986 = vadd.f32 %v742, %v940
      %v987 = vadd.f32 %v755, %v953
      %v988 = vadd.f32 %v768, %v966
      %v989 = vadd.f32 %v781, %v979
      %990 = vrot.lane.b32.xlu0 0.0, 1
      %v991 = vpop.permute.xlu0 %990
      %992 = vrot.lane.b32.xlu0 %v391, 1
      %v993 = vpop.permute.xlu0 %992
      %994 = vrot.lane.b32.xlu0 %v392, 1
      %v995 = vpop.permute.xlu0 %994
      %996 = vrot.lane.b32.xlu0 %v393, 1
      %v997 = vpop.permute.xlu0 %996
      %998 = vrot.lane.b32.xlu0 %v394, 1
      %v999 = vpop.permute.xlu0 %998
      %1000 = vrot.lane.b32.xlu0 %v395, 1
      %v1001 = vpop.permute.xlu0 %1000
      %1002 = vrot.lane.b32.xlu0 %v396, 1
      %v1003 = vpop.permute.xlu0 %1002
      %1004 = vrot.lane.b32.xlu0 %v397, 1
      %v1005 = vpop.permute.xlu0 %1004
      %1006 = vrot.lane.b32.xlu0 %v398, 1
      %v1007 = vpop.permute.xlu0 %1006
      %vm1008 = vcmask 7168
      %v1009 = vsel %vm1008, %v991, %v993
      %v1010 = vsel %vm1008, %v993, %v995
      %v1011 = vsel %vm1008, %v995, %v997
      %v1012 = vsel %vm1008, %v997, %v999
      %v1013 = vsel %vm1008, %v999, %v1001
      %v1014 = vsel %vm1008, %v1001, %v1003
      %v1015 = vsel %vm1008, %v1003, %v1005
      %v1016 = vsel %vm1008, %v1005, %v1007
      %v1025 = vsel %vm407, %v1009, 0.0
      %v1026 = vsel %vm408, %v1010, 0.0
      %v1027 = vsel %vm409, %v1011, 0.0
      %v1028 = vsel %vm410, %v1012, 0.0
      %v1029 = vsel %vm411, %v1013, 0.0
      %v1030 = vsel %vm412, %v1014, 0.0
      %v1031 = vsel %vm413, %v1015, 0.0
      %v1032 = vsel %vm414, %v1016, 0.0
      %v1033 = vpack.c.bf16 %v1025, %v1025
      %v1034 = vpack.c.bf16 %v1026, %v1026
      %v1035 = vpack.c.bf16 %v1027, %v1027
      %v1036 = vpack.c.bf16 %v1028, %v1028
      %v1037 = vpack.c.bf16 %v1029, %v1029
      %v1038 = vpack.c.bf16 %v1030, %v1030
      %v1039 = vpack.c.bf16 %v1031, %v1031
      %v1040 = vpack.c.bf16 %v1032, %v1032
      %v1042 = vsel %vm520, %v337, 0
      %v1045 = vsel %vm524, %v1033, 0
      %v1048 = vsel %vm524, %v1034, 0
      %v1051 = vsel %vm524, %v1035, 0
      %v1054 = vsel %vm524, %v1036, 0
      %v1057 = vsel %vm524, %v1037, 0
      %v1060 = vsel %vm524, %v1038, 0
      %v1063 = vsel %vm524, %v1039, 0
      %v1066 = vsel %vm524, %v1040, 0
      %1068 = vmatpush.bf16.msra.mxu0 0
      %1069 = vmatpush.bf16.msra.mxu0 0
      %1070 = vmatpush.bf16.msra.mxu0 0
      %1071 = vmatpush.bf16.msra.mxu0 0
      %1072 = vmatpush.bf16.msra.mxu0 0
      %1073 = vmatpush.bf16.msra.mxu0 0
      %1074 = vmatpush.bf16.msra.mxu0 0
      %1075 = vmatpush.bf16.msra.mxu0 %v1045
      %1076 = vmatmul.bf16.gmra.mxu0 %v1042
      %v1077 = vpop.f32.mrf.mxu0
      %v1078 = vadd.f32 0.0, %v1077
      %v1079 = vpop.f32.mrf.mxu0
      %1080 = vdwg.mxu0
      %1081 = vmatpush.bf16.msra.mxu0 0
      %1082 = vmatpush.bf16.msra.mxu0 0
      %1083 = vmatpush.bf16.msra.mxu0 0
      %1084 = vmatpush.bf16.msra.mxu0 0
      %1085 = vmatpush.bf16.msra.mxu0 0
      %1086 = vmatpush.bf16.msra.mxu0 0
      %1087 = vmatpush.bf16.msra.mxu0 0
      %1088 = vmatpush.bf16.msra.mxu0 %v1048
      %1089 = vmatmul.bf16.gmra.mxu0 %v1042
      %v1090 = vpop.f32.mrf.mxu0
      %v1091 = vadd.f32 0.0, %v1090
      %v1092 = vpop.f32.mrf.mxu0
      %1093 = vdwg.mxu0
      %1094 = vmatpush.bf16.msra.mxu0 0
      %1095 = vmatpush.bf16.msra.mxu0 0
      %1096 = vmatpush.bf16.msra.mxu0 0
      %1097 = vmatpush.bf16.msra.mxu0 0
      %1098 = vmatpush.bf16.msra.mxu0 0
      %1099 = vmatpush.bf16.msra.mxu0 0
      %1100 = vmatpush.bf16.msra.mxu0 0
      %1101 = vmatpush.bf16.msra.mxu0 %v1051
      %1102 = vmatmul.bf16.gmra.mxu0 %v1042
      %v1103 = vpop.f32.mrf.mxu0
      %v1104 = vadd.f32 0.0, %v1103
      %v1105 = vpop.f32.mrf.mxu0
      %1106 = vdwg.mxu0
      %1107 = vmatpush.bf16.msra.mxu0 0
      %1108 = vmatpush.bf16.msra.mxu0 0
      %1109 = vmatpush.bf16.msra.mxu0 0
      %1110 = vmatpush.bf16.msra.mxu0 0
      %1111 = vmatpush.bf16.msra.mxu0 0
      %1112 = vmatpush.bf16.msra.mxu0 0
      %1113 = vmatpush.bf16.msra.mxu0 0
      %1114 = vmatpush.bf16.msra.mxu0 %v1054
      %1115 = vmatmul.bf16.gmra.mxu0 %v1042
      %v1116 = vpop.f32.mrf.mxu0
      %v1117 = vadd.f32 0.0, %v1116
      %v1118 = vpop.f32.mrf.mxu0
      %1119 = vdwg.mxu0
      %1120 = vmatpush.bf16.msra.mxu0 0
      %1121 = vmatpush.bf16.msra.mxu0 0
      %1122 = vmatpush.bf16.msra.mxu0 0
      %1123 = vmatpush.bf16.msra.mxu0 0
      %1124 = vmatpush.bf16.msra.mxu0 0
      %1125 = vmatpush.bf16.msra.mxu0 0
      %1126 = vmatpush.bf16.msra.mxu0 0
      %1127 = vmatpush.bf16.msra.mxu0 %v1057
      %1128 = vmatmul.bf16.gmra.mxu0 %v1042
      %v1129 = vpop.f32.mrf.mxu0
      %v1130 = vadd.f32 0.0, %v1129
      %v1131 = vpop.f32.mrf.mxu0
      %1132 = vdwg.mxu0
      %1133 = vmatpush.bf16.msra.mxu0 0
      %1134 = vmatpush.bf16.msra.mxu0 0
      %1135 = vmatpush.bf16.msra.mxu0 0
      %1136 = vmatpush.bf16.msra.mxu0 0
      %1137 = vmatpush.bf16.msra.mxu0 0
      %1138 = vmatpush.bf16.msra.mxu0 0
      %1139 = vmatpush.bf16.msra.mxu0 0
      %1140 = vmatpush.bf16.msra.mxu0 %v1060
      %1141 = vmatmul.bf16.gmra.mxu0 %v1042
      %v1142 = vpop.f32.mrf.mxu0
      %v1143 = vadd.f32 0.0, %v1142
      %v1144 = vpop.f32.mrf.mxu0
      %1145 = vdwg.mxu0
      %1146 = vmatpush.bf16.msra.mxu0 0
      %1147 = vmatpush.bf16.msra.mxu0 0
      %1148 = vmatpush.bf16.msra.mxu0 0
      %1149 = vmatpush.bf16.msra.mxu0 0
      %1150 = vmatpush.bf16.msra.mxu0 0
      %1151 = vmatpush.bf16.msra.mxu0 0
      %1152 = vmatpush.bf16.msra.mxu0 0
      %1153 = vmatpush.bf16.msra.mxu0 %v1063
      %1154 = vmatmul.bf16.gmra.mxu0 %v1042
      %v1155 = vpop.f32.mrf.mxu0
      %v1156 = vadd.f32 0.0, %v1155
      %v1157 = vpop.f32.mrf.mxu0
      %1158 = vdwg.mxu0
      %1159 = vmatpush.bf16.msra.mxu0 0
      %1160 = vmatpush.bf16.msra.mxu0 0
      %1161 = vmatpush.bf16.msra.mxu0 0
      %1162 = vmatpush.bf16.msra.mxu0 0
      %1163 = vmatpush.bf16.msra.mxu0 0
      %1164 = vmatpush.bf16.msra.mxu0 0
      %1165 = vmatpush.bf16.msra.mxu0 0
      %1166 = vmatpush.bf16.msra.mxu0 %v1066
      %1167 = vmatmul.bf16.gmra.mxu0 %v1042
      %v1168 = vpop.f32.mrf.mxu0
      %v1169 = vadd.f32 0.0, %v1168
      %v1170 = vpop.f32.mrf.mxu0
      %1171 = vdwg.mxu0
      %v1172 = vadd.f32 %v982, %v1078
      %v1173 = vadd.f32 %v983, %v1091
      %v1174 = vadd.f32 %v984, %v1104
      %v1175 = vadd.f32 %v985, %v1117
      %v1176 = vadd.f32 %v986, %v1130
      %v1177 = vadd.f32 %v987, %v1143
      %v1178 = vadd.f32 %v988, %v1156
      %v1179 = vadd.f32 %v989, %v1169
      %v1181 = vsel %vm520, %v338, 0
      %v1184 = vsel %vm524, %v476, 0
      %v1187 = vsel %vm524, %v477, 0
      %v1190 = vsel %vm524, %v478, 0
      %v1193 = vsel %vm524, %v479, 0
      %v1196 = vsel %vm524, %v480, 0
      %v1199 = vsel %vm524, %v481, 0
      %v1202 = vsel %vm524, %v482, 0
      %v1205 = vsel %vm524, %v483, 0
      %1207 = vmatpush.bf16.msra.mxu0 0
      %1208 = vmatpush.bf16.msra.mxu0 0
      %1209 = vmatpush.bf16.msra.mxu0 0
      %1210 = vmatpush.bf16.msra.mxu0 0
      %1211 = vmatpush.bf16.msra.mxu0 0
      %1212 = vmatpush.bf16.msra.mxu0 0
      %1213 = vmatpush.bf16.msra.mxu0 0
      %1214 = vmatpush.bf16.msra.mxu0 %v1184
      %1215 = vmatmul.bf16.gmra.mxu0 %v1181
      %v1216 = vpop.f32.mrf.mxu0
      %v1217 = vadd.f32 0.0, %v1216
      %v1218 = vpop.f32.mrf.mxu0
      %1219 = vdwg.mxu0
      %1220 = vmatpush.bf16.msra.mxu0 0
      %1221 = vmatpush.bf16.msra.mxu0 0
      %1222 = vmatpush.bf16.msra.mxu0 0
      %1223 = vmatpush.bf16.msra.mxu0 0
      %1224 = vmatpush.bf16.msra.mxu0 0
      %1225 = vmatpush.bf16.msra.mxu0 0
      %1226 = vmatpush.bf16.msra.mxu0 0
      %1227 = vmatpush.bf16.msra.mxu0 %v1187
      %1228 = vmatmul.bf16.gmra.mxu0 %v1181
      %v1229 = vpop.f32.mrf.mxu0
      %v1230 = vadd.f32 0.0, %v1229
      %v1231 = vpop.f32.mrf.mxu0
      %1232 = vdwg.mxu0
      %1233 = vmatpush.bf16.msra.mxu0 0
      %1234 = vmatpush.bf16.msra.mxu0 0
      %1235 = vmatpush.bf16.msra.mxu0 0
      %1236 = vmatpush.bf16.msra.mxu0 0
      %1237 = vmatpush.bf16.msra.mxu0 0
      %1238 = vmatpush.bf16.msra.mxu0 0
      %1239 = vmatpush.bf16.msra.mxu0 0
      %1240 = vmatpush.bf16.msra.mxu0 %v1190
      %1241 = vmatmul.bf16.gmra.mxu0 %v1181
      %v1242 = vpop.f32.mrf.mxu0
      %v1243 = vadd.f32 0.0, %v1242
      %v1244 = vpop.f32.mrf.mxu0
      %1245 = vdwg.mxu0
      %1246 = vmatpush.bf16.msra.mxu0 0
      %1247 = vmatpush.bf16.msra.mxu0 0
      %1248 = vmatpush.bf16.msra.mxu0 0
      %1249 = vmatpush.bf16.msra.mxu0 0
      %1250 = vmatpush.bf16.msra.mxu0 0
      %1251 = vmatpush.bf16.msra.mxu0 0
      %1252 = vmatpush.bf16.msra.mxu0 0
      %1253 = vmatpush.bf16.msra.mxu0 %v1193
      %1254 = vmatmul.bf16.gmra.mxu0 %v1181
      %v1255 = vpop.f32.mrf.mxu0
      %v1256 = vadd.f32 0.0, %v1255
      %v1257 = vpop.f32.mrf.mxu0
      %1258 = vdwg.mxu0
      %1259 = vmatpush.bf16.msra.mxu0 0
      %1260 = vmatpush.bf16.msra.mxu0 0
      %1261 = vmatpush.bf16.msra.mxu0 0
      %1262 = vmatpush.bf16.msra.mxu0 0
      %1263 = vmatpush.bf16.msra.mxu0 0
      %1264 = vmatpush.bf16.msra.mxu0 0
      %1265 = vmatpush.bf16.msra.mxu0 0
      %1266 = vmatpush.bf16.msra.mxu0 %v1196
      %1267 = vmatmul.bf16.gmra.mxu0 %v1181
      %v1268 = vpop.f32.mrf.mxu0
      %v1269 = vadd.f32 0.0, %v1268
      %v1270 = vpop.f32.mrf.mxu0
      %1271 = vdwg.mxu0
      %1272 = vmatpush.bf16.msra.mxu0 0
      %1273 = vmatpush.bf16.msra.mxu0 0
      %1274 = vmatpush.bf16.msra.mxu0 0
      %1275 = vmatpush.bf16.msra.mxu0 0
      %1276 = vmatpush.bf16.msra.mxu0 0
      %1277 = vmatpush.bf16.msra.mxu0 0
      %1278 = vmatpush.bf16.msra.mxu0 0
      %1279 = vmatpush.bf16.msra.mxu0 %v1199
      %1280 = vmatmul.bf16.gmra.mxu0 %v1181
      %v1281 = vpop.f32.mrf.mxu0
      %v1282 = vadd.f32 0.0, %v1281
      %v1283 = vpop.f32.mrf.mxu0
      %1284 = vdwg.mxu0
      %1285 = vmatpush.bf16.msra.mxu0 0
      %1286 = vmatpush.bf16.msra.mxu0 0
      %1287 = vmatpush.bf16.msra.mxu0 0
      %1288 = vmatpush.bf16.msra.mxu0 0
      %1289 = vmatpush.bf16.msra.mxu0 0
      %1290 = vmatpush.bf16.msra.mxu0 0
      %1291 = vmatpush.bf16.msra.mxu0 0
      %1292 = vmatpush.bf16.msra.mxu0 %v1202
      %1293 = vmatmul.bf16.gmra.mxu0 %v1181
      %v1294 = vpop.f32.mrf.mxu0
      %v1295 = vadd.f32 0.0, %v1294
      %v1296 = vpop.f32.mrf.mxu0
      %1297 = vdwg.mxu0
      %1298 = vmatpush.bf16.msra.mxu0 0
      %1299 = vmatpush.bf16.msra.mxu0 0
      %1300 = vmatpush.bf16.msra.mxu0 0
      %1301 = vmatpush.bf16.msra.mxu0 0
      %1302 = vmatpush.bf16.msra.mxu0 0
      %1303 = vmatpush.bf16.msra.mxu0 0
      %1304 = vmatpush.bf16.msra.mxu0 0
      %1305 = vmatpush.bf16.msra.mxu0 %v1205
      %1306 = vmatmul.bf16.gmra.mxu0 %v1181
      %v1307 = vpop.f32.mrf.mxu0
      %v1308 = vadd.f32 0.0, %v1307
      %v1309 = vpop.f32.mrf.mxu0
      %1310 = vdwg.mxu0
      %v1311 = vadd.f32 %v1172, %v1217
      %v1312 = vadd.f32 %v1173, %v1230
      %v1313 = vadd.f32 %v1174, %v1243
      %v1314 = vadd.f32 %v1175, %v1256
      %v1315 = vadd.f32 %v1176, %v1269
      %v1316 = vadd.f32 %v1177, %v1282
      %v1317 = vadd.f32 %v1178, %v1295
      %v1318 = vadd.f32 %v1179, %v1308
      %1319 = vrot.lane.b32.xlu0 %v391, 127
      %v1320 = vpop.permute.xlu0 %1319
      %1321 = vrot.lane.b32.xlu0 %v392, 127
      %v1322 = vpop.permute.xlu0 %1321
      %1323 = vrot.lane.b32.xlu0 %v393, 127
      %v1324 = vpop.permute.xlu0 %1323
      %1325 = vrot.lane.b32.xlu0 %v394, 127
      %v1326 = vpop.permute.xlu0 %1325
      %1327 = vrot.lane.b32.xlu0 %v395, 127
      %v1328 = vpop.permute.xlu0 %1327
      %1329 = vrot.lane.b32.xlu0 %v396, 127
      %v1330 = vpop.permute.xlu0 %1329
      %1331 = vrot.lane.b32.xlu0 %v397, 127
      %v1332 = vpop.permute.xlu0 %1331
      %1333 = vrot.lane.b32.xlu0 %v398, 127
      %v1334 = vpop.permute.xlu0 %1333
      %1335 = vrot.lane.b32.xlu0 0.0, 127
      %v1336 = vpop.permute.xlu0 %1335
      %vm1337 = vcmask 1039360
      %v1338 = vsel %vm1337, %v1320, %v1322
      %v1339 = vsel %vm1337, %v1322, %v1324
      %v1340 = vsel %vm1337, %v1324, %v1326
      %v1341 = vsel %vm1337, %v1326, %v1328
      %v1342 = vsel %vm1337, %v1328, %v1330
      %v1343 = vsel %vm1337, %v1330, %v1332
      %v1344 = vsel %vm1337, %v1332, %v1334
      %v1345 = vsel %vm1337, %v1334, %v1336
      %v1354 = vsel %vm792, %v1338, 0.0
      %v1355 = vsel %vm793, %v1339, 0.0
      %v1356 = vsel %vm794, %v1340, 0.0
      %v1357 = vsel %vm795, %v1341, 0.0
      %v1358 = vsel %vm796, %v1342, 0.0
      %v1359 = vsel %vm797, %v1343, 0.0
      %v1360 = vsel %vm798, %v1344, 0.0
      %v1361 = vsel %vm799, %v1345, 0.0
      %v1362 = vpack.c.bf16 %v1354, %v1354
      %v1363 = vpack.c.bf16 %v1355, %v1355
      %v1364 = vpack.c.bf16 %v1356, %v1356
      %v1365 = vpack.c.bf16 %v1357, %v1357
      %v1366 = vpack.c.bf16 %v1358, %v1358
      %v1367 = vpack.c.bf16 %v1359, %v1359
      %v1368 = vpack.c.bf16 %v1360, %v1360
      %v1369 = vpack.c.bf16 %v1361, %v1361
      %v1371 = vsel %vm520, %v339, 0
      %v1374 = vsel %vm524, %v1362, 0
      %v1377 = vsel %vm524, %v1363, 0
      %v1380 = vsel %vm524, %v1364, 0
      %v1383 = vsel %vm524, %v1365, 0
      %v1386 = vsel %vm524, %v1366, 0
      %v1389 = vsel %vm524, %v1367, 0
      %v1392 = vsel %vm524, %v1368, 0
      %v1395 = vsel %vm524, %v1369, 0
      %1397 = vmatpush.bf16.msra.mxu0 0
      %1398 = vmatpush.bf16.msra.mxu0 0
      %1399 = vmatpush.bf16.msra.mxu0 0
      %1400 = vmatpush.bf16.msra.mxu0 0
      %1401 = vmatpush.bf16.msra.mxu0 0
      %1402 = vmatpush.bf16.msra.mxu0 0
      %1403 = vmatpush.bf16.msra.mxu0 0
      %1404 = vmatpush.bf16.msra.mxu0 %v1374
      %1405 = vmatmul.bf16.gmra.mxu0 %v1371
      %v1406 = vpop.f32.mrf.mxu0
      %v1407 = vadd.f32 0.0, %v1406
      %v1408 = vpop.f32.mrf.mxu0
      %1409 = vdwg.mxu0
      %1410 = vmatpush.bf16.msra.mxu0 0
      %1411 = vmatpush.bf16.msra.mxu0 0
      %1412 = vmatpush.bf16.msra.mxu0 0
      %1413 = vmatpush.bf16.msra.mxu0 0
      %1414 = vmatpush.bf16.msra.mxu0 0
      %1415 = vmatpush.bf16.msra.mxu0 0
      %1416 = vmatpush.bf16.msra.mxu0 0
      %1417 = vmatpush.bf16.msra.mxu0 %v1377
      %1418 = vmatmul.bf16.gmra.mxu0 %v1371
      %v1419 = vpop.f32.mrf.mxu0
      %v1420 = vadd.f32 0.0, %v1419
      %v1421 = vpop.f32.mrf.mxu0
      %1422 = vdwg.mxu0
      %1423 = vmatpush.bf16.msra.mxu0 0
      %1424 = vmatpush.bf16.msra.mxu0 0
      %1425 = vmatpush.bf16.msra.mxu0 0
      %1426 = vmatpush.bf16.msra.mxu0 0
      %1427 = vmatpush.bf16.msra.mxu0 0
      %1428 = vmatpush.bf16.msra.mxu0 0
      %1429 = vmatpush.bf16.msra.mxu0 0
      %1430 = vmatpush.bf16.msra.mxu0 %v1380
      %1431 = vmatmul.bf16.gmra.mxu0 %v1371
      %v1432 = vpop.f32.mrf.mxu0
      %v1433 = vadd.f32 0.0, %v1432
      %v1434 = vpop.f32.mrf.mxu0
      %1435 = vdwg.mxu0
      %1436 = vmatpush.bf16.msra.mxu0 0
      %1437 = vmatpush.bf16.msra.mxu0 0
      %1438 = vmatpush.bf16.msra.mxu0 0
      %1439 = vmatpush.bf16.msra.mxu0 0
      %1440 = vmatpush.bf16.msra.mxu0 0
      %1441 = vmatpush.bf16.msra.mxu0 0
      %1442 = vmatpush.bf16.msra.mxu0 0
      %1443 = vmatpush.bf16.msra.mxu0 %v1383
      %1444 = vmatmul.bf16.gmra.mxu0 %v1371
      %v1445 = vpop.f32.mrf.mxu0
      %v1446 = vadd.f32 0.0, %v1445
      %v1447 = vpop.f32.mrf.mxu0
      %1448 = vdwg.mxu0
      %1449 = vmatpush.bf16.msra.mxu0 0
      %1450 = vmatpush.bf16.msra.mxu0 0
      %1451 = vmatpush.bf16.msra.mxu0 0
      %1452 = vmatpush.bf16.msra.mxu0 0
      %1453 = vmatpush.bf16.msra.mxu0 0
      %1454 = vmatpush.bf16.msra.mxu0 0
      %1455 = vmatpush.bf16.msra.mxu0 0
      %1456 = vmatpush.bf16.msra.mxu0 %v1386
      %1457 = vmatmul.bf16.gmra.mxu0 %v1371
      %v1458 = vpop.f32.mrf.mxu0
      %v1459 = vadd.f32 0.0, %v1458
      %v1460 = vpop.f32.mrf.mxu0
      %1461 = vdwg.mxu0
      %1462 = vmatpush.bf16.msra.mxu0 0
      %1463 = vmatpush.bf16.msra.mxu0 0
      %1464 = vmatpush.bf16.msra.mxu0 0
      %1465 = vmatpush.bf16.msra.mxu0 0
      %1466 = vmatpush.bf16.msra.mxu0 0
      %1467 = vmatpush.bf16.msra.mxu0 0
      %1468 = vmatpush.bf16.msra.mxu0 0
      %1469 = vmatpush.bf16.msra.mxu0 %v1389
      %1470 = vmatmul.bf16.gmra.mxu0 %v1371
      %v1471 = vpop.f32.mrf.mxu0
      %v1472 = vadd.f32 0.0, %v1471
      %v1473 = vpop.f32.mrf.mxu0
      %1474 = vdwg.mxu0
      %1475 = vmatpush.bf16.msra.mxu0 0
      %1476 = vmatpush.bf16.msra.mxu0 0
      %1477 = vmatpush.bf16.msra.mxu0 0
      %1478 = vmatpush.bf16.msra.mxu0 0
      %1479 = vmatpush.bf16.msra.mxu0 0
      %1480 = vmatpush.bf16.msra.mxu0 0
      %1481 = vmatpush.bf16.msra.mxu0 0
      %1482 = vmatpush.bf16.msra.mxu0 %v1392
      %1483 = vmatmul.bf16.gmra.mxu0 %v1371
      %v1484 = vpop.f32.mrf.mxu0
      %v1485 = vadd.f32 0.0, %v1484
      %v1486 = vpop.f32.mrf.mxu0
      %1487 = vdwg.mxu0
      %1488 = vmatpush.bf16.msra.mxu0 0
      %1489 = vmatpush.bf16.msra.mxu0 0
      %1490 = vmatpush.bf16.msra.mxu0 0
      %1491 = vmatpush.bf16.msra.mxu0 0
      %1492 = vmatpush.bf16.msra.mxu0 0
      %1493 = vmatpush.bf16.msra.mxu0 0
      %1494 = vmatpush.bf16.msra.mxu0 0
      %1495 = vmatpush.bf16.msra.mxu0 %v1395
      %1496 = vmatmul.bf16.gmra.mxu0 %v1371
      %v1497 = vpop.f32.mrf.mxu0
      %v1498 = vadd.f32 0.0, %v1497
      %v1499 = vpop.f32.mrf.mxu0
      %1500 = vdwg.mxu0
      %v1501 = vadd.f32 %v1311, %v1407
      %v1502 = vadd.f32 %v1312, %v1420
      %v1503 = vadd.f32 %v1313, %v1433
      %v1504 = vadd.f32 %v1314, %v1446
      %v1505 = vadd.f32 %v1315, %v1459
      %v1506 = vadd.f32 %v1316, %v1472
      %v1507 = vadd.f32 %v1317, %v1485
      %v1508 = vadd.f32 %v1318, %v1498
      %1509 = vrot.lane.b32.xlu0 %v391, 97
      %v1510 = vpop.permute.xlu0 %1509
      %1511 = vrot.lane.b32.xlu0 %v392, 97
      %v1512 = vpop.permute.xlu0 %1511
      %1513 = vrot.lane.b32.xlu0 %v393, 97
      %v1514 = vpop.permute.xlu0 %1513
      %1515 = vrot.lane.b32.xlu0 %v394, 97
      %v1516 = vpop.permute.xlu0 %1515
      %1517 = vrot.lane.b32.xlu0 %v395, 97
      %v1518 = vpop.permute.xlu0 %1517
      %1519 = vrot.lane.b32.xlu0 %v396, 97
      %v1520 = vpop.permute.xlu0 %1519
      %1521 = vrot.lane.b32.xlu0 %v397, 97
      %v1522 = vpop.permute.xlu0 %1521
      %1523 = vrot.lane.b32.xlu0 %v398, 97
      %v1524 = vpop.permute.xlu0 %1523
      %1525 = vrot.lane.b32.xlu0 0.0, 97
      %v1526 = vpop.permute.xlu0 %1525
      %vm1527 = vcmask 793600
      %v1528 = vsel %vm1527, %v1510, %v1512
      %v1529 = vsel %vm1527, %v1512, %v1514
      %v1530 = vsel %vm1527, %v1514, %v1516
      %v1531 = vsel %vm1527, %v1516, %v1518
      %v1532 = vsel %vm1527, %v1518, %v1520
      %v1533 = vsel %vm1527, %v1520, %v1522
      %v1534 = vsel %vm1527, %v1522, %v1524
      %v1535 = vsel %vm1527, %v1524, %v1526
      %v1544 = vsel %vm407, %v1528, 0.0
      %v1545 = vsel %vm408, %v1529, 0.0
      %v1546 = vsel %vm409, %v1530, 0.0
      %v1547 = vsel %vm410, %v1531, 0.0
      %v1548 = vsel %vm411, %v1532, 0.0
      %v1549 = vsel %vm412, %v1533, 0.0
      %v1550 = vsel %vm413, %v1534, 0.0
      %v1551 = vsel %vm414, %v1535, 0.0
      %v1552 = vpack.c.bf16 %v1544, %v1544
      %v1553 = vpack.c.bf16 %v1545, %v1545
      %v1554 = vpack.c.bf16 %v1546, %v1546
      %v1555 = vpack.c.bf16 %v1547, %v1547
      %v1556 = vpack.c.bf16 %v1548, %v1548
      %v1557 = vpack.c.bf16 %v1549, %v1549
      %v1558 = vpack.c.bf16 %v1550, %v1550
      %v1559 = vpack.c.bf16 %v1551, %v1551
      %v1561 = vsel %vm520, %v340, 0
      %v1564 = vsel %vm524, %v1552, 0
      %v1567 = vsel %vm524, %v1553, 0
      %v1570 = vsel %vm524, %v1554, 0
      %v1573 = vsel %vm524, %v1555, 0
      %v1576 = vsel %vm524, %v1556, 0
      %v1579 = vsel %vm524, %v1557, 0
      %v1582 = vsel %vm524, %v1558, 0
      %v1585 = vsel %vm524, %v1559, 0
      %1587 = vmatpush.bf16.msra.mxu0 0
      %1588 = vmatpush.bf16.msra.mxu0 0
      %1589 = vmatpush.bf16.msra.mxu0 0
      %1590 = vmatpush.bf16.msra.mxu0 0
      %1591 = vmatpush.bf16.msra.mxu0 0
      %1592 = vmatpush.bf16.msra.mxu0 0
      %1593 = vmatpush.bf16.msra.mxu0 0
      %1594 = vmatpush.bf16.msra.mxu0 %v1564
      %1595 = vmatmul.bf16.gmra.mxu0 %v1561
      %v1596 = vpop.f32.mrf.mxu0
      %v1597 = vadd.f32 0.0, %v1596
      %v1598 = vpop.f32.mrf.mxu0
      %1599 = vdwg.mxu0
      %1600 = vmatpush.bf16.msra.mxu0 0
      %1601 = vmatpush.bf16.msra.mxu0 0
      %1602 = vmatpush.bf16.msra.mxu0 0
      %1603 = vmatpush.bf16.msra.mxu0 0
      %1604 = vmatpush.bf16.msra.mxu0 0
      %1605 = vmatpush.bf16.msra.mxu0 0
      %1606 = vmatpush.bf16.msra.mxu0 0
      %1607 = vmatpush.bf16.msra.mxu0 %v1567
      %1608 = vmatmul.bf16.gmra.mxu0 %v1561
      %v1609 = vpop.f32.mrf.mxu0
      %v1610 = vadd.f32 0.0, %v1609
      %v1611 = vpop.f32.mrf.mxu0
      %1612 = vdwg.mxu0
      %1613 = vmatpush.bf16.msra.mxu0 0
      %1614 = vmatpush.bf16.msra.mxu0 0
      %1615 = vmatpush.bf16.msra.mxu0 0
      %1616 = vmatpush.bf16.msra.mxu0 0
      %1617 = vmatpush.bf16.msra.mxu0 0
      %1618 = vmatpush.bf16.msra.mxu0 0
      %1619 = vmatpush.bf16.msra.mxu0 0
      %1620 = vmatpush.bf16.msra.mxu0 %v1570
      %1621 = vmatmul.bf16.gmra.mxu0 %v1561
      %v1622 = vpop.f32.mrf.mxu0
      %v1623 = vadd.f32 0.0, %v1622
      %v1624 = vpop.f32.mrf.mxu0
      %1625 = vdwg.mxu0
      %1626 = vmatpush.bf16.msra.mxu0 0
      %1627 = vmatpush.bf16.msra.mxu0 0
      %1628 = vmatpush.bf16.msra.mxu0 0
      %1629 = vmatpush.bf16.msra.mxu0 0
      %1630 = vmatpush.bf16.msra.mxu0 0
      %1631 = vmatpush.bf16.msra.mxu0 0
      %1632 = vmatpush.bf16.msra.mxu0 0
      %1633 = vmatpush.bf16.msra.mxu0 %v1573
      %1634 = vmatmul.bf16.gmra.mxu0 %v1561
      %v1635 = vpop.f32.mrf.mxu0
      %v1636 = vadd.f32 0.0, %v1635
      %v1637 = vpop.f32.mrf.mxu0
      %1638 = vdwg.mxu0
      %1639 = vmatpush.bf16.msra.mxu0 0
      %1640 = vmatpush.bf16.msra.mxu0 0
      %1641 = vmatpush.bf16.msra.mxu0 0
      %1642 = vmatpush.bf16.msra.mxu0 0
      %1643 = vmatpush.bf16.msra.mxu0 0
      %1644 = vmatpush.bf16.msra.mxu0 0
      %1645 = vmatpush.bf16.msra.mxu0 0
      %1646 = vmatpush.bf16.msra.mxu0 %v1576
      %1647 = vmatmul.bf16.gmra.mxu0 %v1561
      %v1648 = vpop.f32.mrf.mxu0
      %v1649 = vadd.f32 0.0, %v1648
      %v1650 = vpop.f32.mrf.mxu0
      %1651 = vdwg.mxu0
      %1652 = vmatpush.bf16.msra.mxu0 0
      %1653 = vmatpush.bf16.msra.mxu0 0
      %1654 = vmatpush.bf16.msra.mxu0 0
      %1655 = vmatpush.bf16.msra.mxu0 0
      %1656 = vmatpush.bf16.msra.mxu0 0
      %1657 = vmatpush.bf16.msra.mxu0 0
      %1658 = vmatpush.bf16.msra.mxu0 0
      %1659 = vmatpush.bf16.msra.mxu0 %v1579
      %1660 = vmatmul.bf16.gmra.mxu0 %v1561
      %v1661 = vpop.f32.mrf.mxu0
      %v1662 = vadd.f32 0.0, %v1661
      %v1663 = vpop.f32.mrf.mxu0
      %1664 = vdwg.mxu0
      %1665 = vmatpush.bf16.msra.mxu0 0
      %1666 = vmatpush.bf16.msra.mxu0 0
      %1667 = vmatpush.bf16.msra.mxu0 0
      %1668 = vmatpush.bf16.msra.mxu0 0
      %1669 = vmatpush.bf16.msra.mxu0 0
      %1670 = vmatpush.bf16.msra.mxu0 0
      %1671 = vmatpush.bf16.msra.mxu0 0
      %1672 = vmatpush.bf16.msra.mxu0 %v1582
      %1673 = vmatmul.bf16.gmra.mxu0 %v1561
      %v1674 = vpop.f32.mrf.mxu0
      %v1675 = vadd.f32 0.0, %v1674
      %v1676 = vpop.f32.mrf.mxu0
      %1677 = vdwg.mxu0
      %1678 = vmatpush.bf16.msra.mxu0 0
      %1679 = vmatpush.bf16.msra.mxu0 0
      %1680 = vmatpush.bf16.msra.mxu0 0
      %1681 = vmatpush.bf16.msra.mxu0 0
      %1682 = vmatpush.bf16.msra.mxu0 0
      %1683 = vmatpush.bf16.msra.mxu0 0
      %1684 = vmatpush.bf16.msra.mxu0 0
      %1685 = vmatpush.bf16.msra.mxu0 %v1585
      %1686 = vmatmul.bf16.gmra.mxu0 %v1561
      %v1687 = vpop.f32.mrf.mxu0
      %v1688 = vadd.f32 0.0, %v1687
      %v1689 = vpop.f32.mrf.mxu0
      %1690 = vdwg.mxu0
      %v1691 = vadd.f32 %v1501, %v1597
      %v1692 = vadd.f32 %v1502, %v1610
      %v1693 = vadd.f32 %v1503, %v1623
      %v1694 = vadd.f32 %v1504, %v1636
      %v1695 = vadd.f32 %v1505, %v1649
      %v1696 = vadd.f32 %v1506, %v1662
      %v1697 = vadd.f32 %v1507, %v1675
      %v1698 = vadd.f32 %v1508, %v1688
      %1699 = vrot.lane.b32.xlu0 %v476, 96
      %v1700 = vpop.permute.xlu0 %1699
      %1701 = vrot.lane.b32.xlu0 %v477, 96
      %v1702 = vpop.permute.xlu0 %1701
      %1703 = vrot.lane.b32.xlu0 %v478, 96
      %v1704 = vpop.permute.xlu0 %1703
      %1705 = vrot.lane.b32.xlu0 %v479, 96
      %v1706 = vpop.permute.xlu0 %1705
      %1707 = vrot.lane.b32.xlu0 %v480, 96
      %v1708 = vpop.permute.xlu0 %1707
      %1709 = vrot.lane.b32.xlu0 %v481, 96
      %v1710 = vpop.permute.xlu0 %1709
      %1711 = vrot.lane.b32.xlu0 %v482, 96
      %v1712 = vpop.permute.xlu0 %1711
      %1713 = vrot.lane.b32.xlu0 %v483, 96
      %v1714 = vpop.permute.xlu0 %1713
      %1715 = vrot.lane.b32.xlu0 %v475, 96
      %v1716 = vpop.permute.xlu0 %1715
      %vm1717 = vcmask 785408
      %v1718 = vsel %vm1717, %v1700, %v1702
      %v1719 = vsel %vm1717, %v1702, %v1704
      %v1720 = vsel %vm1717, %v1704, %v1706
      %v1721 = vsel %vm1717, %v1706, %v1708
      %v1722 = vsel %vm1717, %v1708, %v1710
      %v1723 = vsel %vm1717, %v1710, %v1712
      %v1724 = vsel %vm1717, %v1712, %v1714
      %v1725 = vsel %vm1717, %v1714, %v1716
      %v1727 = vsel %vm520, %v341, 0
      %v1730 = vsel %vm524, %v1718, 0
      %v1733 = vsel %vm524, %v1719, 0
      %v1736 = vsel %vm524, %v1720, 0
      %v1739 = vsel %vm524, %v1721, 0
      %v1742 = vsel %vm524, %v1722, 0
      %v1745 = vsel %vm524, %v1723, 0
      %v1748 = vsel %vm524, %v1724, 0
      %v1751 = vsel %vm524, %v1725, 0
      %1753 = vmatpush.bf16.msra.mxu0 0
      %1754 = vmatpush.bf16.msra.mxu0 0
      %1755 = vmatpush.bf16.msra.mxu0 0
      %1756 = vmatpush.bf16.msra.mxu0 0
      %1757 = vmatpush.bf16.msra.mxu0 0
      %1758 = vmatpush.bf16.msra.mxu0 0
      %1759 = vmatpush.bf16.msra.mxu0 0
      %1760 = vmatpush.bf16.msra.mxu0 %v1730
      %1761 = vmatmul.bf16.gmra.mxu0 %v1727
      %v1762 = vpop.f32.mrf.mxu0
      %v1763 = vadd.f32 0.0, %v1762
      %v1764 = vpop.f32.mrf.mxu0
      %1765 = vdwg.mxu0
      %1766 = vmatpush.bf16.msra.mxu0 0
      %1767 = vmatpush.bf16.msra.mxu0 0
      %1768 = vmatpush.bf16.msra.mxu0 0
      %1769 = vmatpush.bf16.msra.mxu0 0
      %1770 = vmatpush.bf16.msra.mxu0 0
      %1771 = vmatpush.bf16.msra.mxu0 0
      %1772 = vmatpush.bf16.msra.mxu0 0
      %1773 = vmatpush.bf16.msra.mxu0 %v1733
      %1774 = vmatmul.bf16.gmra.mxu0 %v1727
      %v1775 = vpop.f32.mrf.mxu0
      %v1776 = vadd.f32 0.0, %v1775
      %v1777 = vpop.f32.mrf.mxu0
      %1778 = vdwg.mxu0
      %1779 = vmatpush.bf16.msra.mxu0 0
      %1780 = vmatpush.bf16.msra.mxu0 0
      %1781 = vmatpush.bf16.msra.mxu0 0
      %1782 = vmatpush.bf16.msra.mxu0 0
      %1783 = vmatpush.bf16.msra.mxu0 0
      %1784 = vmatpush.bf16.msra.mxu0 0
      %1785 = vmatpush.bf16.msra.mxu0 0
      %1786 = vmatpush.bf16.msra.mxu0 %v1736
      %1787 = vmatmul.bf16.gmra.mxu0 %v1727
      %v1788 = vpop.f32.mrf.mxu0
      %v1789 = vadd.f32 0.0, %v1788
      %v1790 = vpop.f32.mrf.mxu0
      %1791 = vdwg.mxu0
      %1792 = vmatpush.bf16.msra.mxu0 0
      %1793 = vmatpush.bf16.msra.mxu0 0
      %1794 = vmatpush.bf16.msra.mxu0 0
      %1795 = vmatpush.bf16.msra.mxu0 0
      %1796 = vmatpush.bf16.msra.mxu0 0
      %1797 = vmatpush.bf16.msra.mxu0 0
      %1798 = vmatpush.bf16.msra.mxu0 0
      %1799 = vmatpush.bf16.msra.mxu0 %v1739
      %1800 = vmatmul.bf16.gmra.mxu0 %v1727
      %v1801 = vpop.f32.mrf.mxu0
      %v1802 = vadd.f32 0.0, %v1801
      %v1803 = vpop.f32.mrf.mxu0
      %1804 = vdwg.mxu0
      %1805 = vmatpush.bf16.msra.mxu0 0
      %1806 = vmatpush.bf16.msra.mxu0 0
      %1807 = vmatpush.bf16.msra.mxu0 0
      %1808 = vmatpush.bf16.msra.mxu0 0
      %1809 = vmatpush.bf16.msra.mxu0 0
      %1810 = vmatpush.bf16.msra.mxu0 0
      %1811 = vmatpush.bf16.msra.mxu0 0
      %1812 = vmatpush.bf16.msra.mxu0 %v1742
      %1813 = vmatmul.bf16.gmra.mxu0 %v1727
      %v1814 = vpop.f32.mrf.mxu0
      %v1815 = vadd.f32 0.0, %v1814
      %v1816 = vpop.f32.mrf.mxu0
      %1817 = vdwg.mxu0
      %1818 = vmatpush.bf16.msra.mxu0 0
      %1819 = vmatpush.bf16.msra.mxu0 0
      %1820 = vmatpush.bf16.msra.mxu0 0
      %1821 = vmatpush.bf16.msra.mxu0 0
      %1822 = vmatpush.bf16.msra.mxu0 0
      %1823 = vmatpush.bf16.msra.mxu0 0
      %1824 = vmatpush.bf16.msra.mxu0 0
      %1825 = vmatpush.bf16.msra.mxu0 %v1745
      %1826 = vmatmul.bf16.gmra.mxu0 %v1727
      %v1827 = vpop.f32.mrf.mxu0
      %v1828 = vadd.f32 0.0, %v1827
      %v1829 = vpop.f32.mrf.mxu0
      %1830 = vdwg.mxu0
      %1831 = vmatpush.bf16.msra.mxu0 0
      %1832 = vmatpush.bf16.msra.mxu0 0
      %1833 = vmatpush.bf16.msra.mxu0 0
      %1834 = vmatpush.bf16.msra.mxu0 0
      %1835 = vmatpush.bf16.msra.mxu0 0
      %1836 = vmatpush.bf16.msra.mxu0 0
      %1837 = vmatpush.bf16.msra.mxu0 0
      %1838 = vmatpush.bf16.msra.mxu0 %v1748
      %1839 = vmatmul.bf16.gmra.mxu0 %v1727
      %v1840 = vpop.f32.mrf.mxu0
      %v1841 = vadd.f32 0.0, %v1840
      %v1842 = vpop.f32.mrf.mxu0
      %1843 = vdwg.mxu0
      %1844 = vmatpush.bf16.msra.mxu0 0
      %1845 = vmatpush.bf16.msra.mxu0 0
      %1846 = vmatpush.bf16.msra.mxu0 0
      %1847 = vmatpush.bf16.msra.mxu0 0
      %1848 = vmatpush.bf16.msra.mxu0 0
      %1849 = vmatpush.bf16.msra.mxu0 0
      %1850 = vmatpush.bf16.msra.mxu0 0
      %1851 = vmatpush.bf16.msra.mxu0 %v1751
      %1852 = vmatmul.bf16.gmra.mxu0 %v1727
      %v1853 = vpop.f32.mrf.mxu0
      %v1854 = vadd.f32 0.0, %v1853
      %v1855 = vpop.f32.mrf.mxu0
      %1856 = vdwg.mxu0
      %v1857 = vadd.f32 %v1691, %v1763
      %v1858 = vadd.f32 %v1692, %v1776
      %v1859 = vadd.f32 %v1693, %v1789
      %v1860 = vadd.f32 %v1694, %v1802
      %v1861 = vadd.f32 %v1695, %v1815
      %v1862 = vadd.f32 %v1696, %v1828
      %v1863 = vadd.f32 %v1697, %v1841
      %v1864 = vadd.f32 %v1698, %v1854
      %1865 = vrot.lane.b32.xlu0 %v391, 95
      %v1866 = vpop.permute.xlu0 %1865
      %1867 = vrot.lane.b32.xlu0 %v392, 95
      %v1868 = vpop.permute.xlu0 %1867
      %1869 = vrot.lane.b32.xlu0 %v393, 95
      %v1870 = vpop.permute.xlu0 %1869
      %1871 = vrot.lane.b32.xlu0 %v394, 95
      %v1872 = vpop.permute.xlu0 %1871
      %1873 = vrot.lane.b32.xlu0 %v395, 95
      %v1874 = vpop.permute.xlu0 %1873
      %1875 = vrot.lane.b32.xlu0 %v396, 95
      %v1876 = vpop.permute.xlu0 %1875
      %1877 = vrot.lane.b32.xlu0 %v397, 95
      %v1878 = vpop.permute.xlu0 %1877
      %1879 = vrot.lane.b32.xlu0 %v398, 95
      %v1880 = vpop.permute.xlu0 %1879
      %1881 = vrot.lane.b32.xlu0 0.0, 95
      %v1882 = vpop.permute.xlu0 %1881
      %vm1883 = vcmask 777216
      %v1884 = vsel %vm1883, %v1866, %v1868
      %v1885 = vsel %vm1883, %v1868, %v1870
      %v1886 = vsel %vm1883, %v1870, %v1872
      %v1887 = vsel %vm1883, %v1872, %v1874
      %v1888 = vsel %vm1883, %v1874, %v1876
      %v1889 = vsel %vm1883, %v1876, %v1878
      %v1890 = vsel %vm1883, %v1878, %v1880
      %v1891 = vsel %vm1883, %v1880, %v1882
      %v1900 = vsel %vm792, %v1884, 0.0
      %v1901 = vsel %vm793, %v1885, 0.0
      %v1902 = vsel %vm794, %v1886, 0.0
      %v1903 = vsel %vm795, %v1887, 0.0
      %v1904 = vsel %vm796, %v1888, 0.0
      %v1905 = vsel %vm797, %v1889, 0.0
      %v1906 = vsel %vm798, %v1890, 0.0
      %v1907 = vsel %vm799, %v1891, 0.0
      %v1908 = vpack.c.bf16 %v1900, %v1900
      %v1909 = vpack.c.bf16 %v1901, %v1901
      %v1910 = vpack.c.bf16 %v1902, %v1902
      %v1911 = vpack.c.bf16 %v1903, %v1903
      %v1912 = vpack.c.bf16 %v1904, %v1904
      %v1913 = vpack.c.bf16 %v1905, %v1905
      %v1914 = vpack.c.bf16 %v1906, %v1906
      %v1915 = vpack.c.bf16 %v1907, %v1907
      %v1917 = vsel %vm520, %v342, 0
      %v1920 = vsel %vm524, %v1908, 0
      %v1923 = vsel %vm524, %v1909, 0
      %v1926 = vsel %vm524, %v1910, 0
      %v1929 = vsel %vm524, %v1911, 0
      %v1932 = vsel %vm524, %v1912, 0
      %v1935 = vsel %vm524, %v1913, 0
      %v1938 = vsel %vm524, %v1914, 0
      %v1941 = vsel %vm524, %v1915, 0
      %1943 = vmatpush.bf16.msra.mxu0 0
      %1944 = vmatpush.bf16.msra.mxu0 0
      %1945 = vmatpush.bf16.msra.mxu0 0
      %1946 = vmatpush.bf16.msra.mxu0 0
      %1947 = vmatpush.bf16.msra.mxu0 0
      %1948 = vmatpush.bf16.msra.mxu0 0
      %1949 = vmatpush.bf16.msra.mxu0 0
      %1950 = vmatpush.bf16.msra.mxu0 %v1920
      %1951 = vmatmul.bf16.gmra.mxu0 %v1917
      %v1952 = vpop.f32.mrf.mxu0
      %v1953 = vadd.f32 0.0, %v1952
      %v1954 = vpop.f32.mrf.mxu0
      %1955 = vdwg.mxu0
      %1956 = vmatpush.bf16.msra.mxu0 0
      %1957 = vmatpush.bf16.msra.mxu0 0
      %1958 = vmatpush.bf16.msra.mxu0 0
      %1959 = vmatpush.bf16.msra.mxu0 0
      %1960 = vmatpush.bf16.msra.mxu0 0
      %1961 = vmatpush.bf16.msra.mxu0 0
      %1962 = vmatpush.bf16.msra.mxu0 0
      %1963 = vmatpush.bf16.msra.mxu0 %v1923
      %1964 = vmatmul.bf16.gmra.mxu0 %v1917
      %v1965 = vpop.f32.mrf.mxu0
      %v1966 = vadd.f32 0.0, %v1965
      %v1967 = vpop.f32.mrf.mxu0
      %1968 = vdwg.mxu0
      %1969 = vmatpush.bf16.msra.mxu0 0
      %1970 = vmatpush.bf16.msra.mxu0 0
      %1971 = vmatpush.bf16.msra.mxu0 0
      %1972 = vmatpush.bf16.msra.mxu0 0
      %1973 = vmatpush.bf16.msra.mxu0 0
      %1974 = vmatpush.bf16.msra.mxu0 0
      %1975 = vmatpush.bf16.msra.mxu0 0
      %1976 = vmatpush.bf16.msra.mxu0 %v1926
      %1977 = vmatmul.bf16.gmra.mxu0 %v1917
      %v1978 = vpop.f32.mrf.mxu0
      %v1979 = vadd.f32 0.0, %v1978
      %v1980 = vpop.f32.mrf.mxu0
      %1981 = vdwg.mxu0
      %1982 = vmatpush.bf16.msra.mxu0 0
      %1983 = vmatpush.bf16.msra.mxu0 0
      %1984 = vmatpush.bf16.msra.mxu0 0
      %1985 = vmatpush.bf16.msra.mxu0 0
      %1986 = vmatpush.bf16.msra.mxu0 0
      %1987 = vmatpush.bf16.msra.mxu0 0
      %1988 = vmatpush.bf16.msra.mxu0 0
      %1989 = vmatpush.bf16.msra.mxu0 %v1929
      %1990 = vmatmul.bf16.gmra.mxu0 %v1917
      %v1991 = vpop.f32.mrf.mxu0
      %v1992 = vadd.f32 0.0, %v1991
      %v1993 = vpop.f32.mrf.mxu0
      %1994 = vdwg.mxu0
      %1995 = vmatpush.bf16.msra.mxu0 0
      %1996 = vmatpush.bf16.msra.mxu0 0
      %1997 = vmatpush.bf16.msra.mxu0 0
      %1998 = vmatpush.bf16.msra.mxu0 0
      %1999 = vmatpush.bf16.msra.mxu0 0
      %2000 = vmatpush.bf16.msra.mxu0 0
      %2001 = vmatpush.bf16.msra.mxu0 0
      %2002 = vmatpush.bf16.msra.mxu0 %v1932
      %2003 = vmatmul.bf16.gmra.mxu0 %v1917
      %v2004 = vpop.f32.mrf.mxu0
      %v2005 = vadd.f32 0.0, %v2004
      %v2006 = vpop.f32.mrf.mxu0
      %2007 = vdwg.mxu0
      %2008 = vmatpush.bf16.msra.mxu0 0
      %2009 = vmatpush.bf16.msra.mxu0 0
      %2010 = vmatpush.bf16.msra.mxu0 0
      %2011 = vmatpush.bf16.msra.mxu0 0
      %2012 = vmatpush.bf16.msra.mxu0 0
      %2013 = vmatpush.bf16.msra.mxu0 0
      %2014 = vmatpush.bf16.msra.mxu0 0
      %2015 = vmatpush.bf16.msra.mxu0 %v1935
      %2016 = vmatmul.bf16.gmra.mxu0 %v1917
      %v2017 = vpop.f32.mrf.mxu0
      %v2018 = vadd.f32 0.0, %v2017
      %v2019 = vpop.f32.mrf.mxu0
      %2020 = vdwg.mxu0
      %2021 = vmatpush.bf16.msra.mxu0 0
      %2022 = vmatpush.bf16.msra.mxu0 0
      %2023 = vmatpush.bf16.msra.mxu0 0
      %2024 = vmatpush.bf16.msra.mxu0 0
      %2025 = vmatpush.bf16.msra.mxu0 0
      %2026 = vmatpush.bf16.msra.mxu0 0
      %2027 = vmatpush.bf16.msra.mxu0 0
      %2028 = vmatpush.bf16.msra.mxu0 %v1938
      %2029 = vmatmul.bf16.gmra.mxu0 %v1917
      %v2030 = vpop.f32.mrf.mxu0
      %v2031 = vadd.f32 0.0, %v2030
      %v2032 = vpop.f32.mrf.mxu0
      %2033 = vdwg.mxu0
      %2034 = vmatpush.bf16.msra.mxu0 0
      %2035 = vmatpush.bf16.msra.mxu0 0
      %2036 = vmatpush.bf16.msra.mxu0 0
      %2037 = vmatpush.bf16.msra.mxu0 0
      %2038 = vmatpush.bf16.msra.mxu0 0
      %2039 = vmatpush.bf16.msra.mxu0 0
      %2040 = vmatpush.bf16.msra.mxu0 0
      %2041 = vmatpush.bf16.msra.mxu0 %v1941
      %2042 = vmatmul.bf16.gmra.mxu0 %v1917
      %v2043 = vpop.f32.mrf.mxu0
      %v2044 = vadd.f32 0.0, %v2043
      %v2045 = vpop.f32.mrf.mxu0
      %2046 = vdwg.mxu0
      %v2047 = vadd.f32 %v1857, %v1953
      %v2048 = vadd.f32 %v1858, %v1966
      %v2049 = vadd.f32 %v1859, %v1979
      %v2050 = vadd.f32 %v1860, %v1992
      %v2051 = vadd.f32 %v1861, %v2005
      %v2052 = vadd.f32 %v1862, %v2018
      %v2053 = vadd.f32 %v1863, %v2031
      %v2054 = vadd.f32 %v1864, %v2044
      %v2055 = vmul.f32 %v2047, %v359
      %v2056 = vmul.f32 %v2048, %v359
      %v2057 = vmul.f32 %v2049, %v359
      %v2058 = vmul.f32 %v2050, %v359
      %v2059 = vmul.f32 %v2051, %v359
      %v2060 = vmul.f32 %v2052, %v359
      %v2061 = vmul.f32 %v2053, %v359
      %v2062 = vmul.f32 %v2054, %v359
      %v2063 = vadd.f32 %v2055, %v365
      %v2064 = vadd.f32 %v2056, %v365
      %v2065 = vadd.f32 %v2057, %v365
      %v2066 = vadd.f32 %v2058, %v365
      %v2067 = vadd.f32 %v2059, %v365
      %v2068 = vadd.f32 %v2060, %v365
      %v2069 = vadd.f32 %v2061, %v365
      %v2070 = vadd.f32 %v2062, %v365
      %v2071 = vmax.f32 %v2063, 0.0
      %v2072 = vmax.f32 %v2064, 0.0
      %v2073 = vmax.f32 %v2065, 0.0
      %v2074 = vmax.f32 %v2066, 0.0
      %v2075 = vmax.f32 %v2067, 0.0
      %v2076 = vmax.f32 %v2068, 0.0
      %v2077 = vmax.f32 %v2069, 0.0
      %v2078 = vmax.f32 %v2070, 0.0
      %v2079 = vpack.c.bf16 %v2072, %v2071
      %v2080 = vpack.c.bf16 %v2074, %v2073
      %v2081 = vpack.c.bf16 %v2076, %v2075
      %v2082 = vpack.c.bf16 %v2078, %v2077
      %v2087 = vrot.slane %v2079, 2
      %v2088 = vrot.slane %v2080, 4
      %v2089 = vrot.slane %v2080, 6
      %v2090 = vrot.slane %v2081, 2
      %v2091 = vrot.slane %v2082, 4
      %v2092 = vrot.slane %v2082, 6
      %vm2093 = vcmask 1041408
      %v2096 = vsel %vm2093, %v2079, %v2087
      %vm2097 = vcmask 1045508
      %v2100 = vsel %vm2097, %v2088, %v2089
      %v2101 = vsel %vm524, %v2096, %v2100
      %v2104 = vsel %vm2093, %v2081, %v2090
      %v2107 = vsel %vm2097, %v2091, %v2092
      %v2108 = vsel %vm524, %v2104, %v2107
      %2111 = vst [vmem:[%s251] sm:$0xff] %v2101
      %2112 = vst [vmem:[%s251 + $0x8] sm:$0xff] %v2108
      %p2113 = scmp.lt.s32.totalorder %s17, 1
      %s2114 = scalar_select %p2113, %s17, 1
      %s2115 = smul.addr %s2114, 8
      %s2116 = smul.addr %s2115, 2
      %s2117 = scalar_lea.vmem %s6, %s2116
      // Predicated region
      $region45: #{base_encoder_forward.6} parent=43 // pred_check
        %p2118 = pneg %p166
      $region46: #{base_encoder_forward.6} parent=43 // pred_check_branch
        %2120 = sbr.rel (%p2118) target = $region48
      $region47: #{base_encoder_forward.6} parent=43 // pred_region
        _
      $region48: #{base_encoder_forward.6} parent=43 // pred_fallthru
        _
    $region44: #{base_encoder_forward.6} parent=5 // pred_fallthru
      _
    %p2121 = scmp.le.s32.totalorder 2, %s12
    // Predicated region
    $region49: #{base_encoder_forward.6} parent=5 // pred_check
      %p2122 = pneg %p2121
    $region50: #{base_encoder_forward.6} parent=5 // pred_check_branch
      %2124 = sbr.rel (%p2122) target = $region52
    $region51: #{base_encoder_forward.6} parent=5 // pred_region
      %s2125 = ssub.s32 %s12, 2
      // Predicated region
      $region53: #{base_encoder_forward.6} parent=51 // pred_check
        %p2126 = pneg %p172
      $region54: #{base_encoder_forward.6} parent=51 // pred_check_branch
        %2128 = sbr.rel (%p2126) target = $region56
      $region55: #{base_encoder_forward.6} parent=51 // pred_region
        %p2129 = scmp.lt.s32.totalorder %s18, 1
        %s2130 = scalar_select %p2129, %s18, 1
        %s2131 = smul.addr %s2130, 8
        %s2132 = smul.addr %s2131, 2
        %s2133 = scalar_lea.vmem %s6, %s2132
      $region56: #{base_encoder_forward.6} parent=51 // pred_fallthru
        _
    $region52: #{base_encoder_forward.6} parent=5 // pred_fallthru
      _
  $region6: #{base_encoder_forward.6} parent=0 // loop_footer
    %s16 = sadd.s32 1, %s12
  $region7: #{base_encoder_forward.6} parent=0 // loop_footer_branch
    %11 = sbr.rel target = $region3
  $region8: #{base_encoder_forward.6} parent=0 // loop_exit
    _

// kernel: base_encoder_forward.4
$region0: #{base_encoder_forward.4}
  #allocation0 [shape = 'u32[]', space=smem, size = 0x4, offset = 0x4, fixed_abs, tag = 'smem constant byte address 0x4 - core index']
  #allocation1 [shape = 'u32[72,128]{1,0:T(1,128)}', space=vmem, size = 0x9000, scoped, tag = 'internal scratch']
  %s0 = inlined_call_operand.vmem [shape: f32[2,3,1024], index: 0, kind: input, shape index: {}]
  %s1 = inlined_call_operand.vmem [shape: bf16[9,8,3], index: 1, kind: input, shape index: {}]
  %s2 = inlined_call_operand.vmem [shape: f32[2,8,1024], index: 2, kind: output, shape index: {}]
  %s3 = sld [smem:[#allocation0]]
  $region41: #{base_encoder_forward.4} parent=0
    _
  %s5 = ssub.s32 1, %s3
  %s6 = scalar_select 0, %s5, %s3
  loop: start=0, step=1, limit=4
  $region2: #{base_encoder_forward.4} parent=0 // loop_pre_header
    _
  $region3: #{base_encoder_forward.4} parent=0 // loop_header
    %s8 = sphi 0, %s12
    %p9 = scmp.ge.s32.totalorder %s8, 4
    %s18 = sphi 0, %s20
    %s21 = sphi 0, %s18
    %s22 = sphi 0, %s21
    %s38 = sphi 0, %s22
    %s42 = sphi 0, %s42
    %s44 = sphi 0, %s42
    %s45 = sphi 0, %s44
    %s59 = sphi 0, %s45
    %s65 = sphi 0, %s67
    %s68 = sphi 0, %s65
    %s69 = sphi 0, %s68
    %s85 = sphi 0, %s69
  $region4: #{base_encoder_forward.4} parent=0 // loop_header_branch
    %11 = sbr.rel (%p9) target = $region8
  $region5: #{base_encoder_forward.4} parent=0 // loop_body
    %s13 = ssub.s32 %s8, 1
    %s14 = ssub.s32 %s8, 2
    %s15 = sadd.s32 %s8, 1
    %s16 = ssub.s32 %s8, %s15
    %p17 = scmp.eq.s32.totalorder %s16, 0
    %s19 = sadd.s32 %s18, 1
    %s20 = scalar_select %p17, %s18, %s19
    %p23 = pneg %p17
    %p24 = scmp.eq.s32.totalorder %s8, 1
    %p25 = por %p23, %p24
    %p26 = scmp.ne.s32.totalorder %s18, %s21
    %p27 = scmp.eq.s32.totalorder %s8, 0
    %p28 = por %p26, %p27
    %p29 = scmp.ne.s32.totalorder %s18, %s21
    %p30 = scmp.eq.s32.totalorder %s13, 1
    %p31 = por %p29, %p30
    %p32 = scmp.ne.s32.totalorder %s21, %s22
    %p33 = scmp.eq.s32.totalorder %s13, 0
    %p34 = por %p32, %p33
    %p35 = scmp.ne.s32.totalorder %s21, %s22
    %p36 = scmp.eq.s32.totalorder %s14, 1
    %p37 = por %p35, %p36
    %p39 = scmp.ne.s32.totalorder %s22, %s38
    %p40 = scmp.eq.s32.totalorder %s14, 0
    %p41 = por %p39, %p40
    %s43 = sadd.s32 %s42, 1
    %p46 = scmp.eq.s32.totalorder %s8, 1
    %p47 = scmp.ne.s32.totalorder %s42, %s44
    %p48 = scmp.eq.s32.totalorder %s8, 0
    %p49 = por %p47, %p48
    %p50 = scmp.ne.s32.totalorder %s42, %s44
    %p51 = scmp.eq.s32.totalorder %s13, 1
    %p52 = por %p50, %p51
    %p53 = scmp.ne.s32.totalorder %s44, %s45
    %p54 = scmp.eq.s32.totalorder %s13, 0
    %p55 = por %p53, %p54
    %p56 = scmp.ne.s32.totalorder %s44, %s45
    %p57 = scmp.eq.s32.totalorder %s14, 1
    %p58 = por %p56, %p57
    %p60 = scmp.ne.s32.totalorder %s45, %s59
    %p61 = scmp.eq.s32.totalorder %s14, 0
    %p62 = por %p60, %p61
    %s63 = ssub.s32 %s8, %s15
    %p64 = scmp.eq.s32.totalorder %s63, 0
    %s66 = sadd.s32 %s65, 1
    %s67 = scalar_select %p64, %s65, %s66
    %p70 = pneg %p64
    %p71 = scmp.eq.s32.totalorder %s8, 1
    %p72 = por %p70, %p71
    %p73 = scmp.ne.s32.totalorder %s65, %s68
    %p74 = scmp.eq.s32.totalorder %s8, 0
    %p75 = por %p73, %p74
    %p76 = scmp.ne.s32.totalorder %s65, %s68
    %p77 = scmp.eq.s32.totalorder %s13, 1
    %p78 = por %p76, %p77
    %p79 = scmp.ne.s32.totalorder %s68, %s69
    %p80 = scmp.eq.s32.totalorder %s13, 0
    %p81 = por %p79, %p80
    %p82 = scmp.ne.s32.totalorder %s68, %s69
    %p83 = scmp.eq.s32.totalorder %s14, 1
    %p84 = por %p82, %p83
    %p86 = scmp.ne.s32.totalorder %s69, %s85
    %p87 = scmp.eq.s32.totalorder %s14, 0
    %p88 = por %p86, %p87
    %p89 = scmp.le.s32.totalorder 1, %s8
    %p90 = scmp.lt.s32.totalorder %s8, 3
    %p91 = pnand %p89, %p90
    %p92 = pneg %p91
    // Predicated region
    $region9: #{base_encoder_forward.4} parent=5 // pred_check
      _
    $region10: #{base_encoder_forward.4} parent=5 // pred_check_branch
      %94 = sbr.rel (%p91) target = $region12
    $region11: #{base_encoder_forward.4} parent=5 // pred_region
      %s95 = ssub.s32 %s8, 1
      // Predicated region
      $region13: #{base_encoder_forward.4} parent=11 // pred_check
        %p96 = pneg %p55
      $region14: #{base_encoder_forward.4} parent=11 // pred_check_branch
        %98 = sbr.rel (%p96) target = $region16
      $region15: #{base_encoder_forward.4} parent=11 // pred_region
        _
      $region16: #{base_encoder_forward.4} parent=11 // pred_fallthru
        _
    $region12: #{base_encoder_forward.4} parent=5 // pred_fallthru
      _
    %p99 = scmp.lt.s32.totalorder %s8, 2
    // Predicated region
    $region17: #{base_encoder_forward.4} parent=5 // pred_check
      %p100 = pneg %p99
    $region18: #{base_encoder_forward.4} parent=5 // pred_check_branch
      %102 = sbr.rel (%p100) target = $region20
    $region19: #{base_encoder_forward.4} parent=5 // pred_region
      // Predicated region
      $region21: #{base_encoder_forward.4} parent=19 // pred_check
        %p103 = pneg %p28
      $region22: #{base_encoder_forward.4} parent=19 // pred_check_branch
        %105 = sbr.rel (%p103) target = $region24
      $region23: #{base_encoder_forward.4} parent=19 // pred_region
        %p106 = scmp.lt.s32.totalorder %s8, 1
        %s107 = scalar_select %p106, %s8, 1
        %s108 = smul.addr %s107, 8
        %s109 = smul.addr %s108, 4
        %s110 = scalar_lea.vmem %s0, %s109
      $region24: #{base_encoder_forward.4} parent=19 // pred_fallthru
        _
    $region20: #{base_encoder_forward.4} parent=5 // pred_fallthru
      _
    %p111 = scmp.le.s32.totalorder 1, %s8
    %p112 = scmp.lt.s32.totalorder %s8, 3
    %p113 = pnand %p111, %p112
    %p114 = pneg %p113
    // Predicated region
    $region25: #{base_encoder_forward.4} parent=5 // pred_check
      _
    $region26: #{base_encoder_forward.4} parent=5 // pred_check_branch
      %116 = sbr.rel (%p113) target = $region28
    $region27: #{base_encoder_forward.4} parent=5 // pred_region
      %s117 = ssub.s32 %s8, 1
      %p118 = scmp.lt.s32.totalorder %s13, 1
      %s119 = scalar_select %p118, %s13, 1
      %s120 = smul.addr %s119, 8
      %s121 = smul.addr %s120, 4
      %s122 = scalar_lea.vmem %s0, %s121
      %p123 = pneg %p34
      %p124 = pneg %p31
      %p125 = pneg %p55
      %p126 = pneg %p52
      %p127 = pneg %p81
      %p128 = pneg %p78
      %p129 = scmp.lt.s32.totalorder %s13, 1
      %s130 = scalar_select %p129, %s13, 1
      %s131 = smul.addr %s130, 8
      %s132 = smul.addr %s131, 8
      %s133 = scalar_lea.vmem %s2, %s132
      %p134 = scmp.lt.s32.totalorder %s13, 1
      %s135 = scalar_select %p134, %s13, 1
      %s136 = smul.addr %s135, 8
      %s137 = smul.addr %s136, 4
      %s138 = scalar_lea.vmem %s0, %s137
      %p139 = scmp.lt.s32.totalorder %s13, 1
      %s140 = scalar_select %p139, %s13, 1
      %s141 = smul.addr %s140, 8
      %s142 = smul.addr %s141, 8
      %s143 = scalar_lea.vmem %s2, %s142
      %v145 = vlaneseq
      %v146 = vand.u32 %v145, 127
      %v147 = vadd.s32 %v146, 128
      %v148 = vadd.s32 %v146, 256
      %v149 = vadd.s32 %v146, 384
      %v150 = vadd.s32 %v146, 512
      %v151 = vadd.s32 %v146, 640
      %v152 = vadd.s32 %v146, 768
      %v153 = vadd.s32 %v146, 896
      %v154 = vand.u32 %v146, 31
      %v155 = vand.u32 %v147, 31
      %v156 = vand.u32 %v148, 31
      %v157 = vand.u32 %v149, 31
      %v158 = vand.u32 %v150, 31
      %v159 = vand.u32 %v151, 31
      %v160 = vand.u32 %v152, 31
      %v161 = vand.u32 %v153, 31
      %v162 = vadd.s32 %v154, 4294967295
      %v163 = vadd.s32 %v155, 4294967295
      %v164 = vadd.s32 %v156, 4294967295
      %v165 = vadd.s32 %v157, 4294967295
      %v166 = vadd.s32 %v158, 4294967295
      %v167 = vadd.s32 %v159, 4294967295
      %v168 = vadd.s32 %v160, 4294967295
      %v169 = vadd.s32 %v161, 4294967295
      %vm170 = vcmp.ge.s32.totalorder %v162, 0
      %vm171 = vcmp.ge.s32.totalorder %v163, 0
      %vm172 = vcmp.ge.s32.totalorder %v164, 0
      %vm173 = vcmp.ge.s32.totalorder %v165, 0
      %vm174 = vcmp.ge.s32.totalorder %v166, 0
      %vm175 = vcmp.ge.s32.totalorder %v167, 0
      %vm176 = vcmp.ge.s32.totalorder %v168, 0
      %vm177 = vcmp.ge.s32.totalorder %v169, 0
      %vm178 = vcmp.lt.s32.totalorder %v162, 32
      %vm179 = vcmp.lt.s32.totalorder %v163, 32
      %vm180 = vcmp.lt.s32.totalorder %v164, 32
      %vm181 = vcmp.lt.s32.totalorder %v165, 32
      %vm182 = vcmp.lt.s32.totalorder %v166, 32
      %vm183 = vcmp.lt.s32.totalorder %v167, 32
      %vm184 = vcmp.lt.s32.totalorder %v168, 32
      %vm185 = vcmp.lt.s32.totalorder %v169, 32
      %vm186 = vmand %vm170, %vm178
      %vm187 = vmand %vm171, %vm179
      %vm188 = vmand %vm172, %vm180
      %vm189 = vmand %vm173, %vm181
      %vm190 = vmand %vm174, %vm182
      %vm191 = vmand %vm175, %vm183
      %vm192 = vmand %vm176, %vm184
      %vm193 = vmand %vm177, %vm185
      %v194 = vadd.s32 %v154, 1
      %v195 = vadd.s32 %v155, 1
      %v196 = vadd.s32 %v156, 1
      %v197 = vadd.s32 %v157, 1
      %v198 = vadd.s32 %v158, 1
      %v199 = vadd.s32 %v159, 1
      %v200 = vadd.s32 %v160, 1
      %v201 = vadd.s32 %v161, 1
      %vm202 = vcmp.ge.s32.totalorder %v194, 0
      %vm203 = vcmp.ge.s32.totalorder %v195, 0
      %vm204 = vcmp.ge.s32.totalorder %v196, 0
      %vm205 = vcmp.ge.s32.totalorder %v197, 0
      %vm206 = vcmp.ge.s32.totalorder %v198, 0
      %vm207 = vcmp.ge.s32.totalorder %v199, 0
      %vm208 = vcmp.ge.s32.totalorder %v200, 0
      %vm209 = vcmp.ge.s32.totalorder %v201, 0
      %vm210 = vcmp.lt.s32.totalorder %v194, 32
      %vm211 = vcmp.lt.s32.totalorder %v195, 32
      %vm212 = vcmp.lt.s32.totalorder %v196, 32
      %vm213 = vcmp.lt.s32.totalorder %v197, 32
      %vm214 = vcmp.lt.s32.totalorder %v198, 32
      %vm215 = vcmp.lt.s32.totalorder %v199, 32
      %vm216 = vcmp.lt.s32.totalorder %v200, 32
      %vm217 = vcmp.lt.s32.totalorder %v201, 32
      %vm218 = vmand %vm202, %vm210
      %vm219 = vmand %vm203, %vm211
      %vm220 = vmand %vm204, %vm212
      %vm221 = vmand %vm205, %vm213
      %vm222 = vmand %vm206, %vm214
      %vm223 = vmand %vm207, %vm215
      %vm224 = vmand %vm208, %vm216
      %vm225 = vmand %vm209, %vm217
      %v226 = vld [vmem:[%s1] sm:$0xf]
      %v227 = vld [vmem:[%s1 + $0x4] sm:$0xf]
      %v228 = vld [vmem:[%s1 + $0x8] sm:$0xf]
      %v229 = vld [vmem:[%s1 + $0xc] sm:$0xf]
      %v230 = vld [vmem:[%s1 + $0x10] sm:$0xf]
      %v231 = vld [vmem:[%s1 + $0x14] sm:$0xf]
      %v232 = vld [vmem:[%s1 + $0x18] sm:$0xf]
      %v233 = vld [vmem:[%s1 + $0x1c] sm:$0xf]
      %v234 = vld [vmem:[%s1 + $0x20] sm:$0xf]
      %v235 = vld [vmem:[%s138] sm:$0x77]
      %v236 = vld [vmem:[%s138 + $0x8] sm:$0x77]
      %v237 = vld [vmem:[%s138 + $0x10] sm:$0x77]
      %v238 = vld [vmem:[%s138 + $0x18] sm:$0x77]
      %243 = vst [vmem:[#allocation1] ss:$2 sm:$0xff] %v235
      %s244 = scalar_lea.vmem [#allocation1], 16
      %245 = vst [vmem:[%s244] ss:$2 sm:$0xff] %v236
      %s246 = scalar_lea.vmem [#allocation1], 32
      %247 = vst [vmem:[%s246] ss:$2 sm:$0xff] %v237
      %s248 = scalar_lea.vmem [#allocation1], 48
      %249 = vst [vmem:[%s248] ss:$2 sm:$0xff] %v238
      %v250 = vld.sshfl [vmem:[#allocation1] sm:$0xff pattern:$0x75316420]
      %v251 = vld.sshfl [vmem:[#allocation1 + $0x8] sm:$0xff pattern:$0x75316420]
      %v252 = vld.sshfl [vmem:[#allocation1 + $0x10] sm:$0xff pattern:$0x75316420]
      %v253 = vld.sshfl [vmem:[#allocation1 + $0x18] sm:$0xff pattern:$0x75316420]
      %v254 = vld.sshfl [vmem:[#allocation1 + $0x20] sm:$0xff pattern:$0x75316420]
      %v255 = vld.sshfl [vmem:[#allocation1 + $0x28] sm:$0xff pattern:$0x75316420]
      %v256 = vld.sshfl [vmem:[#allocation1 + $0x30] sm:$0xff pattern:$0x75316420]
      %v257 = vld.sshfl [vmem:[#allocation1 + $0x38] sm:$0xff pattern:$0x75316420]
      %v266 = vsel %vm186, 1, 0
      %v267 = vsel %vm187, 1, 0
      %v268 = vsel %vm188, 1, 0
      %v269 = vsel %vm189, 1, 0
      %v270 = vsel %vm190, 1, 0
      %v271 = vsel %vm191, 1, 0
      %v272 = vsel %vm192, 1, 0
      %v273 = vsel %vm193, 1, 0
      %vm274 = vcmp.eq.s32.totalorder %v266, 1
      %vm275 = vcmp.eq.s32.totalorder %v267, 1
      %vm276 = vcmp.eq.s32.totalorder %v268, 1
      %vm277 = vcmp.eq.s32.totalorder %v269, 1
      %vm278 = vcmp.eq.s32.totalorder %v270, 1
      %vm279 = vcmp.eq.s32.totalorder %v271, 1
      %vm280 = vcmp.eq.s32.totalorder %v272, 1
      %vm281 = vcmp.eq.s32.totalorder %v273, 1
      %283 = vrot.lane.b32.xlu0 0.0, 33
      %v284 = vpop.permute.xlu0 %283
      %285 = vrot.lane.b32.xlu0 %v250, 33
      %v286 = vpop.permute.xlu0 %285
      %287 = vrot.lane.b32.xlu0 %v251, 33
      %v288 = vpop.permute.xlu0 %287
      %289 = vrot.lane.b32.xlu0 %v252, 33
      %v290 = vpop.permute.xlu0 %289
      %291 = vrot.lane.b32.xlu0 %v253, 33
      %v292 = vpop.permute.xlu0 %291
      %293 = vrot.lane.b32.xlu0 %v254, 33
      %v294 = vpop.permute.xlu0 %293
      %295 = vrot.lane.b32.xlu0 %v255, 33
      %v296 = vpop.permute.xlu0 %295
      %297 = vrot.lane.b32.xlu0 %v256, 33
      %v298 = vpop.permute.xlu0 %297
      %299 = vrot.lane.b32.xlu0 %v257, 33
      %v300 = vpop.permute.xlu0 %299
      %vm301 = vcmask 269312
      %v302 = vsel %vm301, %v284, %v286
      %v303 = vsel %vm301, %v286, %v288
      %v304 = vsel %vm301, %v288, %v290
      %v305 = vsel %vm301, %v290, %v292
      %v306 = vsel %vm301, %v292, %v294
      %v307 = vsel %vm301, %v294, %v296
      %v308 = vsel %vm301, %v296, %v298
      %v309 = vsel %vm301, %v298, %v300
      %v318 = vsel %vm274, %v302, 0.0
      %v319 = vsel %vm275, %v303, 0.0
      %v320 = vsel %vm276, %v304, 0.0
      %v321 = vsel %vm277, %v305, 0.0
      %v322 = vsel %vm278, %v306, 0.0
      %v323 = vsel %vm279, %v307, 0.0
      %v324 = vsel %vm280, %v308, 0.0
      %v325 = vsel %vm281, %v309, 0.0
      %v326 = vpack.c.bf16 %v318, %v318
      %v327 = vpack.c.bf16 %v319, %v319
      %v328 = vpack.c.bf16 %v320, %v320
      %v329 = vpack.c.bf16 %v321, %v321
      %v330 = vpack.c.bf16 %v322, %v322
      %v331 = vpack.c.bf16 %v323, %v323
      %v332 = vpack.c.bf16 %v324, %v324
      %v333 = vpack.c.bf16 %v325, %v325
      %v334 = vpack.c.bf16 0.0, 0.0
      %v335 = vpack.c.bf16 %v250, %v250
      %v336 = vpack.c.bf16 %v251, %v251
      %v337 = vpack.c.bf16 %v252, %v252
      %v338 = vpack.c.bf16 %v253, %v253
      %v339 = vpack.c.bf16 %v254, %v254
      %v340 = vpack.c.bf16 %v255, %v255
      %v341 = vpack.c.bf16 %v256, %v256
      %v342 = vpack.c.bf16 %v257, %v257
      %352 = vrot.lane.b32.xlu0 %v334, 32
      %v353 = vpop.permute.xlu0 %352
      %354 = vrot.lane.b32.xlu0 %v335, 32
      %v355 = vpop.permute.xlu0 %354
      %356 = vrot.lane.b32.xlu0 %v336, 32
      %v357 = vpop.permute.xlu0 %356
      %358 = vrot.lane.b32.xlu0 %v337, 32
      %v359 = vpop.permute.xlu0 %358
      %360 = vrot.lane.b32.xlu0 %v338, 32
      %v361 = vpop.permute.xlu0 %360
      %362 = vrot.lane.b32.xlu0 %v339, 32
      %v363 = vpop.permute.xlu0 %362
      %364 = vrot.lane.b32.xlu0 %v340, 32
      %v365 = vpop.permute.xlu0 %364
      %366 = vrot.lane.b32.xlu0 %v341, 32
      %v367 = vpop.permute.xlu0 %366
      %368 = vrot.lane.b32.xlu0 %v342, 32
      %v369 = vpop.permute.xlu0 %368
      %vm370 = vcmask 261120
      %v371 = vsel %vm370, %v353, %v355
      %v372 = vsel %vm370, %v355, %v357
      %v373 = vsel %vm370, %v357, %v359
      %v374 = vsel %vm370, %v359, %v361
      %v375 = vsel %vm370, %v361, %v363
      %v376 = vsel %vm370, %v363, %v365
      %v377 = vsel %vm370, %v365, %v367
      %v378 = vsel %vm370, %v367, %v369
      %vm379 = vcmask 23552
      %v381 = vsel %vm379, %v227, 0
      %vm383 = vcmask 1040384
      %vm384 = vcmask 1041408
      %v385 = vsel %vm383, 4294967295, 65535
      %v386 = vsel %vm384, %v385, 0
      %v388 = vand.u32 %v371, %v386
      %v391 = vand.u32 %v372, %v386
      %v394 = vand.u32 %v373, %v386
      %v397 = vand.u32 %v374, %v386
      %v400 = vand.u32 %v375, %v386
      %v403 = vand.u32 %v376, %v386
      %v406 = vand.u32 %v377, %v386
      %v409 = vand.u32 %v378, %v386
      %411 = vmatpush.bf16.msra.mxu0 0
      %412 = vmatpush.bf16.msra.mxu0 0
      %413 = vmatpush.bf16.msra.mxu0 0
      %414 = vmatpush.bf16.msra.mxu0 0
      %415 = vmatpush.bf16.msra.mxu0 0
      %416 = vmatpush.bf16.msra.mxu0 0
      %417 = vmatpush.bf16.msra.mxu0 0
      %418 = vmatpush.bf16.msra.mxu0 %v388
      %419 = vmatmul.bf16.gmra.mxu0 %v381
      %v420 = vpop.f32.mrf.mxu0
      %v421 = vadd.f32 0.0, %v420
      %v422 = vpop.f32.mrf.mxu0
      %423 = vdwg.mxu0
      %424 = vmatpush.bf16.msra.mxu0 0
      %425 = vmatpush.bf16.msra.mxu0 0
      %426 = vmatpush.bf16.msra.mxu0 0
      %427 = vmatpush.bf16.msra.mxu0 0
      %428 = vmatpush.bf16.msra.mxu0 0
      %429 = vmatpush.bf16.msra.mxu0 0
      %430 = vmatpush.bf16.msra.mxu0 0
      %431 = vmatpush.bf16.msra.mxu0 %v391
      %432 = vmatmul.bf16.gmra.mxu0 %v381
      %v433 = vpop.f32.mrf.mxu0
      %v434 = vadd.f32 0.0, %v433
      %v435 = vpop.f32.mrf.mxu0
      %436 = vdwg.mxu0
      %437 = vmatpush.bf16.msra.mxu0 0
      %438 = vmatpush.bf16.msra.mxu0 0
      %439 = vmatpush.bf16.msra.mxu0 0
      %440 = vmatpush.bf16.msra.mxu0 0
      %441 = vmatpush.bf16.msra.mxu0 0
      %442 = vmatpush.bf16.msra.mxu0 0
      %443 = vmatpush.bf16.msra.mxu0 0
      %444 = vmatpush.bf16.msra.mxu0 %v394
      %445 = vmatmul.bf16.gmra.mxu0 %v381
      %v446 = vpop.f32.mrf.mxu0
      %v447 = vadd.f32 0.0, %v446
      %v448 = vpop.f32.mrf.mxu0
      %449 = vdwg.mxu0
      %450 = vmatpush.bf16.msra.mxu0 0
      %451 = vmatpush.bf16.msra.mxu0 0
      %452 = vmatpush.bf16.msra.mxu0 0
      %453 = vmatpush.bf16.msra.mxu0 0
      %454 = vmatpush.bf16.msra.mxu0 0
      %455 = vmatpush.bf16.msra.mxu0 0
      %456 = vmatpush.bf16.msra.mxu0 0
      %457 = vmatpush.bf16.msra.mxu0 %v397
      %458 = vmatmul.bf16.gmra.mxu0 %v381
      %v459 = vpop.f32.mrf.mxu0
      %v460 = vadd.f32 0.0, %v459
      %v461 = vpop.f32.mrf.mxu0
      %462 = vdwg.mxu0
      %463 = vmatpush.bf16.msra.mxu0 0
      %464 = vmatpush.bf16.msra.mxu0 0
      %465 = vmatpush.bf16.msra.mxu0 0
      %466 = vmatpush.bf16.msra.mxu0 0
      %467 = vmatpush.bf16.msra.mxu0 0
      %468 = vmatpush.bf16.msra.mxu0 0
      %469 = vmatpush.bf16.msra.mxu0 0
      %470 = vmatpush.bf16.msra.mxu0 %v400
      %471 = vmatmul.bf16.gmra.mxu0 %v381
      %v472 = vpop.f32.mrf.mxu0
      %v473 = vadd.f32 0.0, %v472
      %v474 = vpop.f32.mrf.mxu0
      %475 = vdwg.mxu0
      %476 = vmatpush.bf16.msra.mxu0 0
      %477 = vmatpush.bf16.msra.mxu0 0
      %478 = vmatpush.bf16.msra.mxu0 0
      %479 = vmatpush.bf16.msra.mxu0 0
      %480 = vmatpush.bf16.msra.mxu0 0
      %481 = vmatpush.bf16.msra.mxu0 0
      %482 = vmatpush.bf16.msra.mxu0 0
      %483 = vmatpush.bf16.msra.mxu0 %v403
      %484 = vmatmul.bf16.gmra.mxu0 %v381
      %v485 = vpop.f32.mrf.mxu0
      %v486 = vadd.f32 0.0, %v485
      %v487 = vpop.f32.mrf.mxu0
      %488 = vdwg.mxu0
      %489 = vmatpush.bf16.msra.mxu0 0
      %490 = vmatpush.bf16.msra.mxu0 0
      %491 = vmatpush.bf16.msra.mxu0 0
      %492 = vmatpush.bf16.msra.mxu0 0
      %493 = vmatpush.bf16.msra.mxu0 0
      %494 = vmatpush.bf16.msra.mxu0 0
      %495 = vmatpush.bf16.msra.mxu0 0
      %496 = vmatpush.bf16.msra.mxu0 %v406
      %497 = vmatmul.bf16.gmra.mxu0 %v381
      %v498 = vpop.f32.mrf.mxu0
      %v499 = vadd.f32 0.0, %v498
      %v500 = vpop.f32.mrf.mxu0
      %501 = vdwg.mxu0
      %502 = vmatpush.bf16.msra.mxu0 0
      %503 = vmatpush.bf16.msra.mxu0 0
      %504 = vmatpush.bf16.msra.mxu0 0
      %505 = vmatpush.bf16.msra.mxu0 0
      %506 = vmatpush.bf16.msra.mxu0 0
      %507 = vmatpush.bf16.msra.mxu0 0
      %508 = vmatpush.bf16.msra.mxu0 0
      %509 = vmatpush.bf16.msra.mxu0 %v409
      %510 = vmatmul.bf16.gmra.mxu0 %v381
      %v511 = vpop.f32.mrf.mxu0
      %v512 = vadd.f32 0.0, %v511
      %v513 = vpop.f32.mrf.mxu0
      %514 = vdwg.mxu0
      %v516 = vsel %vm379, %v226, 0
      %v519 = vand.u32 %v326, %v386
      %v522 = vand.u32 %v327, %v386
      %v525 = vand.u32 %v328, %v386
      %v528 = vand.u32 %v329, %v386
      %v531 = vand.u32 %v330, %v386
      %v534 = vand.u32 %v331, %v386
      %v537 = vand.u32 %v332, %v386
      %v540 = vand.u32 %v333, %v386
      %542 = vmatpush.bf16.msra.mxu0 0
      %543 = vmatpush.bf16.msra.mxu0 0
      %544 = vmatpush.bf16.msra.mxu0 0
      %545 = vmatpush.bf16.msra.mxu0 0
      %546 = vmatpush.bf16.msra.mxu0 0
      %547 = vmatpush.bf16.msra.mxu0 0
      %548 = vmatpush.bf16.msra.mxu0 0
      %549 = vmatpush.bf16.msra.mxu0 %v519
      %550 = vmatmul.bf16.gmra.mxu0 %v516
      %v551 = vpop.f32.mrf.mxu0
      %v552 = vadd.f32 %v421, %v551
      %v553 = vpop.f32.mrf.mxu0
      %554 = vdwg.mxu0
      %555 = vmatpush.bf16.msra.mxu0 0
      %556 = vmatpush.bf16.msra.mxu0 0
      %557 = vmatpush.bf16.msra.mxu0 0
      %558 = vmatpush.bf16.msra.mxu0 0
      %559 = vmatpush.bf16.msra.mxu0 0
      %560 = vmatpush.bf16.msra.mxu0 0
      %561 = vmatpush.bf16.msra.mxu0 0
      %562 = vmatpush.bf16.msra.mxu0 %v522
      %563 = vmatmul.bf16.gmra.mxu0 %v516
      %v564 = vpop.f32.mrf.mxu0
      %v565 = vadd.f32 %v434, %v564
      %v566 = vpop.f32.mrf.mxu0
      %567 = vdwg.mxu0
      %568 = vmatpush.bf16.msra.mxu0 0
      %569 = vmatpush.bf16.msra.mxu0 0
      %570 = vmatpush.bf16.msra.mxu0 0
      %571 = vmatpush.bf16.msra.mxu0 0
      %572 = vmatpush.bf16.msra.mxu0 0
      %573 = vmatpush.bf16.msra.mxu0 0
      %574 = vmatpush.bf16.msra.mxu0 0
      %575 = vmatpush.bf16.msra.mxu0 %v525
      %576 = vmatmul.bf16.gmra.mxu0 %v516
      %v577 = vpop.f32.mrf.mxu0
      %v578 = vadd.f32 %v447, %v577
      %v579 = vpop.f32.mrf.mxu0
      %580 = vdwg.mxu0
      %581 = vmatpush.bf16.msra.mxu0 0
      %582 = vmatpush.bf16.msra.mxu0 0
      %583 = vmatpush.bf16.msra.mxu0 0
      %584 = vmatpush.bf16.msra.mxu0 0
      %585 = vmatpush.bf16.msra.mxu0 0
      %586 = vmatpush.bf16.msra.mxu0 0
      %587 = vmatpush.bf16.msra.mxu0 0
      %588 = vmatpush.bf16.msra.mxu0 %v528
      %589 = vmatmul.bf16.gmra.mxu0 %v516
      %v590 = vpop.f32.mrf.mxu0
      %v591 = vadd.f32 %v460, %v590
      %v592 = vpop.f32.mrf.mxu0
      %593 = vdwg.mxu0
      %594 = vmatpush.bf16.msra.mxu0 0
      %595 = vmatpush.bf16.msra.mxu0 0
      %596 = vmatpush.bf16.msra.mxu0 0
      %597 = vmatpush.bf16.msra.mxu0 0
      %598 = vmatpush.bf16.msra.mxu0 0
      %599 = vmatpush.bf16.msra.mxu0 0
      %600 = vmatpush.bf16.msra.mxu0 0
      %601 = vmatpush.bf16.msra.mxu0 %v531
      %602 = vmatmul.bf16.gmra.mxu0 %v516
      %v603 = vpop.f32.mrf.mxu0
      %v604 = vadd.f32 %v473, %v603
      %v605 = vpop.f32.mrf.mxu0
      %606 = vdwg.mxu0
      %607 = vmatpush.bf16.msra.mxu0 0
      %608 = vmatpush.bf16.msra.mxu0 0
      %609 = vmatpush.bf16.msra.mxu0 0
      %610 = vmatpush.bf16.msra.mxu0 0
      %611 = vmatpush.bf16.msra.mxu0 0
      %612 = vmatpush.bf16.msra.mxu0 0
      %613 = vmatpush.bf16.msra.mxu0 0
      %614 = vmatpush.bf16.msra.mxu0 %v534
      %615 = vmatmul.bf16.gmra.mxu0 %v516
      %v616 = vpop.f32.mrf.mxu0
      %v617 = vadd.f32 %v486, %v616
      %v618 = vpop.f32.mrf.mxu0
      %619 = vdwg.mxu0
      %620 = vmatpush.bf16.msra.mxu0 0
      %621 = vmatpush.bf16.msra.mxu0 0
      %622 = vmatpush.bf16.msra.mxu0 0
      %623 = vmatpush.bf16.msra.mxu0 0
      %624 = vmatpush.bf16.msra.mxu0 0
      %625 = vmatpush.bf16.msra.mxu0 0
      %626 = vmatpush.bf16.msra.mxu0 0
      %627 = vmatpush.bf16.msra.mxu0 %v537
      %628 = vmatmul.bf16.gmra.mxu0 %v516
      %v629 = vpop.f32.mrf.mxu0
      %v630 = vadd.f32 %v499, %v629
      %v631 = vpop.f32.mrf.mxu0
      %632 = vdwg.mxu0
      %633 = vmatpush.bf16.msra.mxu0 0
      %634 = vmatpush.bf16.msra.mxu0 0
      %635 = vmatpush.bf16.msra.mxu0 0
      %636 = vmatpush.bf16.msra.mxu0 0
      %637 = vmatpush.bf16.msra.mxu0 0
      %638 = vmatpush.bf16.msra.mxu0 0
      %639 = vmatpush.bf16.msra.mxu0 0
      %640 = vmatpush.bf16.msra.mxu0 %v540
      %641 = vmatmul.bf16.gmra.mxu0 %v516
      %v642 = vpop.f32.mrf.mxu0
      %v643 = vadd.f32 %v512, %v642
      %v644 = vpop.f32.mrf.mxu0
      %645 = vdwg.mxu0
      %v646 = vsel %vm218, 1, 0
      %v647 = vsel %vm219, 1, 0
      %v648 = vsel %vm220, 1, 0
      %v649 = vsel %vm221, 1, 0
      %v650 = vsel %vm222, 1, 0
      %v651 = vsel %vm223, 1, 0
      %v652 = vsel %vm224, 1, 0
      %v653 = vsel %vm225, 1, 0
      %vm654 = vcmp.eq.s32.totalorder %v646, 1
      %vm655 = vcmp.eq.s32.totalorder %v647, 1
      %vm656 = vcmp.eq.s32.totalorder %v648, 1
      %vm657 = vcmp.eq.s32.totalorder %v649, 1
      %vm658 = vcmp.eq.s32.totalorder %v650, 1
      %vm659 = vcmp.eq.s32.totalorder %v651, 1
      %vm660 = vcmp.eq.s32.totalorder %v652, 1
      %vm661 = vcmp.eq.s32.totalorder %v653, 1
      %662 = vrot.lane.b32.xlu0 0.0, 31
      %v663 = vpop.permute.xlu0 %662
      %664 = vrot.lane.b32.xlu0 %v250, 31
      %v665 = vpop.permute.xlu0 %664
      %666 = vrot.lane.b32.xlu0 %v251, 31
      %v667 = vpop.permute.xlu0 %666
      %668 = vrot.lane.b32.xlu0 %v252, 31
      %v669 = vpop.permute.xlu0 %668
      %670 = vrot.lane.b32.xlu0 %v253, 31
      %v671 = vpop.permute.xlu0 %670
      %672 = vrot.lane.b32.xlu0 %v254, 31
      %v673 = vpop.permute.xlu0 %672
      %674 = vrot.lane.b32.xlu0 %v255, 31
      %v675 = vpop.permute.xlu0 %674
      %676 = vrot.lane.b32.xlu0 %v256, 31
      %v677 = vpop.permute.xlu0 %676
      %678 = vrot.lane.b32.xlu0 %v257, 31
      %v679 = vpop.permute.xlu0 %678
      %vm680 = vcmask 252928
      %v681 = vsel %vm680, %v663, %v665
      %v682 = vsel %vm680, %v665, %v667
      %v683 = vsel %vm680, %v667, %v669
      %v684 = vsel %vm680, %v669, %v671
      %v685 = vsel %vm680, %v671, %v673
      %v686 = vsel %vm680, %v673, %v675
      %v687 = vsel %vm680, %v675, %v677
      %v688 = vsel %vm680, %v677, %v679
      %v697 = vsel %vm654, %v681, 0.0
      %v698 = vsel %vm655, %v682, 0.0
      %v699 = vsel %vm656, %v683, 0.0
      %v700 = vsel %vm657, %v684, 0.0
      %v701 = vsel %vm658, %v685, 0.0
      %v702 = vsel %vm659, %v686, 0.0
      %v703 = vsel %vm660, %v687, 0.0
      %v704 = vsel %vm661, %v688, 0.0
      %v705 = vpack.c.bf16 %v697, %v697
      %v706 = vpack.c.bf16 %v698, %v698
      %v707 = vpack.c.bf16 %v699, %v699
      %v708 = vpack.c.bf16 %v700, %v700
      %v709 = vpack.c.bf16 %v701, %v701
      %v710 = vpack.c.bf16 %v702, %v702
      %v711 = vpack.c.bf16 %v703, %v703
      %v712 = vpack.c.bf16 %v704, %v704
      %v714 = vsel %vm379, %v228, 0
      %v717 = vand.u32 %v705, %v386
      %v720 = vand.u32 %v706, %v386
      %v723 = vand.u32 %v707, %v386
      %v726 = vand.u32 %v708, %v386
      %v729 = vand.u32 %v709, %v386
      %v732 = vand.u32 %v710, %v386
      %v735 = vand.u32 %v711, %v386
      %v738 = vand.u32 %v712, %v386
      %740 = vmatpush.bf16.msra.mxu0 0
      %741 = vmatpush.bf16.msra.mxu0 0
      %742 = vmatpush.bf16.msra.mxu0 0
      %743 = vmatpush.bf16.msra.mxu0 0
      %744 = vmatpush.bf16.msra.mxu0 0
      %745 = vmatpush.bf16.msra.mxu0 0
      %746 = vmatpush.bf16.msra.mxu0 0
      %747 = vmatpush.bf16.msra.mxu0 %v717
      %748 = vmatmul.bf16.gmra.mxu0 %v714
      %v749 = vpop.f32.mrf.mxu0
      %v750 = vadd.f32 0.0, %v749
      %v751 = vpop.f32.mrf.mxu0
      %752 = vdwg.mxu0
      %753 = vmatpush.bf16.msra.mxu0 0
      %754 = vmatpush.bf16.msra.mxu0 0
      %755 = vmatpush.bf16.msra.mxu0 0
      %756 = vmatpush.bf16.msra.mxu0 0
      %757 = vmatpush.bf16.msra.mxu0 0
      %758 = vmatpush.bf16.msra.mxu0 0
      %759 = vmatpush.bf16.msra.mxu0 0
      %760 = vmatpush.bf16.msra.mxu0 %v720
      %761 = vmatmul.bf16.gmra.mxu0 %v714
      %v762 = vpop.f32.mrf.mxu0
      %v763 = vadd.f32 0.0, %v762
      %v764 = vpop.f32.mrf.mxu0
      %765 = vdwg.mxu0
      %766 = vmatpush.bf16.msra.mxu0 0
      %767 = vmatpush.bf16.msra.mxu0 0
      %768 = vmatpush.bf16.msra.mxu0 0
      %769 = vmatpush.bf16.msra.mxu0 0
      %770 = vmatpush.bf16.msra.mxu0 0
      %771 = vmatpush.bf16.msra.mxu0 0
      %772 = vmatpush.bf16.msra.mxu0 0
      %773 = vmatpush.bf16.msra.mxu0 %v723
      %774 = vmatmul.bf16.gmra.mxu0 %v714
      %v775 = vpop.f32.mrf.mxu0
      %v776 = vadd.f32 0.0, %v775
      %v777 = vpop.f32.mrf.mxu0
      %778 = vdwg.mxu0
      %779 = vmatpush.bf16.msra.mxu0 0
      %780 = vmatpush.bf16.msra.mxu0 0
      %781 = vmatpush.bf16.msra.mxu0 0
      %782 = vmatpush.bf16.msra.mxu0 0
      %783 = vmatpush.bf16.msra.mxu0 0
      %784 = vmatpush.bf16.msra.mxu0 0
      %785 = vmatpush.bf16.msra.mxu0 0
      %786 = vmatpush.bf16.msra.mxu0 %v726
      %787 = vmatmul.bf16.gmra.mxu0 %v714
      %v788 = vpop.f32.mrf.mxu0
      %v789 = vadd.f32 0.0, %v788
      %v790 = vpop.f32.mrf.mxu0
      %791 = vdwg.mxu0
      %792 = vmatpush.bf16.msra.mxu0 0
      %793 = vmatpush.bf16.msra.mxu0 0
      %794 = vmatpush.bf16.msra.mxu0 0
      %795 = vmatpush.bf16.msra.mxu0 0
      %796 = vmatpush.bf16.msra.mxu0 0
      %797 = vmatpush.bf16.msra.mxu0 0
      %798 = vmatpush.bf16.msra.mxu0 0
      %799 = vmatpush.bf16.msra.mxu0 %v729
      %800 = vmatmul.bf16.gmra.mxu0 %v714
      %v801 = vpop.f32.mrf.mxu0
      %v802 = vadd.f32 0.0, %v801
      %v803 = vpop.f32.mrf.mxu0
      %804 = vdwg.mxu0
      %805 = vmatpush.bf16.msra.mxu0 0
      %806 = vmatpush.bf16.msra.mxu0 0
      %807 = vmatpush.bf16.msra.mxu0 0
      %808 = vmatpush.bf16.msra.mxu0 0
      %809 = vmatpush.bf16.msra.mxu0 0
      %810 = vmatpush.bf16.msra.mxu0 0
      %811 = vmatpush.bf16.msra.mxu0 0
      %812 = vmatpush.bf16.msra.mxu0 %v732
      %813 = vmatmul.bf16.gmra.mxu0 %v714
      %v814 = vpop.f32.mrf.mxu0
      %v815 = vadd.f32 0.0, %v814
      %v816 = vpop.f32.mrf.mxu0
      %817 = vdwg.mxu0
      %818 = vmatpush.bf16.msra.mxu0 0
      %819 = vmatpush.bf16.msra.mxu0 0
      %820 = vmatpush.bf16.msra.mxu0 0
      %821 = vmatpush.bf16.msra.mxu0 0
      %822 = vmatpush.bf16.msra.mxu0 0
      %823 = vmatpush.bf16.msra.mxu0 0
      %824 = vmatpush.bf16.msra.mxu0 0
      %825 = vmatpush.bf16.msra.mxu0 %v735
      %826 = vmatmul.bf16.gmra.mxu0 %v714
      %v827 = vpop.f32.mrf.mxu0
      %v828 = vadd.f32 0.0, %v827
      %v829 = vpop.f32.mrf.mxu0
      %830 = vdwg.mxu0
      %831 = vmatpush.bf16.msra.mxu0 0
      %832 = vmatpush.bf16.msra.mxu0 0
      %833 = vmatpush.bf16.msra.mxu0 0
      %834 = vmatpush.bf16.msra.mxu0 0
      %835 = vmatpush.bf16.msra.mxu0 0
      %836 = vmatpush.bf16.msra.mxu0 0
      %837 = vmatpush.bf16.msra.mxu0 0
      %838 = vmatpush.bf16.msra.mxu0 %v738
      %839 = vmatmul.bf16.gmra.mxu0 %v714
      %v840 = vpop.f32.mrf.mxu0
      %v841 = vadd.f32 0.0, %v840
      %v842 = vpop.f32.mrf.mxu0
      %843 = vdwg.mxu0
      %v844 = vadd.f32 %v552, %v750
      %v845 = vadd.f32 %v565, %v763
      %v846 = vadd.f32 %v578, %v776
      %v847 = vadd.f32 %v591, %v789
      %v848 = vadd.f32 %v604, %v802
      %v849 = vadd.f32 %v617, %v815
      %v850 = vadd.f32 %v630, %v828
      %v851 = vadd.f32 %v643, %v841
      %852 = vrot.lane.b32.xlu0 0.0, 1
      %v853 = vpop.permute.xlu0 %852
      %854 = vrot.lane.b32.xlu0 %v250, 1
      %v855 = vpop.permute.xlu0 %854
      %856 = vrot.lane.b32.xlu0 %v251, 1
      %v857 = vpop.permute.xlu0 %856
      %858 = vrot.lane.b32.xlu0 %v252, 1
      %v859 = vpop.permute.xlu0 %858
      %860 = vrot.lane.b32.xlu0 %v253, 1
      %v861 = vpop.permute.xlu0 %860
      %862 = vrot.lane.b32.xlu0 %v254, 1
      %v863 = vpop.permute.xlu0 %862
      %864 = vrot.lane.b32.xlu0 %v255, 1
      %v865 = vpop.permute.xlu0 %864
      %866 = vrot.lane.b32.xlu0 %v256, 1
      %v867 = vpop.permute.xlu0 %866
      %868 = vrot.lane.b32.xlu0 %v257, 1
      %v869 = vpop.permute.xlu0 %868
      %vm870 = vcmask 7168
      %v871 = vsel %vm870, %v853, %v855
      %v872 = vsel %vm870, %v855, %v857
      %v873 = vsel %vm870, %v857, %v859
      %v874 = vsel %vm870, %v859, %v861
      %v875 = vsel %vm870, %v861, %v863
      %v876 = vsel %vm870, %v863, %v865
      %v877 = vsel %vm870, %v865, %v867
      %v878 = vsel %vm870, %v867, %v869
      %v887 = vsel %vm274, %v871, 0.0
      %v888 = vsel %vm275, %v872, 0.0
      %v889 = vsel %vm276, %v873, 0.0
      %v890 = vsel %vm277, %v874, 0.0
      %v891 = vsel %vm278, %v875, 0.0
      %v892 = vsel %vm279, %v876, 0.0
      %v893 = vsel %vm280, %v877, 0.0
      %v894 = vsel %vm281, %v878, 0.0
      %v895 = vpack.c.bf16 %v887, %v887
      %v896 = vpack.c.bf16 %v888, %v888
      %v897 = vpack.c.bf16 %v889, %v889
      %v898 = vpack.c.bf16 %v890, %v890
      %v899 = vpack.c.bf16 %v891, %v891
      %v900 = vpack.c.bf16 %v892, %v892
      %v901 = vpack.c.bf16 %v893, %v893
      %v902 = vpack.c.bf16 %v894, %v894
      %v904 = vsel %vm379, %v229, 0
      %v907 = vand.u32 %v895, %v386
      %v910 = vand.u32 %v896, %v386
      %v913 = vand.u32 %v897, %v386
      %v916 = vand.u32 %v898, %v386
      %v919 = vand.u32 %v899, %v386
      %v922 = vand.u32 %v900, %v386
      %v925 = vand.u32 %v901, %v386
      %v928 = vand.u32 %v902, %v386
      %930 = vmatpush.bf16.msra.mxu0 0
      %931 = vmatpush.bf16.msra.mxu0 0
      %932 = vmatpush.bf16.msra.mxu0 0
      %933 = vmatpush.bf16.msra.mxu0 0
      %934 = vmatpush.bf16.msra.mxu0 0
      %935 = vmatpush.bf16.msra.mxu0 0
      %936 = vmatpush.bf16.msra.mxu0 0
      %937 = vmatpush.bf16.msra.mxu0 %v907
      %938 = vmatmul.bf16.gmra.mxu0 %v904
      %v939 = vpop.f32.mrf.mxu0
      %v940 = vadd.f32 0.0, %v939
      %v941 = vpop.f32.mrf.mxu0
      %942 = vdwg.mxu0
      %943 = vmatpush.bf16.msra.mxu0 0
      %944 = vmatpush.bf16.msra.mxu0 0
      %945 = vmatpush.bf16.msra.mxu0 0
      %946 = vmatpush.bf16.msra.mxu0 0
      %947 = vmatpush.bf16.msra.mxu0 0
      %948 = vmatpush.bf16.msra.mxu0 0
      %949 = vmatpush.bf16.msra.mxu0 0
      %950 = vmatpush.bf16.msra.mxu0 %v910
      %951 = vmatmul.bf16.gmra.mxu0 %v904
      %v952 = vpop.f32.mrf.mxu0
      %v953 = vadd.f32 0.0, %v952
      %v954 = vpop.f32.mrf.mxu0
      %955 = vdwg.mxu0
      %956 = vmatpush.bf16.msra.mxu0 0
      %957 = vmatpush.bf16.msra.mxu0 0
      %958 = vmatpush.bf16.msra.mxu0 0
      %959 = vmatpush.bf16.msra.mxu0 0
      %960 = vmatpush.bf16.msra.mxu0 0
      %961 = vmatpush.bf16.msra.mxu0 0
      %962 = vmatpush.bf16.msra.mxu0 0
      %963 = vmatpush.bf16.msra.mxu0 %v913
      %964 = vmatmul.bf16.gmra.mxu0 %v904
      %v965 = vpop.f32.mrf.mxu0
      %v966 = vadd.f32 0.0, %v965
      %v967 = vpop.f32.mrf.mxu0
      %968 = vdwg.mxu0
      %969 = vmatpush.bf16.msra.mxu0 0
      %970 = vmatpush.bf16.msra.mxu0 0
      %971 = vmatpush.bf16.msra.mxu0 0
      %972 = vmatpush.bf16.msra.mxu0 0
      %973 = vmatpush.bf16.msra.mxu0 0
      %974 = vmatpush.bf16.msra.mxu0 0
      %975 = vmatpush.bf16.msra.mxu0 0
      %976 = vmatpush.bf16.msra.mxu0 %v916
      %977 = vmatmul.bf16.gmra.mxu0 %v904
      %v978 = vpop.f32.mrf.mxu0
      %v979 = vadd.f32 0.0, %v978
      %v980 = vpop.f32.mrf.mxu0
      %981 = vdwg.mxu0
      %982 = vmatpush.bf16.msra.mxu0 0
      %983 = vmatpush.bf16.msra.mxu0 0
      %984 = vmatpush.bf16.msra.mxu0 0
      %985 = vmatpush.bf16.msra.mxu0 0
      %986 = vmatpush.bf16.msra.mxu0 0
      %987 = vmatpush.bf16.msra.mxu0 0
      %988 = vmatpush.bf16.msra.mxu0 0
      %989 = vmatpush.bf16.msra.mxu0 %v919
      %990 = vmatmul.bf16.gmra.mxu0 %v904
      %v991 = vpop.f32.mrf.mxu0
      %v992 = vadd.f32 0.0, %v991
      %v993 = vpop.f32.mrf.mxu0
      %994 = vdwg.mxu0
      %995 = vmatpush.bf16.msra.mxu0 0
      %996 = vmatpush.bf16.msra.mxu0 0
      %997 = vmatpush.bf16.msra.mxu0 0
      %998 = vmatpush.bf16.msra.mxu0 0
      %999 = vmatpush.bf16.msra.mxu0 0
      %1000 = vmatpush.bf16.msra.mxu0 0
      %1001 = vmatpush.bf16.msra.mxu0 0
      %1002 = vmatpush.bf16.msra.mxu0 %v922
      %1003 = vmatmul.bf16.gmra.mxu0 %v904
      %v1004 = vpop.f32.mrf.mxu0
      %v1005 = vadd.f32 0.0, %v1004
      %v1006 = vpop.f32.mrf.mxu0
      %1007 = vdwg.mxu0
      %1008 = vmatpush.bf16.msra.mxu0 0
      %1009 = vmatpush.bf16.msra.mxu0 0
      %1010 = vmatpush.bf16.msra.mxu0 0
      %1011 = vmatpush.bf16.msra.mxu0 0
      %1012 = vmatpush.bf16.msra.mxu0 0
      %1013 = vmatpush.bf16.msra.mxu0 0
      %1014 = vmatpush.bf16.msra.mxu0 0
      %1015 = vmatpush.bf16.msra.mxu0 %v925
      %1016 = vmatmul.bf16.gmra.mxu0 %v904
      %v1017 = vpop.f32.mrf.mxu0
      %v1018 = vadd.f32 0.0, %v1017
      %v1019 = vpop.f32.mrf.mxu0
      %1020 = vdwg.mxu0
      %1021 = vmatpush.bf16.msra.mxu0 0
      %1022 = vmatpush.bf16.msra.mxu0 0
      %1023 = vmatpush.bf16.msra.mxu0 0
      %1024 = vmatpush.bf16.msra.mxu0 0
      %1025 = vmatpush.bf16.msra.mxu0 0
      %1026 = vmatpush.bf16.msra.mxu0 0
      %1027 = vmatpush.bf16.msra.mxu0 0
      %1028 = vmatpush.bf16.msra.mxu0 %v928
      %1029 = vmatmul.bf16.gmra.mxu0 %v904
      %v1030 = vpop.f32.mrf.mxu0
      %v1031 = vadd.f32 0.0, %v1030
      %v1032 = vpop.f32.mrf.mxu0
      %1033 = vdwg.mxu0
      %v1034 = vadd.f32 %v844, %v940
      %v1035 = vadd.f32 %v845, %v953
      %v1036 = vadd.f32 %v846, %v966
      %v1037 = vadd.f32 %v847, %v979
      %v1038 = vadd.f32 %v848, %v992
      %v1039 = vadd.f32 %v849, %v1005
      %v1040 = vadd.f32 %v850, %v1018
      %v1041 = vadd.f32 %v851, %v1031
      %v1043 = vsel %vm379, %v230, 0
      %v1046 = vand.u32 %v335, %v386
      %v1049 = vand.u32 %v336, %v386
      %v1052 = vand.u32 %v337, %v386
      %v1055 = vand.u32 %v338, %v386
      %v1058 = vand.u32 %v339, %v386
      %v1061 = vand.u32 %v340, %v386
      %v1064 = vand.u32 %v341, %v386
      %v1067 = vand.u32 %v342, %v386
      %1069 = vmatpush.bf16.msra.mxu0 0
      %1070 = vmatpush.bf16.msra.mxu0 0
      %1071 = vmatpush.bf16.msra.mxu0 0
      %1072 = vmatpush.bf16.msra.mxu0 0
      %1073 = vmatpush.bf16.msra.mxu0 0
      %1074 = vmatpush.bf16.msra.mxu0 0
      %1075 = vmatpush.bf16.msra.mxu0 0
      %1076 = vmatpush.bf16.msra.mxu0 %v1046
      %1077 = vmatmul.bf16.gmra.mxu0 %v1043
      %v1078 = vpop.f32.mrf.mxu0
      %v1079 = vadd.f32 0.0, %v1078
      %v1080 = vpop.f32.mrf.mxu0
      %1081 = vdwg.mxu0
      %1082 = vmatpush.bf16.msra.mxu0 0
      %1083 = vmatpush.bf16.msra.mxu0 0
      %1084 = vmatpush.bf16.msra.mxu0 0
      %1085 = vmatpush.bf16.msra.mxu0 0
      %1086 = vmatpush.bf16.msra.mxu0 0
      %1087 = vmatpush.bf16.msra.mxu0 0
      %1088 = vmatpush.bf16.msra.mxu0 0
      %1089 = vmatpush.bf16.msra.mxu0 %v1049
      %1090 = vmatmul.bf16.gmra.mxu0 %v1043
      %v1091 = vpop.f32.mrf.mxu0
      %v1092 = vadd.f32 0.0, %v1091
      %v1093 = vpop.f32.mrf.mxu0
      %1094 = vdwg.mxu0
      %1095 = vmatpush.bf16.msra.mxu0 0
      %1096 = vmatpush.bf16.msra.mxu0 0
      %1097 = vmatpush.bf16.msra.mxu0 0
      %1098 = vmatpush.bf16.msra.mxu0 0
      %1099 = vmatpush.bf16.msra.mxu0 0
      %1100 = vmatpush.bf16.msra.mxu0 0
      %1101 = vmatpush.bf16.msra.mxu0 0
      %1102 = vmatpush.bf16.msra.mxu0 %v1052
      %1103 = vmatmul.bf16.gmra.mxu0 %v1043
      %v1104 = vpop.f32.mrf.mxu0
      %v1105 = vadd.f32 0.0, %v1104
      %v1106 = vpop.f32.mrf.mxu0
      %1107 = vdwg.mxu0
      %1108 = vmatpush.bf16.msra.mxu0 0
      %1109 = vmatpush.bf16.msra.mxu0 0
      %1110 = vmatpush.bf16.msra.mxu0 0
      %1111 = vmatpush.bf16.msra.mxu0 0
      %1112 = vmatpush.bf16.msra.mxu0 0
      %1113 = vmatpush.bf16.msra.mxu0 0
      %1114 = vmatpush.bf16.msra.mxu0 0
      %1115 = vmatpush.bf16.msra.mxu0 %v1055
      %1116 = vmatmul.bf16.gmra.mxu0 %v1043
      %v1117 = vpop.f32.mrf.mxu0
      %v1118 = vadd.f32 0.0, %v1117
      %v1119 = vpop.f32.mrf.mxu0
      %1120 = vdwg.mxu0
      %1121 = vmatpush.bf16.msra.mxu0 0
      %1122 = vmatpush.bf16.msra.mxu0 0
      %1123 = vmatpush.bf16.msra.mxu0 0
      %1124 = vmatpush.bf16.msra.mxu0 0
      %1125 = vmatpush.bf16.msra.mxu0 0
      %1126 = vmatpush.bf16.msra.mxu0 0
      %1127 = vmatpush.bf16.msra.mxu0 0
      %1128 = vmatpush.bf16.msra.mxu0 %v1058
      %1129 = vmatmul.bf16.gmra.mxu0 %v1043
      %v1130 = vpop.f32.mrf.mxu0
      %v1131 = vadd.f32 0.0, %v1130
      %v1132 = vpop.f32.mrf.mxu0
      %1133 = vdwg.mxu0
      %1134 = vmatpush.bf16.msra.mxu0 0
      %1135 = vmatpush.bf16.msra.mxu0 0
      %1136 = vmatpush.bf16.msra.mxu0 0
      %1137 = vmatpush.bf16.msra.mxu0 0
      %1138 = vmatpush.bf16.msra.mxu0 0
      %1139 = vmatpush.bf16.msra.mxu0 0
      %1140 = vmatpush.bf16.msra.mxu0 0
      %1141 = vmatpush.bf16.msra.mxu0 %v1061
      %1142 = vmatmul.bf16.gmra.mxu0 %v1043
      %v1143 = vpop.f32.mrf.mxu0
      %v1144 = vadd.f32 0.0, %v1143
      %v1145 = vpop.f32.mrf.mxu0
      %1146 = vdwg.mxu0
      %1147 = vmatpush.bf16.msra.mxu0 0
      %1148 = vmatpush.bf16.msra.mxu0 0
      %1149 = vmatpush.bf16.msra.mxu0 0
      %1150 = vmatpush.bf16.msra.mxu0 0
      %1151 = vmatpush.bf16.msra.mxu0 0
      %1152 = vmatpush.bf16.msra.mxu0 0
      %1153 = vmatpush.bf16.msra.mxu0 0
      %1154 = vmatpush.bf16.msra.mxu0 %v1064
      %1155 = vmatmul.bf16.gmra.mxu0 %v1043
      %v1156 = vpop.f32.mrf.mxu0
      %v1157 = vadd.f32 0.0, %v1156
      %v1158 = vpop.f32.mrf.mxu0
      %1159 = vdwg.mxu0
      %1160 = vmatpush.bf16.msra.mxu0 0
      %1161 = vmatpush.bf16.msra.mxu0 0
      %1162 = vmatpush.bf16.msra.mxu0 0
      %1163 = vmatpush.bf16.msra.mxu0 0
      %1164 = vmatpush.bf16.msra.mxu0 0
      %1165 = vmatpush.bf16.msra.mxu0 0
      %1166 = vmatpush.bf16.msra.mxu0 0
      %1167 = vmatpush.bf16.msra.mxu0 %v1067
      %1168 = vmatmul.bf16.gmra.mxu0 %v1043
      %v1169 = vpop.f32.mrf.mxu0
      %v1170 = vadd.f32 0.0, %v1169
      %v1171 = vpop.f32.mrf.mxu0
      %1172 = vdwg.mxu0
      %v1173 = vadd.f32 %v1034, %v1079
      %v1174 = vadd.f32 %v1035, %v1092
      %v1175 = vadd.f32 %v1036, %v1105
      %v1176 = vadd.f32 %v1037, %v1118
      %v1177 = vadd.f32 %v1038, %v1131
      %v1178 = vadd.f32 %v1039, %v1144
      %v1179 = vadd.f32 %v1040, %v1157
      %v1180 = vadd.f32 %v1041, %v1170
      %1181 = vrot.lane.b32.xlu0 %v250, 127
      %v1182 = vpop.permute.xlu0 %1181
      %1183 = vrot.lane.b32.xlu0 %v251, 127
      %v1184 = vpop.permute.xlu0 %1183
      %1185 = vrot.lane.b32.xlu0 %v252, 127
      %v1186 = vpop.permute.xlu0 %1185
      %1187 = vrot.lane.b32.xlu0 %v253, 127
      %v1188 = vpop.permute.xlu0 %1187
      %1189 = vrot.lane.b32.xlu0 %v254, 127
      %v1190 = vpop.permute.xlu0 %1189
      %1191 = vrot.lane.b32.xlu0 %v255, 127
      %v1192 = vpop.permute.xlu0 %1191
      %1193 = vrot.lane.b32.xlu0 %v256, 127
      %v1194 = vpop.permute.xlu0 %1193
      %1195 = vrot.lane.b32.xlu0 %v257, 127
      %v1196 = vpop.permute.xlu0 %1195
      %1197 = vrot.lane.b32.xlu0 0.0, 127
      %v1198 = vpop.permute.xlu0 %1197
      %vm1199 = vcmask 1039360
      %v1200 = vsel %vm1199, %v1182, %v1184
      %v1201 = vsel %vm1199, %v1184, %v1186
      %v1202 = vsel %vm1199, %v1186, %v1188
      %v1203 = vsel %vm1199, %v1188, %v1190
      %v1204 = vsel %vm1199, %v1190, %v1192
      %v1205 = vsel %vm1199, %v1192, %v1194
      %v1206 = vsel %vm1199, %v1194, %v1196
      %v1207 = vsel %vm1199, %v1196, %v1198
      %v1216 = vsel %vm654, %v1200, 0.0
      %v1217 = vsel %vm655, %v1201, 0.0
      %v1218 = vsel %vm656, %v1202, 0.0
      %v1219 = vsel %vm657, %v1203, 0.0
      %v1220 = vsel %vm658, %v1204, 0.0
      %v1221 = vsel %vm659, %v1205, 0.0
      %v1222 = vsel %vm660, %v1206, 0.0
      %v1223 = vsel %vm661, %v1207, 0.0
      %v1224 = vpack.c.bf16 %v1216, %v1216
      %v1225 = vpack.c.bf16 %v1217, %v1217
      %v1226 = vpack.c.bf16 %v1218, %v1218
      %v1227 = vpack.c.bf16 %v1219, %v1219
      %v1228 = vpack.c.bf16 %v1220, %v1220
      %v1229 = vpack.c.bf16 %v1221, %v1221
      %v1230 = vpack.c.bf16 %v1222, %v1222
      %v1231 = vpack.c.bf16 %v1223, %v1223
      %v1233 = vsel %vm379, %v231, 0
      %v1236 = vand.u32 %v1224, %v386
      %v1239 = vand.u32 %v1225, %v386
      %v1242 = vand.u32 %v1226, %v386
      %v1245 = vand.u32 %v1227, %v386
      %v1248 = vand.u32 %v1228, %v386
      %v1251 = vand.u32 %v1229, %v386
      %v1254 = vand.u32 %v1230, %v386
      %v1257 = vand.u32 %v1231, %v386
      %1259 = vmatpush.bf16.msra.mxu0 0
      %1260 = vmatpush.bf16.msra.mxu0 0
      %1261 = vmatpush.bf16.msra.mxu0 0
      %1262 = vmatpush.bf16.msra.mxu0 0
      %1263 = vmatpush.bf16.msra.mxu0 0
      %1264 = vmatpush.bf16.msra.mxu0 0
      %1265 = vmatpush.bf16.msra.mxu0 0
      %1266 = vmatpush.bf16.msra.mxu0 %v1236
      %1267 = vmatmul.bf16.gmra.mxu0 %v1233
      %v1268 = vpop.f32.mrf.mxu0
      %v1269 = vadd.f32 0.0, %v1268
      %v1270 = vpop.f32.mrf.mxu0
      %1271 = vdwg.mxu0
      %1272 = vmatpush.bf16.msra.mxu0 0
      %1273 = vmatpush.bf16.msra.mxu0 0
      %1274 = vmatpush.bf16.msra.mxu0 0
      %1275 = vmatpush.bf16.msra.mxu0 0
      %1276 = vmatpush.bf16.msra.mxu0 0
      %1277 = vmatpush.bf16.msra.mxu0 0
      %1278 = vmatpush.bf16.msra.mxu0 0
      %1279 = vmatpush.bf16.msra.mxu0 %v1239
      %1280 = vmatmul.bf16.gmra.mxu0 %v1233
      %v1281 = vpop.f32.mrf.mxu0
      %v1282 = vadd.f32 0.0, %v1281
      %v1283 = vpop.f32.mrf.mxu0
      %1284 = vdwg.mxu0
      %1285 = vmatpush.bf16.msra.mxu0 0
      %1286 = vmatpush.bf16.msra.mxu0 0
      %1287 = vmatpush.bf16.msra.mxu0 0
      %1288 = vmatpush.bf16.msra.mxu0 0
      %1289 = vmatpush.bf16.msra.mxu0 0
      %1290 = vmatpush.bf16.msra.mxu0 0
      %1291 = vmatpush.bf16.msra.mxu0 0
      %1292 = vmatpush.bf16.msra.mxu0 %v1242
      %1293 = vmatmul.bf16.gmra.mxu0 %v1233
      %v1294 = vpop.f32.mrf.mxu0
      %v1295 = vadd.f32 0.0, %v1294
      %v1296 = vpop.f32.mrf.mxu0
      %1297 = vdwg.mxu0
      %1298 = vmatpush.bf16.msra.mxu0 0
      %1299 = vmatpush.bf16.msra.mxu0 0
      %1300 = vmatpush.bf16.msra.mxu0 0
      %1301 = vmatpush.bf16.msra.mxu0 0
      %1302 = vmatpush.bf16.msra.mxu0 0
      %1303 = vmatpush.bf16.msra.mxu0 0
      %1304 = vmatpush.bf16.msra.mxu0 0
      %1305 = vmatpush.bf16.msra.mxu0 %v1245
      %1306 = vmatmul.bf16.gmra.mxu0 %v1233
      %v1307 = vpop.f32.mrf.mxu0
      %v1308 = vadd.f32 0.0, %v1307
      %v1309 = vpop.f32.mrf.mxu0
      %1310 = vdwg.mxu0
      %1311 = vmatpush.bf16.msra.mxu0 0
      %1312 = vmatpush.bf16.msra.mxu0 0
      %1313 = vmatpush.bf16.msra.mxu0 0
      %1314 = vmatpush.bf16.msra.mxu0 0
      %1315 = vmatpush.bf16.msra.mxu0 0
      %1316 = vmatpush.bf16.msra.mxu0 0
      %1317 = vmatpush.bf16.msra.mxu0 0
      %1318 = vmatpush.bf16.msra.mxu0 %v1248
      %1319 = vmatmul.bf16.gmra.mxu0 %v1233
      %v1320 = vpop.f32.mrf.mxu0
      %v1321 = vadd.f32 0.0, %v1320
      %v1322 = vpop.f32.mrf.mxu0
      %1323 = vdwg.mxu0
      %1324 = vmatpush.bf16.msra.mxu0 0
      %1325 = vmatpush.bf16.msra.mxu0 0
      %1326 = vmatpush.bf16.msra.mxu0 0
      %1327 = vmatpush.bf16.msra.mxu0 0
      %1328 = vmatpush.bf16.msra.mxu0 0
      %1329 = vmatpush.bf16.msra.mxu0 0
      %1330 = vmatpush.bf16.msra.mxu0 0
      %1331 = vmatpush.bf16.msra.mxu0 %v1251
      %1332 = vmatmul.bf16.gmra.mxu0 %v1233
      %v1333 = vpop.f32.mrf.mxu0
      %v1334 = vadd.f32 0.0, %v1333
      %v1335 = vpop.f32.mrf.mxu0
      %1336 = vdwg.mxu0
      %1337 = vmatpush.bf16.msra.mxu0 0
      %1338 = vmatpush.bf16.msra.mxu0 0
      %1339 = vmatpush.bf16.msra.mxu0 0
      %1340 = vmatpush.bf16.msra.mxu0 0
      %1341 = vmatpush.bf16.msra.mxu0 0
      %1342 = vmatpush.bf16.msra.mxu0 0
      %1343 = vmatpush.bf16.msra.mxu0 0
      %1344 = vmatpush.bf16.msra.mxu0 %v1254
      %1345 = vmatmul.bf16.gmra.mxu0 %v1233
      %v1346 = vpop.f32.mrf.mxu0
      %v1347 = vadd.f32 0.0, %v1346
      %v1348 = vpop.f32.mrf.mxu0
      %1349 = vdwg.mxu0
      %1350 = vmatpush.bf16.msra.mxu0 0
      %1351 = vmatpush.bf16.msra.mxu0 0
      %1352 = vmatpush.bf16.msra.mxu0 0
      %1353 = vmatpush.bf16.msra.mxu0 0
      %1354 = vmatpush.bf16.msra.mxu0 0
      %1355 = vmatpush.bf16.msra.mxu0 0
      %1356 = vmatpush.bf16.msra.mxu0 0
      %1357 = vmatpush.bf16.msra.mxu0 %v1257
      %1358 = vmatmul.bf16.gmra.mxu0 %v1233
      %v1359 = vpop.f32.mrf.mxu0
      %v1360 = vadd.f32 0.0, %v1359
      %v1361 = vpop.f32.mrf.mxu0
      %1362 = vdwg.mxu0
      %v1363 = vadd.f32 %v1173, %v1269
      %v1364 = vadd.f32 %v1174, %v1282
      %v1365 = vadd.f32 %v1175, %v1295
      %v1366 = vadd.f32 %v1176, %v1308
      %v1367 = vadd.f32 %v1177, %v1321
      %v1368 = vadd.f32 %v1178, %v1334
      %v1369 = vadd.f32 %v1179, %v1347
      %v1370 = vadd.f32 %v1180, %v1360
      %1371 = vrot.lane.b32.xlu0 %v250, 97
      %v1372 = vpop.permute.xlu0 %1371
      %1373 = vrot.lane.b32.xlu0 %v251, 97
      %v1374 = vpop.permute.xlu0 %1373
      %1375 = vrot.lane.b32.xlu0 %v252, 97
      %v1376 = vpop.permute.xlu0 %1375
      %1377 = vrot.lane.b32.xlu0 %v253, 97
      %v1378 = vpop.permute.xlu0 %1377
      %1379 = vrot.lane.b32.xlu0 %v254, 97
      %v1380 = vpop.permute.xlu0 %1379
      %1381 = vrot.lane.b32.xlu0 %v255, 97
      %v1382 = vpop.permute.xlu0 %1381
      %1383 = vrot.lane.b32.xlu0 %v256, 97
      %v1384 = vpop.permute.xlu0 %1383
      %1385 = vrot.lane.b32.xlu0 %v257, 97
      %v1386 = vpop.permute.xlu0 %1385
      %1387 = vrot.lane.b32.xlu0 0.0, 97
      %v1388 = vpop.permute.xlu0 %1387
      %vm1389 = vcmask 793600
      %v1390 = vsel %vm1389, %v1372, %v1374
      %v1391 = vsel %vm1389, %v1374, %v1376
      %v1392 = vsel %vm1389, %v1376, %v1378
      %v1393 = vsel %vm1389, %v1378, %v1380
      %v1394 = vsel %vm1389, %v1380, %v1382
      %v1395 = vsel %vm1389, %v1382, %v1384
      %v1396 = vsel %vm1389, %v1384, %v1386
      %v1397 = vsel %vm1389, %v1386, %v1388
      %v1406 = vsel %vm274, %v1390, 0.0
      %v1407 = vsel %vm275, %v1391, 0.0
      %v1408 = vsel %vm276, %v1392, 0.0
      %v1409 = vsel %vm277, %v1393, 0.0
      %v1410 = vsel %vm278, %v1394, 0.0
      %v1411 = vsel %vm279, %v1395, 0.0
      %v1412 = vsel %vm280, %v1396, 0.0
      %v1413 = vsel %vm281, %v1397, 0.0
      %v1414 = vpack.c.bf16 %v1406, %v1406
      %v1415 = vpack.c.bf16 %v1407, %v1407
      %v1416 = vpack.c.bf16 %v1408, %v1408
      %v1417 = vpack.c.bf16 %v1409, %v1409
      %v1418 = vpack.c.bf16 %v1410, %v1410
      %v1419 = vpack.c.bf16 %v1411, %v1411
      %v1420 = vpack.c.bf16 %v1412, %v1412
      %v1421 = vpack.c.bf16 %v1413, %v1413
      %v1423 = vsel %vm379, %v232, 0
      %v1426 = vand.u32 %v1414, %v386
      %v1429 = vand.u32 %v1415, %v386
      %v1432 = vand.u32 %v1416, %v386
      %v1435 = vand.u32 %v1417, %v386
      %v1438 = vand.u32 %v1418, %v386
      %v1441 = vand.u32 %v1419, %v386
      %v1444 = vand.u32 %v1420, %v386
      %v1447 = vand.u32 %v1421, %v386
      %1449 = vmatpush.bf16.msra.mxu0 0
      %1450 = vmatpush.bf16.msra.mxu0 0
      %1451 = vmatpush.bf16.msra.mxu0 0
      %1452 = vmatpush.bf16.msra.mxu0 0
      %1453 = vmatpush.bf16.msra.mxu0 0
      %1454 = vmatpush.bf16.msra.mxu0 0
      %1455 = vmatpush.bf16.msra.mxu0 0
      %1456 = vmatpush.bf16.msra.mxu0 %v1426
      %1457 = vmatmul.bf16.gmra.mxu0 %v1423
      %v1458 = vpop.f32.mrf.mxu0
      %v1459 = vadd.f32 0.0, %v1458
      %v1460 = vpop.f32.mrf.mxu0
      %1461 = vdwg.mxu0
      %1462 = vmatpush.bf16.msra.mxu0 0
      %1463 = vmatpush.bf16.msra.mxu0 0
      %1464 = vmatpush.bf16.msra.mxu0 0
      %1465 = vmatpush.bf16.msra.mxu0 0
      %1466 = vmatpush.bf16.msra.mxu0 0
      %1467 = vmatpush.bf16.msra.mxu0 0
      %1468 = vmatpush.bf16.msra.mxu0 0
      %1469 = vmatpush.bf16.msra.mxu0 %v1429
      %1470 = vmatmul.bf16.gmra.mxu0 %v1423
      %v1471 = vpop.f32.mrf.mxu0
      %v1472 = vadd.f32 0.0, %v1471
      %v1473 = vpop.f32.mrf.mxu0
      %1474 = vdwg.mxu0
      %1475 = vmatpush.bf16.msra.mxu0 0
      %1476 = vmatpush.bf16.msra.mxu0 0
      %1477 = vmatpush.bf16.msra.mxu0 0
      %1478 = vmatpush.bf16.msra.mxu0 0
      %1479 = vmatpush.bf16.msra.mxu0 0
      %1480 = vmatpush.bf16.msra.mxu0 0
      %1481 = vmatpush.bf16.msra.mxu0 0
      %1482 = vmatpush.bf16.msra.mxu0 %v1432
      %1483 = vmatmul.bf16.gmra.mxu0 %v1423
      %v1484 = vpop.f32.mrf.mxu0
      %v1485 = vadd.f32 0.0, %v1484
      %v1486 = vpop.f32.mrf.mxu0
      %1487 = vdwg.mxu0
      %1488 = vmatpush.bf16.msra.mxu0 0
      %1489 = vmatpush.bf16.msra.mxu0 0
      %1490 = vmatpush.bf16.msra.mxu0 0
      %1491 = vmatpush.bf16.msra.mxu0 0
      %1492 = vmatpush.bf16.msra.mxu0 0
      %1493 = vmatpush.bf16.msra.mxu0 0
      %1494 = vmatpush.bf16.msra.mxu0 0
      %1495 = vmatpush.bf16.msra.mxu0 %v1435
      %1496 = vmatmul.bf16.gmra.mxu0 %v1423
      %v1497 = vpop.f32.mrf.mxu0
      %v1498 = vadd.f32 0.0, %v1497
      %v1499 = vpop.f32.mrf.mxu0
      %1500 = vdwg.mxu0
      %1501 = vmatpush.bf16.msra.mxu0 0
      %1502 = vmatpush.bf16.msra.mxu0 0
      %1503 = vmatpush.bf16.msra.mxu0 0
      %1504 = vmatpush.bf16.msra.mxu0 0
      %1505 = vmatpush.bf16.msra.mxu0 0
      %1506 = vmatpush.bf16.msra.mxu0 0
      %1507 = vmatpush.bf16.msra.mxu0 0
      %1508 = vmatpush.bf16.msra.mxu0 %v1438
      %1509 = vmatmul.bf16.gmra.mxu0 %v1423
      %v1510 = vpop.f32.mrf.mxu0
      %v1511 = vadd.f32 0.0, %v1510
      %v1512 = vpop.f32.mrf.mxu0
      %1513 = vdwg.mxu0
      %1514 = vmatpush.bf16.msra.mxu0 0
      %1515 = vmatpush.bf16.msra.mxu0 0
      %1516 = vmatpush.bf16.msra.mxu0 0
      %1517 = vmatpush.bf16.msra.mxu0 0
      %1518 = vmatpush.bf16.msra.mxu0 0
      %1519 = vmatpush.bf16.msra.mxu0 0
      %1520 = vmatpush.bf16.msra.mxu0 0
      %1521 = vmatpush.bf16.msra.mxu0 %v1441
      %1522 = vmatmul.bf16.gmra.mxu0 %v1423
      %v1523 = vpop.f32.mrf.mxu0
      %v1524 = vadd.f32 0.0, %v1523
      %v1525 = vpop.f32.mrf.mxu0
      %1526 = vdwg.mxu0
      %1527 = vmatpush.bf16.msra.mxu0 0
      %1528 = vmatpush.bf16.msra.mxu0 0
      %1529 = vmatpush.bf16.msra.mxu0 0
      %1530 = vmatpush.bf16.msra.mxu0 0
      %1531 = vmatpush.bf16.msra.mxu0 0
      %1532 = vmatpush.bf16.msra.mxu0 0
      %1533 = vmatpush.bf16.msra.mxu0 0
      %1534 = vmatpush.bf16.msra.mxu0 %v1444
      %1535 = vmatmul.bf16.gmra.mxu0 %v1423
      %v1536 = vpop.f32.mrf.mxu0
      %v1537 = vadd.f32 0.0, %v1536
      %v1538 = vpop.f32.mrf.mxu0
      %1539 = vdwg.mxu0
      %1540 = vmatpush.bf16.msra.mxu0 0
      %1541 = vmatpush.bf16.msra.mxu0 0
      %1542 = vmatpush.bf16.msra.mxu0 0
      %1543 = vmatpush.bf16.msra.mxu0 0
      %1544 = vmatpush.bf16.msra.mxu0 0
      %1545 = vmatpush.bf16.msra.mxu0 0
      %1546 = vmatpush.bf16.msra.mxu0 0
      %1547 = vmatpush.bf16.msra.mxu0 %v1447
      %1548 = vmatmul.bf16.gmra.mxu0 %v1423
      %v1549 = vpop.f32.mrf.mxu0
      %v1550 = vadd.f32 0.0, %v1549
      %v1551 = vpop.f32.mrf.mxu0
      %1552 = vdwg.mxu0
      %v1553 = vadd.f32 %v1363, %v1459
      %v1554 = vadd.f32 %v1364, %v1472
      %v1555 = vadd.f32 %v1365, %v1485
      %v1556 = vadd.f32 %v1366, %v1498
      %v1557 = vadd.f32 %v1367, %v1511
      %v1558 = vadd.f32 %v1368, %v1524
      %v1559 = vadd.f32 %v1369, %v1537
      %v1560 = vadd.f32 %v1370, %v1550
      %1561 = vrot.lane.b32.xlu0 %v335, 96
      %v1562 = vpop.permute.xlu0 %1561
      %1563 = vrot.lane.b32.xlu0 %v336, 96
      %v1564 = vpop.permute.xlu0 %1563
      %1565 = vrot.lane.b32.xlu0 %v337, 96
      %v1566 = vpop.permute.xlu0 %1565
      %1567 = vrot.lane.b32.xlu0 %v338, 96
      %v1568 = vpop.permute.xlu0 %1567
      %1569 = vrot.lane.b32.xlu0 %v339, 96
      %v1570 = vpop.permute.xlu0 %1569
      %1571 = vrot.lane.b32.xlu0 %v340, 96
      %v1572 = vpop.permute.xlu0 %1571
      %1573 = vrot.lane.b32.xlu0 %v341, 96
      %v1574 = vpop.permute.xlu0 %1573
      %1575 = vrot.lane.b32.xlu0 %v342, 96
      %v1576 = vpop.permute.xlu0 %1575
      %1577 = vrot.lane.b32.xlu0 %v334, 96
      %v1578 = vpop.permute.xlu0 %1577
      %vm1579 = vcmask 785408
      %v1580 = vsel %vm1579, %v1562, %v1564
      %v1581 = vsel %vm1579, %v1564, %v1566
      %v1582 = vsel %vm1579, %v1566, %v1568
      %v1583 = vsel %vm1579, %v1568, %v1570
      %v1584 = vsel %vm1579, %v1570, %v1572
      %v1585 = vsel %vm1579, %v1572, %v1574
      %v1586 = vsel %vm1579, %v1574, %v1576
      %v1587 = vsel %vm1579, %v1576, %v1578
      %v1589 = vsel %vm379, %v233, 0
      %v1592 = vand.u32 %v1580, %v386
      %v1595 = vand.u32 %v1581, %v386
      %v1598 = vand.u32 %v1582, %v386
      %v1601 = vand.u32 %v1583, %v386
      %v1604 = vand.u32 %v1584, %v386
      %v1607 = vand.u32 %v1585, %v386
      %v1610 = vand.u32 %v1586, %v386
      %v1613 = vand.u32 %v1587, %v386
      %1615 = vmatpush.bf16.msra.mxu0 0
      %1616 = vmatpush.bf16.msra.mxu0 0
      %1617 = vmatpush.bf16.msra.mxu0 0
      %1618 = vmatpush.bf16.msra.mxu0 0
      %1619 = vmatpush.bf16.msra.mxu0 0
      %1620 = vmatpush.bf16.msra.mxu0 0
      %1621 = vmatpush.bf16.msra.mxu0 0
      %1622 = vmatpush.bf16.msra.mxu0 %v1592
      %1623 = vmatmul.bf16.gmra.mxu0 %v1589
      %v1624 = vpop.f32.mrf.mxu0
      %v1625 = vadd.f32 0.0, %v1624
      %v1626 = vpop.f32.mrf.mxu0
      %1627 = vdwg.mxu0
      %1628 = vmatpush.bf16.msra.mxu0 0
      %1629 = vmatpush.bf16.msra.mxu0 0
      %1630 = vmatpush.bf16.msra.mxu0 0
      %1631 = vmatpush.bf16.msra.mxu0 0
      %1632 = vmatpush.bf16.msra.mxu0 0
      %1633 = vmatpush.bf16.msra.mxu0 0
      %1634 = vmatpush.bf16.msra.mxu0 0
      %1635 = vmatpush.bf16.msra.mxu0 %v1595
      %1636 = vmatmul.bf16.gmra.mxu0 %v1589
      %v1637 = vpop.f32.mrf.mxu0
      %v1638 = vadd.f32 0.0, %v1637
      %v1639 = vpop.f32.mrf.mxu0
      %1640 = vdwg.mxu0
      %1641 = vmatpush.bf16.msra.mxu0 0
      %1642 = vmatpush.bf16.msra.mxu0 0
      %1643 = vmatpush.bf16.msra.mxu0 0
      %1644 = vmatpush.bf16.msra.mxu0 0
      %1645 = vmatpush.bf16.msra.mxu0 0
      %1646 = vmatpush.bf16.msra.mxu0 0
      %1647 = vmatpush.bf16.msra.mxu0 0
      %1648 = vmatpush.bf16.msra.mxu0 %v1598
      %1649 = vmatmul.bf16.gmra.mxu0 %v1589
      %v1650 = vpop.f32.mrf.mxu0
      %v1651 = vadd.f32 0.0, %v1650
      %v1652 = vpop.f32.mrf.mxu0
      %1653 = vdwg.mxu0
      %1654 = vmatpush.bf16.msra.mxu0 0
      %1655 = vmatpush.bf16.msra.mxu0 0
      %1656 = vmatpush.bf16.msra.mxu0 0
      %1657 = vmatpush.bf16.msra.mxu0 0
      %1658 = vmatpush.bf16.msra.mxu0 0
      %1659 = vmatpush.bf16.msra.mxu0 0
      %1660 = vmatpush.bf16.msra.mxu0 0
      %1661 = vmatpush.bf16.msra.mxu0 %v1601
      %1662 = vmatmul.bf16.gmra.mxu0 %v1589
      %v1663 = vpop.f32.mrf.mxu0
      %v1664 = vadd.f32 0.0, %v1663
      %v1665 = vpop.f32.mrf.mxu0
      %1666 = vdwg.mxu0
      %1667 = vmatpush.bf16.msra.mxu0 0
      %1668 = vmatpush.bf16.msra.mxu0 0
      %1669 = vmatpush.bf16.msra.mxu0 0
      %1670 = vmatpush.bf16.msra.mxu0 0
      %1671 = vmatpush.bf16.msra.mxu0 0
      %1672 = vmatpush.bf16.msra.mxu0 0
      %1673 = vmatpush.bf16.msra.mxu0 0
      %1674 = vmatpush.bf16.msra.mxu0 %v1604
      %1675 = vmatmul.bf16.gmra.mxu0 %v1589
      %v1676 = vpop.f32.mrf.mxu0
      %v1677 = vadd.f32 0.0, %v1676
      %v1678 = vpop.f32.mrf.mxu0
      %1679 = vdwg.mxu0
      %1680 = vmatpush.bf16.msra.mxu0 0
      %1681 = vmatpush.bf16.msra.mxu0 0
      %1682 = vmatpush.bf16.msra.mxu0 0
      %1683 = vmatpush.bf16.msra.mxu0 0
      %1684 = vmatpush.bf16.msra.mxu0 0
      %1685 = vmatpush.bf16.msra.mxu0 0
      %1686 = vmatpush.bf16.msra.mxu0 0
      %1687 = vmatpush.bf16.msra.mxu0 %v1607
      %1688 = vmatmul.bf16.gmra.mxu0 %v1589
      %v1689 = vpop.f32.mrf.mxu0
      %v1690 = vadd.f32 0.0, %v1689
      %v1691 = vpop.f32.mrf.mxu0
      %1692 = vdwg.mxu0
      %1693 = vmatpush.bf16.msra.mxu0 0
      %1694 = vmatpush.bf16.msra.mxu0 0
      %1695 = vmatpush.bf16.msra.mxu0 0
      %1696 = vmatpush.bf16.msra.mxu0 0
      %1697 = vmatpush.bf16.msra.mxu0 0
      %1698 = vmatpush.bf16.msra.mxu0 0
      %1699 = vmatpush.bf16.msra.mxu0 0
      %1700 = vmatpush.bf16.msra.mxu0 %v1610
      %1701 = vmatmul.bf16.gmra.mxu0 %v1589
      %v1702 = vpop.f32.mrf.mxu0
      %v1703 = vadd.f32 0.0, %v1702
      %v1704 = vpop.f32.mrf.mxu0
      %1705 = vdwg.mxu0
      %1706 = vmatpush.bf16.msra.mxu0 0
      %1707 = vmatpush.bf16.msra.mxu0 0
      %1708 = vmatpush.bf16.msra.mxu0 0
      %1709 = vmatpush.bf16.msra.mxu0 0
      %1710 = vmatpush.bf16.msra.mxu0 0
      %1711 = vmatpush.bf16.msra.mxu0 0
      %1712 = vmatpush.bf16.msra.mxu0 0
      %1713 = vmatpush.bf16.msra.mxu0 %v1613
      %1714 = vmatmul.bf16.gmra.mxu0 %v1589
      %v1715 = vpop.f32.mrf.mxu0
      %v1716 = vadd.f32 0.0, %v1715
      %v1717 = vpop.f32.mrf.mxu0
      %1718 = vdwg.mxu0
      %v1719 = vadd.f32 %v1553, %v1625
      %v1720 = vadd.f32 %v1554, %v1638
      %v1721 = vadd.f32 %v1555, %v1651
      %v1722 = vadd.f32 %v1556, %v1664
      %v1723 = vadd.f32 %v1557, %v1677
      %v1724 = vadd.f32 %v1558, %v1690
      %v1725 = vadd.f32 %v1559, %v1703
      %v1726 = vadd.f32 %v1560, %v1716
      %1727 = vrot.lane.b32.xlu0 %v250, 95
      %v1728 = vpop.permute.xlu0 %1727
      %1729 = vrot.lane.b32.xlu0 %v251, 95
      %v1730 = vpop.permute.xlu0 %1729
      %1731 = vrot.lane.b32.xlu0 %v252, 95
      %v1732 = vpop.permute.xlu0 %1731
      %1733 = vrot.lane.b32.xlu0 %v253, 95
      %v1734 = vpop.permute.xlu0 %1733
      %1735 = vrot.lane.b32.xlu0 %v254, 95
      %v1736 = vpop.permute.xlu0 %1735
      %1737 = vrot.lane.b32.xlu0 %v255, 95
      %v1738 = vpop.permute.xlu0 %1737
      %1739 = vrot.lane.b32.xlu0 %v256, 95
      %v1740 = vpop.permute.xlu0 %1739
      %1741 = vrot.lane.b32.xlu0 %v257, 95
      %v1742 = vpop.permute.xlu0 %1741
      %1743 = vrot.lane.b32.xlu0 0.0, 95
      %v1744 = vpop.permute.xlu0 %1743
      %vm1745 = vcmask 777216
      %v1746 = vsel %vm1745, %v1728, %v1730
      %v1747 = vsel %vm1745, %v1730, %v1732
      %v1748 = vsel %vm1745, %v1732, %v1734
      %v1749 = vsel %vm1745, %v1734, %v1736
      %v1750 = vsel %vm1745, %v1736, %v1738
      %v1751 = vsel %vm1745, %v1738, %v1740
      %v1752 = vsel %vm1745, %v1740, %v1742
      %v1753 = vsel %vm1745, %v1742, %v1744
      %v1762 = vsel %vm654, %v1746, 0.0
      %v1763 = vsel %vm655, %v1747, 0.0
      %v1764 = vsel %vm656, %v1748, 0.0
      %v1765 = vsel %vm657, %v1749, 0.0
      %v1766 = vsel %vm658, %v1750, 0.0
      %v1767 = vsel %vm659, %v1751, 0.0
      %v1768 = vsel %vm660, %v1752, 0.0
      %v1769 = vsel %vm661, %v1753, 0.0
      %v1770 = vpack.c.bf16 %v1762, %v1762
      %v1771 = vpack.c.bf16 %v1763, %v1763
      %v1772 = vpack.c.bf16 %v1764, %v1764
      %v1773 = vpack.c.bf16 %v1765, %v1765
      %v1774 = vpack.c.bf16 %v1766, %v1766
      %v1775 = vpack.c.bf16 %v1767, %v1767
      %v1776 = vpack.c.bf16 %v1768, %v1768
      %v1777 = vpack.c.bf16 %v1769, %v1769
      %v1779 = vsel %vm379, %v234, 0
      %v1782 = vand.u32 %v1770, %v386
      %v1785 = vand.u32 %v1771, %v386
      %v1788 = vand.u32 %v1772, %v386
      %v1791 = vand.u32 %v1773, %v386
      %v1794 = vand.u32 %v1774, %v386
      %v1797 = vand.u32 %v1775, %v386
      %v1800 = vand.u32 %v1776, %v386
      %v1803 = vand.u32 %v1777, %v386
      %1805 = vmatpush.bf16.msra.mxu0 0
      %1806 = vmatpush.bf16.msra.mxu0 0
      %1807 = vmatpush.bf16.msra.mxu0 0
      %1808 = vmatpush.bf16.msra.mxu0 0
      %1809 = vmatpush.bf16.msra.mxu0 0
      %1810 = vmatpush.bf16.msra.mxu0 0
      %1811 = vmatpush.bf16.msra.mxu0 0
      %1812 = vmatpush.bf16.msra.mxu0 %v1782
      %1813 = vmatmul.bf16.gmra.mxu0 %v1779
      %v1814 = vpop.f32.mrf.mxu0
      %v1815 = vadd.f32 0.0, %v1814
      %v1816 = vpop.f32.mrf.mxu0
      %1817 = vdwg.mxu0
      %1818 = vmatpush.bf16.msra.mxu0 0
      %1819 = vmatpush.bf16.msra.mxu0 0
      %1820 = vmatpush.bf16.msra.mxu0 0
      %1821 = vmatpush.bf16.msra.mxu0 0
      %1822 = vmatpush.bf16.msra.mxu0 0
      %1823 = vmatpush.bf16.msra.mxu0 0
      %1824 = vmatpush.bf16.msra.mxu0 0
      %1825 = vmatpush.bf16.msra.mxu0 %v1785
      %1826 = vmatmul.bf16.gmra.mxu0 %v1779
      %v1827 = vpop.f32.mrf.mxu0
      %v1828 = vadd.f32 0.0, %v1827
      %v1829 = vpop.f32.mrf.mxu0
      %1830 = vdwg.mxu0
      %1831 = vmatpush.bf16.msra.mxu0 0
      %1832 = vmatpush.bf16.msra.mxu0 0
      %1833 = vmatpush.bf16.msra.mxu0 0
      %1834 = vmatpush.bf16.msra.mxu0 0
      %1835 = vmatpush.bf16.msra.mxu0 0
      %1836 = vmatpush.bf16.msra.mxu0 0
      %1837 = vmatpush.bf16.msra.mxu0 0
      %1838 = vmatpush.bf16.msra.mxu0 %v1788
      %1839 = vmatmul.bf16.gmra.mxu0 %v1779
      %v1840 = vpop.f32.mrf.mxu0
      %v1841 = vadd.f32 0.0, %v1840
      %v1842 = vpop.f32.mrf.mxu0
      %1843 = vdwg.mxu0
      %1844 = vmatpush.bf16.msra.mxu0 0
      %1845 = vmatpush.bf16.msra.mxu0 0
      %1846 = vmatpush.bf16.msra.mxu0 0
      %1847 = vmatpush.bf16.msra.mxu0 0
      %1848 = vmatpush.bf16.msra.mxu0 0
      %1849 = vmatpush.bf16.msra.mxu0 0
      %1850 = vmatpush.bf16.msra.mxu0 0
      %1851 = vmatpush.bf16.msra.mxu0 %v1791
      %1852 = vmatmul.bf16.gmra.mxu0 %v1779
      %v1853 = vpop.f32.mrf.mxu0
      %v1854 = vadd.f32 0.0, %v1853
      %v1855 = vpop.f32.mrf.mxu0
      %1856 = vdwg.mxu0
      %1857 = vmatpush.bf16.msra.mxu0 0
      %1858 = vmatpush.bf16.msra.mxu0 0
      %1859 = vmatpush.bf16.msra.mxu0 0
      %1860 = vmatpush.bf16.msra.mxu0 0
      %1861 = vmatpush.bf16.msra.mxu0 0
      %1862 = vmatpush.bf16.msra.mxu0 0
      %1863 = vmatpush.bf16.msra.mxu0 0
      %1864 = vmatpush.bf16.msra.mxu0 %v1794
      %1865 = vmatmul.bf16.gmra.mxu0 %v1779
      %v1866 = vpop.f32.mrf.mxu0
      %v1867 = vadd.f32 0.0, %v1866
      %v1868 = vpop.f32.mrf.mxu0
      %1869 = vdwg.mxu0
      %1870 = vmatpush.bf16.msra.mxu0 0
      %1871 = vmatpush.bf16.msra.mxu0 0
      %1872 = vmatpush.bf16.msra.mxu0 0
      %1873 = vmatpush.bf16.msra.mxu0 0
      %1874 = vmatpush.bf16.msra.mxu0 0
      %1875 = vmatpush.bf16.msra.mxu0 0
      %1876 = vmatpush.bf16.msra.mxu0 0
      %1877 = vmatpush.bf16.msra.mxu0 %v1797
      %1878 = vmatmul.bf16.gmra.mxu0 %v1779
      %v1879 = vpop.f32.mrf.mxu0
      %v1880 = vadd.f32 0.0, %v1879
      %v1881 = vpop.f32.mrf.mxu0
      %1882 = vdwg.mxu0
      %1883 = vmatpush.bf16.msra.mxu0 0
      %1884 = vmatpush.bf16.msra.mxu0 0
      %1885 = vmatpush.bf16.msra.mxu0 0
      %1886 = vmatpush.bf16.msra.mxu0 0
      %1887 = vmatpush.bf16.msra.mxu0 0
      %1888 = vmatpush.bf16.msra.mxu0 0
      %1889 = vmatpush.bf16.msra.mxu0 0
      %1890 = vmatpush.bf16.msra.mxu0 %v1800
      %1891 = vmatmul.bf16.gmra.mxu0 %v1779
      %v1892 = vpop.f32.mrf.mxu0
      %v1893 = vadd.f32 0.0, %v1892
      %v1894 = vpop.f32.mrf.mxu0
      %1895 = vdwg.mxu0
      %1896 = vmatpush.bf16.msra.mxu0 0
      %1897 = vmatpush.bf16.msra.mxu0 0
      %1898 = vmatpush.bf16.msra.mxu0 0
      %1899 = vmatpush.bf16.msra.mxu0 0
      %1900 = vmatpush.bf16.msra.mxu0 0
      %1901 = vmatpush.bf16.msra.mxu0 0
      %1902 = vmatpush.bf16.msra.mxu0 0
      %1903 = vmatpush.bf16.msra.mxu0 %v1803
      %1904 = vmatmul.bf16.gmra.mxu0 %v1779
      %v1905 = vpop.f32.mrf.mxu0
      %v1906 = vadd.f32 0.0, %v1905
      %v1907 = vpop.f32.mrf.mxu0
      %1908 = vdwg.mxu0
      %v1909 = vadd.f32 %v1719, %v1815
      %v1910 = vadd.f32 %v1720, %v1828
      %v1911 = vadd.f32 %v1721, %v1841
      %v1912 = vadd.f32 %v1722, %v1854
      %v1913 = vadd.f32 %v1723, %v1867
      %v1914 = vadd.f32 %v1724, %v1880
      %v1915 = vadd.f32 %v1725, %v1893
      %v1916 = vadd.f32 %v1726, %v1906
      %1917 = vst [vmem:[%s143] sm:$0xff] %v1909
      %1918 = vst [vmem:[%s143 + $0x8] sm:$0xff] %v1910
      %1919 = vst [vmem:[%s143 + $0x10] sm:$0xff] %v1911
      %1920 = vst [vmem:[%s143 + $0x18] sm:$0xff] %v1912
      %1921 = vst [vmem:[%s143 + $0x20] sm:$0xff] %v1913
      %1922 = vst [vmem:[%s143 + $0x28] sm:$0xff] %v1914
      %1923 = vst [vmem:[%s143 + $0x30] sm:$0xff] %v1915
      %1924 = vst [vmem:[%s143 + $0x38] sm:$0xff] %v1916
      %p1925 = scmp.lt.s32.totalorder %s13, 1
      %s1926 = scalar_select %p1925, %s13, 1
      %s1927 = smul.addr %s1926, 8
      %s1928 = smul.addr %s1927, 8
      %s1929 = scalar_lea.vmem %s2, %s1928
      // Predicated region
      $region29: #{base_encoder_forward.4} parent=27 // pred_check
        %p1930 = pneg %p78
      $region30: #{base_encoder_forward.4} parent=27 // pred_check_branch
        %1932 = sbr.rel (%p1930) target = $region32
      $region31: #{base_encoder_forward.4} parent=27 // pred_region
        _
      $region32: #{base_encoder_forward.4} parent=27 // pred_fallthru
        _
    $region28: #{base_encoder_forward.4} parent=5 // pred_fallthru
      _
    %p1933 = scmp.le.s32.totalorder 2, %s8
    // Predicated region
    $region33: #{base_encoder_forward.4} parent=5 // pred_check
      %p1934 = pneg %p1933
    $region34: #{base_encoder_forward.4} parent=5 // pred_check_branch
      %1936 = sbr.rel (%p1934) target = $region36
    $region35: #{base_encoder_forward.4} parent=5 // pred_region
      %s1937 = ssub.s32 %s8, 2
      // Predicated region
      $region37: #{base_encoder_forward.4} parent=35 // pred_check
        %p1938 = pneg %p84
      $region38: #{base_encoder_forward.4} parent=35 // pred_check_branch
        %1940 = sbr.rel (%p1938) target = $region40
      $region39: #{base_encoder_forward.4} parent=35 // pred_region
        %p1941 = scmp.lt.s32.totalorder %s14, 1
        %s1942 = scalar_select %p1941, %s14, 1
        %s1943 = smul.addr %s1942, 8
        %s1944 = smul.addr %s1943, 8
        %s1945 = scalar_lea.vmem %s2, %s1944
      $region40: #{base_encoder_forward.4} parent=35 // pred_fallthru
        _
    $region36: #{base_encoder_forward.4} parent=5 // pred_fallthru
      _
  $region6: #{base_encoder_forward.4} parent=0 // loop_footer
    %s12 = sadd.s32 1, %s8
  $region7: #{base_encoder_forward.4} parent=0 // loop_footer_branch
    %7 = sbr.rel target = $region3
  $region8: #{base_encoder_forward.4} parent=0 // loop_exit
    _

// kernel: base_encoder_forward.5
$region0: #{base_encoder_forward.5}
  #allocation0 [shape = 'u32[]', space=smem, size = 0x4, offset = 0x4, fixed_abs, tag = 'smem constant byte address 0x4 - core index']
  #allocation1 [shape = 'u32[72,128]{1,0:T(1,128)}', space=vmem, size = 0x9000, scoped, tag = 'internal scratch']
  %s0 = inlined_call_operand.vmem [shape: f32[2,8,1024], index: 0, kind: input, shape index: {}]
  %s1 = inlined_call_operand.vmem [shape: bf16[9,4,8], index: 1, kind: input, shape index: {}]
  %s2 = inlined_call_operand.vmem [shape: f32[8,1], index: 2, kind: input, shape index: {}]
  %s3 = inlined_call_operand.vmem [shape: f32[8,1], index: 3, kind: input, shape index: {}]
  %s4 = inlined_call_operand.vmem [shape: bf16[9,8,4], index: 4, kind: input, shape index: {}]
  %s5 = inlined_call_operand.vmem [shape: f32[4,1], index: 5, kind: input, shape index: {}]
  %s6 = inlined_call_operand.vmem [shape: f32[4,1], index: 6, kind: input, shape index: {}]
  %s7 = inlined_call_operand.vmem [shape: f32[2,8,1024], index: 7, kind: output, shape index: {}]
  %s8 = sld [smem:[#allocation0]]
  $region61: #{base_encoder_forward.5} parent=0
    _
  %s10 = ssub.s32 1, %s8
  %s11 = scalar_select 0, %s10, %s8
  loop: start=0, step=1, limit=4
  $region2: #{base_encoder_forward.5} parent=0 // loop_pre_header
    _
  $region3: #{base_encoder_forward.5} parent=0 // loop_header
    %s13 = sphi 0, %s17
    %p14 = scmp.ge.s32.totalorder %s13, 4
    %s23 = sphi 0, %s25
    %s26 = sphi 0, %s23
    %s27 = sphi 0, %s26
    %s43 = sphi 0, %s27
    %s47 = sphi 0, %s47
    %s49 = sphi 0, %s47
    %s50 = sphi 0, %s49
    %s64 = sphi 0, %s50
    %s68 = sphi 0, %s68
    %s70 = sphi 0, %s68
    %s71 = sphi 0, %s70
    %s85 = sphi 0, %s71
    %s89 = sphi 0, %s89
    %s91 = sphi 0, %s89
    %s92 = sphi 0, %s91
    %s106 = sphi 0, %s92
    %s110 = sphi 0, %s110
    %s112 = sphi 0, %s110
    %s113 = sphi 0, %s112
    %s127 = sphi 0, %s113
    %s131 = sphi 0, %s131
    %s133 = sphi 0, %s131
    %s134 = sphi 0, %s133
    %s148 = sphi 0, %s134
    %s152 = sphi 0, %s152
    %s154 = sphi 0, %s152
    %s155 = sphi 0, %s154
    %s169 = sphi 0, %s155
    %s175 = sphi 0, %s177
    %s178 = sphi 0, %s175
    %s179 = sphi 0, %s178
    %s195 = sphi 0, %s179
  $region4: #{base_encoder_forward.5} parent=0 // loop_header_branch
    %16 = sbr.rel (%p14) target = $region8
  $region5: #{base_encoder_forward.5} parent=0 // loop_body
    %s18 = ssub.s32 %s13, 1
    %s19 = ssub.s32 %s13, 2
    %s20 = sadd.s32 %s13, 1
    %s21 = ssub.s32 %s13, %s20
    %p22 = scmp.eq.s32.totalorder %s21, 0
    %s24 = sadd.s32 %s23, 1
    %s25 = scalar_select %p22, %s23, %s24
    %p28 = pneg %p22
    %p29 = scmp.eq.s32.totalorder %s13, 1
    %p30 = por %p28, %p29
    %p31 = scmp.ne.s32.totalorder %s23, %s26
    %p32 = scmp.eq.s32.totalorder %s13, 0
    %p33 = por %p31, %p32
    %p34 = scmp.ne.s32.totalorder %s23, %s26
    %p35 = scmp.eq.s32.totalorder %s18, 1
    %p36 = por %p34, %p35
    %p37 = scmp.ne.s32.totalorder %s26, %s27
    %p38 = scmp.eq.s32.totalorder %s18, 0
    %p39 = por %p37, %p38
    %p40 = scmp.ne.s32.totalorder %s26, %s27
    %p41 = scmp.eq.s32.totalorder %s19, 1
    %p42 = por %p40, %p41
    %p44 = scmp.ne.s32.totalorder %s27, %s43
    %p45 = scmp.eq.s32.totalorder %s19, 0
    %p46 = por %p44, %p45
    %s48 = sadd.s32 %s47, 1
    %p51 = scmp.eq.s32.totalorder %s13, 1
    %p52 = scmp.ne.s32.totalorder %s47, %s49
    %p53 = scmp.eq.s32.totalorder %s13, 0
    %p54 = por %p52, %p53
    %p55 = scmp.ne.s32.totalorder %s47, %s49
    %p56 = scmp.eq.s32.totalorder %s18, 1
    %p57 = por %p55, %p56
    %p58 = scmp.ne.s32.totalorder %s49, %s50
    %p59 = scmp.eq.s32.totalorder %s18, 0
    %p60 = por %p58, %p59
    %p61 = scmp.ne.s32.totalorder %s49, %s50
    %p62 = scmp.eq.s32.totalorder %s19, 1
    %p63 = por %p61, %p62
    %p65 = scmp.ne.s32.totalorder %s50, %s64
    %p66 = scmp.eq.s32.totalorder %s19, 0
    %p67 = por %p65, %p66
    %s69 = sadd.s32 %s68, 1
    %p72 = scmp.eq.s32.totalorder %s13, 1
    %p73 = scmp.ne.s32.totalorder %s68, %s70
    %p74 = scmp.eq.s32.totalorder %s13, 0
    %p75 = por %p73, %p74
    %p76 = scmp.ne.s32.totalorder %s68, %s70
    %p77 = scmp.eq.s32.totalorder %s18, 1
    %p78 = por %p76, %p77
    %p79 = scmp.ne.s32.totalorder %s70, %s71
    %p80 = scmp.eq.s32.totalorder %s18, 0
    %p81 = por %p79, %p80
    %p82 = scmp.ne.s32.totalorder %s70, %s71
    %p83 = scmp.eq.s32.totalorder %s19, 1
    %p84 = por %p82, %p83
    %p86 = scmp.ne.s32.totalorder %s71, %s85
    %p87 = scmp.eq.s32.totalorder %s19, 0
    %p88 = por %p86, %p87
    %s90 = sadd.s32 %s89, 1
    %p93 = scmp.eq.s32.totalorder %s13, 1
    %p94 = scmp.ne.s32.totalorder %s89, %s91
    %p95 = scmp.eq.s32.totalorder %s13, 0
    %p96 = por %p94, %p95
    %p97 = scmp.ne.s32.totalorder %s89, %s91
    %p98 = scmp.eq.s32.totalorder %s18, 1
    %p99 = por %p97, %p98
    %p100 = scmp.ne.s32.totalorder %s91, %s92
    %p101 = scmp.eq.s32.totalorder %s18, 0
    %p102 = por %p100, %p101
    %p103 = scmp.ne.s32.totalorder %s91, %s92
    %p104 = scmp.eq.s32.totalorder %s19, 1
    %p105 = por %p103, %p104
    %p107 = scmp.ne.s32.totalorder %s92, %s106
    %p108 = scmp.eq.s32.totalorder %s19, 0
    %p109 = por %p107, %p108
    %s111 = sadd.s32 %s110, 1
    %p114 = scmp.eq.s32.totalorder %s13, 1
    %p115 = scmp.ne.s32.totalorder %s110, %s112
    %p116 = scmp.eq.s32.totalorder %s13, 0
    %p117 = por %p115, %p116
    %p118 = scmp.ne.s32.totalorder %s110, %s112
    %p119 = scmp.eq.s32.totalorder %s18, 1
    %p120 = por %p118, %p119
    %p121 = scmp.ne.s32.totalorder %s112, %s113
    %p122 = scmp.eq.s32.totalorder %s18, 0
    %p123 = por %p121, %p122
    %p124 = scmp.ne.s32.totalorder %s112, %s113
    %p125 = scmp.eq.s32.totalorder %s19, 1
    %p126 = por %p124, %p125
    %p128 = scmp.ne.s32.totalorder %s113, %s127
    %p129 = scmp.eq.s32.totalorder %s19, 0
    %p130 = por %p128, %p129
    %s132 = sadd.s32 %s131, 1
    %p135 = scmp.eq.s32.totalorder %s13, 1
    %p136 = scmp.ne.s32.totalorder %s131, %s133
    %p137 = scmp.eq.s32.totalorder %s13, 0
    %p138 = por %p136, %p137
    %p139 = scmp.ne.s32.totalorder %s131, %s133
    %p140 = scmp.eq.s32.totalorder %s18, 1
    %p141 = por %p139, %p140
    %p142 = scmp.ne.s32.totalorder %s133, %s134
    %p143 = scmp.eq.s32.totalorder %s18, 0
    %p144 = por %p142, %p143
    %p145 = scmp.ne.s32.totalorder %s133, %s134
    %p146 = scmp.eq.s32.totalorder %s19, 1
    %p147 = por %p145, %p146
    %p149 = scmp.ne.s32.totalorder %s134, %s148
    %p150 = scmp.eq.s32.totalorder %s19, 0
    %p151 = por %p149, %p150
    %s153 = sadd.s32 %s152, 1
    %p156 = scmp.eq.s32.totalorder %s13, 1
    %p157 = scmp.ne.s32.totalorder %s152, %s154
    %p158 = scmp.eq.s32.totalorder %s13, 0
    %p159 = por %p157, %p158
    %p160 = scmp.ne.s32.totalorder %s152, %s154
    %p161 = scmp.eq.s32.totalorder %s18, 1
    %p162 = por %p160, %p161
    %p163 = scmp.ne.s32.totalorder %s154, %s155
    %p164 = scmp.eq.s32.totalorder %s18, 0
    %p165 = por %p163, %p164
    %p166 = scmp.ne.s32.totalorder %s154, %s155
    %p167 = scmp.eq.s32.totalorder %s19, 1
    %p168 = por %p166, %p167
    %p170 = scmp.ne.s32.totalorder %s155, %s169
    %p171 = scmp.eq.s32.totalorder %s19, 0
    %p172 = por %p170, %p171
    %s173 = ssub.s32 %s13, %s20
    %p174 = scmp.eq.s32.totalorder %s173, 0
    %s176 = sadd.s32 %s175, 1
    %s177 = scalar_select %p174, %s175, %s176
    %p180 = pneg %p174
    %p181 = scmp.eq.s32.totalorder %s13, 1
    %p182 = por %p180, %p181
    %p183 = scmp.ne.s32.totalorder %s175, %s178
    %p184 = scmp.eq.s32.totalorder %s13, 0
    %p185 = por %p183, %p184
    %p186 = scmp.ne.s32.totalorder %s175, %s178
    %p187 = scmp.eq.s32.totalorder %s18, 1
    %p188 = por %p186, %p187
    %p189 = scmp.ne.s32.totalorder %s178, %s179
    %p190 = scmp.eq.s32.totalorder %s18, 0
    %p191 = por %p189, %p190
    %p192 = scmp.ne.s32.totalorder %s178, %s179
    %p193 = scmp.eq.s32.totalorder %s19, 1
    %p194 = por %p192, %p193
    %p196 = scmp.ne.s32.totalorder %s179, %s195
    %p197 = scmp.eq.s32.totalorder %s19, 0
    %p198 = por %p196, %p197
    %p199 = scmp.le.s32.totalorder 1, %s13
    %p200 = scmp.lt.s32.totalorder %s13, 3
    %p201 = pnand %p199, %p200
    %p202 = pneg %p201
    // Predicated region
    $region9: #{base_encoder_forward.5} parent=5 // pred_check
      _
    $region10: #{base_encoder_forward.5} parent=5 // pred_check_branch
      %204 = sbr.rel (%p201) target = $region12
    $region11: #{base_encoder_forward.5} parent=5 // pred_region
      %s205 = ssub.s32 %s13, 1
      // Predicated region
      $region13: #{base_encoder_forward.5} parent=11 // pred_check
        %p206 = pneg %p60
      $region14: #{base_encoder_forward.5} parent=11 // pred_check_branch
        %208 = sbr.rel (%p206) target = $region16
      $region15: #{base_encoder_forward.5} parent=11 // pred_region
        _
      $region16: #{base_encoder_forward.5} parent=11 // pred_fallthru
        _
      // Predicated region
      $region17: #{base_encoder_forward.5} parent=11 // pred_check
        %p209 = pneg %p81
      $region18: #{base_encoder_forward.5} parent=11 // pred_check_branch
        %211 = sbr.rel (%p209) target = $region20
      $region19: #{base_encoder_forward.5} parent=11 // pred_region
        _
      $region20: #{base_encoder_forward.5} parent=11 // pred_fallthru
        _
      // Predicated region
      $region21: #{base_encoder_forward.5} parent=11 // pred_check
        %p212 = pneg %p102
      $region22: #{base_encoder_forward.5} parent=11 // pred_check_branch
        %214 = sbr.rel (%p212) target = $region24
      $region23: #{base_encoder_forward.5} parent=11 // pred_region
        _
      $region24: #{base_encoder_forward.5} parent=11 // pred_fallthru
        _
      // Predicated region
      $region25: #{base_encoder_forward.5} parent=11 // pred_check
        %p215 = pneg %p123
      $region26: #{base_encoder_forward.5} parent=11 // pred_check_branch
        %217 = sbr.rel (%p215) target = $region28
      $region27: #{base_encoder_forward.5} parent=11 // pred_region
        _
      $region28: #{base_encoder_forward.5} parent=11 // pred_fallthru
        _
      // Predicated region
      $region29: #{base_encoder_forward.5} parent=11 // pred_check
        %p218 = pneg %p144
      $region30: #{base_encoder_forward.5} parent=11 // pred_check_branch
        %220 = sbr.rel (%p218) target = $region32
      $region31: #{base_encoder_forward.5} parent=11 // pred_region
        _
      $region32: #{base_encoder_forward.5} parent=11 // pred_fallthru
        _
      // Predicated region
      $region33: #{base_encoder_forward.5} parent=11 // pred_check
        %p221 = pneg %p165
      $region34: #{base_encoder_forward.5} parent=11 // pred_check_branch
        %223 = sbr.rel (%p221) target = $region36
      $region35: #{base_encoder_forward.5} parent=11 // pred_region
        _
      $region36: #{base_encoder_forward.5} parent=11 // pred_fallthru
        _
    $region12: #{base_encoder_forward.5} parent=5 // pred_fallthru
      _
    %p224 = scmp.lt.s32.totalorder %s13, 2
    // Predicated region
    $region37: #{base_encoder_forward.5} parent=5 // pred_check
      %p225 = pneg %p224
    $region38: #{base_encoder_forward.5} parent=5 // pred_check_branch
      %227 = sbr.rel (%p225) target = $region40
    $region39: #{base_encoder_forward.5} parent=5 // pred_region
      // Predicated region
      $region41: #{base_encoder_forward.5} parent=39 // pred_check
        %p228 = pneg %p33
      $region42: #{base_encoder_forward.5} parent=39 // pred_check_branch
        %230 = sbr.rel (%p228) target = $region44
      $region43: #{base_encoder_forward.5} parent=39 // pred_region
        %p231 = scmp.lt.s32.totalorder %s13, 1
        %s232 = scalar_select %p231, %s13, 1
        %s233 = smul.addr %s232, 8
        %s234 = smul.addr %s233, 8
        %s235 = scalar_lea.vmem %s0, %s234
      $region44: #{base_encoder_forward.5} parent=39 // pred_fallthru
        _
    $region40: #{base_encoder_forward.5} parent=5 // pred_fallthru
      _
    %p236 = scmp.le.s32.totalorder 1, %s13
    %p237 = scmp.lt.s32.totalorder %s13, 3
    %p238 = pnand %p236, %p237
    %p239 = pneg %p238
    // Predicated region
    $region45: #{base_encoder_forward.5} parent=5 // pred_check
      _
    $region46: #{base_encoder_forward.5} parent=5 // pred_check_branch
      %241 = sbr.rel (%p238) target = $region48
    $region47: #{base_encoder_forward.5} parent=5 // pred_region
      %s242 = ssub.s32 %s13, 1
      %p243 = scmp.lt.s32.totalorder %s18, 1
      %s244 = scalar_select %p243, %s18, 1
      %s245 = smul.addr %s244, 8
      %s246 = smul.addr %s245, 8
      %s247 = scalar_lea.vmem %s0, %s246
      %p248 = pneg %p39
      %p249 = pneg %p36
      %p250 = pneg %p60
      %p251 = pneg %p57
      %p252 = pneg %p81
      %p253 = pneg %p78
      %p254 = pneg %p102
      %p255 = pneg %p99
      %p256 = pneg %p123
      %p257 = pneg %p120
      %p258 = pneg %p144
      %p259 = pneg %p141
      %p260 = pneg %p165
      %p261 = pneg %p162
      %p262 = pneg %p191
      %p263 = pneg %p188
      %p264 = scmp.lt.s32.totalorder %s18, 1
      %s265 = scalar_select %p264, %s18, 1
      %s266 = smul.addr %s265, 8
      %s267 = smul.addr %s266, 8
      %s268 = scalar_lea.vmem %s7, %s267
      %p269 = scmp.lt.s32.totalorder %s18, 1
      %s270 = scalar_select %p269, %s18, 1
      %s271 = smul.addr %s270, 8
      %s272 = smul.addr %s271, 8
      %s273 = scalar_lea.vmem %s0, %s272
      %p274 = scmp.lt.s32.totalorder %s18, 1
      %s275 = scalar_select %p274, %s18, 1
      %s276 = smul.addr %s275, 8
      %s277 = smul.addr %s276, 8
      %s278 = scalar_lea.vmem %s7, %s277
      %v280 = vlaneseq
      %v281 = vand.u32 %v280, 127
      %v282 = vadd.s32 %v281, 128
      %v283 = vadd.s32 %v281, 256
      %v284 = vadd.s32 %v281, 384
      %v285 = vadd.s32 %v281, 512
      %v286 = vadd.s32 %v281, 640
      %v287 = vadd.s32 %v281, 768
      %v288 = vadd.s32 %v281, 896
      %v289 = vand.u32 %v281, 31
      %v290 = vand.u32 %v282, 31
      %v291 = vand.u32 %v283, 31
      %v292 = vand.u32 %v284, 31
      %v293 = vand.u32 %v285, 31
      %v294 = vand.u32 %v286, 31
      %v295 = vand.u32 %v287, 31
      %v296 = vand.u32 %v288, 31
      %v297 = vadd.s32 %v289, 4294967295
      %v298 = vadd.s32 %v290, 4294967295
      %v299 = vadd.s32 %v291, 4294967295
      %v300 = vadd.s32 %v292, 4294967295
      %v301 = vadd.s32 %v293, 4294967295
      %v302 = vadd.s32 %v294, 4294967295
      %v303 = vadd.s32 %v295, 4294967295
      %v304 = vadd.s32 %v296, 4294967295
      %vm305 = vcmp.ge.s32.totalorder %v297, 0
      %vm306 = vcmp.ge.s32.totalorder %v298, 0
      %vm307 = vcmp.ge.s32.totalorder %v299, 0
      %vm308 = vcmp.ge.s32.totalorder %v300, 0
      %vm309 = vcmp.ge.s32.totalorder %v301, 0
      %vm310 = vcmp.ge.s32.totalorder %v302, 0
      %vm311 = vcmp.ge.s32.totalorder %v303, 0
      %vm312 = vcmp.ge.s32.totalorder %v304, 0
      %vm313 = vcmp.lt.s32.totalorder %v297, 32
      %vm314 = vcmp.lt.s32.totalorder %v298, 32
      %vm315 = vcmp.lt.s32.totalorder %v299, 32
      %vm316 = vcmp.lt.s32.totalorder %v300, 32
      %vm317 = vcmp.lt.s32.totalorder %v301, 32
      %vm318 = vcmp.lt.s32.totalorder %v302, 32
      %vm319 = vcmp.lt.s32.totalorder %v303, 32
      %vm320 = vcmp.lt.s32.totalorder %v304, 32
      %vm321 = vmand %vm305, %vm313
      %vm322 = vmand %vm306, %vm314
      %vm323 = vmand %vm307, %vm315
      %vm324 = vmand %vm308, %vm316
      %vm325 = vmand %vm309, %vm317
      %vm326 = vmand %vm310, %vm318
      %vm327 = vmand %vm311, %vm319
      %vm328 = vmand %vm312, %vm320
      %v329 = vadd.s32 %v289, 1
      %v330 = vadd.s32 %v290, 1
      %v331 = vadd.s32 %v291, 1
      %v332 = vadd.s32 %v292, 1
      %v333 = vadd.s32 %v293, 1
      %v334 = vadd.s32 %v294, 1
      %v335 = vadd.s32 %v295, 1
      %v336 = vadd.s32 %v296, 1
      %vm337 = vcmp.ge.s32.totalorder %v329, 0
      %vm338 = vcmp.ge.s32.totalorder %v330, 0
      %vm339 = vcmp.ge.s32.totalorder %v331, 0
      %vm340 = vcmp.ge.s32.totalorder %v332, 0
      %vm341 = vcmp.ge.s32.totalorder %v333, 0
      %vm342 = vcmp.ge.s32.totalorder %v334, 0
      %vm343 = vcmp.ge.s32.totalorder %v335, 0
      %vm344 = vcmp.ge.s32.totalorder %v336, 0
      %vm345 = vcmp.lt.s32.totalorder %v329, 32
      %vm346 = vcmp.lt.s32.totalorder %v330, 32
      %vm347 = vcmp.lt.s32.totalorder %v331, 32
      %vm348 = vcmp.lt.s32.totalorder %v332, 32
      %vm349 = vcmp.lt.s32.totalorder %v333, 32
      %vm350 = vcmp.lt.s32.totalorder %v334, 32
      %vm351 = vcmp.lt.s32.totalorder %v335, 32
      %vm352 = vcmp.lt.s32.totalorder %v336, 32
      %vm353 = vmand %vm337, %vm345
      %vm354 = vmand %vm338, %vm346
      %vm355 = vmand %vm339, %vm347
      %vm356 = vmand %vm340, %vm348
      %vm357 = vmand %vm341, %vm349
      %vm358 = vmand %vm342, %vm350
      %vm359 = vmand %vm343, %vm351
      %vm360 = vmand %vm344, %vm352
      %v361 = vld [vmem:[%s1] sm:$0x3]
      %v362 = vld [vmem:[%s1 + $0x2] sm:$0x3]
      %v363 = vld [vmem:[%s1 + $0x4] sm:$0x3]
      %v364 = vld [vmem:[%s1 + $0x6] sm:$0x3]
      %v365 = vld [vmem:[%s1 + $0x8] sm:$0x3]
      %v366 = vld [vmem:[%s1 + $0xa] sm:$0x3]
      %v367 = vld [vmem:[%s1 + $0xc] sm:$0x3]
      %v368 = vld [vmem:[%s1 + $0xe] sm:$0x3]
      %v369 = vld [vmem:[%s1 + $0x10] sm:$0x3]
      %v370 = vld [vmem:[%s4] sm:$0xf]
      %v371 = vld [vmem:[%s4 + $0x4] sm:$0xf]
      %v372 = vld [vmem:[%s4 + $0x8] sm:$0xf]
      %v373 = vld [vmem:[%s4 + $0xc] sm:$0xf]
      %v374 = vld [vmem:[%s4 + $0x10] sm:$0xf]
      %v375 = vld [vmem:[%s4 + $0x14] sm:$0xf]
      %v376 = vld [vmem:[%s4 + $0x18] sm:$0xf]
      %v377 = vld [vmem:[%s4 + $0x1c] sm:$0xf]
      %v378 = vld [vmem:[%s4 + $0x20] sm:$0xf]
      %v379 = vld [vmem:[%s2] sm:$0xff]
      %381 = vset.pattern.permute.xlu0 0
      %382 = vperm.xlu0 %381, %v379
      %v383 = vpop.permute.xlu0 %382
      %v385 = vld [vmem:[%s3] sm:$0xff]
      %387 = vset.pattern.permute.xlu0 0
      %388 = vperm.xlu0 %387, %v385
      %v389 = vpop.permute.xlu0 %388
      %v391 = vld [vmem:[%s5] sm:$0xf]
      %393 = vset.pattern.permute.xlu0 0
      %394 = vperm.xlu0 %393, %v391
      %v395 = vpop.permute.xlu0 %394
      %v397 = vld [vmem:[%s6] sm:$0xf]
      %399 = vset.pattern.permute.xlu0 0
      %400 = vperm.xlu0 %399, %v397
      %v401 = vpop.permute.xlu0 %400
      %v403 = vld [vmem:[%s273] sm:$0xff]
      %v404 = vld [vmem:[%s273 + $0x8] sm:$0xff]
      %v405 = vld [vmem:[%s273 + $0x10] sm:$0xff]
      %v406 = vld [vmem:[%s273 + $0x18] sm:$0xff]
      %v407 = vld [vmem:[%s273 + $0x20] sm:$0xff]
      %v408 = vld [vmem:[%s273 + $0x28] sm:$0xff]
      %v409 = vld [vmem:[%s273 + $0x30] sm:$0xff]
      %v410 = vld [vmem:[%s273 + $0x38] sm:$0xff]
      %v411 = vmul.f32 %v403, %v383
      %v412 = vmul.f32 %v404, %v383
      %v413 = vmul.f32 %v405, %v383
      %v414 = vmul.f32 %v406, %v383
      %v415 = vmul.f32 %v407, %v383
      %v416 = vmul.f32 %v408, %v383
      %v417 = vmul.f32 %v409, %v383
      %v418 = vmul.f32 %v410, %v383
      %v419 = vadd.f32 %v411, %v389
      %v420 = vadd.f32 %v412, %v389
      %v421 = vadd.f32 %v413, %v389
      %v422 = vadd.f32 %v414, %v389
      %v423 = vadd.f32 %v415, %v389
      %v424 = vadd.f32 %v416, %v389
      %v425 = vadd.f32 %v417, %v389
      %v426 = vadd.f32 %v418, %v389
      %v427 = vmax.f32 %v419, 0.0
      %v428 = vmax.f32 %v420, 0.0
      %v429 = vmax.f32 %v421, 0.0
      %v430 = vmax.f32 %v422, 0.0
      %v431 = vmax.f32 %v423, 0.0
      %v432 = vmax.f32 %v424, 0.0
      %v433 = vmax.f32 %v425, 0.0
      %v434 = vmax.f32 %v426, 0.0
      %v435 = vsel %vm321, 1, 0
      %v436 = vsel %vm322, 1, 0
      %v437 = vsel %vm323, 1, 0
      %v438 = vsel %vm324, 1, 0
      %v439 = vsel %vm325, 1, 0
      %v440 = vsel %vm326, 1, 0
      %v441 = vsel %vm327, 1, 0
      %v442 = vsel %vm328, 1, 0
      %vm443 = vcmp.eq.s32.totalorder %v435, 1
      %vm444 = vcmp.eq.s32.totalorder %v436, 1
      %vm445 = vcmp.eq.s32.totalorder %v437, 1
      %vm446 = vcmp.eq.s32.totalorder %v438, 1
      %vm447 = vcmp.eq.s32.totalorder %v439, 1
      %vm448 = vcmp.eq.s32.totalorder %v440, 1
      %vm449 = vcmp.eq.s32.totalorder %v441, 1
      %vm450 = vcmp.eq.s32.totalorder %v442, 1
      %460 = vrot.lane.b32.xlu0 0.0, 33
      %v461 = vpop.permute.xlu0 %460
      %462 = vrot.lane.b32.xlu0 %v427, 33
      %v463 = vpop.permute.xlu0 %462
      %464 = vrot.lane.b32.xlu0 %v428, 33
      %v465 = vpop.permute.xlu0 %464
      %466 = vrot.lane.b32.xlu0 %v429, 33
      %v467 = vpop.permute.xlu0 %466
      %468 = vrot.lane.b32.xlu0 %v430, 33
      %v469 = vpop.permute.xlu0 %468
      %470 = vrot.lane.b32.xlu0 %v431, 33
      %v471 = vpop.permute.xlu0 %470
      %472 = vrot.lane.b32.xlu0 %v432, 33
      %v473 = vpop.permute.xlu0 %472
      %474 = vrot.lane.b32.xlu0 %v433, 33
      %v475 = vpop.permute.xlu0 %474
      %476 = vrot.lane.b32.xlu0 %v434, 33
      %v477 = vpop.permute.xlu0 %476
      %vm478 = vcmask 269312
      %v479 = vsel %vm478, %v461, %v463
      %v480 = vsel %vm478, %v463, %v465
      %v481 = vsel %vm478, %v465, %v467
      %v482 = vsel %vm478, %v467, %v469
      %v483 = vsel %vm478, %v469, %v471
      %v484 = vsel %vm478, %v471, %v473
      %v485 = vsel %vm478, %v473, %v475
      %v486 = vsel %vm478, %v475, %v477
      %v495 = vsel %vm443, %v479, 0.0
      %v496 = vsel %vm444, %v480, 0.0
      %v497 = vsel %vm445, %v481, 0.0
      %v498 = vsel %vm446, %v482, 0.0
      %v499 = vsel %vm447, %v483, 0.0
      %v500 = vsel %vm448, %v484, 0.0
      %v501 = vsel %vm449, %v485, 0.0
      %v502 = vsel %vm450, %v486, 0.0
      %v503 = vpack.c.bf16 %v495, %v495
      %v504 = vpack.c.bf16 %v496, %v496
      %v505 = vpack.c.bf16 %v497, %v497
      %v506 = vpack.c.bf16 %v498, %v498
      %v507 = vpack.c.bf16 %v499, %v499
      %v508 = vpack.c.bf16 %v500, %v500
      %v509 = vpack.c.bf16 %v501, %v501
      %v510 = vpack.c.bf16 %v502, %v502
      %v511 = vpack.c.bf16 0.0, 0.0
      %v512 = vpack.c.bf16 %v427, %v427
      %v513 = vpack.c.bf16 %v428, %v428
      %v514 = vpack.c.bf16 %v429, %v429
      %v515 = vpack.c.bf16 %v430, %v430
      %v516 = vpack.c.bf16 %v431, %v431
      %v517 = vpack.c.bf16 %v432, %v432
      %v518 = vpack.c.bf16 %v433, %v433
      %v519 = vpack.c.bf16 %v434, %v434
      %529 = vrot.lane.b32.xlu0 %v511, 32
      %v530 = vpop.permute.xlu0 %529
      %531 = vrot.lane.b32.xlu0 %v512, 32
      %v532 = vpop.permute.xlu0 %531
      %533 = vrot.lane.b32.xlu0 %v513, 32
      %v534 = vpop.permute.xlu0 %533
      %535 = vrot.lane.b32.xlu0 %v514, 32
      %v536 = vpop.permute.xlu0 %535
      %537 = vrot.lane.b32.xlu0 %v515, 32
      %v538 = vpop.permute.xlu0 %537
      %539 = vrot.lane.b32.xlu0 %v516, 32
      %v540 = vpop.permute.xlu0 %539
      %541 = vrot.lane.b32.xlu0 %v517, 32
      %v542 = vpop.permute.xlu0 %541
      %543 = vrot.lane.b32.xlu0 %v518, 32
      %v544 = vpop.permute.xlu0 %543
      %545 = vrot.lane.b32.xlu0 %v519, 32
      %v546 = vpop.permute.xlu0 %545
      %vm547 = vcmask 261120
      %v548 = vsel %vm547, %v530, %v532
      %v549 = vsel %vm547, %v532, %v534
      %v550 = vsel %vm547, %v534, %v536
      %v551 = vsel %vm547, %v536, %v538
      %v552 = vsel %vm547, %v538, %v540
      %v553 = vsel %vm547, %v540, %v542
      %v554 = vsel %vm547, %v542, %v544
      %v555 = vsel %vm547, %v544, %v546
      %vm556 = vcmask 64512
      %v558 = vsel %vm556, %v362, 0
      %vm560 = vcmask 1043456
      %v562 = vsel %vm560, %v548, 0
      %v565 = vsel %vm560, %v549, 0
      %v568 = vsel %vm560, %v550, 0
      %v571 = vsel %vm560, %v551, 0
      %v574 = vsel %vm560, %v552, 0
      %v577 = vsel %vm560, %v553, 0
      %v580 = vsel %vm560, %v554, 0
      %v583 = vsel %vm560, %v555, 0
      %585 = vmatpush.bf16.msra.mxu0 0
      %586 = vmatpush.bf16.msra.mxu0 0
      %587 = vmatpush.bf16.msra.mxu0 0
      %588 = vmatpush.bf16.msra.mxu0 0
      %589 = vmatpush.bf16.msra.mxu0 0
      %590 = vmatpush.bf16.msra.mxu0 0
      %591 = vmatpush.bf16.msra.mxu0 0
      %592 = vmatpush.bf16.msra.mxu0 %v562
      %593 = vmatmul.bf16.gmra.mxu0 %v558
      %v594 = vpop.f32.mrf.mxu0
      %v595 = vadd.f32 0.0, %v594
      %v596 = vpop.f32.mrf.mxu0
      %597 = vdwg.mxu0
      %598 = vmatpush.bf16.msra.mxu0 0
      %599 = vmatpush.bf16.msra.mxu0 0
      %600 = vmatpush.bf16.msra.mxu0 0
      %601 = vmatpush.bf16.msra.mxu0 0
      %602 = vmatpush.bf16.msra.mxu0 0
      %603 = vmatpush.bf16.msra.mxu0 0
      %604 = vmatpush.bf16.msra.mxu0 0
      %605 = vmatpush.bf16.msra.mxu0 %v565
      %606 = vmatmul.bf16.gmra.mxu0 %v558
      %v607 = vpop.f32.mrf.mxu0
      %v608 = vadd.f32 0.0, %v607
      %v609 = vpop.f32.mrf.mxu0
      %610 = vdwg.mxu0
      %611 = vmatpush.bf16.msra.mxu0 0
      %612 = vmatpush.bf16.msra.mxu0 0
      %613 = vmatpush.bf16.msra.mxu0 0
      %614 = vmatpush.bf16.msra.mxu0 0
      %615 = vmatpush.bf16.msra.mxu0 0
      %616 = vmatpush.bf16.msra.mxu0 0
      %617 = vmatpush.bf16.msra.mxu0 0
      %618 = vmatpush.bf16.msra.mxu0 %v568
      %619 = vmatmul.bf16.gmra.mxu0 %v558
      %v620 = vpop.f32.mrf.mxu0
      %v621 = vadd.f32 0.0, %v620
      %v622 = vpop.f32.mrf.mxu0
      %623 = vdwg.mxu0
      %624 = vmatpush.bf16.msra.mxu0 0
      %625 = vmatpush.bf16.msra.mxu0 0
      %626 = vmatpush.bf16.msra.mxu0 0
      %627 = vmatpush.bf16.msra.mxu0 0
      %628 = vmatpush.bf16.msra.mxu0 0
      %629 = vmatpush.bf16.msra.mxu0 0
      %630 = vmatpush.bf16.msra.mxu0 0
      %631 = vmatpush.bf16.msra.mxu0 %v571
      %632 = vmatmul.bf16.gmra.mxu0 %v558
      %v633 = vpop.f32.mrf.mxu0
      %v634 = vadd.f32 0.0, %v633
      %v635 = vpop.f32.mrf.mxu0
      %636 = vdwg.mxu0
      %637 = vmatpush.bf16.msra.mxu0 0
      %638 = vmatpush.bf16.msra.mxu0 0
      %639 = vmatpush.bf16.msra.mxu0 0
      %640 = vmatpush.bf16.msra.mxu0 0
      %641 = vmatpush.bf16.msra.mxu0 0
      %642 = vmatpush.bf16.msra.mxu0 0
      %643 = vmatpush.bf16.msra.mxu0 0
      %644 = vmatpush.bf16.msra.mxu0 %v574
      %645 = vmatmul.bf16.gmra.mxu0 %v558
      %v646 = vpop.f32.mrf.mxu0
      %v647 = vadd.f32 0.0, %v646
      %v648 = vpop.f32.mrf.mxu0
      %649 = vdwg.mxu0
      %650 = vmatpush.bf16.msra.mxu0 0
      %651 = vmatpush.bf16.msra.mxu0 0
      %652 = vmatpush.bf16.msra.mxu0 0
      %653 = vmatpush.bf16.msra.mxu0 0
      %654 = vmatpush.bf16.msra.mxu0 0
      %655 = vmatpush.bf16.msra.mxu0 0
      %656 = vmatpush.bf16.msra.mxu0 0
      %657 = vmatpush.bf16.msra.mxu0 %v577
      %658 = vmatmul.bf16.gmra.mxu0 %v558
      %v659 = vpop.f32.mrf.mxu0
      %v660 = vadd.f32 0.0, %v659
      %v661 = vpop.f32.mrf.mxu0
      %662 = vdwg.mxu0
      %663 = vmatpush.bf16.msra.mxu0 0
      %664 = vmatpush.bf16.msra.mxu0 0
      %665 = vmatpush.bf16.msra.mxu0 0
      %666 = vmatpush.bf16.msra.mxu0 0
      %667 = vmatpush.bf16.msra.mxu0 0
      %668 = vmatpush.bf16.msra.mxu0 0
      %669 = vmatpush.bf16.msra.mxu0 0
      %670 = vmatpush.bf16.msra.mxu0 %v580
      %671 = vmatmul.bf16.gmra.mxu0 %v558
      %v672 = vpop.f32.mrf.mxu0
      %v673 = vadd.f32 0.0, %v672
      %v674 = vpop.f32.mrf.mxu0
      %675 = vdwg.mxu0
      %676 = vmatpush.bf16.msra.mxu0 0
      %677 = vmatpush.bf16.msra.mxu0 0
      %678 = vmatpush.bf16.msra.mxu0 0
      %679 = vmatpush.bf16.msra.mxu0 0
      %680 = vmatpush.bf16.msra.mxu0 0
      %681 = vmatpush.bf16.msra.mxu0 0
      %682 = vmatpush.bf16.msra.mxu0 0
      %683 = vmatpush.bf16.msra.mxu0 %v583
      %684 = vmatmul.bf16.gmra.mxu0 %v558
      %v685 = vpop.f32.mrf.mxu0
      %v686 = vadd.f32 0.0, %v685
      %v687 = vpop.f32.mrf.mxu0
      %688 = vdwg.mxu0
      %v690 = vsel %vm556, %v361, 0
      %v693 = vsel %vm560, %v503, 0
      %v696 = vsel %vm560, %v504, 0
      %v699 = vsel %vm560, %v505, 0
      %v702 = vsel %vm560, %v506, 0
      %v705 = vsel %vm560, %v507, 0
      %v708 = vsel %vm560, %v508, 0
      %v711 = vsel %vm560, %v509, 0
      %v714 = vsel %vm560, %v510, 0
      %716 = vmatpush.bf16.msra.mxu0 0
      %717 = vmatpush.bf16.msra.mxu0 0
      %718 = vmatpush.bf16.msra.mxu0 0
      %719 = vmatpush.bf16.msra.mxu0 0
      %720 = vmatpush.bf16.msra.mxu0 0
      %721 = vmatpush.bf16.msra.mxu0 0
      %722 = vmatpush.bf16.msra.mxu0 0
      %723 = vmatpush.bf16.msra.mxu0 %v693
      %724 = vmatmul.bf16.gmra.mxu0 %v690
      %v725 = vpop.f32.mrf.mxu0
      %v726 = vadd.f32 %v595, %v725
      %v727 = vpop.f32.mrf.mxu0
      %728 = vdwg.mxu0
      %729 = vmatpush.bf16.msra.mxu0 0
      %730 = vmatpush.bf16.msra.mxu0 0
      %731 = vmatpush.bf16.msra.mxu0 0
      %732 = vmatpush.bf16.msra.mxu0 0
      %733 = vmatpush.bf16.msra.mxu0 0
      %734 = vmatpush.bf16.msra.mxu0 0
      %735 = vmatpush.bf16.msra.mxu0 0
      %736 = vmatpush.bf16.msra.mxu0 %v696
      %737 = vmatmul.bf16.gmra.mxu0 %v690
      %v738 = vpop.f32.mrf.mxu0
      %v739 = vadd.f32 %v608, %v738
      %v740 = vpop.f32.mrf.mxu0
      %741 = vdwg.mxu0
      %742 = vmatpush.bf16.msra.mxu0 0
      %743 = vmatpush.bf16.msra.mxu0 0
      %744 = vmatpush.bf16.msra.mxu0 0
      %745 = vmatpush.bf16.msra.mxu0 0
      %746 = vmatpush.bf16.msra.mxu0 0
      %747 = vmatpush.bf16.msra.mxu0 0
      %748 = vmatpush.bf16.msra.mxu0 0
      %749 = vmatpush.bf16.msra.mxu0 %v699
      %750 = vmatmul.bf16.gmra.mxu0 %v690
      %v751 = vpop.f32.mrf.mxu0
      %v752 = vadd.f32 %v621, %v751
      %v753 = vpop.f32.mrf.mxu0
      %754 = vdwg.mxu0
      %755 = vmatpush.bf16.msra.mxu0 0
      %756 = vmatpush.bf16.msra.mxu0 0
      %757 = vmatpush.bf16.msra.mxu0 0
      %758 = vmatpush.bf16.msra.mxu0 0
      %759 = vmatpush.bf16.msra.mxu0 0
      %760 = vmatpush.bf16.msra.mxu0 0
      %761 = vmatpush.bf16.msra.mxu0 0
      %762 = vmatpush.bf16.msra.mxu0 %v702
      %763 = vmatmul.bf16.gmra.mxu0 %v690
      %v764 = vpop.f32.mrf.mxu0
      %v765 = vadd.f32 %v634, %v764
      %v766 = vpop.f32.mrf.mxu0
      %767 = vdwg.mxu0
      %768 = vmatpush.bf16.msra.mxu0 0
      %769 = vmatpush.bf16.msra.mxu0 0
      %770 = vmatpush.bf16.msra.mxu0 0
      %771 = vmatpush.bf16.msra.mxu0 0
      %772 = vmatpush.bf16.msra.mxu0 0
      %773 = vmatpush.bf16.msra.mxu0 0
      %774 = vmatpush.bf16.msra.mxu0 0
      %775 = vmatpush.bf16.msra.mxu0 %v705
      %776 = vmatmul.bf16.gmra.mxu0 %v690
      %v777 = vpop.f32.mrf.mxu0
      %v778 = vadd.f32 %v647, %v777
      %v779 = vpop.f32.mrf.mxu0
      %780 = vdwg.mxu0
      %781 = vmatpush.bf16.msra.mxu0 0
      %782 = vmatpush.bf16.msra.mxu0 0
      %783 = vmatpush.bf16.msra.mxu0 0
      %784 = vmatpush.bf16.msra.mxu0 0
      %785 = vmatpush.bf16.msra.mxu0 0
      %786 = vmatpush.bf16.msra.mxu0 0
      %787 = vmatpush.bf16.msra.mxu0 0
      %788 = vmatpush.bf16.msra.mxu0 %v708
      %789 = vmatmul.bf16.gmra.mxu0 %v690
      %v790 = vpop.f32.mrf.mxu0
      %v791 = vadd.f32 %v660, %v790
      %v792 = vpop.f32.mrf.mxu0
      %793 = vdwg.mxu0
      %794 = vmatpush.bf16.msra.mxu0 0
      %795 = vmatpush.bf16.msra.mxu0 0
      %796 = vmatpush.bf16.msra.mxu0 0
      %797 = vmatpush.bf16.msra.mxu0 0
      %798 = vmatpush.bf16.msra.mxu0 0
      %799 = vmatpush.bf16.msra.mxu0 0
      %800 = vmatpush.bf16.msra.mxu0 0
      %801 = vmatpush.bf16.msra.mxu0 %v711
      %802 = vmatmul.bf16.gmra.mxu0 %v690
      %v803 = vpop.f32.mrf.mxu0
      %v804 = vadd.f32 %v673, %v803
      %v805 = vpop.f32.mrf.mxu0
      %806 = vdwg.mxu0
      %807 = vmatpush.bf16.msra.mxu0 0
      %808 = vmatpush.bf16.msra.mxu0 0
      %809 = vmatpush.bf16.msra.mxu0 0
      %810 = vmatpush.bf16.msra.mxu0 0
      %811 = vmatpush.bf16.msra.mxu0 0
      %812 = vmatpush.bf16.msra.mxu0 0
      %813 = vmatpush.bf16.msra.mxu0 0
      %814 = vmatpush.bf16.msra.mxu0 %v714
      %815 = vmatmul.bf16.gmra.mxu0 %v690
      %v816 = vpop.f32.mrf.mxu0
      %v817 = vadd.f32 %v686, %v816
      %v818 = vpop.f32.mrf.mxu0
      %819 = vdwg.mxu0
      %v820 = vsel %vm353, 1, 0
      %v821 = vsel %vm354, 1, 0
      %v822 = vsel %vm355, 1, 0
      %v823 = vsel %vm356, 1, 0
      %v824 = vsel %vm357, 1, 0
      %v825 = vsel %vm358, 1, 0
      %v826 = vsel %vm359, 1, 0
      %v827 = vsel %vm360, 1, 0
      %vm828 = vcmp.eq.s32.totalorder %v820, 1
      %vm829 = vcmp.eq.s32.totalorder %v821, 1
      %vm830 = vcmp.eq.s32.totalorder %v822, 1
      %vm831 = vcmp.eq.s32.totalorder %v823, 1
      %vm832 = vcmp.eq.s32.totalorder %v824, 1
      %vm833 = vcmp.eq.s32.totalorder %v825, 1
      %vm834 = vcmp.eq.s32.totalorder %v826, 1
      %vm835 = vcmp.eq.s32.totalorder %v827, 1
      %836 = vrot.lane.b32.xlu0 0.0, 31
      %v837 = vpop.permute.xlu0 %836
      %838 = vrot.lane.b32.xlu0 %v427, 31
      %v839 = vpop.permute.xlu0 %838
      %840 = vrot.lane.b32.xlu0 %v428, 31
      %v841 = vpop.permute.xlu0 %840
      %842 = vrot.lane.b32.xlu0 %v429, 31
      %v843 = vpop.permute.xlu0 %842
      %844 = vrot.lane.b32.xlu0 %v430, 31
      %v845 = vpop.permute.xlu0 %844
      %846 = vrot.lane.b32.xlu0 %v431, 31
      %v847 = vpop.permute.xlu0 %846
      %848 = vrot.lane.b32.xlu0 %v432, 31
      %v849 = vpop.permute.xlu0 %848
      %850 = vrot.lane.b32.xlu0 %v433, 31
      %v851 = vpop.permute.xlu0 %850
      %852 = vrot.lane.b32.xlu0 %v434, 31
      %v853 = vpop.permute.xlu0 %852
      %vm854 = vcmask 252928
      %v855 = vsel %vm854, %v837, %v839
      %v856 = vsel %vm854, %v839, %v841
      %v857 = vsel %vm854, %v841, %v843
      %v858 = vsel %vm854, %v843, %v845
      %v859 = vsel %vm854, %v845, %v847
      %v860 = vsel %vm854, %v847, %v849
      %v861 = vsel %vm854, %v849, %v851
      %v862 = vsel %vm854, %v851, %v853
      %v871 = vsel %vm828, %v855, 0.0
      %v872 = vsel %vm829, %v856, 0.0
      %v873 = vsel %vm830, %v857, 0.0
      %v874 = vsel %vm831, %v858, 0.0
      %v875 = vsel %vm832, %v859, 0.0
      %v876 = vsel %vm833, %v860, 0.0
      %v877 = vsel %vm834, %v861, 0.0
      %v878 = vsel %vm835, %v862, 0.0
      %v879 = vpack.c.bf16 %v871, %v871
      %v880 = vpack.c.bf16 %v872, %v872
      %v881 = vpack.c.bf16 %v873, %v873
      %v882 = vpack.c.bf16 %v874, %v874
      %v883 = vpack.c.bf16 %v875, %v875
      %v884 = vpack.c.bf16 %v876, %v876
      %v885 = vpack.c.bf16 %v877, %v877
      %v886 = vpack.c.bf16 %v878, %v878
      %v888 = vsel %vm556, %v363, 0
      %v891 = vsel %vm560, %v879, 0
      %v894 = vsel %vm560, %v880, 0
      %v897 = vsel %vm560, %v881, 0
      %v900 = vsel %vm560, %v882, 0
      %v903 = vsel %vm560, %v883, 0
      %v906 = vsel %vm560, %v884, 0
      %v909 = vsel %vm560, %v885, 0
      %v912 = vsel %vm560, %v886, 0
      %914 = vmatpush.bf16.msra.mxu0 0
      %915 = vmatpush.bf16.msra.mxu0 0
      %916 = vmatpush.bf16.msra.mxu0 0
      %917 = vmatpush.bf16.msra.mxu0 0
      %918 = vmatpush.bf16.msra.mxu0 0
      %919 = vmatpush.bf16.msra.mxu0 0
      %920 = vmatpush.bf16.msra.mxu0 0
      %921 = vmatpush.bf16.msra.mxu0 %v891
      %922 = vmatmul.bf16.gmra.mxu0 %v888
      %v923 = vpop.f32.mrf.mxu0
      %v924 = vadd.f32 0.0, %v923
      %v925 = vpop.f32.mrf.mxu0
      %926 = vdwg.mxu0
      %927 = vmatpush.bf16.msra.mxu0 0
      %928 = vmatpush.bf16.msra.mxu0 0
      %929 = vmatpush.bf16.msra.mxu0 0
      %930 = vmatpush.bf16.msra.mxu0 0
      %931 = vmatpush.bf16.msra.mxu0 0
      %932 = vmatpush.bf16.msra.mxu0 0
      %933 = vmatpush.bf16.msra.mxu0 0
      %934 = vmatpush.bf16.msra.mxu0 %v894
      %935 = vmatmul.bf16.gmra.mxu0 %v888
      %v936 = vpop.f32.mrf.mxu0
      %v937 = vadd.f32 0.0, %v936
      %v938 = vpop.f32.mrf.mxu0
      %939 = vdwg.mxu0
      %940 = vmatpush.bf16.msra.mxu0 0
      %941 = vmatpush.bf16.msra.mxu0 0
      %942 = vmatpush.bf16.msra.mxu0 0
      %943 = vmatpush.bf16.msra.mxu0 0
      %944 = vmatpush.bf16.msra.mxu0 0
      %945 = vmatpush.bf16.msra.mxu0 0
      %946 = vmatpush.bf16.msra.mxu0 0
      %947 = vmatpush.bf16.msra.mxu0 %v897
      %948 = vmatmul.bf16.gmra.mxu0 %v888
      %v949 = vpop.f32.mrf.mxu0
      %v950 = vadd.f32 0.0, %v949
      %v951 = vpop.f32.mrf.mxu0
      %952 = vdwg.mxu0
      %953 = vmatpush.bf16.msra.mxu0 0
      %954 = vmatpush.bf16.msra.mxu0 0
      %955 = vmatpush.bf16.msra.mxu0 0
      %956 = vmatpush.bf16.msra.mxu0 0
      %957 = vmatpush.bf16.msra.mxu0 0
      %958 = vmatpush.bf16.msra.mxu0 0
      %959 = vmatpush.bf16.msra.mxu0 0
      %960 = vmatpush.bf16.msra.mxu0 %v900
      %961 = vmatmul.bf16.gmra.mxu0 %v888
      %v962 = vpop.f32.mrf.mxu0
      %v963 = vadd.f32 0.0, %v962
      %v964 = vpop.f32.mrf.mxu0
      %965 = vdwg.mxu0
      %966 = vmatpush.bf16.msra.mxu0 0
      %967 = vmatpush.bf16.msra.mxu0 0
      %968 = vmatpush.bf16.msra.mxu0 0
      %969 = vmatpush.bf16.msra.mxu0 0
      %970 = vmatpush.bf16.msra.mxu0 0
      %971 = vmatpush.bf16.msra.mxu0 0
      %972 = vmatpush.bf16.msra.mxu0 0
      %973 = vmatpush.bf16.msra.mxu0 %v903
      %974 = vmatmul.bf16.gmra.mxu0 %v888
      %v975 = vpop.f32.mrf.mxu0
      %v976 = vadd.f32 0.0, %v975
      %v977 = vpop.f32.mrf.mxu0
      %978 = vdwg.mxu0
      %979 = vmatpush.bf16.msra.mxu0 0
      %980 = vmatpush.bf16.msra.mxu0 0
      %981 = vmatpush.bf16.msra.mxu0 0
      %982 = vmatpush.bf16.msra.mxu0 0
      %983 = vmatpush.bf16.msra.mxu0 0
      %984 = vmatpush.bf16.msra.mxu0 0
      %985 = vmatpush.bf16.msra.mxu0 0
      %986 = vmatpush.bf16.msra.mxu0 %v906
      %987 = vmatmul.bf16.gmra.mxu0 %v888
      %v988 = vpop.f32.mrf.mxu0
      %v989 = vadd.f32 0.0, %v988
      %v990 = vpop.f32.mrf.mxu0
      %991 = vdwg.mxu0
      %992 = vmatpush.bf16.msra.mxu0 0
      %993 = vmatpush.bf16.msra.mxu0 0
      %994 = vmatpush.bf16.msra.mxu0 0
      %995 = vmatpush.bf16.msra.mxu0 0
      %996 = vmatpush.bf16.msra.mxu0 0
      %997 = vmatpush.bf16.msra.mxu0 0
      %998 = vmatpush.bf16.msra.mxu0 0
      %999 = vmatpush.bf16.msra.mxu0 %v909
      %1000 = vmatmul.bf16.gmra.mxu0 %v888
      %v1001 = vpop.f32.mrf.mxu0
      %v1002 = vadd.f32 0.0, %v1001
      %v1003 = vpop.f32.mrf.mxu0
      %1004 = vdwg.mxu0
      %1005 = vmatpush.bf16.msra.mxu0 0
      %1006 = vmatpush.bf16.msra.mxu0 0
      %1007 = vmatpush.bf16.msra.mxu0 0
      %1008 = vmatpush.bf16.msra.mxu0 0
      %1009 = vmatpush.bf16.msra.mxu0 0
      %1010 = vmatpush.bf16.msra.mxu0 0
      %1011 = vmatpush.bf16.msra.mxu0 0
      %1012 = vmatpush.bf16.msra.mxu0 %v912
      %1013 = vmatmul.bf16.gmra.mxu0 %v888
      %v1014 = vpop.f32.mrf.mxu0
      %v1015 = vadd.f32 0.0, %v1014
      %v1016 = vpop.f32.mrf.mxu0
      %1017 = vdwg.mxu0
      %v1018 = vadd.f32 %v726, %v924
      %v1019 = vadd.f32 %v739, %v937
      %v1020 = vadd.f32 %v752, %v950
      %v1021 = vadd.f32 %v765, %v963
      %v1022 = vadd.f32 %v778, %v976
      %v1023 = vadd.f32 %v791, %v989
      %v1024 = vadd.f32 %v804, %v1002
      %v1025 = vadd.f32 %v817, %v1015
      %1026 = vrot.lane.b32.xlu0 0.0, 1
      %v1027 = vpop.permute.xlu0 %1026
      %1028 = vrot.lane.b32.xlu0 %v427, 1
      %v1029 = vpop.permute.xlu0 %1028
      %1030 = vrot.lane.b32.xlu0 %v428, 1
      %v1031 = vpop.permute.xlu0 %1030
      %1032 = vrot.lane.b32.xlu0 %v429, 1
      %v1033 = vpop.permute.xlu0 %1032
      %1034 = vrot.lane.b32.xlu0 %v430, 1
      %v1035 = vpop.permute.xlu0 %1034
      %1036 = vrot.lane.b32.xlu0 %v431, 1
      %v1037 = vpop.permute.xlu0 %1036
      %1038 = vrot.lane.b32.xlu0 %v432, 1
      %v1039 = vpop.permute.xlu0 %1038
      %1040 = vrot.lane.b32.xlu0 %v433, 1
      %v1041 = vpop.permute.xlu0 %1040
      %1042 = vrot.lane.b32.xlu0 %v434, 1
      %v1043 = vpop.permute.xlu0 %1042
      %vm1044 = vcmask 7168
      %v1045 = vsel %vm1044, %v1027, %v1029
      %v1046 = vsel %vm1044, %v1029, %v1031
      %v1047 = vsel %vm1044, %v1031, %v1033
      %v1048 = vsel %vm1044, %v1033, %v1035
      %v1049 = vsel %vm1044, %v1035, %v1037
      %v1050 = vsel %vm1044, %v1037, %v1039
      %v1051 = vsel %vm1044, %v1039, %v1041
      %v1052 = vsel %vm1044, %v1041, %v1043
      %v1061 = vsel %vm443, %v1045, 0.0
      %v1062 = vsel %vm444, %v1046, 0.0
      %v1063 = vsel %vm445, %v1047, 0.0
      %v1064 = vsel %vm446, %v1048, 0.0
      %v1065 = vsel %vm447, %v1049, 0.0
      %v1066 = vsel %vm448, %v1050, 0.0
      %v1067 = vsel %vm449, %v1051, 0.0
      %v1068 = vsel %vm450, %v1052, 0.0
      %v1069 = vpack.c.bf16 %v1061, %v1061
      %v1070 = vpack.c.bf16 %v1062, %v1062
      %v1071 = vpack.c.bf16 %v1063, %v1063
      %v1072 = vpack.c.bf16 %v1064, %v1064
      %v1073 = vpack.c.bf16 %v1065, %v1065
      %v1074 = vpack.c.bf16 %v1066, %v1066
      %v1075 = vpack.c.bf16 %v1067, %v1067
      %v1076 = vpack.c.bf16 %v1068, %v1068
      %v1078 = vsel %vm556, %v364, 0
      %v1081 = vsel %vm560, %v1069, 0
      %v1084 = vsel %vm560, %v1070, 0
      %v1087 = vsel %vm560, %v1071, 0
      %v1090 = vsel %vm560, %v1072, 0
      %v1093 = vsel %vm560, %v1073, 0
      %v1096 = vsel %vm560, %v1074, 0
      %v1099 = vsel %vm560, %v1075, 0
      %v1102 = vsel %vm560, %v1076, 0
      %1104 = vmatpush.bf16.msra.mxu0 0
      %1105 = vmatpush.bf16.msra.mxu0 0
      %1106 = vmatpush.bf16.msra.mxu0 0
      %1107 = vmatpush.bf16.msra.mxu0 0
      %1108 = vmatpush.bf16.msra.mxu0 0
      %1109 = vmatpush.bf16.msra.mxu0 0
      %1110 = vmatpush.bf16.msra.mxu0 0
      %1111 = vmatpush.bf16.msra.mxu0 %v1081
      %1112 = vmatmul.bf16.gmra.mxu0 %v1078
      %v1113 = vpop.f32.mrf.mxu0
      %v1114 = vadd.f32 0.0, %v1113
      %v1115 = vpop.f32.mrf.mxu0
      %1116 = vdwg.mxu0
      %1117 = vmatpush.bf16.msra.mxu0 0
      %1118 = vmatpush.bf16.msra.mxu0 0
      %1119 = vmatpush.bf16.msra.mxu0 0
      %1120 = vmatpush.bf16.msra.mxu0 0
      %1121 = vmatpush.bf16.msra.mxu0 0
      %1122 = vmatpush.bf16.msra.mxu0 0
      %1123 = vmatpush.bf16.msra.mxu0 0
      %1124 = vmatpush.bf16.msra.mxu0 %v1084
      %1125 = vmatmul.bf16.gmra.mxu0 %v1078
      %v1126 = vpop.f32.mrf.mxu0
      %v1127 = vadd.f32 0.0, %v1126
      %v1128 = vpop.f32.mrf.mxu0
      %1129 = vdwg.mxu0
      %1130 = vmatpush.bf16.msra.mxu0 0
      %1131 = vmatpush.bf16.msra.mxu0 0
      %1132 = vmatpush.bf16.msra.mxu0 0
      %1133 = vmatpush.bf16.msra.mxu0 0
      %1134 = vmatpush.bf16.msra.mxu0 0
      %1135 = vmatpush.bf16.msra.mxu0 0
      %1136 = vmatpush.bf16.msra.mxu0 0
      %1137 = vmatpush.bf16.msra.mxu0 %v1087
      %1138 = vmatmul.bf16.gmra.mxu0 %v1078
      %v1139 = vpop.f32.mrf.mxu0
      %v1140 = vadd.f32 0.0, %v1139
      %v1141 = vpop.f32.mrf.mxu0
      %1142 = vdwg.mxu0
      %1143 = vmatpush.bf16.msra.mxu0 0
      %1144 = vmatpush.bf16.msra.mxu0 0
      %1145 = vmatpush.bf16.msra.mxu0 0
      %1146 = vmatpush.bf16.msra.mxu0 0
      %1147 = vmatpush.bf16.msra.mxu0 0
      %1148 = vmatpush.bf16.msra.mxu0 0
      %1149 = vmatpush.bf16.msra.mxu0 0
      %1150 = vmatpush.bf16.msra.mxu0 %v1090
      %1151 = vmatmul.bf16.gmra.mxu0 %v1078
      %v1152 = vpop.f32.mrf.mxu0
      %v1153 = vadd.f32 0.0, %v1152
      %v1154 = vpop.f32.mrf.mxu0
      %1155 = vdwg.mxu0
      %1156 = vmatpush.bf16.msra.mxu0 0
      %1157 = vmatpush.bf16.msra.mxu0 0
      %1158 = vmatpush.bf16.msra.mxu0 0
      %1159 = vmatpush.bf16.msra.mxu0 0
      %1160 = vmatpush.bf16.msra.mxu0 0
      %1161 = vmatpush.bf16.msra.mxu0 0
      %1162 = vmatpush.bf16.msra.mxu0 0
      %1163 = vmatpush.bf16.msra.mxu0 %v1093
      %1164 = vmatmul.bf16.gmra.mxu0 %v1078
      %v1165 = vpop.f32.mrf.mxu0
      %v1166 = vadd.f32 0.0, %v1165
      %v1167 = vpop.f32.mrf.mxu0
      %1168 = vdwg.mxu0
      %1169 = vmatpush.bf16.msra.mxu0 0
      %1170 = vmatpush.bf16.msra.mxu0 0
      %1171 = vmatpush.bf16.msra.mxu0 0
      %1172 = vmatpush.bf16.msra.mxu0 0
      %1173 = vmatpush.bf16.msra.mxu0 0
      %1174 = vmatpush.bf16.msra.mxu0 0
      %1175 = vmatpush.bf16.msra.mxu0 0
      %1176 = vmatpush.bf16.msra.mxu0 %v1096
      %1177 = vmatmul.bf16.gmra.mxu0 %v1078
      %v1178 = vpop.f32.mrf.mxu0
      %v1179 = vadd.f32 0.0, %v1178
      %v1180 = vpop.f32.mrf.mxu0
      %1181 = vdwg.mxu0
      %1182 = vmatpush.bf16.msra.mxu0 0
      %1183 = vmatpush.bf16.msra.mxu0 0
      %1184 = vmatpush.bf16.msra.mxu0 0
      %1185 = vmatpush.bf16.msra.mxu0 0
      %1186 = vmatpush.bf16.msra.mxu0 0
      %1187 = vmatpush.bf16.msra.mxu0 0
      %1188 = vmatpush.bf16.msra.mxu0 0
      %1189 = vmatpush.bf16.msra.mxu0 %v1099
      %1190 = vmatmul.bf16.gmra.mxu0 %v1078
      %v1191 = vpop.f32.mrf.mxu0
      %v1192 = vadd.f32 0.0, %v1191
      %v1193 = vpop.f32.mrf.mxu0
      %1194 = vdwg.mxu0
      %1195 = vmatpush.bf16.msra.mxu0 0
      %1196 = vmatpush.bf16.msra.mxu0 0
      %1197 = vmatpush.bf16.msra.mxu0 0
      %1198 = vmatpush.bf16.msra.mxu0 0
      %1199 = vmatpush.bf16.msra.mxu0 0
      %1200 = vmatpush.bf16.msra.mxu0 0
      %1201 = vmatpush.bf16.msra.mxu0 0
      %1202 = vmatpush.bf16.msra.mxu0 %v1102
      %1203 = vmatmul.bf16.gmra.mxu0 %v1078
      %v1204 = vpop.f32.mrf.mxu0
      %v1205 = vadd.f32 0.0, %v1204
      %v1206 = vpop.f32.mrf.mxu0
      %1207 = vdwg.mxu0
      %v1208 = vadd.f32 %v1018, %v1114
      %v1209 = vadd.f32 %v1019, %v1127
      %v1210 = vadd.f32 %v1020, %v1140
      %v1211 = vadd.f32 %v1021, %v1153
      %v1212 = vadd.f32 %v1022, %v1166
      %v1213 = vadd.f32 %v1023, %v1179
      %v1214 = vadd.f32 %v1024, %v1192
      %v1215 = vadd.f32 %v1025, %v1205
      %v1217 = vsel %vm556, %v365, 0
      %v1220 = vsel %vm560, %v512, 0
      %v1223 = vsel %vm560, %v513, 0
      %v1226 = vsel %vm560, %v514, 0
      %v1229 = vsel %vm560, %v515, 0
      %v1232 = vsel %vm560, %v516, 0
      %v1235 = vsel %vm560, %v517, 0
      %v1238 = vsel %vm560, %v518, 0
      %v1241 = vsel %vm560, %v519, 0
      %1243 = vmatpush.bf16.msra.mxu0 0
      %1244 = vmatpush.bf16.msra.mxu0 0
      %1245 = vmatpush.bf16.msra.mxu0 0
      %1246 = vmatpush.bf16.msra.mxu0 0
      %1247 = vmatpush.bf16.msra.mxu0 0
      %1248 = vmatpush.bf16.msra.mxu0 0
      %1249 = vmatpush.bf16.msra.mxu0 0
      %1250 = vmatpush.bf16.msra.mxu0 %v1220
      %1251 = vmatmul.bf16.gmra.mxu0 %v1217
      %v1252 = vpop.f32.mrf.mxu0
      %v1253 = vadd.f32 0.0, %v1252
      %v1254 = vpop.f32.mrf.mxu0
      %1255 = vdwg.mxu0
      %1256 = vmatpush.bf16.msra.mxu0 0
      %1257 = vmatpush.bf16.msra.mxu0 0
      %1258 = vmatpush.bf16.msra.mxu0 0
      %1259 = vmatpush.bf16.msra.mxu0 0
      %1260 = vmatpush.bf16.msra.mxu0 0
      %1261 = vmatpush.bf16.msra.mxu0 0
      %1262 = vmatpush.bf16.msra.mxu0 0
      %1263 = vmatpush.bf16.msra.mxu0 %v1223
      %1264 = vmatmul.bf16.gmra.mxu0 %v1217
      %v1265 = vpop.f32.mrf.mxu0
      %v1266 = vadd.f32 0.0, %v1265
      %v1267 = vpop.f32.mrf.mxu0
      %1268 = vdwg.mxu0
      %1269 = vmatpush.bf16.msra.mxu0 0
      %1270 = vmatpush.bf16.msra.mxu0 0
      %1271 = vmatpush.bf16.msra.mxu0 0
      %1272 = vmatpush.bf16.msra.mxu0 0
      %1273 = vmatpush.bf16.msra.mxu0 0
      %1274 = vmatpush.bf16.msra.mxu0 0
      %1275 = vmatpush.bf16.msra.mxu0 0
      %1276 = vmatpush.bf16.msra.mxu0 %v1226
      %1277 = vmatmul.bf16.gmra.mxu0 %v1217
      %v1278 = vpop.f32.mrf.mxu0
      %v1279 = vadd.f32 0.0, %v1278
      %v1280 = vpop.f32.mrf.mxu0
      %1281 = vdwg.mxu0
      %1282 = vmatpush.bf16.msra.mxu0 0
      %1283 = vmatpush.bf16.msra.mxu0 0
      %1284 = vmatpush.bf16.msra.mxu0 0
      %1285 = vmatpush.bf16.msra.mxu0 0
      %1286 = vmatpush.bf16.msra.mxu0 0
      %1287 = vmatpush.bf16.msra.mxu0 0
      %1288 = vmatpush.bf16.msra.mxu0 0
      %1289 = vmatpush.bf16.msra.mxu0 %v1229
      %1290 = vmatmul.bf16.gmra.mxu0 %v1217
      %v1291 = vpop.f32.mrf.mxu0
      %v1292 = vadd.f32 0.0, %v1291
      %v1293 = vpop.f32.mrf.mxu0
      %1294 = vdwg.mxu0
      %1295 = vmatpush.bf16.msra.mxu0 0
      %1296 = vmatpush.bf16.msra.mxu0 0
      %1297 = vmatpush.bf16.msra.mxu0 0
      %1298 = vmatpush.bf16.msra.mxu0 0
      %1299 = vmatpush.bf16.msra.mxu0 0
      %1300 = vmatpush.bf16.msra.mxu0 0
      %1301 = vmatpush.bf16.msra.mxu0 0
      %1302 = vmatpush.bf16.msra.mxu0 %v1232
      %1303 = vmatmul.bf16.gmra.mxu0 %v1217
      %v1304 = vpop.f32.mrf.mxu0
      %v1305 = vadd.f32 0.0, %v1304
      %v1306 = vpop.f32.mrf.mxu0
      %1307 = vdwg.mxu0
      %1308 = vmatpush.bf16.msra.mxu0 0
      %1309 = vmatpush.bf16.msra.mxu0 0
      %1310 = vmatpush.bf16.msra.mxu0 0
      %1311 = vmatpush.bf16.msra.mxu0 0
      %1312 = vmatpush.bf16.msra.mxu0 0
      %1313 = vmatpush.bf16.msra.mxu0 0
      %1314 = vmatpush.bf16.msra.mxu0 0
      %1315 = vmatpush.bf16.msra.mxu0 %v1235
      %1316 = vmatmul.bf16.gmra.mxu0 %v1217
      %v1317 = vpop.f32.mrf.mxu0
      %v1318 = vadd.f32 0.0, %v1317
      %v1319 = vpop.f32.mrf.mxu0
      %1320 = vdwg.mxu0
      %1321 = vmatpush.bf16.msra.mxu0 0
      %1322 = vmatpush.bf16.msra.mxu0 0
      %1323 = vmatpush.bf16.msra.mxu0 0
      %1324 = vmatpush.bf16.msra.mxu0 0
      %1325 = vmatpush.bf16.msra.mxu0 0
      %1326 = vmatpush.bf16.msra.mxu0 0
      %1327 = vmatpush.bf16.msra.mxu0 0
      %1328 = vmatpush.bf16.msra.mxu0 %v1238
      %1329 = vmatmul.bf16.gmra.mxu0 %v1217
      %v1330 = vpop.f32.mrf.mxu0
      %v1331 = vadd.f32 0.0, %v1330
      %v1332 = vpop.f32.mrf.mxu0
      %1333 = vdwg.mxu0
      %1334 = vmatpush.bf16.msra.mxu0 0
      %1335 = vmatpush.bf16.msra.mxu0 0
      %1336 = vmatpush.bf16.msra.mxu0 0
      %1337 = vmatpush.bf16.msra.mxu0 0
      %1338 = vmatpush.bf16.msra.mxu0 0
      %1339 = vmatpush.bf16.msra.mxu0 0
      %1340 = vmatpush.bf16.msra.mxu0 0
      %1341 = vmatpush.bf16.msra.mxu0 %v1241
      %1342 = vmatmul.bf16.gmra.mxu0 %v1217
      %v1343 = vpop.f32.mrf.mxu0
      %v1344 = vadd.f32 0.0, %v1343
      %v1345 = vpop.f32.mrf.mxu0
      %1346 = vdwg.mxu0
      %v1347 = vadd.f32 %v1208, %v1253
      %v1348 = vadd.f32 %v1209, %v1266
      %v1349 = vadd.f32 %v1210, %v1279
      %v1350 = vadd.f32 %v1211, %v1292
      %v1351 = vadd.f32 %v1212, %v1305
      %v1352 = vadd.f32 %v1213, %v1318
      %v1353 = vadd.f32 %v1214, %v1331
      %v1354 = vadd.f32 %v1215, %v1344
      %1355 = vrot.lane.b32.xlu0 %v427, 127
      %v1356 = vpop.permute.xlu0 %1355
      %1357 = vrot.lane.b32.xlu0 %v428, 127
      %v1358 = vpop.permute.xlu0 %1357
      %1359 = vrot.lane.b32.xlu0 %v429, 127
      %v1360 = vpop.permute.xlu0 %1359
      %1361 = vrot.lane.b32.xlu0 %v430, 127
      %v1362 = vpop.permute.xlu0 %1361
      %1363 = vrot.lane.b32.xlu0 %v431, 127
      %v1364 = vpop.permute.xlu0 %1363
      %1365 = vrot.lane.b32.xlu0 %v432, 127
      %v1366 = vpop.permute.xlu0 %1365
      %1367 = vrot.lane.b32.xlu0 %v433, 127
      %v1368 = vpop.permute.xlu0 %1367
      %1369 = vrot.lane.b32.xlu0 %v434, 127
      %v1370 = vpop.permute.xlu0 %1369
      %1371 = vrot.lane.b32.xlu0 0.0, 127
      %v1372 = vpop.permute.xlu0 %1371
      %vm1373 = vcmask 1039360
      %v1374 = vsel %vm1373, %v1356, %v1358
      %v1375 = vsel %vm1373, %v1358, %v1360
      %v1376 = vsel %vm1373, %v1360, %v1362
      %v1377 = vsel %vm1373, %v1362, %v1364
      %v1378 = vsel %vm1373, %v1364, %v1366
      %v1379 = vsel %vm1373, %v1366, %v1368
      %v1380 = vsel %vm1373, %v1368, %v1370
      %v1381 = vsel %vm1373, %v1370, %v1372
      %v1390 = vsel %vm828, %v1374, 0.0
      %v1391 = vsel %vm829, %v1375, 0.0
      %v1392 = vsel %vm830, %v1376, 0.0
      %v1393 = vsel %vm831, %v1377, 0.0
      %v1394 = vsel %vm832, %v1378, 0.0
      %v1395 = vsel %vm833, %v1379, 0.0
      %v1396 = vsel %vm834, %v1380, 0.0
      %v1397 = vsel %vm835, %v1381, 0.0
      %v1398 = vpack.c.bf16 %v1390, %v1390
      %v1399 = vpack.c.bf16 %v1391, %v1391
      %v1400 = vpack.c.bf16 %v1392, %v1392
      %v1401 = vpack.c.bf16 %v1393, %v1393
      %v1402 = vpack.c.bf16 %v1394, %v1394
      %v1403 = vpack.c.bf16 %v1395, %v1395
      %v1404 = vpack.c.bf16 %v1396, %v1396
      %v1405 = vpack.c.bf16 %v1397, %v1397
      %v1407 = vsel %vm556, %v366, 0
      %v1410 = vsel %vm560, %v1398, 0
      %v1413 = vsel %vm560, %v1399, 0
      %v1416 = vsel %vm560, %v1400, 0
      %v1419 = vsel %vm560, %v1401, 0
      %v1422 = vsel %vm560, %v1402, 0
      %v1425 = vsel %vm560, %v1403, 0
      %v1428 = vsel %vm560, %v1404, 0
      %v1431 = vsel %vm560, %v1405, 0
      %1433 = vmatpush.bf16.msra.mxu0 0
      %1434 = vmatpush.bf16.msra.mxu0 0
      %1435 = vmatpush.bf16.msra.mxu0 0
      %1436 = vmatpush.bf16.msra.mxu0 0
      %1437 = vmatpush.bf16.msra.mxu0 0
      %1438 = vmatpush.bf16.msra.mxu0 0
      %1439 = vmatpush.bf16.msra.mxu0 0
      %1440 = vmatpush.bf16.msra.mxu0 %v1410
      %1441 = vmatmul.bf16.gmra.mxu0 %v1407
      %v1442 = vpop.f32.mrf.mxu0
      %v1443 = vadd.f32 0.0, %v1442
      %v1444 = vpop.f32.mrf.mxu0
      %1445 = vdwg.mxu0
      %1446 = vmatpush.bf16.msra.mxu0 0
      %1447 = vmatpush.bf16.msra.mxu0 0
      %1448 = vmatpush.bf16.msra.mxu0 0
      %1449 = vmatpush.bf16.msra.mxu0 0
      %1450 = vmatpush.bf16.msra.mxu0 0
      %1451 = vmatpush.bf16.msra.mxu0 0
      %1452 = vmatpush.bf16.msra.mxu0 0
      %1453 = vmatpush.bf16.msra.mxu0 %v1413
      %1454 = vmatmul.bf16.gmra.mxu0 %v1407
      %v1455 = vpop.f32.mrf.mxu0
      %v1456 = vadd.f32 0.0, %v1455
      %v1457 = vpop.f32.mrf.mxu0
      %1458 = vdwg.mxu0
      %1459 = vmatpush.bf16.msra.mxu0 0
      %1460 = vmatpush.bf16.msra.mxu0 0
      %1461 = vmatpush.bf16.msra.mxu0 0
      %1462 = vmatpush.bf16.msra.mxu0 0
      %1463 = vmatpush.bf16.msra.mxu0 0
      %1464 = vmatpush.bf16.msra.mxu0 0
      %1465 = vmatpush.bf16.msra.mxu0 0
      %1466 = vmatpush.bf16.msra.mxu0 %v1416
      %1467 = vmatmul.bf16.gmra.mxu0 %v1407
      %v1468 = vpop.f32.mrf.mxu0
      %v1469 = vadd.f32 0.0, %v1468
      %v1470 = vpop.f32.mrf.mxu0
      %1471 = vdwg.mxu0
      %1472 = vmatpush.bf16.msra.mxu0 0
      %1473 = vmatpush.bf16.msra.mxu0 0
      %1474 = vmatpush.bf16.msra.mxu0 0
      %1475 = vmatpush.bf16.msra.mxu0 0
      %1476 = vmatpush.bf16.msra.mxu0 0
      %1477 = vmatpush.bf16.msra.mxu0 0
      %1478 = vmatpush.bf16.msra.mxu0 0
      %1479 = vmatpush.bf16.msra.mxu0 %v1419
      %1480 = vmatmul.bf16.gmra.mxu0 %v1407
      %v1481 = vpop.f32.mrf.mxu0
      %v1482 = vadd.f32 0.0, %v1481
      %v1483 = vpop.f32.mrf.mxu0
      %1484 = vdwg.mxu0
      %1485 = vmatpush.bf16.msra.mxu0 0
      %1486 = vmatpush.bf16.msra.mxu0 0
      %1487 = vmatpush.bf16.msra.mxu0 0
      %1488 = vmatpush.bf16.msra.mxu0 0
      %1489 = vmatpush.bf16.msra.mxu0 0
      %1490 = vmatpush.bf16.msra.mxu0 0
      %1491 = vmatpush.bf16.msra.mxu0 0
      %1492 = vmatpush.bf16.msra.mxu0 %v1422
      %1493 = vmatmul.bf16.gmra.mxu0 %v1407
      %v1494 = vpop.f32.mrf.mxu0
      %v1495 = vadd.f32 0.0, %v1494
      %v1496 = vpop.f32.mrf.mxu0
      %1497 = vdwg.mxu0
      %1498 = vmatpush.bf16.msra.mxu0 0
      %1499 = vmatpush.bf16.msra.mxu0 0
      %1500 = vmatpush.bf16.msra.mxu0 0
      %1501 = vmatpush.bf16.msra.mxu0 0
      %1502 = vmatpush.bf16.msra.mxu0 0
      %1503 = vmatpush.bf16.msra.mxu0 0
      %1504 = vmatpush.bf16.msra.mxu0 0
      %1505 = vmatpush.bf16.msra.mxu0 %v1425
      %1506 = vmatmul.bf16.gmra.mxu0 %v1407
      %v1507 = vpop.f32.mrf.mxu0
      %v1508 = vadd.f32 0.0, %v1507
      %v1509 = vpop.f32.mrf.mxu0
      %1510 = vdwg.mxu0
      %1511 = vmatpush.bf16.msra.mxu0 0
      %1512 = vmatpush.bf16.msra.mxu0 0
      %1513 = vmatpush.bf16.msra.mxu0 0
      %1514 = vmatpush.bf16.msra.mxu0 0
      %1515 = vmatpush.bf16.msra.mxu0 0
      %1516 = vmatpush.bf16.msra.mxu0 0
      %1517 = vmatpush.bf16.msra.mxu0 0
      %1518 = vmatpush.bf16.msra.mxu0 %v1428
      %1519 = vmatmul.bf16.gmra.mxu0 %v1407
      %v1520 = vpop.f32.mrf.mxu0
      %v1521 = vadd.f32 0.0, %v1520
      %v1522 = vpop.f32.mrf.mxu0
      %1523 = vdwg.mxu0
      %1524 = vmatpush.bf16.msra.mxu0 0
      %1525 = vmatpush.bf16.msra.mxu0 0
      %1526 = vmatpush.bf16.msra.mxu0 0
      %1527 = vmatpush.bf16.msra.mxu0 0
      %1528 = vmatpush.bf16.msra.mxu0 0
      %1529 = vmatpush.bf16.msra.mxu0 0
      %1530 = vmatpush.bf16.msra.mxu0 0
      %1531 = vmatpush.bf16.msra.mxu0 %v1431
      %1532 = vmatmul.bf16.gmra.mxu0 %v1407
      %v1533 = vpop.f32.mrf.mxu0
      %v1534 = vadd.f32 0.0, %v1533
      %v1535 = vpop.f32.mrf.mxu0
      %1536 = vdwg.mxu0
      %v1537 = vadd.f32 %v1347, %v1443
      %v1538 = vadd.f32 %v1348, %v1456
      %v1539 = vadd.f32 %v1349, %v1469
      %v1540 = vadd.f32 %v1350, %v1482
      %v1541 = vadd.f32 %v1351, %v1495
      %v1542 = vadd.f32 %v1352, %v1508
      %v1543 = vadd.f32 %v1353, %v1521
      %v1544 = vadd.f32 %v1354, %v1534
      %1545 = vrot.lane.b32.xlu0 %v427, 97
      %v1546 = vpop.permute.xlu0 %1545
      %1547 = vrot.lane.b32.xlu0 %v428, 97
      %v1548 = vpop.permute.xlu0 %1547
      %1549 = vrot.lane.b32.xlu0 %v429, 97
      %v1550 = vpop.permute.xlu0 %1549
      %1551 = vrot.lane.b32.xlu0 %v430, 97
      %v1552 = vpop.permute.xlu0 %1551
      %1553 = vrot.lane.b32.xlu0 %v431, 97
      %v1554 = vpop.permute.xlu0 %1553
      %1555 = vrot.lane.b32.xlu0 %v432, 97
      %v1556 = vpop.permute.xlu0 %1555
      %1557 = vrot.lane.b32.xlu0 %v433, 97
      %v1558 = vpop.permute.xlu0 %1557
      %1559 = vrot.lane.b32.xlu0 %v434, 97
      %v1560 = vpop.permute.xlu0 %1559
      %1561 = vrot.lane.b32.xlu0 0.0, 97
      %v1562 = vpop.permute.xlu0 %1561
      %vm1563 = vcmask 793600
      %v1564 = vsel %vm1563, %v1546, %v1548
      %v1565 = vsel %vm1563, %v1548, %v1550
      %v1566 = vsel %vm1563, %v1550, %v1552
      %v1567 = vsel %vm1563, %v1552, %v1554
      %v1568 = vsel %vm1563, %v1554, %v1556
      %v1569 = vsel %vm1563, %v1556, %v1558
      %v1570 = vsel %vm1563, %v1558, %v1560
      %v1571 = vsel %vm1563, %v1560, %v1562
      %v1580 = vsel %vm443, %v1564, 0.0
      %v1581 = vsel %vm444, %v1565, 0.0
      %v1582 = vsel %vm445, %v1566, 0.0
      %v1583 = vsel %vm446, %v1567, 0.0
      %v1584 = vsel %vm447, %v1568, 0.0
      %v1585 = vsel %vm448, %v1569, 0.0
      %v1586 = vsel %vm449, %v1570, 0.0
      %v1587 = vsel %vm450, %v1571, 0.0
      %v1588 = vpack.c.bf16 %v1580, %v1580
      %v1589 = vpack.c.bf16 %v1581, %v1581
      %v1590 = vpack.c.bf16 %v1582, %v1582
      %v1591 = vpack.c.bf16 %v1583, %v1583
      %v1592 = vpack.c.bf16 %v1584, %v1584
      %v1593 = vpack.c.bf16 %v1585, %v1585
      %v1594 = vpack.c.bf16 %v1586, %v1586
      %v1595 = vpack.c.bf16 %v1587, %v1587
      %v1597 = vsel %vm556, %v367, 0
      %v1600 = vsel %vm560, %v1588, 0
      %v1603 = vsel %vm560, %v1589, 0
      %v1606 = vsel %vm560, %v1590, 0
      %v1609 = vsel %vm560, %v1591, 0
      %v1612 = vsel %vm560, %v1592, 0
      %v1615 = vsel %vm560, %v1593, 0
      %v1618 = vsel %vm560, %v1594, 0
      %v1621 = vsel %vm560, %v1595, 0
      %1623 = vmatpush.bf16.msra.mxu0 0
      %1624 = vmatpush.bf16.msra.mxu0 0
      %1625 = vmatpush.bf16.msra.mxu0 0
      %1626 = vmatpush.bf16.msra.mxu0 0
      %1627 = vmatpush.bf16.msra.mxu0 0
      %1628 = vmatpush.bf16.msra.mxu0 0
      %1629 = vmatpush.bf16.msra.mxu0 0
      %1630 = vmatpush.bf16.msra.mxu0 %v1600
      %1631 = vmatmul.bf16.gmra.mxu0 %v1597
      %v1632 = vpop.f32.mrf.mxu0
      %v1633 = vadd.f32 0.0, %v1632
      %v1634 = vpop.f32.mrf.mxu0
      %1635 = vdwg.mxu0
      %1636 = vmatpush.bf16.msra.mxu0 0
      %1637 = vmatpush.bf16.msra.mxu0 0
      %1638 = vmatpush.bf16.msra.mxu0 0
      %1639 = vmatpush.bf16.msra.mxu0 0
      %1640 = vmatpush.bf16.msra.mxu0 0
      %1641 = vmatpush.bf16.msra.mxu0 0
      %1642 = vmatpush.bf16.msra.mxu0 0
      %1643 = vmatpush.bf16.msra.mxu0 %v1603
      %1644 = vmatmul.bf16.gmra.mxu0 %v1597
      %v1645 = vpop.f32.mrf.mxu0
      %v1646 = vadd.f32 0.0, %v1645
      %v1647 = vpop.f32.mrf.mxu0
      %1648 = vdwg.mxu0
      %1649 = vmatpush.bf16.msra.mxu0 0
      %1650 = vmatpush.bf16.msra.mxu0 0
      %1651 = vmatpush.bf16.msra.mxu0 0
      %1652 = vmatpush.bf16.msra.mxu0 0
      %1653 = vmatpush.bf16.msra.mxu0 0
      %1654 = vmatpush.bf16.msra.mxu0 0
      %1655 = vmatpush.bf16.msra.mxu0 0
      %1656 = vmatpush.bf16.msra.mxu0 %v1606
      %1657 = vmatmul.bf16.gmra.mxu0 %v1597
      %v1658 = vpop.f32.mrf.mxu0
      %v1659 = vadd.f32 0.0, %v1658
      %v1660 = vpop.f32.mrf.mxu0
      %1661 = vdwg.mxu0
      %1662 = vmatpush.bf16.msra.mxu0 0
      %1663 = vmatpush.bf16.msra.mxu0 0
      %1664 = vmatpush.bf16.msra.mxu0 0
      %1665 = vmatpush.bf16.msra.mxu0 0
      %1666 = vmatpush.bf16.msra.mxu0 0
      %1667 = vmatpush.bf16.msra.mxu0 0
      %1668 = vmatpush.bf16.msra.mxu0 0
      %1669 = vmatpush.bf16.msra.mxu0 %v1609
      %1670 = vmatmul.bf16.gmra.mxu0 %v1597
      %v1671 = vpop.f32.mrf.mxu0
      %v1672 = vadd.f32 0.0, %v1671
      %v1673 = vpop.f32.mrf.mxu0
      %1674 = vdwg.mxu0
      %1675 = vmatpush.bf16.msra.mxu0 0
      %1676 = vmatpush.bf16.msra.mxu0 0
      %1677 = vmatpush.bf16.msra.mxu0 0
      %1678 = vmatpush.bf16.msra.mxu0 0
      %1679 = vmatpush.bf16.msra.mxu0 0
      %1680 = vmatpush.bf16.msra.mxu0 0
      %1681 = vmatpush.bf16.msra.mxu0 0
      %1682 = vmatpush.bf16.msra.mxu0 %v1612
      %1683 = vmatmul.bf16.gmra.mxu0 %v1597
      %v1684 = vpop.f32.mrf.mxu0
      %v1685 = vadd.f32 0.0, %v1684
      %v1686 = vpop.f32.mrf.mxu0
      %1687 = vdwg.mxu0
      %1688 = vmatpush.bf16.msra.mxu0 0
      %1689 = vmatpush.bf16.msra.mxu0 0
      %1690 = vmatpush.bf16.msra.mxu0 0
      %1691 = vmatpush.bf16.msra.mxu0 0
      %1692 = vmatpush.bf16.msra.mxu0 0
      %1693 = vmatpush.bf16.msra.mxu0 0
      %1694 = vmatpush.bf16.msra.mxu0 0
      %1695 = vmatpush.bf16.msra.mxu0 %v1615
      %1696 = vmatmul.bf16.gmra.mxu0 %v1597
      %v1697 = vpop.f32.mrf.mxu0
      %v1698 = vadd.f32 0.0, %v1697
      %v1699 = vpop.f32.mrf.mxu0
      %1700 = vdwg.mxu0
      %1701 = vmatpush.bf16.msra.mxu0 0
      %1702 = vmatpush.bf16.msra.mxu0 0
      %1703 = vmatpush.bf16.msra.mxu0 0
      %1704 = vmatpush.bf16.msra.mxu0 0
      %1705 = vmatpush.bf16.msra.mxu0 0
      %1706 = vmatpush.bf16.msra.mxu0 0
      %1707 = vmatpush.bf16.msra.mxu0 0
      %1708 = vmatpush.bf16.msra.mxu0 %v1618
      %1709 = vmatmul.bf16.gmra.mxu0 %v1597
      %v1710 = vpop.f32.mrf.mxu0
      %v1711 = vadd.f32 0.0, %v1710
      %v1712 = vpop.f32.mrf.mxu0
      %1713 = vdwg.mxu0
      %1714 = vmatpush.bf16.msra.mxu0 0
      %1715 = vmatpush.bf16.msra.mxu0 0
      %1716 = vmatpush.bf16.msra.mxu0 0
      %1717 = vmatpush.bf16.msra.mxu0 0
      %1718 = vmatpush.bf16.msra.mxu0 0
      %1719 = vmatpush.bf16.msra.mxu0 0
      %1720 = vmatpush.bf16.msra.mxu0 0
      %1721 = vmatpush.bf16.msra.mxu0 %v1621
      %1722 = vmatmul.bf16.gmra.mxu0 %v1597
      %v1723 = vpop.f32.mrf.mxu0
      %v1724 = vadd.f32 0.0, %v1723
      %v1725 = vpop.f32.mrf.mxu0
      %1726 = vdwg.mxu0
      %v1727 = vadd.f32 %v1537, %v1633
      %v1728 = vadd.f32 %v1538, %v1646
      %v1729 = vadd.f32 %v1539, %v1659
      %v1730 = vadd.f32 %v1540, %v1672
      %v1731 = vadd.f32 %v1541, %v1685
      %v1732 = vadd.f32 %v1542, %v1698
      %v1733 = vadd.f32 %v1543, %v1711
      %v1734 = vadd.f32 %v1544, %v1724
      %1735 = vrot.lane.b32.xlu0 %v512, 96
      %v1736 = vpop.permute.xlu0 %1735
      %1737 = vrot.lane.b32.xlu0 %v513, 96
      %v1738 = vpop.permute.xlu0 %1737
      %1739 = vrot.lane.b32.xlu0 %v514, 96
      %v1740 = vpop.permute.xlu0 %1739
      %1741 = vrot.lane.b32.xlu0 %v515, 96
      %v1742 = vpop.permute.xlu0 %1741
      %1743 = vrot.lane.b32.xlu0 %v516, 96
      %v1744 = vpop.permute.xlu0 %1743
      %1745 = vrot.lane.b32.xlu0 %v517, 96
      %v1746 = vpop.permute.xlu0 %1745
      %1747 = vrot.lane.b32.xlu0 %v518, 96
      %v1748 = vpop.permute.xlu0 %1747
      %1749 = vrot.lane.b32.xlu0 %v519, 96
      %v1750 = vpop.permute.xlu0 %1749
      %1751 = vrot.lane.b32.xlu0 %v511, 96
      %v1752 = vpop.permute.xlu0 %1751
      %vm1753 = vcmask 785408
      %v1754 = vsel %vm1753, %v1736, %v1738
      %v1755 = vsel %vm1753, %v1738, %v1740
      %v1756 = vsel %vm1753, %v1740, %v1742
      %v1757 = vsel %vm1753, %v1742, %v1744
      %v1758 = vsel %vm1753, %v1744, %v1746
      %v1759 = vsel %vm1753, %v1746, %v1748
      %v1760 = vsel %vm1753, %v1748, %v1750
      %v1761 = vsel %vm1753, %v1750, %v1752
      %v1763 = vsel %vm556, %v368, 0
      %v1766 = vsel %vm560, %v1754, 0
      %v1769 = vsel %vm560, %v1755, 0
      %v1772 = vsel %vm560, %v1756, 0
      %v1775 = vsel %vm560, %v1757, 0
      %v1778 = vsel %vm560, %v1758, 0
      %v1781 = vsel %vm560, %v1759, 0
      %v1784 = vsel %vm560, %v1760, 0
      %v1787 = vsel %vm560, %v1761, 0
      %1789 = vmatpush.bf16.msra.mxu0 0
      %1790 = vmatpush.bf16.msra.mxu0 0
      %1791 = vmatpush.bf16.msra.mxu0 0
      %1792 = vmatpush.bf16.msra.mxu0 0
      %1793 = vmatpush.bf16.msra.mxu0 0
      %1794 = vmatpush.bf16.msra.mxu0 0
      %1795 = vmatpush.bf16.msra.mxu0 0
      %1796 = vmatpush.bf16.msra.mxu0 %v1766
      %1797 = vmatmul.bf16.gmra.mxu0 %v1763
      %v1798 = vpop.f32.mrf.mxu0
      %v1799 = vadd.f32 0.0, %v1798
      %v1800 = vpop.f32.mrf.mxu0
      %1801 = vdwg.mxu0
      %1802 = vmatpush.bf16.msra.mxu0 0
      %1803 = vmatpush.bf16.msra.mxu0 0
      %1804 = vmatpush.bf16.msra.mxu0 0
      %1805 = vmatpush.bf16.msra.mxu0 0
      %1806 = vmatpush.bf16.msra.mxu0 0
      %1807 = vmatpush.bf16.msra.mxu0 0
      %1808 = vmatpush.bf16.msra.mxu0 0
      %1809 = vmatpush.bf16.msra.mxu0 %v1769
      %1810 = vmatmul.bf16.gmra.mxu0 %v1763
      %v1811 = vpop.f32.mrf.mxu0
      %v1812 = vadd.f32 0.0, %v1811
      %v1813 = vpop.f32.mrf.mxu0
      %1814 = vdwg.mxu0
      %1815 = vmatpush.bf16.msra.mxu0 0
      %1816 = vmatpush.bf16.msra.mxu0 0
      %1817 = vmatpush.bf16.msra.mxu0 0
      %1818 = vmatpush.bf16.msra.mxu0 0
      %1819 = vmatpush.bf16.msra.mxu0 0
      %1820 = vmatpush.bf16.msra.mxu0 0
      %1821 = vmatpush.bf16.msra.mxu0 0
      %1822 = vmatpush.bf16.msra.mxu0 %v1772
      %1823 = vmatmul.bf16.gmra.mxu0 %v1763
      %v1824 = vpop.f32.mrf.mxu0
      %v1825 = vadd.f32 0.0, %v1824
      %v1826 = vpop.f32.mrf.mxu0
      %1827 = vdwg.mxu0
      %1828 = vmatpush.bf16.msra.mxu0 0
      %1829 = vmatpush.bf16.msra.mxu0 0
      %1830 = vmatpush.bf16.msra.mxu0 0
      %1831 = vmatpush.bf16.msra.mxu0 0
      %1832 = vmatpush.bf16.msra.mxu0 0
      %1833 = vmatpush.bf16.msra.mxu0 0
      %1834 = vmatpush.bf16.msra.mxu0 0
      %1835 = vmatpush.bf16.msra.mxu0 %v1775
      %1836 = vmatmul.bf16.gmra.mxu0 %v1763
      %v1837 = vpop.f32.mrf.mxu0
      %v1838 = vadd.f32 0.0, %v1837
      %v1839 = vpop.f32.mrf.mxu0
      %1840 = vdwg.mxu0
      %1841 = vmatpush.bf16.msra.mxu0 0
      %1842 = vmatpush.bf16.msra.mxu0 0
      %1843 = vmatpush.bf16.msra.mxu0 0
      %1844 = vmatpush.bf16.msra.mxu0 0
      %1845 = vmatpush.bf16.msra.mxu0 0
      %1846 = vmatpush.bf16.msra.mxu0 0
      %1847 = vmatpush.bf16.msra.mxu0 0
      %1848 = vmatpush.bf16.msra.mxu0 %v1778
      %1849 = vmatmul.bf16.gmra.mxu0 %v1763
      %v1850 = vpop.f32.mrf.mxu0
      %v1851 = vadd.f32 0.0, %v1850
      %v1852 = vpop.f32.mrf.mxu0
      %1853 = vdwg.mxu0
      %1854 = vmatpush.bf16.msra.mxu0 0
      %1855 = vmatpush.bf16.msra.mxu0 0
      %1856 = vmatpush.bf16.msra.mxu0 0
      %1857 = vmatpush.bf16.msra.mxu0 0
      %1858 = vmatpush.bf16.msra.mxu0 0
      %1859 = vmatpush.bf16.msra.mxu0 0
      %1860 = vmatpush.bf16.msra.mxu0 0
      %1861 = vmatpush.bf16.msra.mxu0 %v1781
      %1862 = vmatmul.bf16.gmra.mxu0 %v1763
      %v1863 = vpop.f32.mrf.mxu0
      %v1864 = vadd.f32 0.0, %v1863
      %v1865 = vpop.f32.mrf.mxu0
      %1866 = vdwg.mxu0
      %1867 = vmatpush.bf16.msra.mxu0 0
      %1868 = vmatpush.bf16.msra.mxu0 0
      %1869 = vmatpush.bf16.msra.mxu0 0
      %1870 = vmatpush.bf16.msra.mxu0 0
      %1871 = vmatpush.bf16.msra.mxu0 0
      %1872 = vmatpush.bf16.msra.mxu0 0
      %1873 = vmatpush.bf16.msra.mxu0 0
      %1874 = vmatpush.bf16.msra.mxu0 %v1784
      %1875 = vmatmul.bf16.gmra.mxu0 %v1763
      %v1876 = vpop.f32.mrf.mxu0
      %v1877 = vadd.f32 0.0, %v1876
      %v1878 = vpop.f32.mrf.mxu0
      %1879 = vdwg.mxu0
      %1880 = vmatpush.bf16.msra.mxu0 0
      %1881 = vmatpush.bf16.msra.mxu0 0
      %1882 = vmatpush.bf16.msra.mxu0 0
      %1883 = vmatpush.bf16.msra.mxu0 0
      %1884 = vmatpush.bf16.msra.mxu0 0
      %1885 = vmatpush.bf16.msra.mxu0 0
      %1886 = vmatpush.bf16.msra.mxu0 0
      %1887 = vmatpush.bf16.msra.mxu0 %v1787
      %1888 = vmatmul.bf16.gmra.mxu0 %v1763
      %v1889 = vpop.f32.mrf.mxu0
      %v1890 = vadd.f32 0.0, %v1889
      %v1891 = vpop.f32.mrf.mxu0
      %1892 = vdwg.mxu0
      %v1893 = vadd.f32 %v1727, %v1799
      %v1894 = vadd.f32 %v1728, %v1812
      %v1895 = vadd.f32 %v1729, %v1825
      %v1896 = vadd.f32 %v1730, %v1838
      %v1897 = vadd.f32 %v1731, %v1851
      %v1898 = vadd.f32 %v1732, %v1864
      %v1899 = vadd.f32 %v1733, %v1877
      %v1900 = vadd.f32 %v1734, %v1890
      %1901 = vrot.lane.b32.xlu0 %v427, 95
      %v1902 = vpop.permute.xlu0 %1901
      %1903 = vrot.lane.b32.xlu0 %v428, 95
      %v1904 = vpop.permute.xlu0 %1903
      %1905 = vrot.lane.b32.xlu0 %v429, 95
      %v1906 = vpop.permute.xlu0 %1905
      %1907 = vrot.lane.b32.xlu0 %v430, 95
      %v1908 = vpop.permute.xlu0 %1907
      %1909 = vrot.lane.b32.xlu0 %v431, 95
      %v1910 = vpop.permute.xlu0 %1909
      %1911 = vrot.lane.b32.xlu0 %v432, 95
      %v1912 = vpop.permute.xlu0 %1911
      %1913 = vrot.lane.b32.xlu0 %v433, 95
      %v1914 = vpop.permute.xlu0 %1913
      %1915 = vrot.lane.b32.xlu0 %v434, 95
      %v1916 = vpop.permute.xlu0 %1915
      %1917 = vrot.lane.b32.xlu0 0.0, 95
      %v1918 = vpop.permute.xlu0 %1917
      %vm1919 = vcmask 777216
      %v1920 = vsel %vm1919, %v1902, %v1904
      %v1921 = vsel %vm1919, %v1904, %v1906
      %v1922 = vsel %vm1919, %v1906, %v1908
      %v1923 = vsel %vm1919, %v1908, %v1910
      %v1924 = vsel %vm1919, %v1910, %v1912
      %v1925 = vsel %vm1919, %v1912, %v1914
      %v1926 = vsel %vm1919, %v1914, %v1916
      %v1927 = vsel %vm1919, %v1916, %v1918
      %v1936 = vsel %vm828, %v1920, 0.0
      %v1937 = vsel %vm829, %v1921, 0.0
      %v1938 = vsel %vm830, %v1922, 0.0
      %v1939 = vsel %vm831, %v1923, 0.0
      %v1940 = vsel %vm832, %v1924, 0.0
      %v1941 = vsel %vm833, %v1925, 0.0
      %v1942 = vsel %vm834, %v1926, 0.0
      %v1943 = vsel %vm835, %v1927, 0.0
      %v1944 = vpack.c.bf16 %v1936, %v1936
      %v1945 = vpack.c.bf16 %v1937, %v1937
      %v1946 = vpack.c.bf16 %v1938, %v1938
      %v1947 = vpack.c.bf16 %v1939, %v1939
      %v1948 = vpack.c.bf16 %v1940, %v1940
      %v1949 = vpack.c.bf16 %v1941, %v1941
      %v1950 = vpack.c.bf16 %v1942, %v1942
      %v1951 = vpack.c.bf16 %v1943, %v1943
      %v1953 = vsel %vm556, %v369, 0
      %v1956 = vsel %vm560, %v1944, 0
      %v1959 = vsel %vm560, %v1945, 0
      %v1962 = vsel %vm560, %v1946, 0
      %v1965 = vsel %vm560, %v1947, 0
      %v1968 = vsel %vm560, %v1948, 0
      %v1971 = vsel %vm560, %v1949, 0
      %v1974 = vsel %vm560, %v1950, 0
      %v1977 = vsel %vm560, %v1951, 0
      %1979 = vmatpush.bf16.msra.mxu0 0
      %1980 = vmatpush.bf16.msra.mxu0 0
      %1981 = vmatpush.bf16.msra.mxu0 0
      %1982 = vmatpush.bf16.msra.mxu0 0
      %1983 = vmatpush.bf16.msra.mxu0 0
      %1984 = vmatpush.bf16.msra.mxu0 0
      %1985 = vmatpush.bf16.msra.mxu0 0
      %1986 = vmatpush.bf16.msra.mxu0 %v1956
      %1987 = vmatmul.bf16.gmra.mxu0 %v1953
      %v1988 = vpop.f32.mrf.mxu0
      %v1989 = vadd.f32 0.0, %v1988
      %v1990 = vpop.f32.mrf.mxu0
      %1991 = vdwg.mxu0
      %1992 = vmatpush.bf16.msra.mxu0 0
      %1993 = vmatpush.bf16.msra.mxu0 0
      %1994 = vmatpush.bf16.msra.mxu0 0
      %1995 = vmatpush.bf16.msra.mxu0 0
      %1996 = vmatpush.bf16.msra.mxu0 0
      %1997 = vmatpush.bf16.msra.mxu0 0
      %1998 = vmatpush.bf16.msra.mxu0 0
      %1999 = vmatpush.bf16.msra.mxu0 %v1959
      %2000 = vmatmul.bf16.gmra.mxu0 %v1953
      %v2001 = vpop.f32.mrf.mxu0
      %v2002 = vadd.f32 0.0, %v2001
      %v2003 = vpop.f32.mrf.mxu0
      %2004 = vdwg.mxu0
      %2005 = vmatpush.bf16.msra.mxu0 0
      %2006 = vmatpush.bf16.msra.mxu0 0
      %2007 = vmatpush.bf16.msra.mxu0 0
      %2008 = vmatpush.bf16.msra.mxu0 0
      %2009 = vmatpush.bf16.msra.mxu0 0
      %2010 = vmatpush.bf16.msra.mxu0 0
      %2011 = vmatpush.bf16.msra.mxu0 0
      %2012 = vmatpush.bf16.msra.mxu0 %v1962
      %2013 = vmatmul.bf16.gmra.mxu0 %v1953
      %v2014 = vpop.f32.mrf.mxu0
      %v2015 = vadd.f32 0.0, %v2014
      %v2016 = vpop.f32.mrf.mxu0
      %2017 = vdwg.mxu0
      %2018 = vmatpush.bf16.msra.mxu0 0
      %2019 = vmatpush.bf16.msra.mxu0 0
      %2020 = vmatpush.bf16.msra.mxu0 0
      %2021 = vmatpush.bf16.msra.mxu0 0
      %2022 = vmatpush.bf16.msra.mxu0 0
      %2023 = vmatpush.bf16.msra.mxu0 0
      %2024 = vmatpush.bf16.msra.mxu0 0
      %2025 = vmatpush.bf16.msra.mxu0 %v1965
      %2026 = vmatmul.bf16.gmra.mxu0 %v1953
      %v2027 = vpop.f32.mrf.mxu0
      %v2028 = vadd.f32 0.0, %v2027
      %v2029 = vpop.f32.mrf.mxu0
      %2030 = vdwg.mxu0
      %2031 = vmatpush.bf16.msra.mxu0 0
      %2032 = vmatpush.bf16.msra.mxu0 0
      %2033 = vmatpush.bf16.msra.mxu0 0
      %2034 = vmatpush.bf16.msra.mxu0 0
      %2035 = vmatpush.bf16.msra.mxu0 0
      %2036 = vmatpush.bf16.msra.mxu0 0
      %2037 = vmatpush.bf16.msra.mxu0 0
      %2038 = vmatpush.bf16.msra.mxu0 %v1968
      %2039 = vmatmul.bf16.gmra.mxu0 %v1953
      %v2040 = vpop.f32.mrf.mxu0
      %v2041 = vadd.f32 0.0, %v2040
      %v2042 = vpop.f32.mrf.mxu0
      %2043 = vdwg.mxu0
      %2044 = vmatpush.bf16.msra.mxu0 0
      %2045 = vmatpush.bf16.msra.mxu0 0
      %2046 = vmatpush.bf16.msra.mxu0 0
      %2047 = vmatpush.bf16.msra.mxu0 0
      %2048 = vmatpush.bf16.msra.mxu0 0
      %2049 = vmatpush.bf16.msra.mxu0 0
      %2050 = vmatpush.bf16.msra.mxu0 0
      %2051 = vmatpush.bf16.msra.mxu0 %v1971
      %2052 = vmatmul.bf16.gmra.mxu0 %v1953
      %v2053 = vpop.f32.mrf.mxu0
      %v2054 = vadd.f32 0.0, %v2053
      %v2055 = vpop.f32.mrf.mxu0
      %2056 = vdwg.mxu0
      %2057 = vmatpush.bf16.msra.mxu0 0
      %2058 = vmatpush.bf16.msra.mxu0 0
      %2059 = vmatpush.bf16.msra.mxu0 0
      %2060 = vmatpush.bf16.msra.mxu0 0
      %2061 = vmatpush.bf16.msra.mxu0 0
      %2062 = vmatpush.bf16.msra.mxu0 0
      %2063 = vmatpush.bf16.msra.mxu0 0
      %2064 = vmatpush.bf16.msra.mxu0 %v1974
      %2065 = vmatmul.bf16.gmra.mxu0 %v1953
      %v2066 = vpop.f32.mrf.mxu0
      %v2067 = vadd.f32 0.0, %v2066
      %v2068 = vpop.f32.mrf.mxu0
      %2069 = vdwg.mxu0
      %2070 = vmatpush.bf16.msra.mxu0 0
      %2071 = vmatpush.bf16.msra.mxu0 0
      %2072 = vmatpush.bf16.msra.mxu0 0
      %2073 = vmatpush.bf16.msra.mxu0 0
      %2074 = vmatpush.bf16.msra.mxu0 0
      %2075 = vmatpush.bf16.msra.mxu0 0
      %2076 = vmatpush.bf16.msra.mxu0 0
      %2077 = vmatpush.bf16.msra.mxu0 %v1977
      %2078 = vmatmul.bf16.gmra.mxu0 %v1953
      %v2079 = vpop.f32.mrf.mxu0
      %v2080 = vadd.f32 0.0, %v2079
      %v2081 = vpop.f32.mrf.mxu0
      %2082 = vdwg.mxu0
      %v2083 = vadd.f32 %v1893, %v1989
      %v2084 = vadd.f32 %v1894, %v2002
      %v2085 = vadd.f32 %v1895, %v2015
      %v2086 = vadd.f32 %v1896, %v2028
      %v2087 = vadd.f32 %v1897, %v2041
      %v2088 = vadd.f32 %v1898, %v2054
      %v2089 = vadd.f32 %v1899, %v2067
      %v2090 = vadd.f32 %v1900, %v2080
      %v2091 = vmul.f32 %v2083, %v395
      %v2092 = vmul.f32 %v2084, %v395
      %v2093 = vmul.f32 %v2085, %v395
      %v2094 = vmul.f32 %v2086, %v395
      %v2095 = vmul.f32 %v2087, %v395
      %v2096 = vmul.f32 %v2088, %v395
      %v2097 = vmul.f32 %v2089, %v395
      %v2098 = vmul.f32 %v2090, %v395
      %v2099 = vadd.f32 %v2091, %v401
      %v2100 = vadd.f32 %v2092, %v401
      %v2101 = vadd.f32 %v2093, %v401
      %v2102 = vadd.f32 %v2094, %v401
      %v2103 = vadd.f32 %v2095, %v401
      %v2104 = vadd.f32 %v2096, %v401
      %v2105 = vadd.f32 %v2097, %v401
      %v2106 = vadd.f32 %v2098, %v401
      %v2107 = vmax.f32 %v2099, 0.0
      %v2108 = vmax.f32 %v2100, 0.0
      %v2109 = vmax.f32 %v2101, 0.0
      %v2110 = vmax.f32 %v2102, 0.0
      %v2111 = vmax.f32 %v2103, 0.0
      %v2112 = vmax.f32 %v2104, 0.0
      %v2113 = vmax.f32 %v2105, 0.0
      %v2114 = vmax.f32 %v2106, 0.0
      %2123 = vrot.lane.b32.xlu0 %v2107, 33
      %v2124 = vpop.permute.xlu0 %2123
      %2125 = vrot.lane.b32.xlu0 %v2108, 33
      %v2126 = vpop.permute.xlu0 %2125
      %2127 = vrot.lane.b32.xlu0 %v2109, 33
      %v2128 = vpop.permute.xlu0 %2127
      %2129 = vrot.lane.b32.xlu0 %v2110, 33
      %v2130 = vpop.permute.xlu0 %2129
      %2131 = vrot.lane.b32.xlu0 %v2111, 33
      %v2132 = vpop.permute.xlu0 %2131
      %2133 = vrot.lane.b32.xlu0 %v2112, 33
      %v2134 = vpop.permute.xlu0 %2133
      %2135 = vrot.lane.b32.xlu0 %v2113, 33
      %v2136 = vpop.permute.xlu0 %2135
      %2137 = vrot.lane.b32.xlu0 %v2114, 33
      %v2138 = vpop.permute.xlu0 %2137
      %v2139 = vsel %vm478, %v461, %v2124
      %v2140 = vsel %vm478, %v2124, %v2126
      %v2141 = vsel %vm478, %v2126, %v2128
      %v2142 = vsel %vm478, %v2128, %v2130
      %v2143 = vsel %vm478, %v2130, %v2132
      %v2144 = vsel %vm478, %v2132, %v2134
      %v2145 = vsel %vm478, %v2134, %v2136
      %v2146 = vsel %vm478, %v2136, %v2138
      %v2155 = vsel %vm443, %v2139, 0.0
      %v2156 = vsel %vm444, %v2140, 0.0
      %v2157 = vsel %vm445, %v2141, 0.0
      %v2158 = vsel %vm446, %v2142, 0.0
      %v2159 = vsel %vm447, %v2143, 0.0
      %v2160 = vsel %vm448, %v2144, 0.0
      %v2161 = vsel %vm449, %v2145, 0.0
      %v2162 = vsel %vm450, %v2146, 0.0
      %v2163 = vpack.c.bf16 %v2155, %v2155
      %v2164 = vpack.c.bf16 %v2156, %v2156
      %v2165 = vpack.c.bf16 %v2157, %v2157
      %v2166 = vpack.c.bf16 %v2158, %v2158
      %v2167 = vpack.c.bf16 %v2159, %v2159
      %v2168 = vpack.c.bf16 %v2160, %v2160
      %v2169 = vpack.c.bf16 %v2161, %v2161
      %v2170 = vpack.c.bf16 %v2162, %v2162
      %v2171 = vpack.c.bf16 %v2107, %v2107
      %v2172 = vpack.c.bf16 %v2108, %v2108
      %v2173 = vpack.c.bf16 %v2109, %v2109
      %v2174 = vpack.c.bf16 %v2110, %v2110
      %v2175 = vpack.c.bf16 %v2111, %v2111
      %v2176 = vpack.c.bf16 %v2112, %v2112
      %v2177 = vpack.c.bf16 %v2113, %v2113
      %v2178 = vpack.c.bf16 %v2114, %v2114
      %2187 = vrot.lane.b32.xlu0 %v2171, 32
      %v2188 = vpop.permute.xlu0 %2187
      %2189 = vrot.lane.b32.xlu0 %v2172, 32
      %v2190 = vpop.permute.xlu0 %2189
      %2191 = vrot.lane.b32.xlu0 %v2173, 32
      %v2192 = vpop.permute.xlu0 %2191
      %2193 = vrot.lane.b32.xlu0 %v2174, 32
      %v2194 = vpop.permute.xlu0 %2193
      %2195 = vrot.lane.b32.xlu0 %v2175, 32
      %v2196 = vpop.permute.xlu0 %2195
      %2197 = vrot.lane.b32.xlu0 %v2176, 32
      %v2198 = vpop.permute.xlu0 %2197
      %2199 = vrot.lane.b32.xlu0 %v2177, 32
      %v2200 = vpop.permute.xlu0 %2199
      %2201 = vrot.lane.b32.xlu0 %v2178, 32
      %v2202 = vpop.permute.xlu0 %2201
      %v2203 = vsel %vm547, %v530, %v2188
      %v2204 = vsel %vm547, %v2188, %v2190
      %v2205 = vsel %vm547, %v2190, %v2192
      %v2206 = vsel %vm547, %v2192, %v2194
      %v2207 = vsel %vm547, %v2194, %v2196
      %v2208 = vsel %vm547, %v2196, %v2198
      %v2209 = vsel %vm547, %v2198, %v2200
      %v2210 = vsel %vm547, %v2200, %v2202
      %vm2211 = vcmask 31744
      %v2213 = vsel %vm2211, %v371, 0
      %vm2215 = vcmask 1041408
      %v2217 = vsel %vm2215, %v2203, 0
      %v2220 = vsel %vm2215, %v2204, 0
      %v2223 = vsel %vm2215, %v2205, 0
      %v2226 = vsel %vm2215, %v2206, 0
      %v2229 = vsel %vm2215, %v2207, 0
      %v2232 = vsel %vm2215, %v2208, 0
      %v2235 = vsel %vm2215, %v2209, 0
      %v2238 = vsel %vm2215, %v2210, 0
      %2240 = vmatpush.bf16.msra.mxu0 0
      %2241 = vmatpush.bf16.msra.mxu0 0
      %2242 = vmatpush.bf16.msra.mxu0 0
      %2243 = vmatpush.bf16.msra.mxu0 0
      %2244 = vmatpush.bf16.msra.mxu0 0
      %2245 = vmatpush.bf16.msra.mxu0 0
      %2246 = vmatpush.bf16.msra.mxu0 0
      %2247 = vmatpush.bf16.msra.mxu0 %v2217
      %2248 = vmatmul.bf16.gmra.mxu0 %v2213
      %v2249 = vpop.f32.mrf.mxu0
      %v2250 = vadd.f32 0.0, %v2249
      %v2251 = vpop.f32.mrf.mxu0
      %2252 = vdwg.mxu0
      %2253 = vmatpush.bf16.msra.mxu0 0
      %2254 = vmatpush.bf16.msra.mxu0 0
      %2255 = vmatpush.bf16.msra.mxu0 0
      %2256 = vmatpush.bf16.msra.mxu0 0
      %2257 = vmatpush.bf16.msra.mxu0 0
      %2258 = vmatpush.bf16.msra.mxu0 0
      %2259 = vmatpush.bf16.msra.mxu0 0
      %2260 = vmatpush.bf16.msra.mxu0 %v2220
      %2261 = vmatmul.bf16.gmra.mxu0 %v2213
      %v2262 = vpop.f32.mrf.mxu0
      %v2263 = vadd.f32 0.0, %v2262
      %v2264 = vpop.f32.mrf.mxu0
      %2265 = vdwg.mxu0
      %2266 = vmatpush.bf16.msra.mxu0 0
      %2267 = vmatpush.bf16.msra.mxu0 0
      %2268 = vmatpush.bf16.msra.mxu0 0
      %2269 = vmatpush.bf16.msra.mxu0 0
      %2270 = vmatpush.bf16.msra.mxu0 0
      %2271 = vmatpush.bf16.msra.mxu0 0
      %2272 = vmatpush.bf16.msra.mxu0 0
      %2273 = vmatpush.bf16.msra.mxu0 %v2223
      %2274 = vmatmul.bf16.gmra.mxu0 %v2213
      %v2275 = vpop.f32.mrf.mxu0
      %v2276 = vadd.f32 0.0, %v2275
      %v2277 = vpop.f32.mrf.mxu0
      %2278 = vdwg.mxu0
      %2279 = vmatpush.bf16.msra.mxu0 0
      %2280 = vmatpush.bf16.msra.mxu0 0
      %2281 = vmatpush.bf16.msra.mxu0 0
      %2282 = vmatpush.bf16.msra.mxu0 0
      %2283 = vmatpush.bf16.msra.mxu0 0
      %2284 = vmatpush.bf16.msra.mxu0 0
      %2285 = vmatpush.bf16.msra.mxu0 0
      %2286 = vmatpush.bf16.msra.mxu0 %v2226
      %2287 = vmatmul.bf16.gmra.mxu0 %v2213
      %v2288 = vpop.f32.mrf.mxu0
      %v2289 = vadd.f32 0.0, %v2288
      %v2290 = vpop.f32.mrf.mxu0
      %2291 = vdwg.mxu0
      %2292 = vmatpush.bf16.msra.mxu0 0
      %2293 = vmatpush.bf16.msra.mxu0 0
      %2294 = vmatpush.bf16.msra.mxu0 0
      %2295 = vmatpush.bf16.msra.mxu0 0
      %2296 = vmatpush.bf16.msra.mxu0 0
      %2297 = vmatpush.bf16.msra.mxu0 0
      %2298 = vmatpush.bf16.msra.mxu0 0
      %2299 = vmatpush.bf16.msra.mxu0 %v2229
      %2300 = vmatmul.bf16.gmra.mxu0 %v2213
      %v2301 = vpop.f32.mrf.mxu0
      %v2302 = vadd.f32 0.0, %v2301
      %v2303 = vpop.f32.mrf.mxu0
      %2304 = vdwg.mxu0
      %2305 = vmatpush.bf16.msra.mxu0 0
      %2306 = vmatpush.bf16.msra.mxu0 0
      %2307 = vmatpush.bf16.msra.mxu0 0
      %2308 = vmatpush.bf16.msra.mxu0 0
      %2309 = vmatpush.bf16.msra.mxu0 0
      %2310 = vmatpush.bf16.msra.mxu0 0
      %2311 = vmatpush.bf16.msra.mxu0 0
      %2312 = vmatpush.bf16.msra.mxu0 %v2232
      %2313 = vmatmul.bf16.gmra.mxu0 %v2213
      %v2314 = vpop.f32.mrf.mxu0
      %v2315 = vadd.f32 0.0, %v2314
      %v2316 = vpop.f32.mrf.mxu0
      %2317 = vdwg.mxu0
      %2318 = vmatpush.bf16.msra.mxu0 0
      %2319 = vmatpush.bf16.msra.mxu0 0
      %2320 = vmatpush.bf16.msra.mxu0 0
      %2321 = vmatpush.bf16.msra.mxu0 0
      %2322 = vmatpush.bf16.msra.mxu0 0
      %2323 = vmatpush.bf16.msra.mxu0 0
      %2324 = vmatpush.bf16.msra.mxu0 0
      %2325 = vmatpush.bf16.msra.mxu0 %v2235
      %2326 = vmatmul.bf16.gmra.mxu0 %v2213
      %v2327 = vpop.f32.mrf.mxu0
      %v2328 = vadd.f32 0.0, %v2327
      %v2329 = vpop.f32.mrf.mxu0
      %2330 = vdwg.mxu0
      %2331 = vmatpush.bf16.msra.mxu0 0
      %2332 = vmatpush.bf16.msra.mxu0 0
      %2333 = vmatpush.bf16.msra.mxu0 0
      %2334 = vmatpush.bf16.msra.mxu0 0
      %2335 = vmatpush.bf16.msra.mxu0 0
      %2336 = vmatpush.bf16.msra.mxu0 0
      %2337 = vmatpush.bf16.msra.mxu0 0
      %2338 = vmatpush.bf16.msra.mxu0 %v2238
      %2339 = vmatmul.bf16.gmra.mxu0 %v2213
      %v2340 = vpop.f32.mrf.mxu0
      %v2341 = vadd.f32 0.0, %v2340
      %v2342 = vpop.f32.mrf.mxu0
      %2343 = vdwg.mxu0
      %v2345 = vsel %vm2211, %v370, 0
      %v2348 = vsel %vm2215, %v2163, 0
      %v2351 = vsel %vm2215, %v2164, 0
      %v2354 = vsel %vm2215, %v2165, 0
      %v2357 = vsel %vm2215, %v2166, 0
      %v2360 = vsel %vm2215, %v2167, 0
      %v2363 = vsel %vm2215, %v2168, 0
      %v2366 = vsel %vm2215, %v2169, 0
      %v2369 = vsel %vm2215, %v2170, 0
      %2371 = vmatpush.bf16.msra.mxu0 0
      %2372 = vmatpush.bf16.msra.mxu0 0
      %2373 = vmatpush.bf16.msra.mxu0 0
      %2374 = vmatpush.bf16.msra.mxu0 0
      %2375 = vmatpush.bf16.msra.mxu0 0
      %2376 = vmatpush.bf16.msra.mxu0 0
      %2377 = vmatpush.bf16.msra.mxu0 0
      %2378 = vmatpush.bf16.msra.mxu0 %v2348
      %2379 = vmatmul.bf16.gmra.mxu0 %v2345
      %v2380 = vpop.f32.mrf.mxu0
      %v2381 = vadd.f32 %v2250, %v2380
      %v2382 = vpop.f32.mrf.mxu0
      %2383 = vdwg.mxu0
      %2384 = vmatpush.bf16.msra.mxu0 0
      %2385 = vmatpush.bf16.msra.mxu0 0
      %2386 = vmatpush.bf16.msra.mxu0 0
      %2387 = vmatpush.bf16.msra.mxu0 0
      %2388 = vmatpush.bf16.msra.mxu0 0
      %2389 = vmatpush.bf16.msra.mxu0 0
      %2390 = vmatpush.bf16.msra.mxu0 0
      %2391 = vmatpush.bf16.msra.mxu0 %v2351
      %2392 = vmatmul.bf16.gmra.mxu0 %v2345
      %v2393 = vpop.f32.mrf.mxu0
      %v2394 = vadd.f32 %v2263, %v2393
      %v2395 = vpop.f32.mrf.mxu0
      %2396 = vdwg.mxu0
      %2397 = vmatpush.bf16.msra.mxu0 0
      %2398 = vmatpush.bf16.msra.mxu0 0
      %2399 = vmatpush.bf16.msra.mxu0 0
      %2400 = vmatpush.bf16.msra.mxu0 0
      %2401 = vmatpush.bf16.msra.mxu0 0
      %2402 = vmatpush.bf16.msra.mxu0 0
      %2403 = vmatpush.bf16.msra.mxu0 0
      %2404 = vmatpush.bf16.msra.mxu0 %v2354
      %2405 = vmatmul.bf16.gmra.mxu0 %v2345
      %v2406 = vpop.f32.mrf.mxu0
      %v2407 = vadd.f32 %v2276, %v2406
      %v2408 = vpop.f32.mrf.mxu0
      %2409 = vdwg.mxu0
      %2410 = vmatpush.bf16.msra.mxu0 0
      %2411 = vmatpush.bf16.msra.mxu0 0
      %2412 = vmatpush.bf16.msra.mxu0 0
      %2413 = vmatpush.bf16.msra.mxu0 0
      %2414 = vmatpush.bf16.msra.mxu0 0
      %2415 = vmatpush.bf16.msra.mxu0 0
      %2416 = vmatpush.bf16.msra.mxu0 0
      %2417 = vmatpush.bf16.msra.mxu0 %v2357
      %2418 = vmatmul.bf16.gmra.mxu0 %v2345
      %v2419 = vpop.f32.mrf.mxu0
      %v2420 = vadd.f32 %v2289, %v2419
      %v2421 = vpop.f32.mrf.mxu0
      %2422 = vdwg.mxu0
      %2423 = vmatpush.bf16.msra.mxu0 0
      %2424 = vmatpush.bf16.msra.mxu0 0
      %2425 = vmatpush.bf16.msra.mxu0 0
      %2426 = vmatpush.bf16.msra.mxu0 0
      %2427 = vmatpush.bf16.msra.mxu0 0
      %2428 = vmatpush.bf16.msra.mxu0 0
      %2429 = vmatpush.bf16.msra.mxu0 0
      %2430 = vmatpush.bf16.msra.mxu0 %v2360
      %2431 = vmatmul.bf16.gmra.mxu0 %v2345
      %v2432 = vpop.f32.mrf.mxu0
      %v2433 = vadd.f32 %v2302, %v2432
      %v2434 = vpop.f32.mrf.mxu0
      %2435 = vdwg.mxu0
      %2436 = vmatpush.bf16.msra.mxu0 0
      %2437 = vmatpush.bf16.msra.mxu0 0
      %2438 = vmatpush.bf16.msra.mxu0 0
      %2439 = vmatpush.bf16.msra.mxu0 0
      %2440 = vmatpush.bf16.msra.mxu0 0
      %2441 = vmatpush.bf16.msra.mxu0 0
      %2442 = vmatpush.bf16.msra.mxu0 0
      %2443 = vmatpush.bf16.msra.mxu0 %v2363
      %2444 = vmatmul.bf16.gmra.mxu0 %v2345
      %v2445 = vpop.f32.mrf.mxu0
      %v2446 = vadd.f32 %v2315, %v2445
      %v2447 = vpop.f32.mrf.mxu0
      %2448 = vdwg.mxu0
      %2449 = vmatpush.bf16.msra.mxu0 0
      %2450 = vmatpush.bf16.msra.mxu0 0
      %2451 = vmatpush.bf16.msra.mxu0 0
      %2452 = vmatpush.bf16.msra.mxu0 0
      %2453 = vmatpush.bf16.msra.mxu0 0
      %2454 = vmatpush.bf16.msra.mxu0 0
      %2455 = vmatpush.bf16.msra.mxu0 0
      %2456 = vmatpush.bf16.msra.mxu0 %v2366
      %2457 = vmatmul.bf16.gmra.mxu0 %v2345
      %v2458 = vpop.f32.mrf.mxu0
      %v2459 = vadd.f32 %v2328, %v2458
      %v2460 = vpop.f32.mrf.mxu0
      %2461 = vdwg.mxu0
      %2462 = vmatpush.bf16.msra.mxu0 0
      %2463 = vmatpush.bf16.msra.mxu0 0
      %2464 = vmatpush.bf16.msra.mxu0 0
      %2465 = vmatpush.bf16.msra.mxu0 0
      %2466 = vmatpush.bf16.msra.mxu0 0
      %2467 = vmatpush.bf16.msra.mxu0 0
      %2468 = vmatpush.bf16.msra.mxu0 0
      %2469 = vmatpush.bf16.msra.mxu0 %v2369
      %2470 = vmatmul.bf16.gmra.mxu0 %v2345
      %v2471 = vpop.f32.mrf.mxu0
      %v2472 = vadd.f32 %v2341, %v2471
      %v2473 = vpop.f32.mrf.mxu0
      %2474 = vdwg.mxu0
      %2475 = vrot.lane.b32.xlu0 %v2107, 31
      %v2476 = vpop.permute.xlu0 %2475
      %2477 = vrot.lane.b32.xlu0 %v2108, 31
      %v2478 = vpop.permute.xlu0 %2477
      %2479 = vrot.lane.b32.xlu0 %v2109, 31
      %v2480 = vpop.permute.xlu0 %2479
      %2481 = vrot.lane.b32.xlu0 %v2110, 31
      %v2482 = vpop.permute.xlu0 %2481
      %2483 = vrot.lane.b32.xlu0 %v2111, 31
      %v2484 = vpop.permute.xlu0 %2483
      %2485 = vrot.lane.b32.xlu0 %v2112, 31
      %v2486 = vpop.permute.xlu0 %2485
      %2487 = vrot.lane.b32.xlu0 %v2113, 31
      %v2488 = vpop.permute.xlu0 %2487
      %2489 = vrot.lane.b32.xlu0 %v2114, 31
      %v2490 = vpop.permute.xlu0 %2489
      %v2491 = vsel %vm854, %v837, %v2476
      %v2492 = vsel %vm854, %v2476, %v2478
      %v2493 = vsel %vm854, %v2478, %v2480
      %v2494 = vsel %vm854, %v2480, %v2482
      %v2495 = vsel %vm854, %v2482, %v2484
      %v2496 = vsel %vm854, %v2484, %v2486
      %v2497 = vsel %vm854, %v2486, %v2488
      %v2498 = vsel %vm854, %v2488, %v2490
      %v2507 = vsel %vm828, %v2491, 0.0
      %v2508 = vsel %vm829, %v2492, 0.0
      %v2509 = vsel %vm830, %v2493, 0.0
      %v2510 = vsel %vm831, %v2494, 0.0
      %v2511 = vsel %vm832, %v2495, 0.0
      %v2512 = vsel %vm833, %v2496, 0.0
      %v2513 = vsel %vm834, %v2497, 0.0
      %v2514 = vsel %vm835, %v2498, 0.0
      %v2515 = vpack.c.bf16 %v2507, %v2507
      %v2516 = vpack.c.bf16 %v2508, %v2508
      %v2517 = vpack.c.bf16 %v2509, %v2509
      %v2518 = vpack.c.bf16 %v2510, %v2510
      %v2519 = vpack.c.bf16 %v2511, %v2511
      %v2520 = vpack.c.bf16 %v2512, %v2512
      %v2521 = vpack.c.bf16 %v2513, %v2513
      %v2522 = vpack.c.bf16 %v2514, %v2514
      %v2524 = vsel %vm2211, %v372, 0
      %v2527 = vsel %vm2215, %v2515, 0
      %v2530 = vsel %vm2215, %v2516, 0
      %v2533 = vsel %vm2215, %v2517, 0
      %v2536 = vsel %vm2215, %v2518, 0
      %v2539 = vsel %vm2215, %v2519, 0
      %v2542 = vsel %vm2215, %v2520, 0
      %v2545 = vsel %vm2215, %v2521, 0
      %v2548 = vsel %vm2215, %v2522, 0
      %2550 = vmatpush.bf16.msra.mxu0 0
      %2551 = vmatpush.bf16.msra.mxu0 0
      %2552 = vmatpush.bf16.msra.mxu0 0
      %2553 = vmatpush.bf16.msra.mxu0 0
      %2554 = vmatpush.bf16.msra.mxu0 0
      %2555 = vmatpush.bf16.msra.mxu0 0
      %2556 = vmatpush.bf16.msra.mxu0 0
      %2557 = vmatpush.bf16.msra.mxu0 %v2527
      %2558 = vmatmul.bf16.gmra.mxu0 %v2524
      %v2559 = vpop.f32.mrf.mxu0
      %v2560 = vadd.f32 0.0, %v2559
      %v2561 = vpop.f32.mrf.mxu0
      %2562 = vdwg.mxu0
      %2563 = vmatpush.bf16.msra.mxu0 0
      %2564 = vmatpush.bf16.msra.mxu0 0
      %2565 = vmatpush.bf16.msra.mxu0 0
      %2566 = vmatpush.bf16.msra.mxu0 0
      %2567 = vmatpush.bf16.msra.mxu0 0
      %2568 = vmatpush.bf16.msra.mxu0 0
      %2569 = vmatpush.bf16.msra.mxu0 0
      %2570 = vmatpush.bf16.msra.mxu0 %v2530
      %2571 = vmatmul.bf16.gmra.mxu0 %v2524
      %v2572 = vpop.f32.mrf.mxu0
      %v2573 = vadd.f32 0.0, %v2572
      %v2574 = vpop.f32.mrf.mxu0
      %2575 = vdwg.mxu0
      %2576 = vmatpush.bf16.msra.mxu0 0
      %2577 = vmatpush.bf16.msra.mxu0 0
      %2578 = vmatpush.bf16.msra.mxu0 0
      %2579 = vmatpush.bf16.msra.mxu0 0
      %2580 = vmatpush.bf16.msra.mxu0 0
      %2581 = vmatpush.bf16.msra.mxu0 0
      %2582 = vmatpush.bf16.msra.mxu0 0
      %2583 = vmatpush.bf16.msra.mxu0 %v2533
      %2584 = vmatmul.bf16.gmra.mxu0 %v2524
      %v2585 = vpop.f32.mrf.mxu0
      %v2586 = vadd.f32 0.0, %v2585
      %v2587 = vpop.f32.mrf.mxu0
      %2588 = vdwg.mxu0
      %2589 = vmatpush.bf16.msra.mxu0 0
      %2590 = vmatpush.bf16.msra.mxu0 0
      %2591 = vmatpush.bf16.msra.mxu0 0
      %2592 = vmatpush.bf16.msra.mxu0 0
      %2593 = vmatpush.bf16.msra.mxu0 0
      %2594 = vmatpush.bf16.msra.mxu0 0
      %2595 = vmatpush.bf16.msra.mxu0 0
      %2596 = vmatpush.bf16.msra.mxu0 %v2536
      %2597 = vmatmul.bf16.gmra.mxu0 %v2524
      %v2598 = vpop.f32.mrf.mxu0
      %v2599 = vadd.f32 0.0, %v2598
      %v2600 = vpop.f32.mrf.mxu0
      %2601 = vdwg.mxu0
      %2602 = vmatpush.bf16.msra.mxu0 0
      %2603 = vmatpush.bf16.msra.mxu0 0
      %2604 = vmatpush.bf16.msra.mxu0 0
      %2605 = vmatpush.bf16.msra.mxu0 0
      %2606 = vmatpush.bf16.msra.mxu0 0
      %2607 = vmatpush.bf16.msra.mxu0 0
      %2608 = vmatpush.bf16.msra.mxu0 0
      %2609 = vmatpush.bf16.msra.mxu0 %v2539
      %2610 = vmatmul.bf16.gmra.mxu0 %v2524
      %v2611 = vpop.f32.mrf.mxu0
      %v2612 = vadd.f32 0.0, %v2611
      %v2613 = vpop.f32.mrf.mxu0
      %2614 = vdwg.mxu0
      %2615 = vmatpush.bf16.msra.mxu0 0
      %2616 = vmatpush.bf16.msra.mxu0 0
      %2617 = vmatpush.bf16.msra.mxu0 0
      %2618 = vmatpush.bf16.msra.mxu0 0
      %2619 = vmatpush.bf16.msra.mxu0 0
      %2620 = vmatpush.bf16.msra.mxu0 0
      %2621 = vmatpush.bf16.msra.mxu0 0
      %2622 = vmatpush.bf16.msra.mxu0 %v2542
      %2623 = vmatmul.bf16.gmra.mxu0 %v2524
      %v2624 = vpop.f32.mrf.mxu0
      %v2625 = vadd.f32 0.0, %v2624
      %v2626 = vpop.f32.mrf.mxu0
      %2627 = vdwg.mxu0
      %2628 = vmatpush.bf16.msra.mxu0 0
      %2629 = vmatpush.bf16.msra.mxu0 0
      %2630 = vmatpush.bf16.msra.mxu0 0
      %2631 = vmatpush.bf16.msra.mxu0 0
      %2632 = vmatpush.bf16.msra.mxu0 0
      %2633 = vmatpush.bf16.msra.mxu0 0
      %2634 = vmatpush.bf16.msra.mxu0 0
      %2635 = vmatpush.bf16.msra.mxu0 %v2545
      %2636 = vmatmul.bf16.gmra.mxu0 %v2524
      %v2637 = vpop.f32.mrf.mxu0
      %v2638 = vadd.f32 0.0, %v2637
      %v2639 = vpop.f32.mrf.mxu0
      %2640 = vdwg.mxu0
      %2641 = vmatpush.bf16.msra.mxu0 0
      %2642 = vmatpush.bf16.msra.mxu0 0
      %2643 = vmatpush.bf16.msra.mxu0 0
      %2644 = vmatpush.bf16.msra.mxu0 0
      %2645 = vmatpush.bf16.msra.mxu0 0
      %2646 = vmatpush.bf16.msra.mxu0 0
      %2647 = vmatpush.bf16.msra.mxu0 0
      %2648 = vmatpush.bf16.msra.mxu0 %v2548
      %2649 = vmatmul.bf16.gmra.mxu0 %v2524
      %v2650 = vpop.f32.mrf.mxu0
      %v2651 = vadd.f32 0.0, %v2650
      %v2652 = vpop.f32.mrf.mxu0
      %2653 = vdwg.mxu0
      %v2654 = vadd.f32 %v2381, %v2560
      %v2655 = vadd.f32 %v2394, %v2573
      %v2656 = vadd.f32 %v2407, %v2586
      %v2657 = vadd.f32 %v2420, %v2599
      %v2658 = vadd.f32 %v2433, %v2612
      %v2659 = vadd.f32 %v2446, %v2625
      %v2660 = vadd.f32 %v2459, %v2638
      %v2661 = vadd.f32 %v2472, %v2651
      %2662 = vrot.lane.b32.xlu0 %v2107, 1
      %v2663 = vpop.permute.xlu0 %2662
      %2664 = vrot.lane.b32.xlu0 %v2108, 1
      %v2665 = vpop.permute.xlu0 %2664
      %2666 = vrot.lane.b32.xlu0 %v2109, 1
      %v2667 = vpop.permute.xlu0 %2666
      %2668 = vrot.lane.b32.xlu0 %v2110, 1
      %v2669 = vpop.permute.xlu0 %2668
      %2670 = vrot.lane.b32.xlu0 %v2111, 1
      %v2671 = vpop.permute.xlu0 %2670
      %2672 = vrot.lane.b32.xlu0 %v2112, 1
      %v2673 = vpop.permute.xlu0 %2672
      %2674 = vrot.lane.b32.xlu0 %v2113, 1
      %v2675 = vpop.permute.xlu0 %2674
      %2676 = vrot.lane.b32.xlu0 %v2114, 1
      %v2677 = vpop.permute.xlu0 %2676
      %v2678 = vsel %vm1044, %v1027, %v2663
      %v2679 = vsel %vm1044, %v2663, %v2665
      %v2680 = vsel %vm1044, %v2665, %v2667
      %v2681 = vsel %vm1044, %v2667, %v2669
      %v2682 = vsel %vm1044, %v2669, %v2671
      %v2683 = vsel %vm1044, %v2671, %v2673
      %v2684 = vsel %vm1044, %v2673, %v2675
      %v2685 = vsel %vm1044, %v2675, %v2677
      %v2694 = vsel %vm443, %v2678, 0.0
      %v2695 = vsel %vm444, %v2679, 0.0
      %v2696 = vsel %vm445, %v2680, 0.0
      %v2697 = vsel %vm446, %v2681, 0.0
      %v2698 = vsel %vm447, %v2682, 0.0
      %v2699 = vsel %vm448, %v2683, 0.0
      %v2700 = vsel %vm449, %v2684, 0.0
      %v2701 = vsel %vm450, %v2685, 0.0
      %v2702 = vpack.c.bf16 %v2694, %v2694
      %v2703 = vpack.c.bf16 %v2695, %v2695
      %v2704 = vpack.c.bf16 %v2696, %v2696
      %v2705 = vpack.c.bf16 %v2697, %v2697
      %v2706 = vpack.c.bf16 %v2698, %v2698
      %v2707 = vpack.c.bf16 %v2699, %v2699
      %v2708 = vpack.c.bf16 %v2700, %v2700
      %v2709 = vpack.c.bf16 %v2701, %v2701
      %v2711 = vsel %vm2211, %v373, 0
      %v2714 = vsel %vm2215, %v2702, 0
      %v2717 = vsel %vm2215, %v2703, 0
      %v2720 = vsel %vm2215, %v2704, 0
      %v2723 = vsel %vm2215, %v2705, 0
      %v2726 = vsel %vm2215, %v2706, 0
      %v2729 = vsel %vm2215, %v2707, 0
      %v2732 = vsel %vm2215, %v2708, 0
      %v2735 = vsel %vm2215, %v2709, 0
      %2737 = vmatpush.bf16.msra.mxu0 0
      %2738 = vmatpush.bf16.msra.mxu0 0
      %2739 = vmatpush.bf16.msra.mxu0 0
      %2740 = vmatpush.bf16.msra.mxu0 0
      %2741 = vmatpush.bf16.msra.mxu0 0
      %2742 = vmatpush.bf16.msra.mxu0 0
      %2743 = vmatpush.bf16.msra.mxu0 0
      %2744 = vmatpush.bf16.msra.mxu0 %v2714
      %2745 = vmatmul.bf16.gmra.mxu0 %v2711
      %v2746 = vpop.f32.mrf.mxu0
      %v2747 = vadd.f32 0.0, %v2746
      %v2748 = vpop.f32.mrf.mxu0
      %2749 = vdwg.mxu0
      %2750 = vmatpush.bf16.msra.mxu0 0
      %2751 = vmatpush.bf16.msra.mxu0 0
      %2752 = vmatpush.bf16.msra.mxu0 0
      %2753 = vmatpush.bf16.msra.mxu0 0
      %2754 = vmatpush.bf16.msra.mxu0 0
      %2755 = vmatpush.bf16.msra.mxu0 0
      %2756 = vmatpush.bf16.msra.mxu0 0
      %2757 = vmatpush.bf16.msra.mxu0 %v2717
      %2758 = vmatmul.bf16.gmra.mxu0 %v2711
      %v2759 = vpop.f32.mrf.mxu0
      %v2760 = vadd.f32 0.0, %v2759
      %v2761 = vpop.f32.mrf.mxu0
      %2762 = vdwg.mxu0
      %2763 = vmatpush.bf16.msra.mxu0 0
      %2764 = vmatpush.bf16.msra.mxu0 0
      %2765 = vmatpush.bf16.msra.mxu0 0
      %2766 = vmatpush.bf16.msra.mxu0 0
      %2767 = vmatpush.bf16.msra.mxu0 0
      %2768 = vmatpush.bf16.msra.mxu0 0
      %2769 = vmatpush.bf16.msra.mxu0 0
      %2770 = vmatpush.bf16.msra.mxu0 %v2720
      %2771 = vmatmul.bf16.gmra.mxu0 %v2711
      %v2772 = vpop.f32.mrf.mxu0
      %v2773 = vadd.f32 0.0, %v2772
      %v2774 = vpop.f32.mrf.mxu0
      %2775 = vdwg.mxu0
      %2776 = vmatpush.bf16.msra.mxu0 0
      %2777 = vmatpush.bf16.msra.mxu0 0
      %2778 = vmatpush.bf16.msra.mxu0 0
      %2779 = vmatpush.bf16.msra.mxu0 0
      %2780 = vmatpush.bf16.msra.mxu0 0
      %2781 = vmatpush.bf16.msra.mxu0 0
      %2782 = vmatpush.bf16.msra.mxu0 0
      %2783 = vmatpush.bf16.msra.mxu0 %v2723
      %2784 = vmatmul.bf16.gmra.mxu0 %v2711
      %v2785 = vpop.f32.mrf.mxu0
      %v2786 = vadd.f32 0.0, %v2785
      %v2787 = vpop.f32.mrf.mxu0
      %2788 = vdwg.mxu0
      %2789 = vmatpush.bf16.msra.mxu0 0
      %2790 = vmatpush.bf16.msra.mxu0 0
      %2791 = vmatpush.bf16.msra.mxu0 0
      %2792 = vmatpush.bf16.msra.mxu0 0
      %2793 = vmatpush.bf16.msra.mxu0 0
      %2794 = vmatpush.bf16.msra.mxu0 0
      %2795 = vmatpush.bf16.msra.mxu0 0
      %2796 = vmatpush.bf16.msra.mxu0 %v2726
      %2797 = vmatmul.bf16.gmra.mxu0 %v2711
      %v2798 = vpop.f32.mrf.mxu0
      %v2799 = vadd.f32 0.0, %v2798
      %v2800 = vpop.f32.mrf.mxu0
      %2801 = vdwg.mxu0
      %2802 = vmatpush.bf16.msra.mxu0 0
      %2803 = vmatpush.bf16.msra.mxu0 0
      %2804 = vmatpush.bf16.msra.mxu0 0
      %2805 = vmatpush.bf16.msra.mxu0 0
      %2806 = vmatpush.bf16.msra.mxu0 0
      %2807 = vmatpush.bf16.msra.mxu0 0
      %2808 = vmatpush.bf16.msra.mxu0 0
      %2809 = vmatpush.bf16.msra.mxu0 %v2729
      %2810 = vmatmul.bf16.gmra.mxu0 %v2711
      %v2811 = vpop.f32.mrf.mxu0
      %v2812 = vadd.f32 0.0, %v2811
      %v2813 = vpop.f32.mrf.mxu0
      %2814 = vdwg.mxu0
      %2815 = vmatpush.bf16.msra.mxu0 0
      %2816 = vmatpush.bf16.msra.mxu0 0
      %2817 = vmatpush.bf16.msra.mxu0 0
      %2818 = vmatpush.bf16.msra.mxu0 0
      %2819 = vmatpush.bf16.msra.mxu0 0
      %2820 = vmatpush.bf16.msra.mxu0 0
      %2821 = vmatpush.bf16.msra.mxu0 0
      %2822 = vmatpush.bf16.msra.mxu0 %v2732
      %2823 = vmatmul.bf16.gmra.mxu0 %v2711
      %v2824 = vpop.f32.mrf.mxu0
      %v2825 = vadd.f32 0.0, %v2824
      %v2826 = vpop.f32.mrf.mxu0
      %2827 = vdwg.mxu0
      %2828 = vmatpush.bf16.msra.mxu0 0
      %2829 = vmatpush.bf16.msra.mxu0 0
      %2830 = vmatpush.bf16.msra.mxu0 0
      %2831 = vmatpush.bf16.msra.mxu0 0
      %2832 = vmatpush.bf16.msra.mxu0 0
      %2833 = vmatpush.bf16.msra.mxu0 0
      %2834 = vmatpush.bf16.msra.mxu0 0
      %2835 = vmatpush.bf16.msra.mxu0 %v2735
      %2836 = vmatmul.bf16.gmra.mxu0 %v2711
      %v2837 = vpop.f32.mrf.mxu0
      %v2838 = vadd.f32 0.0, %v2837
      %v2839 = vpop.f32.mrf.mxu0
      %2840 = vdwg.mxu0
      %v2841 = vadd.f32 %v2654, %v2747
      %v2842 = vadd.f32 %v2655, %v2760
      %v2843 = vadd.f32 %v2656, %v2773
      %v2844 = vadd.f32 %v2657, %v2786
      %v2845 = vadd.f32 %v2658, %v2799
      %v2846 = vadd.f32 %v2659, %v2812
      %v2847 = vadd.f32 %v2660, %v2825
      %v2848 = vadd.f32 %v2661, %v2838
      %v2850 = vsel %vm2211, %v374, 0
      %v2853 = vsel %vm2215, %v2171, 0
      %v2856 = vsel %vm2215, %v2172, 0
      %v2859 = vsel %vm2215, %v2173, 0
      %v2862 = vsel %vm2215, %v2174, 0
      %v2865 = vsel %vm2215, %v2175, 0
      %v2868 = vsel %vm2215, %v2176, 0
      %v2871 = vsel %vm2215, %v2177, 0
      %v2874 = vsel %vm2215, %v2178, 0
      %2876 = vmatpush.bf16.msra.mxu0 0
      %2877 = vmatpush.bf16.msra.mxu0 0
      %2878 = vmatpush.bf16.msra.mxu0 0
      %2879 = vmatpush.bf16.msra.mxu0 0
      %2880 = vmatpush.bf16.msra.mxu0 0
      %2881 = vmatpush.bf16.msra.mxu0 0
      %2882 = vmatpush.bf16.msra.mxu0 0
      %2883 = vmatpush.bf16.msra.mxu0 %v2853
      %2884 = vmatmul.bf16.gmra.mxu0 %v2850
      %v2885 = vpop.f32.mrf.mxu0
      %v2886 = vadd.f32 0.0, %v2885
      %v2887 = vpop.f32.mrf.mxu0
      %2888 = vdwg.mxu0
      %2889 = vmatpush.bf16.msra.mxu0 0
      %2890 = vmatpush.bf16.msra.mxu0 0
      %2891 = vmatpush.bf16.msra.mxu0 0
      %2892 = vmatpush.bf16.msra.mxu0 0
      %2893 = vmatpush.bf16.msra.mxu0 0
      %2894 = vmatpush.bf16.msra.mxu0 0
      %2895 = vmatpush.bf16.msra.mxu0 0
      %2896 = vmatpush.bf16.msra.mxu0 %v2856
      %2897 = vmatmul.bf16.gmra.mxu0 %v2850
      %v2898 = vpop.f32.mrf.mxu0
      %v2899 = vadd.f32 0.0, %v2898
      %v2900 = vpop.f32.mrf.mxu0
      %2901 = vdwg.mxu0
      %2902 = vmatpush.bf16.msra.mxu0 0
      %2903 = vmatpush.bf16.msra.mxu0 0
      %2904 = vmatpush.bf16.msra.mxu0 0
      %2905 = vmatpush.bf16.msra.mxu0 0
      %2906 = vmatpush.bf16.msra.mxu0 0
      %2907 = vmatpush.bf16.msra.mxu0 0
      %2908 = vmatpush.bf16.msra.mxu0 0
      %2909 = vmatpush.bf16.msra.mxu0 %v2859
      %2910 = vmatmul.bf16.gmra.mxu0 %v2850
      %v2911 = vpop.f32.mrf.mxu0
      %v2912 = vadd.f32 0.0, %v2911
      %v2913 = vpop.f32.mrf.mxu0
      %2914 = vdwg.mxu0
      %2915 = vmatpush.bf16.msra.mxu0 0
      %2916 = vmatpush.bf16.msra.mxu0 0
      %2917 = vmatpush.bf16.msra.mxu0 0
      %2918 = vmatpush.bf16.msra.mxu0 0
      %2919 = vmatpush.bf16.msra.mxu0 0
      %2920 = vmatpush.bf16.msra.mxu0 0
      %2921 = vmatpush.bf16.msra.mxu0 0
      %2922 = vmatpush.bf16.msra.mxu0 %v2862
      %2923 = vmatmul.bf16.gmra.mxu0 %v2850
      %v2924 = vpop.f32.mrf.mxu0
      %v2925 = vadd.f32 0.0, %v2924
      %v2926 = vpop.f32.mrf.mxu0
      %2927 = vdwg.mxu0
      %2928 = vmatpush.bf16.msra.mxu0 0
      %2929 = vmatpush.bf16.msra.mxu0 0
      %2930 = vmatpush.bf16.msra.mxu0 0
      %2931 = vmatpush.bf16.msra.mxu0 0
      %2932 = vmatpush.bf16.msra.mxu0 0
      %2933 = vmatpush.bf16.msra.mxu0 0
      %2934 = vmatpush.bf16.msra.mxu0 0
      %2935 = vmatpush.bf16.msra.mxu0 %v2865
      %2936 = vmatmul.bf16.gmra.mxu0 %v2850
      %v2937 = vpop.f32.mrf.mxu0
      %v2938 = vadd.f32 0.0, %v2937
      %v2939 = vpop.f32.mrf.mxu0
      %2940 = vdwg.mxu0
      %2941 = vmatpush.bf16.msra.mxu0 0
      %2942 = vmatpush.bf16.msra.mxu0 0
      %2943 = vmatpush.bf16.msra.mxu0 0
      %2944 = vmatpush.bf16.msra.mxu0 0
      %2945 = vmatpush.bf16.msra.mxu0 0
      %2946 = vmatpush.bf16.msra.mxu0 0
      %2947 = vmatpush.bf16.msra.mxu0 0
      %2948 = vmatpush.bf16.msra.mxu0 %v2868
      %2949 = vmatmul.bf16.gmra.mxu0 %v2850
      %v2950 = vpop.f32.mrf.mxu0
      %v2951 = vadd.f32 0.0, %v2950
      %v2952 = vpop.f32.mrf.mxu0
      %2953 = vdwg.mxu0
      %2954 = vmatpush.bf16.msra.mxu0 0
      %2955 = vmatpush.bf16.msra.mxu0 0
      %2956 = vmatpush.bf16.msra.mxu0 0
      %2957 = vmatpush.bf16.msra.mxu0 0
      %2958 = vmatpush.bf16.msra.mxu0 0
      %2959 = vmatpush.bf16.msra.mxu0 0
      %2960 = vmatpush.bf16.msra.mxu0 0
      %2961 = vmatpush.bf16.msra.mxu0 %v2871
      %2962 = vmatmul.bf16.gmra.mxu0 %v2850
      %v2963 = vpop.f32.mrf.mxu0
      %v2964 = vadd.f32 0.0, %v2963
      %v2965 = vpop.f32.mrf.mxu0
      %2966 = vdwg.mxu0
      %2967 = vmatpush.bf16.msra.mxu0 0
      %2968 = vmatpush.bf16.msra.mxu0 0
      %2969 = vmatpush.bf16.msra.mxu0 0
      %2970 = vmatpush.bf16.msra.mxu0 0
      %2971 = vmatpush.bf16.msra.mxu0 0
      %2972 = vmatpush.bf16.msra.mxu0 0
      %2973 = vmatpush.bf16.msra.mxu0 0
      %2974 = vmatpush.bf16.msra.mxu0 %v2874
      %2975 = vmatmul.bf16.gmra.mxu0 %v2850
      %v2976 = vpop.f32.mrf.mxu0
      %v2977 = vadd.f32 0.0, %v2976
      %v2978 = vpop.f32.mrf.mxu0
      %2979 = vdwg.mxu0
      %v2980 = vadd.f32 %v2841, %v2886
      %v2981 = vadd.f32 %v2842, %v2899
      %v2982 = vadd.f32 %v2843, %v2912
      %v2983 = vadd.f32 %v2844, %v2925
      %v2984 = vadd.f32 %v2845, %v2938
      %v2985 = vadd.f32 %v2846, %v2951
      %v2986 = vadd.f32 %v2847, %v2964
      %v2987 = vadd.f32 %v2848, %v2977
      %2988 = vrot.lane.b32.xlu0 %v2107, 127
      %v2989 = vpop.permute.xlu0 %2988
      %2990 = vrot.lane.b32.xlu0 %v2108, 127
      %v2991 = vpop.permute.xlu0 %2990
      %2992 = vrot.lane.b32.xlu0 %v2109, 127
      %v2993 = vpop.permute.xlu0 %2992
      %2994 = vrot.lane.b32.xlu0 %v2110, 127
      %v2995 = vpop.permute.xlu0 %2994
      %2996 = vrot.lane.b32.xlu0 %v2111, 127
      %v2997 = vpop.permute.xlu0 %2996
      %2998 = vrot.lane.b32.xlu0 %v2112, 127
      %v2999 = vpop.permute.xlu0 %2998
      %3000 = vrot.lane.b32.xlu0 %v2113, 127
      %v3001 = vpop.permute.xlu0 %3000
      %3002 = vrot.lane.b32.xlu0 %v2114, 127
      %v3003 = vpop.permute.xlu0 %3002
      %v3004 = vsel %vm1373, %v2989, %v2991
      %v3005 = vsel %vm1373, %v2991, %v2993
      %v3006 = vsel %vm1373, %v2993, %v2995
      %v3007 = vsel %vm1373, %v2995, %v2997
      %v3008 = vsel %vm1373, %v2997, %v2999
      %v3009 = vsel %vm1373, %v2999, %v3001
      %v3010 = vsel %vm1373, %v3001, %v3003
      %v3011 = vsel %vm1373, %v3003, %v1372
      %v3020 = vsel %vm828, %v3004, 0.0
      %v3021 = vsel %vm829, %v3005, 0.0
      %v3022 = vsel %vm830, %v3006, 0.0
      %v3023 = vsel %vm831, %v3007, 0.0
      %v3024 = vsel %vm832, %v3008, 0.0
      %v3025 = vsel %vm833, %v3009, 0.0
      %v3026 = vsel %vm834, %v3010, 0.0
      %v3027 = vsel %vm835, %v3011, 0.0
      %v3028 = vpack.c.bf16 %v3020, %v3020
      %v3029 = vpack.c.bf16 %v3021, %v3021
      %v3030 = vpack.c.bf16 %v3022, %v3022
      %v3031 = vpack.c.bf16 %v3023, %v3023
      %v3032 = vpack.c.bf16 %v3024, %v3024
      %v3033 = vpack.c.bf16 %v3025, %v3025
      %v3034 = vpack.c.bf16 %v3026, %v3026
      %v3035 = vpack.c.bf16 %v3027, %v3027
      %v3037 = vsel %vm2211, %v375, 0
      %v3040 = vsel %vm2215, %v3028, 0
      %v3043 = vsel %vm2215, %v3029, 0
      %v3046 = vsel %vm2215, %v3030, 0
      %v3049 = vsel %vm2215, %v3031, 0
      %v3052 = vsel %vm2215, %v3032, 0
      %v3055 = vsel %vm2215, %v3033, 0
      %v3058 = vsel %vm2215, %v3034, 0
      %v3061 = vsel %vm2215, %v3035, 0
      %3063 = vmatpush.bf16.msra.mxu0 0
      %3064 = vmatpush.bf16.msra.mxu0 0
      %3065 = vmatpush.bf16.msra.mxu0 0
      %3066 = vmatpush.bf16.msra.mxu0 0
      %3067 = vmatpush.bf16.msra.mxu0 0
      %3068 = vmatpush.bf16.msra.mxu0 0
      %3069 = vmatpush.bf16.msra.mxu0 0
      %3070 = vmatpush.bf16.msra.mxu0 %v3040
      %3071 = vmatmul.bf16.gmra.mxu0 %v3037
      %v3072 = vpop.f32.mrf.mxu0
      %v3073 = vadd.f32 0.0, %v3072
      %v3074 = vpop.f32.mrf.mxu0
      %3075 = vdwg.mxu0
      %3076 = vmatpush.bf16.msra.mxu0 0
      %3077 = vmatpush.bf16.msra.mxu0 0
      %3078 = vmatpush.bf16.msra.mxu0 0
      %3079 = vmatpush.bf16.msra.mxu0 0
      %3080 = vmatpush.bf16.msra.mxu0 0
      %3081 = vmatpush.bf16.msra.mxu0 0
      %3082 = vmatpush.bf16.msra.mxu0 0
      %3083 = vmatpush.bf16.msra.mxu0 %v3043
      %3084 = vmatmul.bf16.gmra.mxu0 %v3037
      %v3085 = vpop.f32.mrf.mxu0
      %v3086 = vadd.f32 0.0, %v3085
      %v3087 = vpop.f32.mrf.mxu0
      %3088 = vdwg.mxu0
      %3089 = vmatpush.bf16.msra.mxu0 0
      %3090 = vmatpush.bf16.msra.mxu0 0
      %3091 = vmatpush.bf16.msra.mxu0 0
      %3092 = vmatpush.bf16.msra.mxu0 0
      %3093 = vmatpush.bf16.msra.mxu0 0
      %3094 = vmatpush.bf16.msra.mxu0 0
      %3095 = vmatpush.bf16.msra.mxu0 0
      %3096 = vmatpush.bf16.msra.mxu0 %v3046
      %3097 = vmatmul.bf16.gmra.mxu0 %v3037
      %v3098 = vpop.f32.mrf.mxu0
      %v3099 = vadd.f32 0.0, %v3098
      %v3100 = vpop.f32.mrf.mxu0
      %3101 = vdwg.mxu0
      %3102 = vmatpush.bf16.msra.mxu0 0
      %3103 = vmatpush.bf16.msra.mxu0 0
      %3104 = vmatpush.bf16.msra.mxu0 0
      %3105 = vmatpush.bf16.msra.mxu0 0
      %3106 = vmatpush.bf16.msra.mxu0 0
      %3107 = vmatpush.bf16.msra.mxu0 0
      %3108 = vmatpush.bf16.msra.mxu0 0
      %3109 = vmatpush.bf16.msra.mxu0 %v3049
      %3110 = vmatmul.bf16.gmra.mxu0 %v3037
      %v3111 = vpop.f32.mrf.mxu0
      %v3112 = vadd.f32 0.0, %v3111
      %v3113 = vpop.f32.mrf.mxu0
      %3114 = vdwg.mxu0
      %3115 = vmatpush.bf16.msra.mxu0 0
      %3116 = vmatpush.bf16.msra.mxu0 0
      %3117 = vmatpush.bf16.msra.mxu0 0
      %3118 = vmatpush.bf16.msra.mxu0 0
      %3119 = vmatpush.bf16.msra.mxu0 0
      %3120 = vmatpush.bf16.msra.mxu0 0
      %3121 = vmatpush.bf16.msra.mxu0 0
      %3122 = vmatpush.bf16.msra.mxu0 %v3052
      %3123 = vmatmul.bf16.gmra.mxu0 %v3037
      %v3124 = vpop.f32.mrf.mxu0
      %v3125 = vadd.f32 0.0, %v3124
      %v3126 = vpop.f32.mrf.mxu0
      %3127 = vdwg.mxu0
      %3128 = vmatpush.bf16.msra.mxu0 0
      %3129 = vmatpush.bf16.msra.mxu0 0
      %3130 = vmatpush.bf16.msra.mxu0 0
      %3131 = vmatpush.bf16.msra.mxu0 0
      %3132 = vmatpush.bf16.msra.mxu0 0
      %3133 = vmatpush.bf16.msra.mxu0 0
      %3134 = vmatpush.bf16.msra.mxu0 0
      %3135 = vmatpush.bf16.msra.mxu0 %v3055
      %3136 = vmatmul.bf16.gmra.mxu0 %v3037
      %v3137 = vpop.f32.mrf.mxu0
      %v3138 = vadd.f32 0.0, %v3137
      %v3139 = vpop.f32.mrf.mxu0
      %3140 = vdwg.mxu0
      %3141 = vmatpush.bf16.msra.mxu0 0
      %3142 = vmatpush.bf16.msra.mxu0 0
      %3143 = vmatpush.bf16.msra.mxu0 0
      %3144 = vmatpush.bf16.msra.mxu0 0
      %3145 = vmatpush.bf16.msra.mxu0 0
      %3146 = vmatpush.bf16.msra.mxu0 0
      %3147 = vmatpush.bf16.msra.mxu0 0
      %3148 = vmatpush.bf16.msra.mxu0 %v3058
      %3149 = vmatmul.bf16.gmra.mxu0 %v3037
      %v3150 = vpop.f32.mrf.mxu0
      %v3151 = vadd.f32 0.0, %v3150
      %v3152 = vpop.f32.mrf.mxu0
      %3153 = vdwg.mxu0
      %3154 = vmatpush.bf16.msra.mxu0 0
      %3155 = vmatpush.bf16.msra.mxu0 0
      %3156 = vmatpush.bf16.msra.mxu0 0
      %3157 = vmatpush.bf16.msra.mxu0 0
      %3158 = vmatpush.bf16.msra.mxu0 0
      %3159 = vmatpush.bf16.msra.mxu0 0
      %3160 = vmatpush.bf16.msra.mxu0 0
      %3161 = vmatpush.bf16.msra.mxu0 %v3061
      %3162 = vmatmul.bf16.gmra.mxu0 %v3037
      %v3163 = vpop.f32.mrf.mxu0
      %v3164 = vadd.f32 0.0, %v3163
      %v3165 = vpop.f32.mrf.mxu0
      %3166 = vdwg.mxu0
      %v3167 = vadd.f32 %v2980, %v3073
      %v3168 = vadd.f32 %v2981, %v3086
      %v3169 = vadd.f32 %v2982, %v3099
      %v3170 = vadd.f32 %v2983, %v3112
      %v3171 = vadd.f32 %v2984, %v3125
      %v3172 = vadd.f32 %v2985, %v3138
      %v3173 = vadd.f32 %v2986, %v3151
      %v3174 = vadd.f32 %v2987, %v3164
      %3175 = vrot.lane.b32.xlu0 %v2107, 97
      %v3176 = vpop.permute.xlu0 %3175
      %3177 = vrot.lane.b32.xlu0 %v2108, 97
      %v3178 = vpop.permute.xlu0 %3177
      %3179 = vrot.lane.b32.xlu0 %v2109, 97
      %v3180 = vpop.permute.xlu0 %3179
      %3181 = vrot.lane.b32.xlu0 %v2110, 97
      %v3182 = vpop.permute.xlu0 %3181
      %3183 = vrot.lane.b32.xlu0 %v2111, 97
      %v3184 = vpop.permute.xlu0 %3183
      %3185 = vrot.lane.b32.xlu0 %v2112, 97
      %v3186 = vpop.permute.xlu0 %3185
      %3187 = vrot.lane.b32.xlu0 %v2113, 97
      %v3188 = vpop.permute.xlu0 %3187
      %3189 = vrot.lane.b32.xlu0 %v2114, 97
      %v3190 = vpop.permute.xlu0 %3189
      %v3191 = vsel %vm1563, %v3176, %v3178
      %v3192 = vsel %vm1563, %v3178, %v3180
      %v3193 = vsel %vm1563, %v3180, %v3182
      %v3194 = vsel %vm1563, %v3182, %v3184
      %v3195 = vsel %vm1563, %v3184, %v3186
      %v3196 = vsel %vm1563, %v3186, %v3188
      %v3197 = vsel %vm1563, %v3188, %v3190
      %v3198 = vsel %vm1563, %v3190, %v1562
      %v3207 = vsel %vm443, %v3191, 0.0
      %v3208 = vsel %vm444, %v3192, 0.0
      %v3209 = vsel %vm445, %v3193, 0.0
      %v3210 = vsel %vm446, %v3194, 0.0
      %v3211 = vsel %vm447, %v3195, 0.0
      %v3212 = vsel %vm448, %v3196, 0.0
      %v3213 = vsel %vm449, %v3197, 0.0
      %v3214 = vsel %vm450, %v3198, 0.0
      %v3215 = vpack.c.bf16 %v3207, %v3207
      %v3216 = vpack.c.bf16 %v3208, %v3208
      %v3217 = vpack.c.bf16 %v3209, %v3209
      %v3218 = vpack.c.bf16 %v3210, %v3210
      %v3219 = vpack.c.bf16 %v3211, %v3211
      %v3220 = vpack.c.bf16 %v3212, %v3212
      %v3221 = vpack.c.bf16 %v3213, %v3213
      %v3222 = vpack.c.bf16 %v3214, %v3214
      %v3224 = vsel %vm2211, %v376, 0
      %v3227 = vsel %vm2215, %v3215, 0
      %v3230 = vsel %vm2215, %v3216, 0
      %v3233 = vsel %vm2215, %v3217, 0
      %v3236 = vsel %vm2215, %v3218, 0
      %v3239 = vsel %vm2215, %v3219, 0
      %v3242 = vsel %vm2215, %v3220, 0
      %v3245 = vsel %vm2215, %v3221, 0
      %v3248 = vsel %vm2215, %v3222, 0
      %3250 = vmatpush.bf16.msra.mxu0 0
      %3251 = vmatpush.bf16.msra.mxu0 0
      %3252 = vmatpush.bf16.msra.mxu0 0
      %3253 = vmatpush.bf16.msra.mxu0 0
      %3254 = vmatpush.bf16.msra.mxu0 0
      %3255 = vmatpush.bf16.msra.mxu0 0
      %3256 = vmatpush.bf16.msra.mxu0 0
      %3257 = vmatpush.bf16.msra.mxu0 %v3227
      %3258 = vmatmul.bf16.gmra.mxu0 %v3224
      %v3259 = vpop.f32.mrf.mxu0
      %v3260 = vadd.f32 0.0, %v3259
      %v3261 = vpop.f32.mrf.mxu0
      %3262 = vdwg.mxu0
      %3263 = vmatpush.bf16.msra.mxu0 0
      %3264 = vmatpush.bf16.msra.mxu0 0
      %3265 = vmatpush.bf16.msra.mxu0 0
      %3266 = vmatpush.bf16.msra.mxu0 0
      %3267 = vmatpush.bf16.msra.mxu0 0
      %3268 = vmatpush.bf16.msra.mxu0 0
      %3269 = vmatpush.bf16.msra.mxu0 0
      %3270 = vmatpush.bf16.msra.mxu0 %v3230
      %3271 = vmatmul.bf16.gmra.mxu0 %v3224
      %v3272 = vpop.f32.mrf.mxu0
      %v3273 = vadd.f32 0.0, %v3272
      %v3274 = vpop.f32.mrf.mxu0
      %3275 = vdwg.mxu0
      %3276 = vmatpush.bf16.msra.mxu0 0
      %3277 = vmatpush.bf16.msra.mxu0 0
      %3278 = vmatpush.bf16.msra.mxu0 0
      %3279 = vmatpush.bf16.msra.mxu0 0
      %3280 = vmatpush.bf16.msra.mxu0 0
      %3281 = vmatpush.bf16.msra.mxu0 0
      %3282 = vmatpush.bf16.msra.mxu0 0
      %3283 = vmatpush.bf16.msra.mxu0 %v3233
      %3284 = vmatmul.bf16.gmra.mxu0 %v3224
      %v3285 = vpop.f32.mrf.mxu0
      %v3286 = vadd.f32 0.0, %v3285
      %v3287 = vpop.f32.mrf.mxu0
      %3288 = vdwg.mxu0
      %3289 = vmatpush.bf16.msra.mxu0 0
      %3290 = vmatpush.bf16.msra.mxu0 0
      %3291 = vmatpush.bf16.msra.mxu0 0
      %3292 = vmatpush.bf16.msra.mxu0 0
      %3293 = vmatpush.bf16.msra.mxu0 0
      %3294 = vmatpush.bf16.msra.mxu0 0
      %3295 = vmatpush.bf16.msra.mxu0 0
      %3296 = vmatpush.bf16.msra.mxu0 %v3236
      %3297 = vmatmul.bf16.gmra.mxu0 %v3224
      %v3298 = vpop.f32.mrf.mxu0
      %v3299 = vadd.f32 0.0, %v3298
      %v3300 = vpop.f32.mrf.mxu0
      %3301 = vdwg.mxu0
      %3302 = vmatpush.bf16.msra.mxu0 0
      %3303 = vmatpush.bf16.msra.mxu0 0
      %3304 = vmatpush.bf16.msra.mxu0 0
      %3305 = vmatpush.bf16.msra.mxu0 0
      %3306 = vmatpush.bf16.msra.mxu0 0
      %3307 = vmatpush.bf16.msra.mxu0 0
      %3308 = vmatpush.bf16.msra.mxu0 0
      %3309 = vmatpush.bf16.msra.mxu0 %v3239
      %3310 = vmatmul.bf16.gmra.mxu0 %v3224
      %v3311 = vpop.f32.mrf.mxu0
      %v3312 = vadd.f32 0.0, %v3311
      %v3313 = vpop.f32.mrf.mxu0
      %3314 = vdwg.mxu0
      %3315 = vmatpush.bf16.msra.mxu0 0
      %3316 = vmatpush.bf16.msra.mxu0 0
      %3317 = vmatpush.bf16.msra.mxu0 0
      %3318 = vmatpush.bf16.msra.mxu0 0
      %3319 = vmatpush.bf16.msra.mxu0 0
      %3320 = vmatpush.bf16.msra.mxu0 0
      %3321 = vmatpush.bf16.msra.mxu0 0
      %3322 = vmatpush.bf16.msra.mxu0 %v3242
      %3323 = vmatmul.bf16.gmra.mxu0 %v3224
      %v3324 = vpop.f32.mrf.mxu0
      %v3325 = vadd.f32 0.0, %v3324
      %v3326 = vpop.f32.mrf.mxu0
      %3327 = vdwg.mxu0
      %3328 = vmatpush.bf16.msra.mxu0 0
      %3329 = vmatpush.bf16.msra.mxu0 0
      %3330 = vmatpush.bf16.msra.mxu0 0
      %3331 = vmatpush.bf16.msra.mxu0 0
      %3332 = vmatpush.bf16.msra.mxu0 0
      %3333 = vmatpush.bf16.msra.mxu0 0
      %3334 = vmatpush.bf16.msra.mxu0 0
      %3335 = vmatpush.bf16.msra.mxu0 %v3245
      %3336 = vmatmul.bf16.gmra.mxu0 %v3224
      %v3337 = vpop.f32.mrf.mxu0
      %v3338 = vadd.f32 0.0, %v3337
      %v3339 = vpop.f32.mrf.mxu0
      %3340 = vdwg.mxu0
      %3341 = vmatpush.bf16.msra.mxu0 0
      %3342 = vmatpush.bf16.msra.mxu0 0
      %3343 = vmatpush.bf16.msra.mxu0 0
      %3344 = vmatpush.bf16.msra.mxu0 0
      %3345 = vmatpush.bf16.msra.mxu0 0
      %3346 = vmatpush.bf16.msra.mxu0 0
      %3347 = vmatpush.bf16.msra.mxu0 0
      %3348 = vmatpush.bf16.msra.mxu0 %v3248
      %3349 = vmatmul.bf16.gmra.mxu0 %v3224
      %v3350 = vpop.f32.mrf.mxu0
      %v3351 = vadd.f32 0.0, %v3350
      %v3352 = vpop.f32.mrf.mxu0
      %3353 = vdwg.mxu0
      %v3354 = vadd.f32 %v3167, %v3260
      %v3355 = vadd.f32 %v3168, %v3273
      %v3356 = vadd.f32 %v3169, %v3286
      %v3357 = vadd.f32 %v3170, %v3299
      %v3358 = vadd.f32 %v3171, %v3312
      %v3359 = vadd.f32 %v3172, %v3325
      %v3360 = vadd.f32 %v3173, %v3338
      %v3361 = vadd.f32 %v3174, %v3351
      %3362 = vrot.lane.b32.xlu0 %v2171, 96
      %v3363 = vpop.permute.xlu0 %3362
      %3364 = vrot.lane.b32.xlu0 %v2172, 96
      %v3365 = vpop.permute.xlu0 %3364
      %3366 = vrot.lane.b32.xlu0 %v2173, 96
      %v3367 = vpop.permute.xlu0 %3366
      %3368 = vrot.lane.b32.xlu0 %v2174, 96
      %v3369 = vpop.permute.xlu0 %3368
      %3370 = vrot.lane.b32.xlu0 %v2175, 96
      %v3371 = vpop.permute.xlu0 %3370
      %3372 = vrot.lane.b32.xlu0 %v2176, 96
      %v3373 = vpop.permute.xlu0 %3372
      %3374 = vrot.lane.b32.xlu0 %v2177, 96
      %v3375 = vpop.permute.xlu0 %3374
      %3376 = vrot.lane.b32.xlu0 %v2178, 96
      %v3377 = vpop.permute.xlu0 %3376
      %v3378 = vsel %vm1753, %v3363, %v3365
      %v3379 = vsel %vm1753, %v3365, %v3367
      %v3380 = vsel %vm1753, %v3367, %v3369
      %v3381 = vsel %vm1753, %v3369, %v3371
      %v3382 = vsel %vm1753, %v3371, %v3373
      %v3383 = vsel %vm1753, %v3373, %v3375
      %v3384 = vsel %vm1753, %v3375, %v3377
      %v3385 = vsel %vm1753, %v3377, %v1752
      %v3387 = vsel %vm2211, %v377, 0
      %v3390 = vsel %vm2215, %v3378, 0
      %v3393 = vsel %vm2215, %v3379, 0
      %v3396 = vsel %vm2215, %v3380, 0
      %v3399 = vsel %vm2215, %v3381, 0
      %v3402 = vsel %vm2215, %v3382, 0
      %v3405 = vsel %vm2215, %v3383, 0
      %v3408 = vsel %vm2215, %v3384, 0
      %v3411 = vsel %vm2215, %v3385, 0
      %3413 = vmatpush.bf16.msra.mxu0 0
      %3414 = vmatpush.bf16.msra.mxu0 0
      %3415 = vmatpush.bf16.msra.mxu0 0
      %3416 = vmatpush.bf16.msra.mxu0 0
      %3417 = vmatpush.bf16.msra.mxu0 0
      %3418 = vmatpush.bf16.msra.mxu0 0
      %3419 = vmatpush.bf16.msra.mxu0 0
      %3420 = vmatpush.bf16.msra.mxu0 %v3390
      %3421 = vmatmul.bf16.gmra.mxu0 %v3387
      %v3422 = vpop.f32.mrf.mxu0
      %v3423 = vadd.f32 0.0, %v3422
      %v3424 = vpop.f32.mrf.mxu0
      %3425 = vdwg.mxu0
      %3426 = vmatpush.bf16.msra.mxu0 0
      %3427 = vmatpush.bf16.msra.mxu0 0
      %3428 = vmatpush.bf16.msra.mxu0 0
      %3429 = vmatpush.bf16.msra.mxu0 0
      %3430 = vmatpush.bf16.msra.mxu0 0
      %3431 = vmatpush.bf16.msra.mxu0 0
      %3432 = vmatpush.bf16.msra.mxu0 0
      %3433 = vmatpush.bf16.msra.mxu0 %v3393
      %3434 = vmatmul.bf16.gmra.mxu0 %v3387
      %v3435 = vpop.f32.mrf.mxu0
      %v3436 = vadd.f32 0.0, %v3435
      %v3437 = vpop.f32.mrf.mxu0
      %3438 = vdwg.mxu0
      %3439 = vmatpush.bf16.msra.mxu0 0
      %3440 = vmatpush.bf16.msra.mxu0 0
      %3441 = vmatpush.bf16.msra.mxu0 0
      %3442 = vmatpush.bf16.msra.mxu0 0
      %3443 = vmatpush.bf16.msra.mxu0 0
      %3444 = vmatpush.bf16.msra.mxu0 0
      %3445 = vmatpush.bf16.msra.mxu0 0
      %3446 = vmatpush.bf16.msra.mxu0 %v3396
      %3447 = vmatmul.bf16.gmra.mxu0 %v3387
      %v3448 = vpop.f32.mrf.mxu0
      %v3449 = vadd.f32 0.0, %v3448
      %v3450 = vpop.f32.mrf.mxu0
      %3451 = vdwg.mxu0
      %3452 = vmatpush.bf16.msra.mxu0 0
      %3453 = vmatpush.bf16.msra.mxu0 0
      %3454 = vmatpush.bf16.msra.mxu0 0
      %3455 = vmatpush.bf16.msra.mxu0 0
      %3456 = vmatpush.bf16.msra.mxu0 0
      %3457 = vmatpush.bf16.msra.mxu0 0
      %3458 = vmatpush.bf16.msra.mxu0 0
      %3459 = vmatpush.bf16.msra.mxu0 %v3399
      %3460 = vmatmul.bf16.gmra.mxu0 %v3387
      %v3461 = vpop.f32.mrf.mxu0
      %v3462 = vadd.f32 0.0, %v3461
      %v3463 = vpop.f32.mrf.mxu0
      %3464 = vdwg.mxu0
      %3465 = vmatpush.bf16.msra.mxu0 0
      %3466 = vmatpush.bf16.msra.mxu0 0
      %3467 = vmatpush.bf16.msra.mxu0 0
      %3468 = vmatpush.bf16.msra.mxu0 0
      %3469 = vmatpush.bf16.msra.mxu0 0
      %3470 = vmatpush.bf16.msra.mxu0 0
      %3471 = vmatpush.bf16.msra.mxu0 0
      %3472 = vmatpush.bf16.msra.mxu0 %v3402
      %3473 = vmatmul.bf16.gmra.mxu0 %v3387
      %v3474 = vpop.f32.mrf.mxu0
      %v3475 = vadd.f32 0.0, %v3474
      %v3476 = vpop.f32.mrf.mxu0
      %3477 = vdwg.mxu0
      %3478 = vmatpush.bf16.msra.mxu0 0
      %3479 = vmatpush.bf16.msra.mxu0 0
      %3480 = vmatpush.bf16.msra.mxu0 0
      %3481 = vmatpush.bf16.msra.mxu0 0
      %3482 = vmatpush.bf16.msra.mxu0 0
      %3483 = vmatpush.bf16.msra.mxu0 0
      %3484 = vmatpush.bf16.msra.mxu0 0
      %3485 = vmatpush.bf16.msra.mxu0 %v3405
      %3486 = vmatmul.bf16.gmra.mxu0 %v3387
      %v3487 = vpop.f32.mrf.mxu0
      %v3488 = vadd.f32 0.0, %v3487
      %v3489 = vpop.f32.mrf.mxu0
      %3490 = vdwg.mxu0
      %3491 = vmatpush.bf16.msra.mxu0 0
      %3492 = vmatpush.bf16.msra.mxu0 0
      %3493 = vmatpush.bf16.msra.mxu0 0
      %3494 = vmatpush.bf16.msra.mxu0 0
      %3495 = vmatpush.bf16.msra.mxu0 0
      %3496 = vmatpush.bf16.msra.mxu0 0
      %3497 = vmatpush.bf16.msra.mxu0 0
      %3498 = vmatpush.bf16.msra.mxu0 %v3408
      %3499 = vmatmul.bf16.gmra.mxu0 %v3387
      %v3500 = vpop.f32.mrf.mxu0
      %v3501 = vadd.f32 0.0, %v3500
      %v3502 = vpop.f32.mrf.mxu0
      %3503 = vdwg.mxu0
      %3504 = vmatpush.bf16.msra.mxu0 0
      %3505 = vmatpush.bf16.msra.mxu0 0
      %3506 = vmatpush.bf16.msra.mxu0 0
      %3507 = vmatpush.bf16.msra.mxu0 0
      %3508 = vmatpush.bf16.msra.mxu0 0
      %3509 = vmatpush.bf16.msra.mxu0 0
      %3510 = vmatpush.bf16.msra.mxu0 0
      %3511 = vmatpush.bf16.msra.mxu0 %v3411
      %3512 = vmatmul.bf16.gmra.mxu0 %v3387
      %v3513 = vpop.f32.mrf.mxu0
      %v3514 = vadd.f32 0.0, %v3513
      %v3515 = vpop.f32.mrf.mxu0
      %3516 = vdwg.mxu0
      %v3517 = vadd.f32 %v3354, %v3423
      %v3518 = vadd.f32 %v3355, %v3436
      %v3519 = vadd.f32 %v3356, %v3449
      %v3520 = vadd.f32 %v3357, %v3462
      %v3521 = vadd.f32 %v3358, %v3475
      %v3522 = vadd.f32 %v3359, %v3488
      %v3523 = vadd.f32 %v3360, %v3501
      %v3524 = vadd.f32 %v3361, %v3514
      %3525 = vrot.lane.b32.xlu0 %v2107, 95
      %v3526 = vpop.permute.xlu0 %3525
      %3527 = vrot.lane.b32.xlu0 %v2108, 95
      %v3528 = vpop.permute.xlu0 %3527
      %3529 = vrot.lane.b32.xlu0 %v2109, 95
      %v3530 = vpop.permute.xlu0 %3529
      %3531 = vrot.lane.b32.xlu0 %v2110, 95
      %v3532 = vpop.permute.xlu0 %3531
      %3533 = vrot.lane.b32.xlu0 %v2111, 95
      %v3534 = vpop.permute.xlu0 %3533
      %3535 = vrot.lane.b32.xlu0 %v2112, 95
      %v3536 = vpop.permute.xlu0 %3535
      %3537 = vrot.lane.b32.xlu0 %v2113, 95
      %v3538 = vpop.permute.xlu0 %3537
      %3539 = vrot.lane.b32.xlu0 %v2114, 95
      %v3540 = vpop.permute.xlu0 %3539
      %v3541 = vsel %vm1919, %v3526, %v3528
      %v3542 = vsel %vm1919, %v3528, %v3530
      %v3543 = vsel %vm1919, %v3530, %v3532
      %v3544 = vsel %vm1919, %v3532, %v3534
      %v3545 = vsel %vm1919, %v3534, %v3536
      %v3546 = vsel %vm1919, %v3536, %v3538
      %v3547 = vsel %vm1919, %v3538, %v3540
      %v3548 = vsel %vm1919, %v3540, %v1918
      %v3557 = vsel %vm828, %v3541, 0.0
      %v3558 = vsel %vm829, %v3542, 0.0
      %v3559 = vsel %vm830, %v3543, 0.0
      %v3560 = vsel %vm831, %v3544, 0.0
      %v3561 = vsel %vm832, %v3545, 0.0
      %v3562 = vsel %vm833, %v3546, 0.0
      %v3563 = vsel %vm834, %v3547, 0.0
      %v3564 = vsel %vm835, %v3548, 0.0
      %v3565 = vpack.c.bf16 %v3557, %v3557
      %v3566 = vpack.c.bf16 %v3558, %v3558
      %v3567 = vpack.c.bf16 %v3559, %v3559
      %v3568 = vpack.c.bf16 %v3560, %v3560
      %v3569 = vpack.c.bf16 %v3561, %v3561
      %v3570 = vpack.c.bf16 %v3562, %v3562
      %v3571 = vpack.c.bf16 %v3563, %v3563
      %v3572 = vpack.c.bf16 %v3564, %v3564
      %v3574 = vsel %vm2211, %v378, 0
      %v3577 = vsel %vm2215, %v3565, 0
      %v3580 = vsel %vm2215, %v3566, 0
      %v3583 = vsel %vm2215, %v3567, 0
      %v3586 = vsel %vm2215, %v3568, 0
      %v3589 = vsel %vm2215, %v3569, 0
      %v3592 = vsel %vm2215, %v3570, 0
      %v3595 = vsel %vm2215, %v3571, 0
      %v3598 = vsel %vm2215, %v3572, 0
      %3600 = vmatpush.bf16.msra.mxu0 0
      %3601 = vmatpush.bf16.msra.mxu0 0
      %3602 = vmatpush.bf16.msra.mxu0 0
      %3603 = vmatpush.bf16.msra.mxu0 0
      %3604 = vmatpush.bf16.msra.mxu0 0
      %3605 = vmatpush.bf16.msra.mxu0 0
      %3606 = vmatpush.bf16.msra.mxu0 0
      %3607 = vmatpush.bf16.msra.mxu0 %v3577
      %3608 = vmatmul.bf16.gmra.mxu0 %v3574
      %v3609 = vpop.f32.mrf.mxu0
      %v3610 = vadd.f32 0.0, %v3609
      %v3611 = vpop.f32.mrf.mxu0
      %3612 = vdwg.mxu0
      %3613 = vmatpush.bf16.msra.mxu0 0
      %3614 = vmatpush.bf16.msra.mxu0 0
      %3615 = vmatpush.bf16.msra.mxu0 0
      %3616 = vmatpush.bf16.msra.mxu0 0
      %3617 = vmatpush.bf16.msra.mxu0 0
      %3618 = vmatpush.bf16.msra.mxu0 0
      %3619 = vmatpush.bf16.msra.mxu0 0
      %3620 = vmatpush.bf16.msra.mxu0 %v3580
      %3621 = vmatmul.bf16.gmra.mxu0 %v3574
      %v3622 = vpop.f32.mrf.mxu0
      %v3623 = vadd.f32 0.0, %v3622
      %v3624 = vpop.f32.mrf.mxu0
      %3625 = vdwg.mxu0
      %3626 = vmatpush.bf16.msra.mxu0 0
      %3627 = vmatpush.bf16.msra.mxu0 0
      %3628 = vmatpush.bf16.msra.mxu0 0
      %3629 = vmatpush.bf16.msra.mxu0 0
      %3630 = vmatpush.bf16.msra.mxu0 0
      %3631 = vmatpush.bf16.msra.mxu0 0
      %3632 = vmatpush.bf16.msra.mxu0 0
      %3633 = vmatpush.bf16.msra.mxu0 %v3583
      %3634 = vmatmul.bf16.gmra.mxu0 %v3574
      %v3635 = vpop.f32.mrf.mxu0
      %v3636 = vadd.f32 0.0, %v3635
      %v3637 = vpop.f32.mrf.mxu0
      %3638 = vdwg.mxu0
      %3639 = vmatpush.bf16.msra.mxu0 0
      %3640 = vmatpush.bf16.msra.mxu0 0
      %3641 = vmatpush.bf16.msra.mxu0 0
      %3642 = vmatpush.bf16.msra.mxu0 0
      %3643 = vmatpush.bf16.msra.mxu0 0
      %3644 = vmatpush.bf16.msra.mxu0 0
      %3645 = vmatpush.bf16.msra.mxu0 0
      %3646 = vmatpush.bf16.msra.mxu0 %v3586
      %3647 = vmatmul.bf16.gmra.mxu0 %v3574
      %v3648 = vpop.f32.mrf.mxu0
      %v3649 = vadd.f32 0.0, %v3648
      %v3650 = vpop.f32.mrf.mxu0
      %3651 = vdwg.mxu0
      %3652 = vmatpush.bf16.msra.mxu0 0
      %3653 = vmatpush.bf16.msra.mxu0 0
      %3654 = vmatpush.bf16.msra.mxu0 0
      %3655 = vmatpush.bf16.msra.mxu0 0
      %3656 = vmatpush.bf16.msra.mxu0 0
      %3657 = vmatpush.bf16.msra.mxu0 0
      %3658 = vmatpush.bf16.msra.mxu0 0
      %3659 = vmatpush.bf16.msra.mxu0 %v3589
      %3660 = vmatmul.bf16.gmra.mxu0 %v3574
      %v3661 = vpop.f32.mrf.mxu0
      %v3662 = vadd.f32 0.0, %v3661
      %v3663 = vpop.f32.mrf.mxu0
      %3664 = vdwg.mxu0
      %3665 = vmatpush.bf16.msra.mxu0 0
      %3666 = vmatpush.bf16.msra.mxu0 0
      %3667 = vmatpush.bf16.msra.mxu0 0
      %3668 = vmatpush.bf16.msra.mxu0 0
      %3669 = vmatpush.bf16.msra.mxu0 0
      %3670 = vmatpush.bf16.msra.mxu0 0
      %3671 = vmatpush.bf16.msra.mxu0 0
      %3672 = vmatpush.bf16.msra.mxu0 %v3592
      %3673 = vmatmul.bf16.gmra.mxu0 %v3574
      %v3674 = vpop.f32.mrf.mxu0
      %v3675 = vadd.f32 0.0, %v3674
      %v3676 = vpop.f32.mrf.mxu0
      %3677 = vdwg.mxu0
      %3678 = vmatpush.bf16.msra.mxu0 0
      %3679 = vmatpush.bf16.msra.mxu0 0
      %3680 = vmatpush.bf16.msra.mxu0 0
      %3681 = vmatpush.bf16.msra.mxu0 0
      %3682 = vmatpush.bf16.msra.mxu0 0
      %3683 = vmatpush.bf16.msra.mxu0 0
      %3684 = vmatpush.bf16.msra.mxu0 0
      %3685 = vmatpush.bf16.msra.mxu0 %v3595
      %3686 = vmatmul.bf16.gmra.mxu0 %v3574
      %v3687 = vpop.f32.mrf.mxu0
      %v3688 = vadd.f32 0.0, %v3687
      %v3689 = vpop.f32.mrf.mxu0
      %3690 = vdwg.mxu0
      %3691 = vmatpush.bf16.msra.mxu0 0
      %3692 = vmatpush.bf16.msra.mxu0 0
      %3693 = vmatpush.bf16.msra.mxu0 0
      %3694 = vmatpush.bf16.msra.mxu0 0
      %3695 = vmatpush.bf16.msra.mxu0 0
      %3696 = vmatpush.bf16.msra.mxu0 0
      %3697 = vmatpush.bf16.msra.mxu0 0
      %3698 = vmatpush.bf16.msra.mxu0 %v3598
      %3699 = vmatmul.bf16.gmra.mxu0 %v3574
      %v3700 = vpop.f32.mrf.mxu0
      %v3701 = vadd.f32 0.0, %v3700
      %v3702 = vpop.f32.mrf.mxu0
      %3703 = vdwg.mxu0
      %v3704 = vadd.f32 %v3517, %v3610
      %v3705 = vadd.f32 %v3518, %v3623
      %v3706 = vadd.f32 %v3519, %v3636
      %v3707 = vadd.f32 %v3520, %v3649
      %v3708 = vadd.f32 %v3521, %v3662
      %v3709 = vadd.f32 %v3522, %v3675
      %v3710 = vadd.f32 %v3523, %v3688
      %v3711 = vadd.f32 %v3524, %v3701
      %v3712 = vadd.f32 %v403, %v3704
      %v3713 = vadd.f32 %v404, %v3705
      %v3714 = vadd.f32 %v405, %v3706
      %v3715 = vadd.f32 %v406, %v3707
      %v3716 = vadd.f32 %v407, %v3708
      %v3717 = vadd.f32 %v408, %v3709
      %v3718 = vadd.f32 %v409, %v3710
      %v3719 = vadd.f32 %v410, %v3711
      %3720 = vst [vmem:[%s278] sm:$0xff] %v3712
      %3721 = vst [vmem:[%s278 + $0x8] sm:$0xff] %v3713
      %3722 = vst [vmem:[%s278 + $0x10] sm:$0xff] %v3714
      %3723 = vst [vmem:[%s278 + $0x18] sm:$0xff] %v3715
      %3724 = vst [vmem:[%s278 + $0x20] sm:$0xff] %v3716
      %3725 = vst [vmem:[%s278 + $0x28] sm:$0xff] %v3717
      %3726 = vst [vmem:[%s278 + $0x30] sm:$0xff] %v3718
      %3727 = vst [vmem:[%s278 + $0x38] sm:$0xff] %v3719
      %p3728 = scmp.lt.s32.totalorder %s18, 1
      %s3729 = scalar_select %p3728, %s18, 1
      %s3730 = smul.addr %s3729, 8
      %s3731 = smul.addr %s3730, 8
      %s3732 = scalar_lea.vmem %s7, %s3731
      // Predicated region
      $region49: #{base_encoder_forward.5} parent=47 // pred_check
        %p3733 = pneg %p188
      $region50: #{base_encoder_forward.5} parent=47 // pred_check_branch
        %3735 = sbr.rel (%p3733) target = $region52
      $region51: #{base_encoder_forward.5} parent=47 // pred_region
        _
      $region52: #{base_encoder_forward.5} parent=47 // pred_fallthru
        _
    $region48: #{base_encoder_forward.5} parent=5 // pred_fallthru
      _
    %p3736 = scmp.le.s32.totalorder 2, %s13
    // Predicated region
    $region53: #{base_encoder_forward.5} parent=5 // pred_check
      %p3737 = pneg %p3736
    $region54: #{base_encoder_forward.5} parent=5 // pred_check_branch
      %3739 = sbr.rel (%p3737) target = $region56
    $region55: #{base_encoder_forward.5} parent=5 // pred_region
      %s3740 = ssub.s32 %s13, 2
      // Predicated region
      $region57: #{base_encoder_forward.5} parent=55 // pred_check
        %p3741 = pneg %p194
      $region58: #{base_encoder_forward.5} parent=55 // pred_check_branch
        %3743 = sbr.rel (%p3741) target = $region60
      $region59: #{base_encoder_forward.5} parent=55 // pred_region
        %p3744 = scmp.lt.s32.totalorder %s19, 1
        %s3745 = scalar_select %p3744, %s19, 1
        %s3746 = smul.addr %s3745, 8
        %s3747 = smul.addr %s3746, 8
        %s3748 = scalar_lea.vmem %s7, %s3747
      $region60: #{base_encoder_forward.5} parent=55 // pred_fallthru
        _
    $region56: #{base_encoder_forward.5} parent=5 // pred_fallthru
      _
  $region6: #{base_encoder_forward.5} parent=0 // loop_footer
    %s17 = sadd.s32 1, %s13
  $region7: #{base_encoder_forward.5} parent=0 // loop_footer_branch
    %12 = sbr.rel target = $region3
  $region8: #{base_encoder_forward.5} parent=0 // loop_exit
    _

// kernel: base_encoder_forward.7
$region0: #{base_encoder_forward.7}
  #allocation0 [shape = 'u32[]', space=smem, size = 0x4, offset = 0x4, fixed_abs, tag = 'smem constant byte address 0x4 - core index']
  #allocation1 [shape = 'u32[72,128]{1,0:T(1,128)}', space=vmem, size = 0x9000, scoped, tag = 'internal scratch']
  %s0 = inlined_call_operand.vmem [shape: bf16[2,4096], index: 0, kind: input, shape index: {}]
  %s1 = inlined_call_operand.vmem [shape: bf16[4096,32], index: 1, kind: input, shape index: {}]
  %s2 = inlined_call_operand.vmem [shape: f32[1,32], index: 2, kind: input, shape index: {}]
  %s3 = inlined_call_operand.hbm [shape: f32[2,16], index: 3, kind: output, shape index: {0}]
  %s4 = inlined_call_operand.hbm [shape: f32[2,16], index: 4, kind: output, shape index: {1}]
  %5 = xla_tuple %s3, %s4
  %s6 = sld [smem:[#allocation0]]
  $region30: #{base_encoder_forward.7} parent=0
    _
  %s8 = ssub.s32 1, %s6
  %s9 = scalar_select 0, %s8, %s6
  $region1: #{base_encoder_forward.7} parent=0
    #allocation2 [shape = 'u8[1024]{0}', space=vmem, size = 0x400, scoped, tag = 'output window, operand 0, single buffered']
    #allocation3 [shape = 's32[1]{0}', space=sflag, size = 0x4, scoped, tag = 'scoped memory for base_encoder_forward.7']
    #allocation4 [shape = 'u8[1024]{0}', space=vmem, size = 0x400, scoped, tag = 'output window, operand 1, single buffered']
    #allocation5 [shape = 's32[1]{0}', space=sflag, size = 0x4, scoped, tag = 'scoped memory for base_encoder_forward.7']
    %10 = vsyncpa [#allocation3], 0
    %11 = vsyncpa [#allocation5], 0
    // Predicated region
    $region2: #{base_encoder_forward.7} parent=1 // pred_check
      _
    $region3: #{base_encoder_forward.7} parent=1 // pred_check_branch
      %13 = sbr.rel (0) target = $region5
    $region4: #{base_encoder_forward.7} parent=1 // pred_region
      _
    $region5: #{base_encoder_forward.7} parent=1 // pred_fallthru
      _
    // Predicated region
    $region6: #{base_encoder_forward.7} parent=1 // pred_check
      _
    $region7: #{base_encoder_forward.7} parent=1 // pred_check_branch
      %15 = sbr.rel (0) target = $region9
    $region8: #{base_encoder_forward.7} parent=1 // pred_region
      _
    $region9: #{base_encoder_forward.7} parent=1 // pred_fallthru
      _
    // Predicated region
    $region10: #{base_encoder_forward.7} parent=1 // pred_check
      _
    $region11: #{base_encoder_forward.7} parent=1 // pred_check_branch
      %17 = sbr.rel (0) target = $region13
    $region12: #{base_encoder_forward.7} parent=1 // pred_region
      _
    $region13: #{base_encoder_forward.7} parent=1 // pred_fallthru
      _
    %v18 = vld [vmem:[%s0] sm:$0xff]
    %v19 = vld [vmem:[%s0 + $0x8] sm:$0xff]
    %v20 = vld [vmem:[%s0 + $0x10] sm:$0xff]
    %v21 = vld [vmem:[%s0 + $0x18] sm:$0xff]
    %v22 = vld [vmem:[%s1] sm:$0xf]
    %v23 = vld [vmem:[%s1 + $0x4] sm:$0xf]
    %v24 = vld [vmem:[%s1 + $0x8] sm:$0xf]
    %v25 = vld [vmem:[%s1 + $0xc] sm:$0xf]
    %v26 = vld [vmem:[%s1 + $0x10] sm:$0xf]
    %v27 = vld [vmem:[%s1 + $0x14] sm:$0xf]
    %v28 = vld [vmem:[%s1 + $0x18] sm:$0xf]
    %v29 = vld [vmem:[%s1 + $0x1c] sm:$0xf]
    %v30 = vld [vmem:[%s1 + $0x20] sm:$0xf]
    %v31 = vld [vmem:[%s1 + $0x24] sm:$0xf]
    %v32 = vld [vmem:[%s1 + $0x28] sm:$0xf]
    %v33 = vld [vmem:[%s1 + $0x2c] sm:$0xf]
    %v34 = vld [vmem:[%s1 + $0x30] sm:$0xf]
    %v35 = vld [vmem:[%s1 + $0x34] sm:$0xf]
    %v36 = vld [vmem:[%s1 + $0x38] sm:$0xf]
    %v37 = vld [vmem:[%s1 + $0x3c] sm:$0xf]
    %v38 = vld [vmem:[%s1 + $0x40] sm:$0xf]
    %v39 = vld [vmem:[%s1 + $0x44] sm:$0xf]
    %v40 = vld [vmem:[%s1 + $0x48] sm:$0xf]
    %v41 = vld [vmem:[%s1 + $0x4c] sm:$0xf]
    %v42 = vld [vmem:[%s1 + $0x50] sm:$0xf]
    %v43 = vld [vmem:[%s1 + $0x54] sm:$0xf]
    %v44 = vld [vmem:[%s1 + $0x58] sm:$0xf]
    %v45 = vld [vmem:[%s1 + $0x5c] sm:$0xf]
    %v46 = vld [vmem:[%s1 + $0x60] sm:$0xf]
    %v47 = vld [vmem:[%s1 + $0x64] sm:$0xf]
    %v48 = vld [vmem:[%s1 + $0x68] sm:$0xf]
    %v49 = vld [vmem:[%s1 + $0x6c] sm:$0xf]
    %v50 = vld [vmem:[%s1 + $0x70] sm:$0xf]
    %v51 = vld [vmem:[%s1 + $0x74] sm:$0xf]
    %v52 = vld [vmem:[%s1 + $0x78] sm:$0xf]
    %v53 = vld [vmem:[%s1 + $0x7c] sm:$0xf]
    %v54 = vld [vmem:[%s1 + $0x80] sm:$0xf]
    %v55 = vld [vmem:[%s1 + $0x84] sm:$0xf]
    %v56 = vld [vmem:[%s1 + $0x88] sm:$0xf]
    %v57 = vld [vmem:[%s1 + $0x8c] sm:$0xf]
    %v58 = vld [vmem:[%s1 + $0x90] sm:$0xf]
    %v59 = vld [vmem:[%s1 + $0x94] sm:$0xf]
    %v60 = vld [vmem:[%s1 + $0x98] sm:$0xf]
    %v61 = vld [vmem:[%s1 + $0x9c] sm:$0xf]
    %v62 = vld [vmem:[%s1 + $0xa0] sm:$0xf]
    %v63 = vld [vmem:[%s1 + $0xa4] sm:$0xf]
    %v64 = vld [vmem:[%s1 + $0xa8] sm:$0xf]
    %v65 = vld [vmem:[%s1 + $0xac] sm:$0xf]
    %v66 = vld [vmem:[%s1 + $0xb0] sm:$0xf]
    %v67 = vld [vmem:[%s1 + $0xb4] sm:$0xf]
    %v68 = vld [vmem:[%s1 + $0xb8] sm:$0xf]
    %v69 = vld [vmem:[%s1 + $0xbc] sm:$0xf]
    %v70 = vld [vmem:[%s1 + $0xc0] sm:$0xf]
    %v71 = vld [vmem:[%s1 + $0xc4] sm:$0xf]
    %v72 = vld [vmem:[%s1 + $0xc8] sm:$0xf]
    %v73 = vld [vmem:[%s1 + $0xcc] sm:$0xf]
    %v74 = vld [vmem:[%s1 + $0xd0] sm:$0xf]
    %v75 = vld [vmem:[%s1 + $0xd4] sm:$0xf]
    %v76 = vld [vmem:[%s1 + $0xd8] sm:$0xf]
    %v77 = vld [vmem:[%s1 + $0xdc] sm:$0xf]
    %v78 = vld [vmem:[%s1 + $0xe0] sm:$0xf]
    %v79 = vld [vmem:[%s1 + $0xe4] sm:$0xf]
    %v80 = vld [vmem:[%s1 + $0xe8] sm:$0xf]
    %v81 = vld [vmem:[%s1 + $0xec] sm:$0xf]
    %v82 = vld [vmem:[%s1 + $0xf0] sm:$0xf]
    %v83 = vld [vmem:[%s1 + $0xf4] sm:$0xf]
    %v84 = vld [vmem:[%s1 + $0xf8] sm:$0xf]
    %v85 = vld [vmem:[%s1 + $0xfc] sm:$0xf]
    %v86 = vld [vmem:[%s1 + $0x100] sm:$0xf]
    %v87 = vld [vmem:[%s1 + $0x104] sm:$0xf]
    %v88 = vld [vmem:[%s1 + $0x108] sm:$0xf]
    %v89 = vld [vmem:[%s1 + $0x10c] sm:$0xf]
    %v90 = vld [vmem:[%s1 + $0x110] sm:$0xf]
    %v91 = vld [vmem:[%s1 + $0x114] sm:$0xf]
    %v92 = vld [vmem:[%s1 + $0x118] sm:$0xf]
    %v93 = vld [vmem:[%s1 + $0x11c] sm:$0xf]
    %v94 = vld [vmem:[%s1 + $0x120] sm:$0xf]
    %v95 = vld [vmem:[%s1 + $0x124] sm:$0xf]
    %v96 = vld [vmem:[%s1 + $0x128] sm:$0xf]
    %v97 = vld [vmem:[%s1 + $0x12c] sm:$0xf]
    %v98 = vld [vmem:[%s1 + $0x130] sm:$0xf]
    %v99 = vld [vmem:[%s1 + $0x134] sm:$0xf]
    %v100 = vld [vmem:[%s1 + $0x138] sm:$0xf]
    %v101 = vld [vmem:[%s1 + $0x13c] sm:$0xf]
    %v102 = vld [vmem:[%s1 + $0x140] sm:$0xf]
    %v103 = vld [vmem:[%s1 + $0x144] sm:$0xf]
    %v104 = vld [vmem:[%s1 + $0x148] sm:$0xf]
    %v105 = vld [vmem:[%s1 + $0x14c] sm:$0xf]
    %v106 = vld [vmem:[%s1 + $0x150] sm:$0xf]
    %v107 = vld [vmem:[%s1 + $0x154] sm:$0xf]
    %v108 = vld [vmem:[%s1 + $0x158] sm:$0xf]
    %v109 = vld [vmem:[%s1 + $0x15c] sm:$0xf]
    %v110 = vld [vmem:[%s1 + $0x160] sm:$0xf]
    %v111 = vld [vmem:[%s1 + $0x164] sm:$0xf]
    %v112 = vld [vmem:[%s1 + $0x168] sm:$0xf]
    %v113 = vld [vmem:[%s1 + $0x16c] sm:$0xf]
    %v114 = vld [vmem:[%s1 + $0x170] sm:$0xf]
    %v115 = vld [vmem:[%s1 + $0x174] sm:$0xf]
    %v116 = vld [vmem:[%s1 + $0x178] sm:$0xf]
    %v117 = vld [vmem:[%s1 + $0x17c] sm:$0xf]
    %v118 = vld [vmem:[%s1 + $0x180] sm:$0xf]
    %v119 = vld [vmem:[%s1 + $0x184] sm:$0xf]
    %v120 = vld [vmem:[%s1 + $0x188] sm:$0xf]
    %v121 = vld [vmem:[%s1 + $0x18c] sm:$0xf]
    %v122 = vld [vmem:[%s1 + $0x190] sm:$0xf]
    %v123 = vld [vmem:[%s1 + $0x194] sm:$0xf]
    %v124 = vld [vmem:[%s1 + $0x198] sm:$0xf]
    %v125 = vld [vmem:[%s1 + $0x19c] sm:$0xf]
    %v126 = vld [vmem:[%s1 + $0x1a0] sm:$0xf]
    %v127 = vld [vmem:[%s1 + $0x1a4] sm:$0xf]
    %v128 = vld [vmem:[%s1 + $0x1a8] sm:$0xf]
    %v129 = vld [vmem:[%s1 + $0x1ac] sm:$0xf]
    %v130 = vld [vmem:[%s1 + $0x1b0] sm:$0xf]
    %v131 = vld [vmem:[%s1 + $0x1b4] sm:$0xf]
    %v132 = vld [vmem:[%s1 + $0x1b8] sm:$0xf]
    %v133 = vld [vmem:[%s1 + $0x1bc] sm:$0xf]
    %v134 = vld [vmem:[%s1 + $0x1c0] sm:$0xf]
    %v135 = vld [vmem:[%s1 + $0x1c4] sm:$0xf]
    %v136 = vld [vmem:[%s1 + $0x1c8] sm:$0xf]
    %v137 = vld [vmem:[%s1 + $0x1cc] sm:$0xf]
    %v138 = vld [vmem:[%s1 + $0x1d0] sm:$0xf]
    %v139 = vld [vmem:[%s1 + $0x1d4] sm:$0xf]
    %v140 = vld [vmem:[%s1 + $0x1d8] sm:$0xf]
    %v141 = vld [vmem:[%s1 + $0x1dc] sm:$0xf]
    %v142 = vld [vmem:[%s1 + $0x1e0] sm:$0xf]
    %v143 = vld [vmem:[%s1 + $0x1e4] sm:$0xf]
    %v144 = vld [vmem:[%s1 + $0x1e8] sm:$0xf]
    %v145 = vld [vmem:[%s1 + $0x1ec] sm:$0xf]
    %v146 = vld [vmem:[%s1 + $0x1f0] sm:$0xf]
    %v147 = vld [vmem:[%s1 + $0x1f4] sm:$0xf]
    %v148 = vld [vmem:[%s1 + $0x1f8] sm:$0xf]
    %v149 = vld [vmem:[%s1 + $0x1fc] sm:$0xf]
    %v150 = vld [vmem:[%s1 + $0x200] sm:$0xf]
    %v151 = vld [vmem:[%s1 + $0x204] sm:$0xf]
    %v152 = vld [vmem:[%s1 + $0x208] sm:$0xf]
    %v153 = vld [vmem:[%s1 + $0x20c] sm:$0xf]
    %v154 = vld [vmem:[%s1 + $0x210] sm:$0xf]
    %v155 = vld [vmem:[%s1 + $0x214] sm:$0xf]
    %v156 = vld [vmem:[%s1 + $0x218] sm:$0xf]
    %v157 = vld [vmem:[%s1 + $0x21c] sm:$0xf]
    %v158 = vld [vmem:[%s1 + $0x220] sm:$0xf]
    %v159 = vld [vmem:[%s1 + $0x224] sm:$0xf]
    %v160 = vld [vmem:[%s1 + $0x228] sm:$0xf]
    %v161 = vld [vmem:[%s1 + $0x22c] sm:$0xf]
    %v162 = vld [vmem:[%s1 + $0x230] sm:$0xf]
    %v163 = vld [vmem:[%s1 + $0x234] sm:$0xf]
    %v164 = vld [vmem:[%s1 + $0x238] sm:$0xf]
    %v165 = vld [vmem:[%s1 + $0x23c] sm:$0xf]
    %v166 = vld [vmem:[%s1 + $0x240] sm:$0xf]
    %v167 = vld [vmem:[%s1 + $0x244] sm:$0xf]
    %v168 = vld [vmem:[%s1 + $0x248] sm:$0xf]
    %v169 = vld [vmem:[%s1 + $0x24c] sm:$0xf]
    %v170 = vld [vmem:[%s1 + $0x250] sm:$0xf]
    %v171 = vld [vmem:[%s1 + $0x254] sm:$0xf]
    %v172 = vld [vmem:[%s1 + $0x258] sm:$0xf]
    %v173 = vld [vmem:[%s1 + $0x25c] sm:$0xf]
    %v174 = vld [vmem:[%s1 + $0x260] sm:$0xf]
    %v175 = vld [vmem:[%s1 + $0x264] sm:$0xf]
    %v176 = vld [vmem:[%s1 + $0x268] sm:$0xf]
    %v177 = vld [vmem:[%s1 + $0x26c] sm:$0xf]
    %v178 = vld [vmem:[%s1 + $0x270] sm:$0xf]
    %v179 = vld [vmem:[%s1 + $0x274] sm:$0xf]
    %v180 = vld [vmem:[%s1 + $0x278] sm:$0xf]
    %v181 = vld [vmem:[%s1 + $0x27c] sm:$0xf]
    %v182 = vld [vmem:[%s1 + $0x280] sm:$0xf]
    %v183 = vld [vmem:[%s1 + $0x284] sm:$0xf]
    %v184 = vld [vmem:[%s1 + $0x288] sm:$0xf]
    %v185 = vld [vmem:[%s1 + $0x28c] sm:$0xf]
    %v186 = vld [vmem:[%s1 + $0x290] sm:$0xf]
    %v187 = vld [vmem:[%s1 + $0x294] sm:$0xf]
    %v188 = vld [vmem:[%s1 + $0x298] sm:$0xf]
    %v189 = vld [vmem:[%s1 + $0x29c] sm:$0xf]
    %v190 = vld [vmem:[%s1 + $0x2a0] sm:$0xf]
    %v191 = vld [vmem:[%s1 + $0x2a4] sm:$0xf]
    %v192 = vld [vmem:[%s1 + $0x2a8] sm:$0xf]
    %v193 = vld [vmem:[%s1 + $0x2ac] sm:$0xf]
    %v194 = vld [vmem:[%s1 + $0x2b0] sm:$0xf]
    %v195 = vld [vmem:[%s1 + $0x2b4] sm:$0xf]
    %v196 = vld [vmem:[%s1 + $0x2b8] sm:$0xf]
    %v197 = vld [vmem:[%s1 + $0x2bc] sm:$0xf]
    %v198 = vld [vmem:[%s1 + $0x2c0] sm:$0xf]
    %v199 = vld [vmem:[%s1 + $0x2c4] sm:$0xf]
    %v200 = vld [vmem:[%s1 + $0x2c8] sm:$0xf]
    %v201 = vld [vmem:[%s1 + $0x2cc] sm:$0xf]
    %v202 = vld [vmem:[%s1 + $0x2d0] sm:$0xf]
    %v203 = vld [vmem:[%s1 + $0x2d4] sm:$0xf]
    %v204 = vld [vmem:[%s1 + $0x2d8] sm:$0xf]
    %v205 = vld [vmem:[%s1 + $0x2dc] sm:$0xf]
    %v206 = vld [vmem:[%s1 + $0x2e0] sm:$0xf]
    %v207 = vld [vmem:[%s1 + $0x2e4] sm:$0xf]
    %v208 = vld [vmem:[%s1 + $0x2e8] sm:$0xf]
    %v209 = vld [vmem:[%s1 + $0x2ec] sm:$0xf]
    %v210 = vld [vmem:[%s1 + $0x2f0] sm:$0xf]
    %v211 = vld [vmem:[%s1 + $0x2f4] sm:$0xf]
    %v212 = vld [vmem:[%s1 + $0x2f8] sm:$0xf]
    %v213 = vld [vmem:[%s1 + $0x2fc] sm:$0xf]
    %v214 = vld [vmem:[%s1 + $0x300] sm:$0xf]
    %v215 = vld [vmem:[%s1 + $0x304] sm:$0xf]
    %v216 = vld [vmem:[%s1 + $0x308] sm:$0xf]
    %v217 = vld [vmem:[%s1 + $0x30c] sm:$0xf]
    %v218 = vld [vmem:[%s1 + $0x310] sm:$0xf]
    %v219 = vld [vmem:[%s1 + $0x314] sm:$0xf]
    %v220 = vld [vmem:[%s1 + $0x318] sm:$0xf]
    %v221 = vld [vmem:[%s1 + $0x31c] sm:$0xf]
    %v222 = vld [vmem:[%s1 + $0x320] sm:$0xf]
    %v223 = vld [vmem:[%s1 + $0x324] sm:$0xf]
    %v224 = vld [vmem:[%s1 + $0x328] sm:$0xf]
    %v225 = vld [vmem:[%s1 + $0x32c] sm:$0xf]
    %v226 = vld [vmem:[%s1 + $0x330] sm:$0xf]
    %v227 = vld [vmem:[%s1 + $0x334] sm:$0xf]
    %v228 = vld [vmem:[%s1 + $0x338] sm:$0xf]
    %v229 = vld [vmem:[%s1 + $0x33c] sm:$0xf]
    %v230 = vld [vmem:[%s1 + $0x340] sm:$0xf]
    %v231 = vld [vmem:[%s1 + $0x344] sm:$0xf]
    %v232 = vld [vmem:[%s1 + $0x348] sm:$0xf]
    %v233 = vld [vmem:[%s1 + $0x34c] sm:$0xf]
    %v234 = vld [vmem:[%s1 + $0x350] sm:$0xf]
    %v235 = vld [vmem:[%s1 + $0x354] sm:$0xf]
    %v236 = vld [vmem:[%s1 + $0x358] sm:$0xf]
    %v237 = vld [vmem:[%s1 + $0x35c] sm:$0xf]
    %v238 = vld [vmem:[%s1 + $0x360] sm:$0xf]
    %v239 = vld [vmem:[%s1 + $0x364] sm:$0xf]
    %v240 = vld [vmem:[%s1 + $0x368] sm:$0xf]
    %v241 = vld [vmem:[%s1 + $0x36c] sm:$0xf]
    %v242 = vld [vmem:[%s1 + $0x370] sm:$0xf]
    %v243 = vld [vmem:[%s1 + $0x374] sm:$0xf]
    %v244 = vld [vmem:[%s1 + $0x378] sm:$0xf]
    %v245 = vld [vmem:[%s1 + $0x37c] sm:$0xf]
    %v246 = vld [vmem:[%s1 + $0x380] sm:$0xf]
    %v247 = vld [vmem:[%s1 + $0x384] sm:$0xf]
    %v248 = vld [vmem:[%s1 + $0x388] sm:$0xf]
    %v249 = vld [vmem:[%s1 + $0x38c] sm:$0xf]
    %v250 = vld [vmem:[%s1 + $0x390] sm:$0xf]
    %v251 = vld [vmem:[%s1 + $0x394] sm:$0xf]
    %v252 = vld [vmem:[%s1 + $0x398] sm:$0xf]
    %v253 = vld [vmem:[%s1 + $0x39c] sm:$0xf]
    %v254 = vld [vmem:[%s1 + $0x3a0] sm:$0xf]
    %v255 = vld [vmem:[%s1 + $0x3a4] sm:$0xf]
    %v256 = vld [vmem:[%s1 + $0x3a8] sm:$0xf]
    %v257 = vld [vmem:[%s1 + $0x3ac] sm:$0xf]
    %v258 = vld [vmem:[%s1 + $0x3b0] sm:$0xf]
    %v259 = vld [vmem:[%s1 + $0x3b4] sm:$0xf]
    %v260 = vld [vmem:[%s1 + $0x3b8] sm:$0xf]
    %v261 = vld [vmem:[%s1 + $0x3bc] sm:$0xf]
    %v262 = vld [vmem:[%s1 + $0x3c0] sm:$0xf]
    %v263 = vld [vmem:[%s1 + $0x3c4] sm:$0xf]
    %v264 = vld [vmem:[%s1 + $0x3c8] sm:$0xf]
    %v265 = vld [vmem:[%s1 + $0x3cc] sm:$0xf]
    %v266 = vld [vmem:[%s1 + $0x3d0] sm:$0xf]
    %v267 = vld [vmem:[%s1 + $0x3d4] sm:$0xf]
    %v268 = vld [vmem:[%s1 + $0x3d8] sm:$0xf]
    %v269 = vld [vmem:[%s1 + $0x3dc] sm:$0xf]
    %v270 = vld [vmem:[%s1 + $0x3e0] sm:$0xf]
    %v271 = vld [vmem:[%s1 + $0x3e4] sm:$0xf]
    %v272 = vld [vmem:[%s1 + $0x3e8] sm:$0xf]
    %v273 = vld [vmem:[%s1 + $0x3ec] sm:$0xf]
    %v274 = vld [vmem:[%s1 + $0x3f0] sm:$0xf]
    %v275 = vld [vmem:[%s1 + $0x3f4] sm:$0xf]
    %v276 = vld [vmem:[%s1 + $0x3f8] sm:$0xf]
    %v277 = vld [vmem:[%s1 + $0x3fc] sm:$0xf]
    %v278 = vld [vmem:[%s1 + $0x400] sm:$0xf]
    %v279 = vld [vmem:[%s1 + $0x404] sm:$0xf]
    %v280 = vld [vmem:[%s1 + $0x408] sm:$0xf]
    %v281 = vld [vmem:[%s1 + $0x40c] sm:$0xf]
    %v282 = vld [vmem:[%s1 + $0x410] sm:$0xf]
    %v283 = vld [vmem:[%s1 + $0x414] sm:$0xf]
    %v284 = vld [vmem:[%s1 + $0x418] sm:$0xf]
    %v285 = vld [vmem:[%s1 + $0x41c] sm:$0xf]
    %v286 = vld [vmem:[%s1 + $0x420] sm:$0xf]
    %v287 = vld [vmem:[%s1 + $0x424] sm:$0xf]
    %v288 = vld [vmem:[%s1 + $0x428] sm:$0xf]
    %v289 = vld [vmem:[%s1 + $0x42c] sm:$0xf]
    %v290 = vld [vmem:[%s1 + $0x430] sm:$0xf]
    %v291 = vld [vmem:[%s1 + $0x434] sm:$0xf]
    %v292 = vld [vmem:[%s1 + $0x438] sm:$0xf]
    %v293 = vld [vmem:[%s1 + $0x43c] sm:$0xf]
    %v294 = vld [vmem:[%s1 + $0x440] sm:$0xf]
    %v295 = vld [vmem:[%s1 + $0x444] sm:$0xf]
    %v296 = vld [vmem:[%s1 + $0x448] sm:$0xf]
    %v297 = vld [vmem:[%s1 + $0x44c] sm:$0xf]
    %v298 = vld [vmem:[%s1 + $0x450] sm:$0xf]
    %v299 = vld [vmem:[%s1 + $0x454] sm:$0xf]
    %v300 = vld [vmem:[%s1 + $0x458] sm:$0xf]
    %v301 = vld [vmem:[%s1 + $0x45c] sm:$0xf]
    %v302 = vld [vmem:[%s1 + $0x460] sm:$0xf]
    %v303 = vld [vmem:[%s1 + $0x464] sm:$0xf]
    %v304 = vld [vmem:[%s1 + $0x468] sm:$0xf]
    %v305 = vld [vmem:[%s1 + $0x46c] sm:$0xf]
    %v306 = vld [vmem:[%s1 + $0x470] sm:$0xf]
    %v307 = vld [vmem:[%s1 + $0x474] sm:$0xf]
    %v308 = vld [vmem:[%s1 + $0x478] sm:$0xf]
    %v309 = vld [vmem:[%s1 + $0x47c] sm:$0xf]
    %v310 = vld [vmem:[%s1 + $0x480] sm:$0xf]
    %v311 = vld [vmem:[%s1 + $0x484] sm:$0xf]
    %v312 = vld [vmem:[%s1 + $0x488] sm:$0xf]
    %v313 = vld [vmem:[%s1 + $0x48c] sm:$0xf]
    %v314 = vld [vmem:[%s1 + $0x490] sm:$0xf]
    %v315 = vld [vmem:[%s1 + $0x494] sm:$0xf]
    %v316 = vld [vmem:[%s1 + $0x498] sm:$0xf]
    %v317 = vld [vmem:[%s1 + $0x49c] sm:$0xf]
    %v318 = vld [vmem:[%s1 + $0x4a0] sm:$0xf]
    %v319 = vld [vmem:[%s1 + $0x4a4] sm:$0xf]
    %v320 = vld [vmem:[%s1 + $0x4a8] sm:$0xf]
    %v321 = vld [vmem:[%s1 + $0x4ac] sm:$0xf]
    %v322 = vld [vmem:[%s1 + $0x4b0] sm:$0xf]
    %v323 = vld [vmem:[%s1 + $0x4b4] sm:$0xf]
    %v324 = vld [vmem:[%s1 + $0x4b8] sm:$0xf]
    %v325 = vld [vmem:[%s1 + $0x4bc] sm:$0xf]
    %v326 = vld [vmem:[%s1 + $0x4c0] sm:$0xf]
    %v327 = vld [vmem:[%s1 + $0x4c4] sm:$0xf]
    %v328 = vld [vmem:[%s1 + $0x4c8] sm:$0xf]
    %v329 = vld [vmem:[%s1 + $0x4cc] sm:$0xf]
    %v330 = vld [vmem:[%s1 + $0x4d0] sm:$0xf]
    %v331 = vld [vmem:[%s1 + $0x4d4] sm:$0xf]
    %v332 = vld [vmem:[%s1 + $0x4d8] sm:$0xf]
    %v333 = vld [vmem:[%s1 + $0x4dc] sm:$0xf]
    %v334 = vld [vmem:[%s1 + $0x4e0] sm:$0xf]
    %v335 = vld [vmem:[%s1 + $0x4e4] sm:$0xf]
    %v336 = vld [vmem:[%s1 + $0x4e8] sm:$0xf]
    %v337 = vld [vmem:[%s1 + $0x4ec] sm:$0xf]
    %v338 = vld [vmem:[%s1 + $0x4f0] sm:$0xf]
    %v339 = vld [vmem:[%s1 + $0x4f4] sm:$0xf]
    %v340 = vld [vmem:[%s1 + $0x4f8] sm:$0xf]
    %v341 = vld [vmem:[%s1 + $0x4fc] sm:$0xf]
    %v342 = vld [vmem:[%s1 + $0x500] sm:$0xf]
    %v343 = vld [vmem:[%s1 + $0x504] sm:$0xf]
    %v344 = vld [vmem:[%s1 + $0x508] sm:$0xf]
    %v345 = vld [vmem:[%s1 + $0x50c] sm:$0xf]
    %v346 = vld [vmem:[%s1 + $0x510] sm:$0xf]
    %v347 = vld [vmem:[%s1 + $0x514] sm:$0xf]
    %v348 = vld [vmem:[%s1 + $0x518] sm:$0xf]
    %v349 = vld [vmem:[%s1 + $0x51c] sm:$0xf]
    %v350 = vld [vmem:[%s1 + $0x520] sm:$0xf]
    %v351 = vld [vmem:[%s1 + $0x524] sm:$0xf]
    %v352 = vld [vmem:[%s1 + $0x528] sm:$0xf]
    %v353 = vld [vmem:[%s1 + $0x52c] sm:$0xf]
    %v354 = vld [vmem:[%s1 + $0x530] sm:$0xf]
    %v355 = vld [vmem:[%s1 + $0x534] sm:$0xf]
    %v356 = vld [vmem:[%s1 + $0x538] sm:$0xf]
    %v357 = vld [vmem:[%s1 + $0x53c] sm:$0xf]
    %v358 = vld [vmem:[%s1 + $0x540] sm:$0xf]
    %v359 = vld [vmem:[%s1 + $0x544] sm:$0xf]
    %v360 = vld [vmem:[%s1 + $0x548] sm:$0xf]
    %v361 = vld [vmem:[%s1 + $0x54c] sm:$0xf]
    %v362 = vld [vmem:[%s1 + $0x550] sm:$0xf]
    %v363 = vld [vmem:[%s1 + $0x554] sm:$0xf]
    %v364 = vld [vmem:[%s1 + $0x558] sm:$0xf]
    %v365 = vld [vmem:[%s1 + $0x55c] sm:$0xf]
    %v366 = vld [vmem:[%s1 + $0x560] sm:$0xf]
    %v367 = vld [vmem:[%s1 + $0x564] sm:$0xf]
    %v368 = vld [vmem:[%s1 + $0x568] sm:$0xf]
    %v369 = vld [vmem:[%s1 + $0x56c] sm:$0xf]
    %v370 = vld [vmem:[%s1 + $0x570] sm:$0xf]
    %v371 = vld [vmem:[%s1 + $0x574] sm:$0xf]
    %v372 = vld [vmem:[%s1 + $0x578] sm:$0xf]
    %v373 = vld [vmem:[%s1 + $0x57c] sm:$0xf]
    %v374 = vld [vmem:[%s1 + $0x580] sm:$0xf]
    %v375 = vld [vmem:[%s1 + $0x584] sm:$0xf]
    %v376 = vld [vmem:[%s1 + $0x588] sm:$0xf]
    %v377 = vld [vmem:[%s1 + $0x58c] sm:$0xf]
    %v378 = vld [vmem:[%s1 + $0x590] sm:$0xf]
    %v379 = vld [vmem:[%s1 + $0x594] sm:$0xf]
    %v380 = vld [vmem:[%s1 + $0x598] sm:$0xf]
    %v381 = vld [vmem:[%s1 + $0x59c] sm:$0xf]
    %v382 = vld [vmem:[%s1 + $0x5a0] sm:$0xf]
    %v383 = vld [vmem:[%s1 + $0x5a4] sm:$0xf]
    %v384 = vld [vmem:[%s1 + $0x5a8] sm:$0xf]
    %v385 = vld [vmem:[%s1 + $0x5ac] sm:$0xf]
    %v386 = vld [vmem:[%s1 + $0x5b0] sm:$0xf]
    %v387 = vld [vmem:[%s1 + $0x5b4] sm:$0xf]
    %v388 = vld [vmem:[%s1 + $0x5b8] sm:$0xf]
    %v389 = vld [vmem:[%s1 + $0x5bc] sm:$0xf]
    %v390 = vld [vmem:[%s1 + $0x5c0] sm:$0xf]
    %v391 = vld [vmem:[%s1 + $0x5c4] sm:$0xf]
    %v392 = vld [vmem:[%s1 + $0x5c8] sm:$0xf]
    %v393 = vld [vmem:[%s1 + $0x5cc] sm:$0xf]
    %v394 = vld [vmem:[%s1 + $0x5d0] sm:$0xf]
    %v395 = vld [vmem:[%s1 + $0x5d4] sm:$0xf]
    %v396 = vld [vmem:[%s1 + $0x5d8] sm:$0xf]
    %v397 = vld [vmem:[%s1 + $0x5dc] sm:$0xf]
    %v398 = vld [vmem:[%s1 + $0x5e0] sm:$0xf]
    %v399 = vld [vmem:[%s1 + $0x5e4] sm:$0xf]
    %v400 = vld [vmem:[%s1 + $0x5e8] sm:$0xf]
    %v401 = vld [vmem:[%s1 + $0x5ec] sm:$0xf]
    %v402 = vld [vmem:[%s1 + $0x5f0] sm:$0xf]
    %v403 = vld [vmem:[%s1 + $0x5f4] sm:$0xf]
    %v404 = vld [vmem:[%s1 + $0x5f8] sm:$0xf]
    %v405 = vld [vmem:[%s1 + $0x5fc] sm:$0xf]
    %v406 = vld [vmem:[%s1 + $0x600] sm:$0xf]
    %v407 = vld [vmem:[%s1 + $0x604] sm:$0xf]
    %v408 = vld [vmem:[%s1 + $0x608] sm:$0xf]
    %v409 = vld [vmem:[%s1 + $0x60c] sm:$0xf]
    %v410 = vld [vmem:[%s1 + $0x610] sm:$0xf]
    %v411 = vld [vmem:[%s1 + $0x614] sm:$0xf]
    %v412 = vld [vmem:[%s1 + $0x618] sm:$0xf]
    %v413 = vld [vmem:[%s1 + $0x61c] sm:$0xf]
    %v414 = vld [vmem:[%s1 + $0x620] sm:$0xf]
    %v415 = vld [vmem:[%s1 + $0x624] sm:$0xf]
    %v416 = vld [vmem:[%s1 + $0x628] sm:$0xf]
    %v417 = vld [vmem:[%s1 + $0x62c] sm:$0xf]
    %v418 = vld [vmem:[%s1 + $0x630] sm:$0xf]
    %v419 = vld [vmem:[%s1 + $0x634] sm:$0xf]
    %v420 = vld [vmem:[%s1 + $0x638] sm:$0xf]
    %v421 = vld [vmem:[%s1 + $0x63c] sm:$0xf]
    %v422 = vld [vmem:[%s1 + $0x640] sm:$0xf]
    %v423 = vld [vmem:[%s1 + $0x644] sm:$0xf]
    %v424 = vld [vmem:[%s1 + $0x648] sm:$0xf]
    %v425 = vld [vmem:[%s1 + $0x64c] sm:$0xf]
    %v426 = vld [vmem:[%s1 + $0x650] sm:$0xf]
    %v427 = vld [vmem:[%s1 + $0x654] sm:$0xf]
    %v428 = vld [vmem:[%s1 + $0x658] sm:$0xf]
    %v429 = vld [vmem:[%s1 + $0x65c] sm:$0xf]
    %v430 = vld [vmem:[%s1 + $0x660] sm:$0xf]
    %v431 = vld [vmem:[%s1 + $0x664] sm:$0xf]
    %v432 = vld [vmem:[%s1 + $0x668] sm:$0xf]
    %v433 = vld [vmem:[%s1 + $0x66c] sm:$0xf]
    %v434 = vld [vmem:[%s1 + $0x670] sm:$0xf]
    %v435 = vld [vmem:[%s1 + $0x674] sm:$0xf]
    %v436 = vld [vmem:[%s1 + $0x678] sm:$0xf]
    %v437 = vld [vmem:[%s1 + $0x67c] sm:$0xf]
    %v438 = vld [vmem:[%s1 + $0x680] sm:$0xf]
    %v439 = vld [vmem:[%s1 + $0x684] sm:$0xf]
    %v440 = vld [vmem:[%s1 + $0x688] sm:$0xf]
    %v441 = vld [vmem:[%s1 + $0x68c] sm:$0xf]
    %v442 = vld [vmem:[%s1 + $0x690] sm:$0xf]
    %v443 = vld [vmem:[%s1 + $0x694] sm:$0xf]
    %v444 = vld [vmem:[%s1 + $0x698] sm:$0xf]
    %v445 = vld [vmem:[%s1 + $0x69c] sm:$0xf]
    %v446 = vld [vmem:[%s1 + $0x6a0] sm:$0xf]
    %v447 = vld [vmem:[%s1 + $0x6a4] sm:$0xf]
    %v448 = vld [vmem:[%s1 + $0x6a8] sm:$0xf]
    %v449 = vld [vmem:[%s1 + $0x6ac] sm:$0xf]
    %v450 = vld [vmem:[%s1 + $0x6b0] sm:$0xf]
    %v451 = vld [vmem:[%s1 + $0x6b4] sm:$0xf]
    %v452 = vld [vmem:[%s1 + $0x6b8] sm:$0xf]
    %v453 = vld [vmem:[%s1 + $0x6bc] sm:$0xf]
    %v454 = vld [vmem:[%s1 + $0x6c0] sm:$0xf]
    %v455 = vld [vmem:[%s1 + $0x6c4] sm:$0xf]
    %v456 = vld [vmem:[%s1 + $0x6c8] sm:$0xf]
    %v457 = vld [vmem:[%s1 + $0x6cc] sm:$0xf]
    %v458 = vld [vmem:[%s1 + $0x6d0] sm:$0xf]
    %v459 = vld [vmem:[%s1 + $0x6d4] sm:$0xf]
    %v460 = vld [vmem:[%s1 + $0x6d8] sm:$0xf]
    %v461 = vld [vmem:[%s1 + $0x6dc] sm:$0xf]
    %v462 = vld [vmem:[%s1 + $0x6e0] sm:$0xf]
    %v463 = vld [vmem:[%s1 + $0x6e4] sm:$0xf]
    %v464 = vld [vmem:[%s1 + $0x6e8] sm:$0xf]
    %v465 = vld [vmem:[%s1 + $0x6ec] sm:$0xf]
    %v466 = vld [vmem:[%s1 + $0x6f0] sm:$0xf]
    %v467 = vld [vmem:[%s1 + $0x6f4] sm:$0xf]
    %v468 = vld [vmem:[%s1 + $0x6f8] sm:$0xf]
    %v469 = vld [vmem:[%s1 + $0x6fc] sm:$0xf]
    %v470 = vld [vmem:[%s1 + $0x700] sm:$0xf]
    %v471 = vld [vmem:[%s1 + $0x704] sm:$0xf]
    %v472 = vld [vmem:[%s1 + $0x708] sm:$0xf]
    %v473 = vld [vmem:[%s1 + $0x70c] sm:$0xf]
    %v474 = vld [vmem:[%s1 + $0x710] sm:$0xf]
    %v475 = vld [vmem:[%s1 + $0x714] sm:$0xf]
    %v476 = vld [vmem:[%s1 + $0x718] sm:$0xf]
    %v477 = vld [vmem:[%s1 + $0x71c] sm:$0xf]
    %v478 = vld [vmem:[%s1 + $0x720] sm:$0xf]
    %v479 = vld [vmem:[%s1 + $0x724] sm:$0xf]
    %v480 = vld [vmem:[%s1 + $0x728] sm:$0xf]
    %v481 = vld [vmem:[%s1 + $0x72c] sm:$0xf]
    %v482 = vld [vmem:[%s1 + $0x730] sm:$0xf]
    %v483 = vld [vmem:[%s1 + $0x734] sm:$0xf]
    %v484 = vld [vmem:[%s1 + $0x738] sm:$0xf]
    %v485 = vld [vmem:[%s1 + $0x73c] sm:$0xf]
    %v486 = vld [vmem:[%s1 + $0x740] sm:$0xf]
    %v487 = vld [vmem:[%s1 + $0x744] sm:$0xf]
    %v488 = vld [vmem:[%s1 + $0x748] sm:$0xf]
    %v489 = vld [vmem:[%s1 + $0x74c] sm:$0xf]
    %v490 = vld [vmem:[%s1 + $0x750] sm:$0xf]
    %v491 = vld [vmem:[%s1 + $0x754] sm:$0xf]
    %v492 = vld [vmem:[%s1 + $0x758] sm:$0xf]
    %v493 = vld [vmem:[%s1 + $0x75c] sm:$0xf]
    %v494 = vld [vmem:[%s1 + $0x760] sm:$0xf]
    %v495 = vld [vmem:[%s1 + $0x764] sm:$0xf]
    %v496 = vld [vmem:[%s1 + $0x768] sm:$0xf]
    %v497 = vld [vmem:[%s1 + $0x76c] sm:$0xf]
    %v498 = vld [vmem:[%s1 + $0x770] sm:$0xf]
    %v499 = vld [vmem:[%s1 + $0x774] sm:$0xf]
    %v500 = vld [vmem:[%s1 + $0x778] sm:$0xf]
    %v501 = vld [vmem:[%s1 + $0x77c] sm:$0xf]
    %v502 = vld [vmem:[%s1 + $0x780] sm:$0xf]
    %v503 = vld [vmem:[%s1 + $0x784] sm:$0xf]
    %v504 = vld [vmem:[%s1 + $0x788] sm:$0xf]
    %v505 = vld [vmem:[%s1 + $0x78c] sm:$0xf]
    %v506 = vld [vmem:[%s1 + $0x790] sm:$0xf]
    %v507 = vld [vmem:[%s1 + $0x794] sm:$0xf]
    %v508 = vld [vmem:[%s1 + $0x798] sm:$0xf]
    %v509 = vld [vmem:[%s1 + $0x79c] sm:$0xf]
    %v510 = vld [vmem:[%s1 + $0x7a0] sm:$0xf]
    %v511 = vld [vmem:[%s1 + $0x7a4] sm:$0xf]
    %v512 = vld [vmem:[%s1 + $0x7a8] sm:$0xf]
    %v513 = vld [vmem:[%s1 + $0x7ac] sm:$0xf]
    %v514 = vld [vmem:[%s1 + $0x7b0] sm:$0xf]
    %v515 = vld [vmem:[%s1 + $0x7b4] sm:$0xf]
    %v516 = vld [vmem:[%s1 + $0x7b8] sm:$0xf]
    %v517 = vld [vmem:[%s1 + $0x7bc] sm:$0xf]
    %v518 = vld [vmem:[%s1 + $0x7c0] sm:$0xf]
    %v519 = vld [vmem:[%s1 + $0x7c4] sm:$0xf]
    %v520 = vld [vmem:[%s1 + $0x7c8] sm:$0xf]
    %v521 = vld [vmem:[%s1 + $0x7cc] sm:$0xf]
    %v522 = vld [vmem:[%s1 + $0x7d0] sm:$0xf]
    %v523 = vld [vmem:[%s1 + $0x7d4] sm:$0xf]
    %v524 = vld [vmem:[%s1 + $0x7d8] sm:$0xf]
    %v525 = vld [vmem:[%s1 + $0x7dc] sm:$0xf]
    %v526 = vld [vmem:[%s1 + $0x7e0] sm:$0xf]
    %v527 = vld [vmem:[%s1 + $0x7e4] sm:$0xf]
    %v528 = vld [vmem:[%s1 + $0x7e8] sm:$0xf]
    %v529 = vld [vmem:[%s1 + $0x7ec] sm:$0xf]
    %v530 = vld [vmem:[%s1 + $0x7f0] sm:$0xf]
    %v531 = vld [vmem:[%s1 + $0x7f4] sm:$0xf]
    %v532 = vld [vmem:[%s1 + $0x7f8] sm:$0xf]
    %v533 = vld [vmem:[%s1 + $0x7fc] sm:$0xf]
    %v534 = vld [vmem:[%s2] sm:$0x1]
    %v536 = vperm.slane %v534, 0
    %539 = vst [vmem:[#allocation1] ss:$9 sm:$0xff] %v18
    %v540 = vld [vmem:[#allocation1] sm:$0xff]
    %v541 = vld [vmem:[#allocation1 + $0x9] sm:$0xff]
    %v542 = vld [vmem:[#allocation1 + $0x12] sm:$0xff]
    %v543 = vld [vmem:[#allocation1 + $0x1b] sm:$0xff]
    %v544 = vld [vmem:[#allocation1 + $0x24] sm:$0xff]
    %v545 = vld [vmem:[#allocation1 + $0x2d] sm:$0xff]
    %v546 = vld [vmem:[#allocation1 + $0x36] sm:$0xff]
    %v547 = vld [vmem:[#allocation1 + $0x3f] sm:$0xff]
    %549 = vst [vmem:[#allocation1] ss:$9 sm:$0xff] %v19
    %v550 = vld [vmem:[#allocation1] sm:$0xff]
    %v551 = vld [vmem:[#allocation1 + $0x9] sm:$0xff]
    %v552 = vld [vmem:[#allocation1 + $0x12] sm:$0xff]
    %v553 = vld [vmem:[#allocation1 + $0x1b] sm:$0xff]
    %v554 = vld [vmem:[#allocation1 + $0x24] sm:$0xff]
    %v555 = vld [vmem:[#allocation1 + $0x2d] sm:$0xff]
    %v556 = vld [vmem:[#allocation1 + $0x36] sm:$0xff]
    %v557 = vld [vmem:[#allocation1 + $0x3f] sm:$0xff]
    %559 = vst [vmem:[#allocation1] ss:$9 sm:$0xff] %v20
    %v560 = vld [vmem:[#allocation1] sm:$0xff]
    %v561 = vld [vmem:[#allocation1 + $0x9] sm:$0xff]
    %v562 = vld [vmem:[#allocation1 + $0x12] sm:$0xff]
    %v563 = vld [vmem:[#allocation1 + $0x1b] sm:$0xff]
    %v564 = vld [vmem:[#allocation1 + $0x24] sm:$0xff]
    %v565 = vld [vmem:[#allocation1 + $0x2d] sm:$0xff]
    %v566 = vld [vmem:[#allocation1 + $0x36] sm:$0xff]
    %v567 = vld [vmem:[#allocation1 + $0x3f] sm:$0xff]
    %569 = vst [vmem:[#allocation1] ss:$9 sm:$0xff] %v21
    %v570 = vld [vmem:[#allocation1] sm:$0xff]
    %v571 = vld [vmem:[#allocation1 + $0x9] sm:$0xff]
    %v572 = vld [vmem:[#allocation1 + $0x12] sm:$0xff]
    %v573 = vld [vmem:[#allocation1 + $0x1b] sm:$0xff]
    %v574 = vld [vmem:[#allocation1 + $0x24] sm:$0xff]
    %v575 = vld [vmem:[#allocation1 + $0x2d] sm:$0xff]
    %v576 = vld [vmem:[#allocation1 + $0x36] sm:$0xff]
    %v577 = vld [vmem:[#allocation1 + $0x3f] sm:$0xff]
    %v1122 = vunpack.c.l.b16 %v22
    %v1123 = vunpack.c.l.b16 %v23
    %v1124 = vunpack.c.l.b16 %v24
    %v1125 = vunpack.c.l.b16 %v25
    %v1126 = vunpack.c.l.b16 %v26
    %v1127 = vunpack.c.l.b16 %v27
    %v1128 = vunpack.c.l.b16 %v28
    %v1129 = vunpack.c.l.b16 %v29
    %v1130 = vunpack.c.l.b16 %v30
    %v1131 = vunpack.c.l.b16 %v31
    %v1132 = vunpack.c.l.b16 %v32
    %v1133 = vunpack.c.l.b16 %v33
    %v1134 = vunpack.c.l.b16 %v34
    %v1135 = vunpack.c.l.b16 %v35
    %v1136 = vunpack.c.l.b16 %v36
    %v1137 = vunpack.c.l.b16 %v37
    %v1138 = vunpack.c.l.b16 %v38
    %v1139 = vunpack.c.l.b16 %v39
    %v1140 = vunpack.c.l.b16 %v40
    %v1141 = vunpack.c.l.b16 %v41
    %v1142 = vunpack.c.l.b16 %v42
    %v1143 = vunpack.c.l.b16 %v43
    %v1144 = vunpack.c.l.b16 %v44
    %v1145 = vunpack.c.l.b16 %v45
    %v1146 = vunpack.c.l.b16 %v46
    %v1147 = vunpack.c.l.b16 %v47
    %v1148 = vunpack.c.l.b16 %v48
    %v1149 = vunpack.c.l.b16 %v49
    %v1150 = vunpack.c.l.b16 %v50
    %v1151 = vunpack.c.l.b16 %v51
    %v1152 = vunpack.c.l.b16 %v52
    %v1153 = vunpack.c.l.b16 %v53
    %v1154 = vunpack.c.l.b16 %v54
    %v1155 = vunpack.c.l.b16 %v55
    %v1156 = vunpack.c.l.b16 %v56
    %v1157 = vunpack.c.l.b16 %v57
    %v1158 = vunpack.c.l.b16 %v58
    %v1159 = vunpack.c.l.b16 %v59
    %v1160 = vunpack.c.l.b16 %v60
    %v1161 = vunpack.c.l.b16 %v61
    %v1162 = vunpack.c.l.b16 %v62
    %v1163 = vunpack.c.l.b16 %v63
    %v1164 = vunpack.c.l.b16 %v64
    %v1165 = vunpack.c.l.b16 %v65
    %v1166 = vunpack.c.l.b16 %v66
    %v1167 = vunpack.c.l.b16 %v67
    %v1168 = vunpack.c.l.b16 %v68
    %v1169 = vunpack.c.l.b16 %v69
    %v1170 = vunpack.c.l.b16 %v70
    %v1171 = vunpack.c.l.b16 %v71
    %v1172 = vunpack.c.l.b16 %v72
    %v1173 = vunpack.c.l.b16 %v73
    %v1174 = vunpack.c.l.b16 %v74
    %v1175 = vunpack.c.l.b16 %v75
    %v1176 = vunpack.c.l.b16 %v76
    %v1177 = vunpack.c.l.b16 %v77
    %v1178 = vunpack.c.l.b16 %v78
    %v1179 = vunpack.c.l.b16 %v79
    %v1180 = vunpack.c.l.b16 %v80
    %v1181 = vunpack.c.l.b16 %v81
    %v1182 = vunpack.c.l.b16 %v82
    %v1183 = vunpack.c.l.b16 %v83
    %v1184 = vunpack.c.l.b16 %v84
    %v1185 = vunpack.c.l.b16 %v85
    %v1186 = vunpack.c.l.b16 %v86
    %v1187 = vunpack.c.l.b16 %v87
    %v1188 = vunpack.c.l.b16 %v88
    %v1189 = vunpack.c.l.b16 %v89
    %v1190 = vunpack.c.l.b16 %v90
    %v1191 = vunpack.c.l.b16 %v91
    %v1192 = vunpack.c.l.b16 %v92
    %v1193 = vunpack.c.l.b16 %v93
    %v1194 = vunpack.c.l.b16 %v94
    %v1195 = vunpack.c.l.b16 %v95
    %v1196 = vunpack.c.l.b16 %v96
    %v1197 = vunpack.c.l.b16 %v97
    %v1198 = vunpack.c.l.b16 %v98
    %v1199 = vunpack.c.l.b16 %v99
    %v1200 = vunpack.c.l.b16 %v100
    %v1201 = vunpack.c.l.b16 %v101
    %v1202 = vunpack.c.l.b16 %v102
    %v1203 = vunpack.c.l.b16 %v103
    %v1204 = vunpack.c.l.b16 %v104
    %v1205 = vunpack.c.l.b16 %v105
    %v1206 = vunpack.c.l.b16 %v106
    %v1207 = vunpack.c.l.b16 %v107
    %v1208 = vunpack.c.l.b16 %v108
    %v1209 = vunpack.c.l.b16 %v109
    %v1210 = vunpack.c.l.b16 %v110
    %v1211 = vunpack.c.l.b16 %v111
    %v1212 = vunpack.c.l.b16 %v112
    %v1213 = vunpack.c.l.b16 %v113
    %v1214 = vunpack.c.l.b16 %v114
    %v1215 = vunpack.c.l.b16 %v115
    %v1216 = vunpack.c.l.b16 %v116
    %v1217 = vunpack.c.l.b16 %v117
    %v1218 = vunpack.c.l.b16 %v118
    %v1219 = vunpack.c.l.b16 %v119
    %v1220 = vunpack.c.l.b16 %v120
    %v1221 = vunpack.c.l.b16 %v121
    %v1222 = vunpack.c.l.b16 %v122
    %v1223 = vunpack.c.l.b16 %v123
    %v1224 = vunpack.c.l.b16 %v124
    %v1225 = vunpack.c.l.b16 %v125
    %v1226 = vunpack.c.l.b16 %v126
    %v1227 = vunpack.c.l.b16 %v127
    %v1228 = vunpack.c.l.b16 %v128
    %v1229 = vunpack.c.l.b16 %v129
    %v1230 = vunpack.c.l.b16 %v130
    %v1231 = vunpack.c.l.b16 %v131
    %v1232 = vunpack.c.l.b16 %v132
    %v1233 = vunpack.c.l.b16 %v133
    %v1234 = vunpack.c.l.b16 %v134
    %v1235 = vunpack.c.l.b16 %v135
    %v1236 = vunpack.c.l.b16 %v136
    %v1237 = vunpack.c.l.b16 %v137
    %v1238 = vunpack.c.l.b16 %v138
    %v1239 = vunpack.c.l.b16 %v139
    %v1240 = vunpack.c.l.b16 %v140
    %v1241 = vunpack.c.l.b16 %v141
    %v1242 = vunpack.c.l.b16 %v142
    %v1243 = vunpack.c.l.b16 %v143
    %v1244 = vunpack.c.l.b16 %v144
    %v1245 = vunpack.c.l.b16 %v145
    %v1246 = vunpack.c.l.b16 %v146
    %v1247 = vunpack.c.l.b16 %v147
    %v1248 = vunpack.c.l.b16 %v148
    %v1249 = vunpack.c.l.b16 %v149
    %v1250 = vunpack.c.l.b16 %v150
    %v1251 = vunpack.c.l.b16 %v151
    %v1252 = vunpack.c.l.b16 %v152
    %v1253 = vunpack.c.l.b16 %v153
    %v1254 = vunpack.c.l.b16 %v154
    %v1255 = vunpack.c.l.b16 %v155
    %v1256 = vunpack.c.l.b16 %v156
    %v1257 = vunpack.c.l.b16 %v157
    %v1258 = vunpack.c.l.b16 %v158
    %v1259 = vunpack.c.l.b16 %v159
    %v1260 = vunpack.c.l.b16 %v160
    %v1261 = vunpack.c.l.b16 %v161
    %v1262 = vunpack.c.l.b16 %v162
    %v1263 = vunpack.c.l.b16 %v163
    %v1264 = vunpack.c.l.b16 %v164
    %v1265 = vunpack.c.l.b16 %v165
    %v1266 = vunpack.c.l.b16 %v166
    %v1267 = vunpack.c.l.b16 %v167
    %v1268 = vunpack.c.l.b16 %v168
    %v1269 = vunpack.c.l.b16 %v169
    %v1270 = vunpack.c.l.b16 %v170
    %v1271 = vunpack.c.l.b16 %v171
    %v1272 = vunpack.c.l.b16 %v172
    %v1273 = vunpack.c.l.b16 %v173
    %v1274 = vunpack.c.l.b16 %v174
    %v1275 = vunpack.c.l.b16 %v175
    %v1276 = vunpack.c.l.b16 %v176
    %v1277 = vunpack.c.l.b16 %v177
    %v1278 = vunpack.c.l.b16 %v178
    %v1279 = vunpack.c.l.b16 %v179
    %v1280 = vunpack.c.l.b16 %v180
    %v1281 = vunpack.c.l.b16 %v181
    %v1282 = vunpack.c.l.b16 %v182
    %v1283 = vunpack.c.l.b16 %v183
    %v1284 = vunpack.c.l.b16 %v184
    %v1285 = vunpack.c.l.b16 %v185
    %v1286 = vunpack.c.l.b16 %v186
    %v1287 = vunpack.c.l.b16 %v187
    %v1288 = vunpack.c.l.b16 %v188
    %v1289 = vunpack.c.l.b16 %v189
    %v1290 = vunpack.c.l.b16 %v190
    %v1291 = vunpack.c.l.b16 %v191
    %v1292 = vunpack.c.l.b16 %v192
    %v1293 = vunpack.c.l.b16 %v193
    %v1294 = vunpack.c.l.b16 %v194
    %v1295 = vunpack.c.l.b16 %v195
    %v1296 = vunpack.c.l.b16 %v196
    %v1297 = vunpack.c.l.b16 %v197
    %v1298 = vunpack.c.l.b16 %v198
    %v1299 = vunpack.c.l.b16 %v199
    %v1300 = vunpack.c.l.b16 %v200
    %v1301 = vunpack.c.l.b16 %v201
    %v1302 = vunpack.c.l.b16 %v202
    %v1303 = vunpack.c.l.b16 %v203
    %v1304 = vunpack.c.l.b16 %v204
    %v1305 = vunpack.c.l.b16 %v205
    %v1306 = vunpack.c.l.b16 %v206
    %v1307 = vunpack.c.l.b16 %v207
    %v1308 = vunpack.c.l.b16 %v208
    %v1309 = vunpack.c.l.b16 %v209
    %v1310 = vunpack.c.l.b16 %v210
    %v1311 = vunpack.c.l.b16 %v211
    %v1312 = vunpack.c.l.b16 %v212
    %v1313 = vunpack.c.l.b16 %v213
    %v1314 = vunpack.c.l.b16 %v214
    %v1315 = vunpack.c.l.b16 %v215
    %v1316 = vunpack.c.l.b16 %v216
    %v1317 = vunpack.c.l.b16 %v217
    %v1318 = vunpack.c.l.b16 %v218
    %v1319 = vunpack.c.l.b16 %v219
    %v1320 = vunpack.c.l.b16 %v220
    %v1321 = vunpack.c.l.b16 %v221
    %v1322 = vunpack.c.l.b16 %v222
    %v1323 = vunpack.c.l.b16 %v223
    %v1324 = vunpack.c.l.b16 %v224
    %v1325 = vunpack.c.l.b16 %v225
    %v1326 = vunpack.c.l.b16 %v226
    %v1327 = vunpack.c.l.b16 %v227
    %v1328 = vunpack.c.l.b16 %v228
    %v1329 = vunpack.c.l.b16 %v229
    %v1330 = vunpack.c.l.b16 %v230
    %v1331 = vunpack.c.l.b16 %v231
    %v1332 = vunpack.c.l.b16 %v232
    %v1333 = vunpack.c.l.b16 %v233
    %v1334 = vunpack.c.l.b16 %v234
    %v1335 = vunpack.c.l.b16 %v235
    %v1336 = vunpack.c.l.b16 %v236
    %v1337 = vunpack.c.l.b16 %v237
    %v1338 = vunpack.c.l.b16 %v238
    %v1339 = vunpack.c.l.b16 %v239
    %v1340 = vunpack.c.l.b16 %v240
    %v1341 = vunpack.c.l.b16 %v241
    %v1342 = vunpack.c.l.b16 %v242
    %v1343 = vunpack.c.l.b16 %v243
    %v1344 = vunpack.c.l.b16 %v244
    %v1345 = vunpack.c.l.b16 %v245
    %v1346 = vunpack.c.l.b16 %v246
    %v1347 = vunpack.c.l.b16 %v247
    %v1348 = vunpack.c.l.b16 %v248
    %v1349 = vunpack.c.l.b16 %v249
    %v1350 = vunpack.c.l.b16 %v250
    %v1351 = vunpack.c.l.b16 %v251
    %v1352 = vunpack.c.l.b16 %v252
    %v1353 = vunpack.c.l.b16 %v253
    %v1354 = vunpack.c.l.b16 %v254
    %v1355 = vunpack.c.l.b16 %v255
    %v1356 = vunpack.c.l.b16 %v256
    %v1357 = vunpack.c.l.b16 %v257
    %v1358 = vunpack.c.l.b16 %v258
    %v1359 = vunpack.c.l.b16 %v259
    %v1360 = vunpack.c.l.b16 %v260
    %v1361 = vunpack.c.l.b16 %v261
    %v1362 = vunpack.c.l.b16 %v262
    %v1363 = vunpack.c.l.b16 %v263
    %v1364 = vunpack.c.l.b16 %v264
    %v1365 = vunpack.c.l.b16 %v265
    %v1366 = vunpack.c.l.b16 %v266
    %v1367 = vunpack.c.l.b16 %v267
    %v1368 = vunpack.c.l.b16 %v268
    %v1369 = vunpack.c.l.b16 %v269
    %v1370 = vunpack.c.l.b16 %v270
    %v1371 = vunpack.c.l.b16 %v271
    %v1372 = vunpack.c.l.b16 %v272
    %v1373 = vunpack.c.l.b16 %v273
    %v1374 = vunpack.c.l.b16 %v274
    %v1375 = vunpack.c.l.b16 %v275
    %v1376 = vunpack.c.l.b16 %v276
    %v1377 = vunpack.c.l.b16 %v277
    %v1378 = vunpack.c.l.b16 %v278
    %v1379 = vunpack.c.l.b16 %v279
    %v1380 = vunpack.c.l.b16 %v280
    %v1381 = vunpack.c.l.b16 %v281
    %v1382 = vunpack.c.l.b16 %v282
    %v1383 = vunpack.c.l.b16 %v283
    %v1384 = vunpack.c.l.b16 %v284
    %v1385 = vunpack.c.l.b16 %v285
    %v1386 = vunpack.c.l.b16 %v286
    %v1387 = vunpack.c.l.b16 %v287
    %v1388 = vunpack.c.l.b16 %v288
    %v1389 = vunpack.c.l.b16 %v289
    %v1390 = vunpack.c.l.b16 %v290
    %v1391 = vunpack.c.l.b16 %v291
    %v1392 = vunpack.c.l.b16 %v292
    %v1393 = vunpack.c.l.b16 %v293
    %v1394 = vunpack.c.l.b16 %v294
    %v1395 = vunpack.c.l.b16 %v295
    %v1396 = vunpack.c.l.b16 %v296
    %v1397 = vunpack.c.l.b16 %v297
    %v1398 = vunpack.c.l.b16 %v298
    %v1399 = vunpack.c.l.b16 %v299
    %v1400 = vunpack.c.l.b16 %v300
    %v1401 = vunpack.c.l.b16 %v301
    %v1402 = vunpack.c.l.b16 %v302
    %v1403 = vunpack.c.l.b16 %v303
    %v1404 = vunpack.c.l.b16 %v304
    %v1405 = vunpack.c.l.b16 %v305
    %v1406 = vunpack.c.l.b16 %v306
    %v1407 = vunpack.c.l.b16 %v307
    %v1408 = vunpack.c.l.b16 %v308
    %v1409 = vunpack.c.l.b16 %v309
    %v1410 = vunpack.c.l.b16 %v310
    %v1411 = vunpack.c.l.b16 %v311
    %v1412 = vunpack.c.l.b16 %v312
    %v1413 = vunpack.c.l.b16 %v313
    %v1414 = vunpack.c.l.b16 %v314
    %v1415 = vunpack.c.l.b16 %v315
    %v1416 = vunpack.c.l.b16 %v316
    %v1417 = vunpack.c.l.b16 %v317
    %v1418 = vunpack.c.l.b16 %v318
    %v1419 = vunpack.c.l.b16 %v319
    %v1420 = vunpack.c.l.b16 %v320
    %v1421 = vunpack.c.l.b16 %v321
    %v1422 = vunpack.c.l.b16 %v322
    %v1423 = vunpack.c.l.b16 %v323
    %v1424 = vunpack.c.l.b16 %v324
    %v1425 = vunpack.c.l.b16 %v325
    %v1426 = vunpack.c.l.b16 %v326
    %v1427 = vunpack.c.l.b16 %v327
    %v1428 = vunpack.c.l.b16 %v328
    %v1429 = vunpack.c.l.b16 %v329
    %v1430 = vunpack.c.l.b16 %v330
    %v1431 = vunpack.c.l.b16 %v331
    %v1432 = vunpack.c.l.b16 %v332
    %v1433 = vunpack.c.l.b16 %v333
    %v1434 = vunpack.c.l.b16 %v334
    %v1435 = vunpack.c.l.b16 %v335
    %v1436 = vunpack.c.l.b16 %v336
    %v1437 = vunpack.c.l.b16 %v337
    %v1438 = vunpack.c.l.b16 %v338
    %v1439 = vunpack.c.l.b16 %v339
    %v1440 = vunpack.c.l.b16 %v340
    %v1441 = vunpack.c.l.b16 %v341
    %v1442 = vunpack.c.l.b16 %v342
    %v1443 = vunpack.c.l.b16 %v343
    %v1444 = vunpack.c.l.b16 %v344
    %v1445 = vunpack.c.l.b16 %v345
    %v1446 = vunpack.c.l.b16 %v346
    %v1447 = vunpack.c.l.b16 %v347
    %v1448 = vunpack.c.l.b16 %v348
    %v1449 = vunpack.c.l.b16 %v349
    %v1450 = vunpack.c.l.b16 %v350
    %v1451 = vunpack.c.l.b16 %v351
    %v1452 = vunpack.c.l.b16 %v352
    %v1453 = vunpack.c.l.b16 %v353
    %v1454 = vunpack.c.l.b16 %v354
    %v1455 = vunpack.c.l.b16 %v355
    %v1456 = vunpack.c.l.b16 %v356
    %v1457 = vunpack.c.l.b16 %v357
    %v1458 = vunpack.c.l.b16 %v358
    %v1459 = vunpack.c.l.b16 %v359
    %v1460 = vunpack.c.l.b16 %v360
    %v1461 = vunpack.c.l.b16 %v361
    %v1462 = vunpack.c.l.b16 %v362
    %v1463 = vunpack.c.l.b16 %v363
    %v1464 = vunpack.c.l.b16 %v364
    %v1465 = vunpack.c.l.b16 %v365
    %v1466 = vunpack.c.l.b16 %v366
    %v1467 = vunpack.c.l.b16 %v367
    %v1468 = vunpack.c.l.b16 %v368
    %v1469 = vunpack.c.l.b16 %v369
    %v1470 = vunpack.c.l.b16 %v370
    %v1471 = vunpack.c.l.b16 %v371
    %v1472 = vunpack.c.l.b16 %v372
    %v1473 = vunpack.c.l.b16 %v373
    %v1474 = vunpack.c.l.b16 %v374
    %v1475 = vunpack.c.l.b16 %v375
    %v1476 = vunpack.c.l.b16 %v376
    %v1477 = vunpack.c.l.b16 %v377
    %v1478 = vunpack.c.l.b16 %v378
    %v1479 = vunpack.c.l.b16 %v379
    %v1480 = vunpack.c.l.b16 %v380
    %v1481 = vunpack.c.l.b16 %v381
    %v1482 = vunpack.c.l.b16 %v382
    %v1483 = vunpack.c.l.b16 %v383
    %v1484 = vunpack.c.l.b16 %v384
    %v1485 = vunpack.c.l.b16 %v385
    %v1486 = vunpack.c.l.b16 %v386
    %v1487 = vunpack.c.l.b16 %v387
    %v1488 = vunpack.c.l.b16 %v388
    %v1489 = vunpack.c.l.b16 %v389
    %v1490 = vunpack.c.l.b16 %v390
    %v1491 = vunpack.c.l.b16 %v391
    %v1492 = vunpack.c.l.b16 %v392
    %v1493 = vunpack.c.l.b16 %v393
    %v1494 = vunpack.c.l.b16 %v394
    %v1495 = vunpack.c.l.b16 %v395
    %v1496 = vunpack.c.l.b16 %v396
    %v1497 = vunpack.c.l.b16 %v397
    %v1498 = vunpack.c.l.b16 %v398
    %v1499 = vunpack.c.l.b16 %v399
    %v1500 = vunpack.c.l.b16 %v400
    %v1501 = vunpack.c.l.b16 %v401
    %v1502 = vunpack.c.l.b16 %v402
    %v1503 = vunpack.c.l.b16 %v403
    %v1504 = vunpack.c.l.b16 %v404
    %v1505 = vunpack.c.l.b16 %v405
    %v1506 = vunpack.c.l.b16 %v406
    %v1507 = vunpack.c.l.b16 %v407
    %v1508 = vunpack.c.l.b16 %v408
    %v1509 = vunpack.c.l.b16 %v409
    %v1510 = vunpack.c.l.b16 %v410
    %v1511 = vunpack.c.l.b16 %v411
    %v1512 = vunpack.c.l.b16 %v412
    %v1513 = vunpack.c.l.b16 %v413
    %v1514 = vunpack.c.l.b16 %v414
    %v1515 = vunpack.c.l.b16 %v415
    %v1516 = vunpack.c.l.b16 %v416
    %v1517 = vunpack.c.l.b16 %v417
    %v1518 = vunpack.c.l.b16 %v418
    %v1519 = vunpack.c.l.b16 %v419
    %v1520 = vunpack.c.l.b16 %v420
    %v1521 = vunpack.c.l.b16 %v421
    %v1522 = vunpack.c.l.b16 %v422
    %v1523 = vunpack.c.l.b16 %v423
    %v1524 = vunpack.c.l.b16 %v424
    %v1525 = vunpack.c.l.b16 %v425
    %v1526 = vunpack.c.l.b16 %v426
    %v1527 = vunpack.c.l.b16 %v427
    %v1528 = vunpack.c.l.b16 %v428
    %v1529 = vunpack.c.l.b16 %v429
    %v1530 = vunpack.c.l.b16 %v430
    %v1531 = vunpack.c.l.b16 %v431
    %v1532 = vunpack.c.l.b16 %v432
    %v1533 = vunpack.c.l.b16 %v433
    %v1534 = vunpack.c.l.b16 %v434
    %v1535 = vunpack.c.l.b16 %v435
    %v1536 = vunpack.c.l.b16 %v436
    %v1537 = vunpack.c.l.b16 %v437
    %v1538 = vunpack.c.l.b16 %v438
    %v1539 = vunpack.c.l.b16 %v439
    %v1540 = vunpack.c.l.b16 %v440
    %v1541 = vunpack.c.l.b16 %v441
    %v1542 = vunpack.c.l.b16 %v442
    %v1543 = vunpack.c.l.b16 %v443
    %v1544 = vunpack.c.l.b16 %v444
    %v1545 = vunpack.c.l.b16 %v445
    %v1546 = vunpack.c.l.b16 %v446
    %v1547 = vunpack.c.l.b16 %v447
    %v1548 = vunpack.c.l.b16 %v448
    %v1549 = vunpack.c.l.b16 %v449
    %v1550 = vunpack.c.l.b16 %v450
    %v1551 = vunpack.c.l.b16 %v451
    %v1552 = vunpack.c.l.b16 %v452
    %v1553 = vunpack.c.l.b16 %v453
    %v1554 = vunpack.c.l.b16 %v454
    %v1555 = vunpack.c.l.b16 %v455
    %v1556 = vunpack.c.l.b16 %v456
    %v1557 = vunpack.c.l.b16 %v457
    %v1558 = vunpack.c.l.b16 %v458
    %v1559 = vunpack.c.l.b16 %v459
    %v1560 = vunpack.c.l.b16 %v460
    %v1561 = vunpack.c.l.b16 %v461
    %v1562 = vunpack.c.l.b16 %v462
    %v1563 = vunpack.c.l.b16 %v463
    %v1564 = vunpack.c.l.b16 %v464
    %v1565 = vunpack.c.l.b16 %v465
    %v1566 = vunpack.c.l.b16 %v466
    %v1567 = vunpack.c.l.b16 %v467
    %v1568 = vunpack.c.l.b16 %v468
    %v1569 = vunpack.c.l.b16 %v469
    %v1570 = vunpack.c.l.b16 %v470
    %v1571 = vunpack.c.l.b16 %v471
    %v1572 = vunpack.c.l.b16 %v472
    %v1573 = vunpack.c.l.b16 %v473
    %v1574 = vunpack.c.l.b16 %v474
    %v1575 = vunpack.c.l.b16 %v475
    %v1576 = vunpack.c.l.b16 %v476
    %v1577 = vunpack.c.l.b16 %v477
    %v1578 = vunpack.c.l.b16 %v478
    %v1579 = vunpack.c.l.b16 %v479
    %v1580 = vunpack.c.l.b16 %v480
    %v1581 = vunpack.c.l.b16 %v481
    %v1582 = vunpack.c.l.b16 %v482
    %v1583 = vunpack.c.l.b16 %v483
    %v1584 = vunpack.c.l.b16 %v484
    %v1585 = vunpack.c.l.b16 %v485
    %v1586 = vunpack.c.l.b16 %v486
    %v1587 = vunpack.c.l.b16 %v487
    %v1588 = vunpack.c.l.b16 %v488
    %v1589 = vunpack.c.l.b16 %v489
    %v1590 = vunpack.c.l.b16 %v490
    %v1591 = vunpack.c.l.b16 %v491
    %v1592 = vunpack.c.l.b16 %v492
    %v1593 = vunpack.c.l.b16 %v493
    %v1594 = vunpack.c.l.b16 %v494
    %v1595 = vunpack.c.l.b16 %v495
    %v1596 = vunpack.c.l.b16 %v496
    %v1597 = vunpack.c.l.b16 %v497
    %v1598 = vunpack.c.l.b16 %v498
    %v1599 = vunpack.c.l.b16 %v499
    %v1600 = vunpack.c.l.b16 %v500
    %v1601 = vunpack.c.l.b16 %v501
    %v1602 = vunpack.c.l.b16 %v502
    %v1603 = vunpack.c.l.b16 %v503
    %v1604 = vunpack.c.l.b16 %v504
    %v1605 = vunpack.c.l.b16 %v505
    %v1606 = vunpack.c.l.b16 %v506
    %v1607 = vunpack.c.l.b16 %v507
    %v1608 = vunpack.c.l.b16 %v508
    %v1609 = vunpack.c.l.b16 %v509
    %v1610 = vunpack.c.l.b16 %v510
    %v1611 = vunpack.c.l.b16 %v511
    %v1612 = vunpack.c.l.b16 %v512
    %v1613 = vunpack.c.l.b16 %v513
    %v1614 = vunpack.c.l.b16 %v514
    %v1615 = vunpack.c.l.b16 %v515
    %v1616 = vunpack.c.l.b16 %v516
    %v1617 = vunpack.c.l.b16 %v517
    %v1618 = vunpack.c.l.b16 %v518
    %v1619 = vunpack.c.l.b16 %v519
    %v1620 = vunpack.c.l.b16 %v520
    %v1621 = vunpack.c.l.b16 %v521
    %v1622 = vunpack.c.l.b16 %v522
    %v1623 = vunpack.c.l.b16 %v523
    %v1624 = vunpack.c.l.b16 %v524
    %v1625 = vunpack.c.l.b16 %v525
    %v1626 = vunpack.c.l.b16 %v526
    %v1627 = vunpack.c.l.b16 %v527
    %v1628 = vunpack.c.l.b16 %v528
    %v1629 = vunpack.c.l.b16 %v529
    %v1630 = vunpack.c.l.b16 %v530
    %v1631 = vunpack.c.l.b16 %v531
    %v1632 = vunpack.c.l.b16 %v532
    %v1633 = vunpack.c.l.b16 %v533
    %v1634 = vpack.c.b16 %v1123, %v1122
    %v1635 = vpack.c.b16 %v1125, %v1124
    %v1636 = vpack.c.b16 %v1127, %v1126
    %v1637 = vpack.c.b16 %v1129, %v1128
    %v1638 = vpack.c.b16 %v1131, %v1130
    %v1639 = vpack.c.b16 %v1133, %v1132
    %v1640 = vpack.c.b16 %v1135, %v1134
    %v1641 = vpack.c.b16 %v1137, %v1136
    %v1642 = vpack.c.b16 %v1139, %v1138
    %v1643 = vpack.c.b16 %v1141, %v1140
    %v1644 = vpack.c.b16 %v1143, %v1142
    %v1645 = vpack.c.b16 %v1145, %v1144
    %v1646 = vpack.c.b16 %v1147, %v1146
    %v1647 = vpack.c.b16 %v1149, %v1148
    %v1648 = vpack.c.b16 %v1151, %v1150
    %v1649 = vpack.c.b16 %v1153, %v1152
    %v1650 = vpack.c.b16 %v1155, %v1154
    %v1651 = vpack.c.b16 %v1157, %v1156
    %v1652 = vpack.c.b16 %v1159, %v1158
    %v1653 = vpack.c.b16 %v1161, %v1160
    %v1654 = vpack.c.b16 %v1163, %v1162
    %v1655 = vpack.c.b16 %v1165, %v1164
    %v1656 = vpack.c.b16 %v1167, %v1166
    %v1657 = vpack.c.b16 %v1169, %v1168
    %v1658 = vpack.c.b16 %v1171, %v1170
    %v1659 = vpack.c.b16 %v1173, %v1172
    %v1660 = vpack.c.b16 %v1175, %v1174
    %v1661 = vpack.c.b16 %v1177, %v1176
    %v1662 = vpack.c.b16 %v1179, %v1178
    %v1663 = vpack.c.b16 %v1181, %v1180
    %v1664 = vpack.c.b16 %v1183, %v1182
    %v1665 = vpack.c.b16 %v1185, %v1184
    %v1666 = vpack.c.b16 %v1187, %v1186
    %v1667 = vpack.c.b16 %v1189, %v1188
    %v1668 = vpack.c.b16 %v1191, %v1190
    %v1669 = vpack.c.b16 %v1193, %v1192
    %v1670 = vpack.c.b16 %v1195, %v1194
    %v1671 = vpack.c.b16 %v1197, %v1196
    %v1672 = vpack.c.b16 %v1199, %v1198
    %v1673 = vpack.c.b16 %v1201, %v1200
    %v1674 = vpack.c.b16 %v1203, %v1202
    %v1675 = vpack.c.b16 %v1205, %v1204
    %v1676 = vpack.c.b16 %v1207, %v1206
    %v1677 = vpack.c.b16 %v1209, %v1208
    %v1678 = vpack.c.b16 %v1211, %v1210
    %v1679 = vpack.c.b16 %v1213, %v1212
    %v1680 = vpack.c.b16 %v1215, %v1214
    %v1681 = vpack.c.b16 %v1217, %v1216
    %v1682 = vpack.c.b16 %v1219, %v1218
    %v1683 = vpack.c.b16 %v1221, %v1220
    %v1684 = vpack.c.b16 %v1223, %v1222
    %v1685 = vpack.c.b16 %v1225, %v1224
    %v1686 = vpack.c.b16 %v1227, %v1226
    %v1687 = vpack.c.b16 %v1229, %v1228
    %v1688 = vpack.c.b16 %v1231, %v1230
    %v1689 = vpack.c.b16 %v1233, %v1232
    %v1690 = vpack.c.b16 %v1235, %v1234
    %v1691 = vpack.c.b16 %v1237, %v1236
    %v1692 = vpack.c.b16 %v1239, %v1238
    %v1693 = vpack.c.b16 %v1241, %v1240
    %v1694 = vpack.c.b16 %v1243, %v1242
    %v1695 = vpack.c.b16 %v1245, %v1244
    %v1696 = vpack.c.b16 %v1247, %v1246
    %v1697 = vpack.c.b16 %v1249, %v1248
    %v1698 = vpack.c.b16 %v1251, %v1250
    %v1699 = vpack.c.b16 %v1253, %v1252
    %v1700 = vpack.c.b16 %v1255, %v1254
    %v1701 = vpack.c.b16 %v1257, %v1256
    %v1702 = vpack.c.b16 %v1259, %v1258
    %v1703 = vpack.c.b16 %v1261, %v1260
    %v1704 = vpack.c.b16 %v1263, %v1262
    %v1705 = vpack.c.b16 %v1265, %v1264
    %v1706 = vpack.c.b16 %v1267, %v1266
    %v1707 = vpack.c.b16 %v1269, %v1268
    %v1708 = vpack.c.b16 %v1271, %v1270
    %v1709 = vpack.c.b16 %v1273, %v1272
    %v1710 = vpack.c.b16 %v1275, %v1274
    %v1711 = vpack.c.b16 %v1277, %v1276
    %v1712 = vpack.c.b16 %v1279, %v1278
    %v1713 = vpack.c.b16 %v1281, %v1280
    %v1714 = vpack.c.b16 %v1283, %v1282
    %v1715 = vpack.c.b16 %v1285, %v1284
    %v1716 = vpack.c.b16 %v1287, %v1286
    %v1717 = vpack.c.b16 %v1289, %v1288
    %v1718 = vpack.c.b16 %v1291, %v1290
    %v1719 = vpack.c.b16 %v1293, %v1292
    %v1720 = vpack.c.b16 %v1295, %v1294
    %v1721 = vpack.c.b16 %v1297, %v1296
    %v1722 = vpack.c.b16 %v1299, %v1298
    %v1723 = vpack.c.b16 %v1301, %v1300
    %v1724 = vpack.c.b16 %v1303, %v1302
    %v1725 = vpack.c.b16 %v1305, %v1304
    %v1726 = vpack.c.b16 %v1307, %v1306
    %v1727 = vpack.c.b16 %v1309, %v1308
    %v1728 = vpack.c.b16 %v1311, %v1310
    %v1729 = vpack.c.b16 %v1313, %v1312
    %v1730 = vpack.c.b16 %v1315, %v1314
    %v1731 = vpack.c.b16 %v1317, %v1316
    %v1732 = vpack.c.b16 %v1319, %v1318
    %v1733 = vpack.c.b16 %v1321, %v1320
    %v1734 = vpack.c.b16 %v1323, %v1322
    %v1735 = vpack.c.b16 %v1325, %v1324
    %v1736 = vpack.c.b16 %v1327, %v1326
    %v1737 = vpack.c.b16 %v1329, %v1328
    %v1738 = vpack.c.b16 %v1331, %v1330
    %v1739 = vpack.c.b16 %v1333, %v1332
    %v1740 = vpack.c.b16 %v1335, %v1334
    %v1741 = vpack.c.b16 %v1337, %v1336
    %v1742 = vpack.c.b16 %v1339, %v1338
    %v1743 = vpack.c.b16 %v1341, %v1340
    %v1744 = vpack.c.b16 %v1343, %v1342
    %v1745 = vpack.c.b16 %v1345, %v1344
    %v1746 = vpack.c.b16 %v1347, %v1346
    %v1747 = vpack.c.b16 %v1349, %v1348
    %v1748 = vpack.c.b16 %v1351, %v1350
    %v1749 = vpack.c.b16 %v1353, %v1352
    %v1750 = vpack.c.b16 %v1355, %v1354
    %v1751 = vpack.c.b16 %v1357, %v1356
    %v1752 = vpack.c.b16 %v1359, %v1358
    %v1753 = vpack.c.b16 %v1361, %v1360
    %v1754 = vpack.c.b16 %v1363, %v1362
    %v1755 = vpack.c.b16 %v1365, %v1364
    %v1756 = vpack.c.b16 %v1367, %v1366
    %v1757 = vpack.c.b16 %v1369, %v1368
    %v1758 = vpack.c.b16 %v1371, %v1370
    %v1759 = vpack.c.b16 %v1373, %v1372
    %v1760 = vpack.c.b16 %v1375, %v1374
    %v1761 = vpack.c.b16 %v1377, %v1376
    %v1762 = vpack.c.b16 %v1379, %v1378
    %v1763 = vpack.c.b16 %v1381, %v1380
    %v1764 = vpack.c.b16 %v1383, %v1382
    %v1765 = vpack.c.b16 %v1385, %v1384
    %v1766 = vpack.c.b16 %v1387, %v1386
    %v1767 = vpack.c.b16 %v1389, %v1388
    %v1768 = vpack.c.b16 %v1391, %v1390
    %v1769 = vpack.c.b16 %v1393, %v1392
    %v1770 = vpack.c.b16 %v1395, %v1394
    %v1771 = vpack.c.b16 %v1397, %v1396
    %v1772 = vpack.c.b16 %v1399, %v1398
    %v1773 = vpack.c.b16 %v1401, %v1400
    %v1774 = vpack.c.b16 %v1403, %v1402
    %v1775 = vpack.c.b16 %v1405, %v1404
    %v1776 = vpack.c.b16 %v1407, %v1406
    %v1777 = vpack.c.b16 %v1409, %v1408
    %v1778 = vpack.c.b16 %v1411, %v1410
    %v1779 = vpack.c.b16 %v1413, %v1412
    %v1780 = vpack.c.b16 %v1415, %v1414
    %v1781 = vpack.c.b16 %v1417, %v1416
    %v1782 = vpack.c.b16 %v1419, %v1418
    %v1783 = vpack.c.b16 %v1421, %v1420
    %v1784 = vpack.c.b16 %v1423, %v1422
    %v1785 = vpack.c.b16 %v1425, %v1424
    %v1786 = vpack.c.b16 %v1427, %v1426
    %v1787 = vpack.c.b16 %v1429, %v1428
    %v1788 = vpack.c.b16 %v1431, %v1430
    %v1789 = vpack.c.b16 %v1433, %v1432
    %v1790 = vpack.c.b16 %v1435, %v1434
    %v1791 = vpack.c.b16 %v1437, %v1436
    %v1792 = vpack.c.b16 %v1439, %v1438
    %v1793 = vpack.c.b16 %v1441, %v1440
    %v1794 = vpack.c.b16 %v1443, %v1442
    %v1795 = vpack.c.b16 %v1445, %v1444
    %v1796 = vpack.c.b16 %v1447, %v1446
    %v1797 = vpack.c.b16 %v1449, %v1448
    %v1798 = vpack.c.b16 %v1451, %v1450
    %v1799 = vpack.c.b16 %v1453, %v1452
    %v1800 = vpack.c.b16 %v1455, %v1454
    %v1801 = vpack.c.b16 %v1457, %v1456
    %v1802 = vpack.c.b16 %v1459, %v1458
    %v1803 = vpack.c.b16 %v1461, %v1460
    %v1804 = vpack.c.b16 %v1463, %v1462
    %v1805 = vpack.c.b16 %v1465, %v1464
    %v1806 = vpack.c.b16 %v1467, %v1466
    %v1807 = vpack.c.b16 %v1469, %v1468
    %v1808 = vpack.c.b16 %v1471, %v1470
    %v1809 = vpack.c.b16 %v1473, %v1472
    %v1810 = vpack.c.b16 %v1475, %v1474
    %v1811 = vpack.c.b16 %v1477, %v1476
    %v1812 = vpack.c.b16 %v1479, %v1478
    %v1813 = vpack.c.b16 %v1481, %v1480
    %v1814 = vpack.c.b16 %v1483, %v1482
    %v1815 = vpack.c.b16 %v1485, %v1484
    %v1816 = vpack.c.b16 %v1487, %v1486
    %v1817 = vpack.c.b16 %v1489, %v1488
    %v1818 = vpack.c.b16 %v1491, %v1490
    %v1819 = vpack.c.b16 %v1493, %v1492
    %v1820 = vpack.c.b16 %v1495, %v1494
    %v1821 = vpack.c.b16 %v1497, %v1496
    %v1822 = vpack.c.b16 %v1499, %v1498
    %v1823 = vpack.c.b16 %v1501, %v1500
    %v1824 = vpack.c.b16 %v1503, %v1502
    %v1825 = vpack.c.b16 %v1505, %v1504
    %v1826 = vpack.c.b16 %v1507, %v1506
    %v1827 = vpack.c.b16 %v1509, %v1508
    %v1828 = vpack.c.b16 %v1511, %v1510
    %v1829 = vpack.c.b16 %v1513, %v1512
    %v1830 = vpack.c.b16 %v1515, %v1514
    %v1831 = vpack.c.b16 %v1517, %v1516
    %v1832 = vpack.c.b16 %v1519, %v1518
    %v1833 = vpack.c.b16 %v1521, %v1520
    %v1834 = vpack.c.b16 %v1523, %v1522
    %v1835 = vpack.c.b16 %v1525, %v1524
    %v1836 = vpack.c.b16 %v1527, %v1526
    %v1837 = vpack.c.b16 %v1529, %v1528
    %v1838 = vpack.c.b16 %v1531, %v1530
    %v1839 = vpack.c.b16 %v1533, %v1532
    %v1840 = vpack.c.b16 %v1535, %v1534
    %v1841 = vpack.c.b16 %v1537, %v1536
    %v1842 = vpack.c.b16 %v1539, %v1538
    %v1843 = vpack.c.b16 %v1541, %v1540
    %v1844 = vpack.c.b16 %v1543, %v1542
    %v1845 = vpack.c.b16 %v1545, %v1544
    %v1846 = vpack.c.b16 %v1547, %v1546
    %v1847 = vpack.c.b16 %v1549, %v1548
    %v1848 = vpack.c.b16 %v1551, %v1550
    %v1849 = vpack.c.b16 %v1553, %v1552
    %v1850 = vpack.c.b16 %v1555, %v1554
    %v1851 = vpack.c.b16 %v1557, %v1556
    %v1852 = vpack.c.b16 %v1559, %v1558
    %v1853 = vpack.c.b16 %v1561, %v1560
    %v1854 = vpack.c.b16 %v1563, %v1562
    %v1855 = vpack.c.b16 %v1565, %v1564
    %v1856 = vpack.c.b16 %v1567, %v1566
    %v1857 = vpack.c.b16 %v1569, %v1568
    %v1858 = vpack.c.b16 %v1571, %v1570
    %v1859 = vpack.c.b16 %v1573, %v1572
    %v1860 = vpack.c.b16 %v1575, %v1574
    %v1861 = vpack.c.b16 %v1577, %v1576
    %v1862 = vpack.c.b16 %v1579, %v1578
    %v1863 = vpack.c.b16 %v1581, %v1580
    %v1864 = vpack.c.b16 %v1583, %v1582
    %v1865 = vpack.c.b16 %v1585, %v1584
    %v1866 = vpack.c.b16 %v1587, %v1586
    %v1867 = vpack.c.b16 %v1589, %v1588
    %v1868 = vpack.c.b16 %v1591, %v1590
    %v1869 = vpack.c.b16 %v1593, %v1592
    %v1870 = vpack.c.b16 %v1595, %v1594
    %v1871 = vpack.c.b16 %v1597, %v1596
    %v1872 = vpack.c.b16 %v1599, %v1598
    %v1873 = vpack.c.b16 %v1601, %v1600
    %v1874 = vpack.c.b16 %v1603, %v1602
    %v1875 = vpack.c.b16 %v1605, %v1604
    %v1876 = vpack.c.b16 %v1607, %v1606
    %v1877 = vpack.c.b16 %v1609, %v1608
    %v1878 = vpack.c.b16 %v1611, %v1610
    %v1879 = vpack.c.b16 %v1613, %v1612
    %v1880 = vpack.c.b16 %v1615, %v1614
    %v1881 = vpack.c.b16 %v1617, %v1616
    %v1882 = vpack.c.b16 %v1619, %v1618
    %v1883 = vpack.c.b16 %v1621, %v1620
    %v1884 = vpack.c.b16 %v1623, %v1622
    %v1885 = vpack.c.b16 %v1625, %v1624
    %v1886 = vpack.c.b16 %v1627, %v1626
    %v1887 = vpack.c.b16 %v1629, %v1628
    %v1888 = vpack.c.b16 %v1631, %v1630
    %v1889 = vpack.c.b16 %v1633, %v1632
    %2146 = vmatpush.bf16.msra.mxu0 %v1641
    %2147 = vmatpush.bf16.msra.mxu0 %v1640
    %2148 = vmatpush.bf16.msra.mxu0 %v1639
    %2149 = vmatpush.bf16.msra.mxu0 %v1638
    %2150 = vmatpush.bf16.msra.mxu0 %v1637
    %2151 = vmatpush.bf16.msra.mxu0 %v1636
    %2152 = vmatpush.bf16.msra.mxu0 %v1635
    %2153 = vmatpush.bf16.msra.mxu0 %v1634
    %2154 = vmatmul.bf16.gmra.mxu0 %v540
    %v2155 = vpop.f32.mrf.mxu0
    %v2156 = vadd.f32 %v536, %v2155
    %v2157 = vpop.f32.mrf.mxu0
    %2158 = vdwg.mxu0
    %2159 = vmatpush.bf16.msra.mxu0 %v1649
    %2160 = vmatpush.bf16.msra.mxu0 %v1648
    %2161 = vmatpush.bf16.msra.mxu0 %v1647
    %2162 = vmatpush.bf16.msra.mxu0 %v1646
    %2163 = vmatpush.bf16.msra.mxu0 %v1645
    %2164 = vmatpush.bf16.msra.mxu0 %v1644
    %2165 = vmatpush.bf16.msra.mxu0 %v1643
    %2166 = vmatpush.bf16.msra.mxu0 %v1642
    %2167 = vmatmul.bf16.gmra.mxu0 %v541
    %v2168 = vpop.f32.mrf.mxu0
    %v2169 = vadd.f32 %v2156, %v2168
    %v2170 = vpop.f32.mrf.mxu0
    %2171 = vdwg.mxu0
    %2172 = vmatpush.bf16.msra.mxu0 %v1657
    %2173 = vmatpush.bf16.msra.mxu0 %v1656
    %2174 = vmatpush.bf16.msra.mxu0 %v1655
    %2175 = vmatpush.bf16.msra.mxu0 %v1654
    %2176 = vmatpush.bf16.msra.mxu0 %v1653
    %2177 = vmatpush.bf16.msra.mxu0 %v1652
    %2178 = vmatpush.bf16.msra.mxu0 %v1651
    %2179 = vmatpush.bf16.msra.mxu0 %v1650
    %2180 = vmatmul.bf16.gmra.mxu0 %v542
    %v2181 = vpop.f32.mrf.mxu0
    %v2182 = vadd.f32 %v2169, %v2181
    %v2183 = vpop.f32.mrf.mxu0
    %2184 = vdwg.mxu0
    %2185 = vmatpush.bf16.msra.mxu0 %v1665
    %2186 = vmatpush.bf16.msra.mxu0 %v1664
    %2187 = vmatpush.bf16.msra.mxu0 %v1663
    %2188 = vmatpush.bf16.msra.mxu0 %v1662
    %2189 = vmatpush.bf16.msra.mxu0 %v1661
    %2190 = vmatpush.bf16.msra.mxu0 %v1660
    %2191 = vmatpush.bf16.msra.mxu0 %v1659
    %2192 = vmatpush.bf16.msra.mxu0 %v1658
    %2193 = vmatmul.bf16.gmra.mxu0 %v543
    %v2194 = vpop.f32.mrf.mxu0
    %v2195 = vadd.f32 %v2182, %v2194
    %v2196 = vpop.f32.mrf.mxu0
    %2197 = vdwg.mxu0
    %2198 = vmatpush.bf16.msra.mxu0 %v1673
    %2199 = vmatpush.bf16.msra.mxu0 %v1672
    %2200 = vmatpush.bf16.msra.mxu0 %v1671
    %2201 = vmatpush.bf16.msra.mxu0 %v1670
    %2202 = vmatpush.bf16.msra.mxu0 %v1669
    %2203 = vmatpush.bf16.msra.mxu0 %v1668
    %2204 = vmatpush.bf16.msra.mxu0 %v1667
    %2205 = vmatpush.bf16.msra.mxu0 %v1666
    %2206 = vmatmul.bf16.gmra.mxu0 %v544
    %v2207 = vpop.f32.mrf.mxu0
    %v2208 = vadd.f32 %v2195, %v2207
    %v2209 = vpop.f32.mrf.mxu0
    %2210 = vdwg.mxu0
    %2211 = vmatpush.bf16.msra.mxu0 %v1681
    %2212 = vmatpush.bf16.msra.mxu0 %v1680
    %2213 = vmatpush.bf16.msra.mxu0 %v1679
    %2214 = vmatpush.bf16.msra.mxu0 %v1678
    %2215 = vmatpush.bf16.msra.mxu0 %v1677
    %2216 = vmatpush.bf16.msra.mxu0 %v1676
    %2217 = vmatpush.bf16.msra.mxu0 %v1675
    %2218 = vmatpush.bf16.msra.mxu0 %v1674
    %2219 = vmatmul.bf16.gmra.mxu0 %v545
    %v2220 = vpop.f32.mrf.mxu0
    %v2221 = vadd.f32 %v2208, %v2220
    %v2222 = vpop.f32.mrf.mxu0
    %2223 = vdwg.mxu0
    %2224 = vmatpush.bf16.msra.mxu0 %v1689
    %2225 = vmatpush.bf16.msra.mxu0 %v1688
    %2226 = vmatpush.bf16.msra.mxu0 %v1687
    %2227 = vmatpush.bf16.msra.mxu0 %v1686
    %2228 = vmatpush.bf16.msra.mxu0 %v1685
    %2229 = vmatpush.bf16.msra.mxu0 %v1684
    %2230 = vmatpush.bf16.msra.mxu0 %v1683
    %2231 = vmatpush.bf16.msra.mxu0 %v1682
    %2232 = vmatmul.bf16.gmra.mxu0 %v546
    %v2233 = vpop.f32.mrf.mxu0
    %v2234 = vadd.f32 %v2221, %v2233
    %v2235 = vpop.f32.mrf.mxu0
    %2236 = vdwg.mxu0
    %2237 = vmatpush.bf16.msra.mxu0 %v1697
    %2238 = vmatpush.bf16.msra.mxu0 %v1696
    %2239 = vmatpush.bf16.msra.mxu0 %v1695
    %2240 = vmatpush.bf16.msra.mxu0 %v1694
    %2241 = vmatpush.bf16.msra.mxu0 %v1693
    %2242 = vmatpush.bf16.msra.mxu0 %v1692
    %2243 = vmatpush.bf16.msra.mxu0 %v1691
    %2244 = vmatpush.bf16.msra.mxu0 %v1690
    %2245 = vmatmul.bf16.gmra.mxu0 %v547
    %v2246 = vpop.f32.mrf.mxu0
    %v2247 = vadd.f32 %v2234, %v2246
    %v2248 = vpop.f32.mrf.mxu0
    %2249 = vdwg.mxu0
    %2250 = vmatpush.bf16.msra.mxu0 %v1705
    %2251 = vmatpush.bf16.msra.mxu0 %v1704
    %2252 = vmatpush.bf16.msra.mxu0 %v1703
    %2253 = vmatpush.bf16.msra.mxu0 %v1702
    %2254 = vmatpush.bf16.msra.mxu0 %v1701
    %2255 = vmatpush.bf16.msra.mxu0 %v1700
    %2256 = vmatpush.bf16.msra.mxu0 %v1699
    %2257 = vmatpush.bf16.msra.mxu0 %v1698
    %2258 = vmatmul.bf16.gmra.mxu0 %v550
    %v2259 = vpop.f32.mrf.mxu0
    %v2260 = vadd.f32 %v2247, %v2259
    %v2261 = vpop.f32.mrf.mxu0
    %2262 = vdwg.mxu0
    %2263 = vmatpush.bf16.msra.mxu0 %v1713
    %2264 = vmatpush.bf16.msra.mxu0 %v1712
    %2265 = vmatpush.bf16.msra.mxu0 %v1711
    %2266 = vmatpush.bf16.msra.mxu0 %v1710
    %2267 = vmatpush.bf16.msra.mxu0 %v1709
    %2268 = vmatpush.bf16.msra.mxu0 %v1708
    %2269 = vmatpush.bf16.msra.mxu0 %v1707
    %2270 = vmatpush.bf16.msra.mxu0 %v1706
    %2271 = vmatmul.bf16.gmra.mxu0 %v551
    %v2272 = vpop.f32.mrf.mxu0
    %v2273 = vadd.f32 %v2260, %v2272
    %v2274 = vpop.f32.mrf.mxu0
    %2275 = vdwg.mxu0
    %2276 = vmatpush.bf16.msra.mxu0 %v1721
    %2277 = vmatpush.bf16.msra.mxu0 %v1720
    %2278 = vmatpush.bf16.msra.mxu0 %v1719
    %2279 = vmatpush.bf16.msra.mxu0 %v1718
    %2280 = vmatpush.bf16.msra.mxu0 %v1717
    %2281 = vmatpush.bf16.msra.mxu0 %v1716
    %2282 = vmatpush.bf16.msra.mxu0 %v1715
    %2283 = vmatpush.bf16.msra.mxu0 %v1714
    %2284 = vmatmul.bf16.gmra.mxu0 %v552
    %v2285 = vpop.f32.mrf.mxu0
    %v2286 = vadd.f32 %v2273, %v2285
    %v2287 = vpop.f32.mrf.mxu0
    %2288 = vdwg.mxu0
    %2289 = vmatpush.bf16.msra.mxu0 %v1729
    %2290 = vmatpush.bf16.msra.mxu0 %v1728
    %2291 = vmatpush.bf16.msra.mxu0 %v1727
    %2292 = vmatpush.bf16.msra.mxu0 %v1726
    %2293 = vmatpush.bf16.msra.mxu0 %v1725
    %2294 = vmatpush.bf16.msra.mxu0 %v1724
    %2295 = vmatpush.bf16.msra.mxu0 %v1723
    %2296 = vmatpush.bf16.msra.mxu0 %v1722
    %2297 = vmatmul.bf16.gmra.mxu0 %v553
    %v2298 = vpop.f32.mrf.mxu0
    %v2299 = vadd.f32 %v2286, %v2298
    %v2300 = vpop.f32.mrf.mxu0
    %2301 = vdwg.mxu0
    %2302 = vmatpush.bf16.msra.mxu0 %v1737
    %2303 = vmatpush.bf16.msra.mxu0 %v1736
    %2304 = vmatpush.bf16.msra.mxu0 %v1735
    %2305 = vmatpush.bf16.msra.mxu0 %v1734
    %2306 = vmatpush.bf16.msra.mxu0 %v1733
    %2307 = vmatpush.bf16.msra.mxu0 %v1732
    %2308 = vmatpush.bf16.msra.mxu0 %v1731
    %2309 = vmatpush.bf16.msra.mxu0 %v1730
    %2310 = vmatmul.bf16.gmra.mxu0 %v554
    %v2311 = vpop.f32.mrf.mxu0
    %v2312 = vadd.f32 %v2299, %v2311
    %v2313 = vpop.f32.mrf.mxu0
    %2314 = vdwg.mxu0
    %2315 = vmatpush.bf16.msra.mxu0 %v1745
    %2316 = vmatpush.bf16.msra.mxu0 %v1744
    %2317 = vmatpush.bf16.msra.mxu0 %v1743
    %2318 = vmatpush.bf16.msra.mxu0 %v1742
    %2319 = vmatpush.bf16.msra.mxu0 %v1741
    %2320 = vmatpush.bf16.msra.mxu0 %v1740
    %2321 = vmatpush.bf16.msra.mxu0 %v1739
    %2322 = vmatpush.bf16.msra.mxu0 %v1738
    %2323 = vmatmul.bf16.gmra.mxu0 %v555
    %v2324 = vpop.f32.mrf.mxu0
    %v2325 = vadd.f32 %v2312, %v2324
    %v2326 = vpop.f32.mrf.mxu0
    %2327 = vdwg.mxu0
    %2328 = vmatpush.bf16.msra.mxu0 %v1753
    %2329 = vmatpush.bf16.msra.mxu0 %v1752
    %2330 = vmatpush.bf16.msra.mxu0 %v1751
    %2331 = vmatpush.bf16.msra.mxu0 %v1750
    %2332 = vmatpush.bf16.msra.mxu0 %v1749
    %2333 = vmatpush.bf16.msra.mxu0 %v1748
    %2334 = vmatpush.bf16.msra.mxu0 %v1747
    %2335 = vmatpush.bf16.msra.mxu0 %v1746
    %2336 = vmatmul.bf16.gmra.mxu0 %v556
    %v2337 = vpop.f32.mrf.mxu0
    %v2338 = vadd.f32 %v2325, %v2337
    %v2339 = vpop.f32.mrf.mxu0
    %2340 = vdwg.mxu0
    %2341 = vmatpush.bf16.msra.mxu0 %v1761
    %2342 = vmatpush.bf16.msra.mxu0 %v1760
    %2343 = vmatpush.bf16.msra.mxu0 %v1759
    %2344 = vmatpush.bf16.msra.mxu0 %v1758
    %2345 = vmatpush.bf16.msra.mxu0 %v1757
    %2346 = vmatpush.bf16.msra.mxu0 %v1756
    %2347 = vmatpush.bf16.msra.mxu0 %v1755
    %2348 = vmatpush.bf16.msra.mxu0 %v1754
    %2349 = vmatmul.bf16.gmra.mxu0 %v557
    %v2350 = vpop.f32.mrf.mxu0
    %v2351 = vadd.f32 %v2338, %v2350
    %v2352 = vpop.f32.mrf.mxu0
    %2353 = vdwg.mxu0
    %2354 = vmatpush.bf16.msra.mxu0 %v1769
    %2355 = vmatpush.bf16.msra.mxu0 %v1768
    %2356 = vmatpush.bf16.msra.mxu0 %v1767
    %2357 = vmatpush.bf16.msra.mxu0 %v1766
    %2358 = vmatpush.bf16.msra.mxu0 %v1765
    %2359 = vmatpush.bf16.msra.mxu0 %v1764
    %2360 = vmatpush.bf16.msra.mxu0 %v1763
    %2361 = vmatpush.bf16.msra.mxu0 %v1762
    %2362 = vmatmul.bf16.gmra.mxu0 %v560
    %v2363 = vpop.f32.mrf.mxu0
    %v2364 = vadd.f32 %v2351, %v2363
    %v2365 = vpop.f32.mrf.mxu0
    %2366 = vdwg.mxu0
    %2367 = vmatpush.bf16.msra.mxu0 %v1777
    %2368 = vmatpush.bf16.msra.mxu0 %v1776
    %2369 = vmatpush.bf16.msra.mxu0 %v1775
    %2370 = vmatpush.bf16.msra.mxu0 %v1774
    %2371 = vmatpush.bf16.msra.mxu0 %v1773
    %2372 = vmatpush.bf16.msra.mxu0 %v1772
    %2373 = vmatpush.bf16.msra.mxu0 %v1771
    %2374 = vmatpush.bf16.msra.mxu0 %v1770
    %2375 = vmatmul.bf16.gmra.mxu0 %v561
    %v2376 = vpop.f32.mrf.mxu0
    %v2377 = vadd.f32 %v2364, %v2376
    %v2378 = vpop.f32.mrf.mxu0
    %2379 = vdwg.mxu0
    %2380 = vmatpush.bf16.msra.mxu0 %v1785
    %2381 = vmatpush.bf16.msra.mxu0 %v1784
    %2382 = vmatpush.bf16.msra.mxu0 %v1783
    %2383 = vmatpush.bf16.msra.mxu0 %v1782
    %2384 = vmatpush.bf16.msra.mxu0 %v1781
    %2385 = vmatpush.bf16.msra.mxu0 %v1780
    %2386 = vmatpush.bf16.msra.mxu0 %v1779
    %2387 = vmatpush.bf16.msra.mxu0 %v1778
    %2388 = vmatmul.bf16.gmra.mxu0 %v562
    %v2389 = vpop.f32.mrf.mxu0
    %v2390 = vadd.f32 %v2377, %v2389
    %v2391 = vpop.f32.mrf.mxu0
    %2392 = vdwg.mxu0
    %2393 = vmatpush.bf16.msra.mxu0 %v1793
    %2394 = vmatpush.bf16.msra.mxu0 %v1792
    %2395 = vmatpush.bf16.msra.mxu0 %v1791
    %2396 = vmatpush.bf16.msra.mxu0 %v1790
    %2397 = vmatpush.bf16.msra.mxu0 %v1789
    %2398 = vmatpush.bf16.msra.mxu0 %v1788
    %2399 = vmatpush.bf16.msra.mxu0 %v1787
    %2400 = vmatpush.bf16.msra.mxu0 %v1786
    %2401 = vmatmul.bf16.gmra.mxu0 %v563
    %v2402 = vpop.f32.mrf.mxu0
    %v2403 = vadd.f32 %v2390, %v2402
    %v2404 = vpop.f32.mrf.mxu0
    %2405 = vdwg.mxu0
    %2406 = vmatpush.bf16.msra.mxu0 %v1801
    %2407 = vmatpush.bf16.msra.mxu0 %v1800
    %2408 = vmatpush.bf16.msra.mxu0 %v1799
    %2409 = vmatpush.bf16.msra.mxu0 %v1798
    %2410 = vmatpush.bf16.msra.mxu0 %v1797
    %2411 = vmatpush.bf16.msra.mxu0 %v1796
    %2412 = vmatpush.bf16.msra.mxu0 %v1795
    %2413 = vmatpush.bf16.msra.mxu0 %v1794
    %2414 = vmatmul.bf16.gmra.mxu0 %v564
    %v2415 = vpop.f32.mrf.mxu0
    %v2416 = vadd.f32 %v2403, %v2415
    %v2417 = vpop.f32.mrf.mxu0
    %2418 = vdwg.mxu0
    %2419 = vmatpush.bf16.msra.mxu0 %v1809
    %2420 = vmatpush.bf16.msra.mxu0 %v1808
    %2421 = vmatpush.bf16.msra.mxu0 %v1807
    %2422 = vmatpush.bf16.msra.mxu0 %v1806
    %2423 = vmatpush.bf16.msra.mxu0 %v1805
    %2424 = vmatpush.bf16.msra.mxu0 %v1804
    %2425 = vmatpush.bf16.msra.mxu0 %v1803
    %2426 = vmatpush.bf16.msra.mxu0 %v1802
    %2427 = vmatmul.bf16.gmra.mxu0 %v565
    %v2428 = vpop.f32.mrf.mxu0
    %v2429 = vadd.f32 %v2416, %v2428
    %v2430 = vpop.f32.mrf.mxu0
    %2431 = vdwg.mxu0
    %2432 = vmatpush.bf16.msra.mxu0 %v1817
    %2433 = vmatpush.bf16.msra.mxu0 %v1816
    %2434 = vmatpush.bf16.msra.mxu0 %v1815
    %2435 = vmatpush.bf16.msra.mxu0 %v1814
    %2436 = vmatpush.bf16.msra.mxu0 %v1813
    %2437 = vmatpush.bf16.msra.mxu0 %v1812
    %2438 = vmatpush.bf16.msra.mxu0 %v1811
    %2439 = vmatpush.bf16.msra.mxu0 %v1810
    %2440 = vmatmul.bf16.gmra.mxu0 %v566
    %v2441 = vpop.f32.mrf.mxu0
    %v2442 = vadd.f32 %v2429, %v2441
    %v2443 = vpop.f32.mrf.mxu0
    %2444 = vdwg.mxu0
    %2445 = vmatpush.bf16.msra.mxu0 %v1825
    %2446 = vmatpush.bf16.msra.mxu0 %v1824
    %2447 = vmatpush.bf16.msra.mxu0 %v1823
    %2448 = vmatpush.bf16.msra.mxu0 %v1822
    %2449 = vmatpush.bf16.msra.mxu0 %v1821
    %2450 = vmatpush.bf16.msra.mxu0 %v1820
    %2451 = vmatpush.bf16.msra.mxu0 %v1819
    %2452 = vmatpush.bf16.msra.mxu0 %v1818
    %2453 = vmatmul.bf16.gmra.mxu0 %v567
    %v2454 = vpop.f32.mrf.mxu0
    %v2455 = vadd.f32 %v2442, %v2454
    %v2456 = vpop.f32.mrf.mxu0
    %2457 = vdwg.mxu0
    %2458 = vmatpush.bf16.msra.mxu0 %v1833
    %2459 = vmatpush.bf16.msra.mxu0 %v1832
    %2460 = vmatpush.bf16.msra.mxu0 %v1831
    %2461 = vmatpush.bf16.msra.mxu0 %v1830
    %2462 = vmatpush.bf16.msra.mxu0 %v1829
    %2463 = vmatpush.bf16.msra.mxu0 %v1828
    %2464 = vmatpush.bf16.msra.mxu0 %v1827
    %2465 = vmatpush.bf16.msra.mxu0 %v1826
    %2466 = vmatmul.bf16.gmra.mxu0 %v570
    %v2467 = vpop.f32.mrf.mxu0
    %v2468 = vadd.f32 %v2455, %v2467
    %v2469 = vpop.f32.mrf.mxu0
    %2470 = vdwg.mxu0
    %2471 = vmatpush.bf16.msra.mxu0 %v1841
    %2472 = vmatpush.bf16.msra.mxu0 %v1840
    %2473 = vmatpush.bf16.msra.mxu0 %v1839
    %2474 = vmatpush.bf16.msra.mxu0 %v1838
    %2475 = vmatpush.bf16.msra.mxu0 %v1837
    %2476 = vmatpush.bf16.msra.mxu0 %v1836
    %2477 = vmatpush.bf16.msra.mxu0 %v1835
    %2478 = vmatpush.bf16.msra.mxu0 %v1834
    %2479 = vmatmul.bf16.gmra.mxu0 %v571
    %v2480 = vpop.f32.mrf.mxu0
    %v2481 = vadd.f32 %v2468, %v2480
    %v2482 = vpop.f32.mrf.mxu0
    %2483 = vdwg.mxu0
    %2484 = vmatpush.bf16.msra.mxu0 %v1849
    %2485 = vmatpush.bf16.msra.mxu0 %v1848
    %2486 = vmatpush.bf16.msra.mxu0 %v1847
    %2487 = vmatpush.bf16.msra.mxu0 %v1846
    %2488 = vmatpush.bf16.msra.mxu0 %v1845
    %2489 = vmatpush.bf16.msra.mxu0 %v1844
    %2490 = vmatpush.bf16.msra.mxu0 %v1843
    %2491 = vmatpush.bf16.msra.mxu0 %v1842
    %2492 = vmatmul.bf16.gmra.mxu0 %v572
    %v2493 = vpop.f32.mrf.mxu0
    %v2494 = vadd.f32 %v2481, %v2493
    %v2495 = vpop.f32.mrf.mxu0
    %2496 = vdwg.mxu0
    %2497 = vmatpush.bf16.msra.mxu0 %v1857
    %2498 = vmatpush.bf16.msra.mxu0 %v1856
    %2499 = vmatpush.bf16.msra.mxu0 %v1855
    %2500 = vmatpush.bf16.msra.mxu0 %v1854
    %2501 = vmatpush.bf16.msra.mxu0 %v1853
    %2502 = vmatpush.bf16.msra.mxu0 %v1852
    %2503 = vmatpush.bf16.msra.mxu0 %v1851
    %2504 = vmatpush.bf16.msra.mxu0 %v1850
    %2505 = vmatmul.bf16.gmra.mxu0 %v573
    %v2506 = vpop.f32.mrf.mxu0
    %v2507 = vadd.f32 %v2494, %v2506
    %v2508 = vpop.f32.mrf.mxu0
    %2509 = vdwg.mxu0
    %2510 = vmatpush.bf16.msra.mxu0 %v1865
    %2511 = vmatpush.bf16.msra.mxu0 %v1864
    %2512 = vmatpush.bf16.msra.mxu0 %v1863
    %2513 = vmatpush.bf16.msra.mxu0 %v1862
    %2514 = vmatpush.bf16.msra.mxu0 %v1861
    %2515 = vmatpush.bf16.msra.mxu0 %v1860
    %2516 = vmatpush.bf16.msra.mxu0 %v1859
    %2517 = vmatpush.bf16.msra.mxu0 %v1858
    %2518 = vmatmul.bf16.gmra.mxu0 %v574
    %v2519 = vpop.f32.mrf.mxu0
    %v2520 = vadd.f32 %v2507, %v2519
    %v2521 = vpop.f32.mrf.mxu0
    %2522 = vdwg.mxu0
    %2523 = vmatpush.bf16.msra.mxu0 %v1873
    %2524 = vmatpush.bf16.msra.mxu0 %v1872
    %2525 = vmatpush.bf16.msra.mxu0 %v1871
    %2526 = vmatpush.bf16.msra.mxu0 %v1870
    %2527 = vmatpush.bf16.msra.mxu0 %v1869
    %2528 = vmatpush.bf16.msra.mxu0 %v1868
    %2529 = vmatpush.bf16.msra.mxu0 %v1867
    %2530 = vmatpush.bf16.msra.mxu0 %v1866
    %2531 = vmatmul.bf16.gmra.mxu0 %v575
    %v2532 = vpop.f32.mrf.mxu0
    %v2533 = vadd.f32 %v2520, %v2532
    %v2534 = vpop.f32.mrf.mxu0
    %2535 = vdwg.mxu0
    %2536 = vmatpush.bf16.msra.mxu0 %v1881
    %2537 = vmatpush.bf16.msra.mxu0 %v1880
    %2538 = vmatpush.bf16.msra.mxu0 %v1879
    %2539 = vmatpush.bf16.msra.mxu0 %v1878
    %2540 = vmatpush.bf16.msra.mxu0 %v1877
    %2541 = vmatpush.bf16.msra.mxu0 %v1876
    %2542 = vmatpush.bf16.msra.mxu0 %v1875
    %2543 = vmatpush.bf16.msra.mxu0 %v1874
    %2544 = vmatmul.bf16.gmra.mxu0 %v576
    %v2545 = vpop.f32.mrf.mxu0
    %v2546 = vadd.f32 %v2533, %v2545
    %v2547 = vpop.f32.mrf.mxu0
    %2548 = vdwg.mxu0
    %2549 = vmatpush.bf16.msra.mxu0 %v1889
    %2550 = vmatpush.bf16.msra.mxu0 %v1888
    %2551 = vmatpush.bf16.msra.mxu0 %v1887
    %2552 = vmatpush.bf16.msra.mxu0 %v1886
    %2553 = vmatpush.bf16.msra.mxu0 %v1885
    %2554 = vmatpush.bf16.msra.mxu0 %v1884
    %2555 = vmatpush.bf16.msra.mxu0 %v1883
    %2556 = vmatpush.bf16.msra.mxu0 %v1882
    %2557 = vmatmul.bf16.gmra.mxu0 %v577
    %v2558 = vpop.f32.mrf.mxu0
    %v2559 = vadd.f32 %v2546, %v2558
    %v2560 = vpop.f32.mrf.mxu0
    %2561 = vdwg.mxu0
    %vm2562 = vcmask 123904
    %2563 = vst.msk [vmem:[#allocation2] sm:$0x3] %vm2562, %v2559
    %v2564 = vtanh.pop %v2559
    %2566 = vrot.lane.b32.xlu0 %v2564, 112
    %v2567 = vpop.permute.xlu0 %2566
    %2569 = vst.msk [vmem:[#allocation4] sm:$0x3] %vm2562, %v2567
    // Predicated region
    $region14: #{base_encoder_forward.7} parent=1 // pred_check
      _
    $region15: #{base_encoder_forward.7} parent=1 // pred_check_branch
      %2571 = sbr.rel (0) target = $region17
    $region16: #{base_encoder_forward.7} parent=1 // pred_region
      %2573 = vsyncadd [#allocation3], 0
      %s2575 = sshll.u32 [#allocation2], 4
      %s2576 = int_to_ptr.vmem [resolvable:$true] %s2575
      %s2577 = sshll.u32 %s3, 4
      %s2578 = int_to_ptr.hbm [resolvable:$true] %s2577
      %2580 = dma.vmem_to_hbm [thread:$0]  %s2576, 32, %s2578, [#allocation3]
    $region17: #{base_encoder_forward.7} parent=1 // pred_fallthru
      _
    // Predicated region
    $region18: #{base_encoder_forward.7} parent=1 // pred_check
      _
    $region19: #{base_encoder_forward.7} parent=1 // pred_check_branch
      %2582 = sbr.rel (0) target = $region21
    $region20: #{base_encoder_forward.7} parent=1 // pred_region
      %2584 = vsyncadd [#allocation5], 0
      %s2586 = sshll.u32 [#allocation4], 4
      %s2587 = int_to_ptr.vmem [resolvable:$true] %s2586
      %s2588 = sshll.u32 %s4, 4
      %s2589 = int_to_ptr.hbm [resolvable:$true] %s2588
      %2591 = dma.vmem_to_hbm [thread:$0]  %s2587, 32, %s2589, [#allocation5]
    $region21: #{base_encoder_forward.7} parent=1 // pred_fallthru
      _
    // Predicated region
    $region22: #{base_encoder_forward.7} parent=1 // pred_check
      _
    $region23: #{base_encoder_forward.7} parent=1 // pred_check_branch
      %2593 = sbr.rel (0) target = $region25
    $region24: #{base_encoder_forward.7} parent=1 // pred_region
      %2595 = dma.done [#allocation3], 32
    $region25: #{base_encoder_forward.7} parent=1 // pred_fallthru
      _
    // Predicated region
    $region26: #{base_encoder_forward.7} parent=1 // pred_check
      _
    $region27: #{base_encoder_forward.7} parent=1 // pred_check_branch
      %2597 = sbr.rel (0) target = $region29
    $region28: #{base_encoder_forward.7} parent=1 // pred_region
      %2599 = dma.done [#allocation5], 32
    $region29: #{base_encoder_forward.7} parent=1 // pred_fallthru
      _
    %2600 = vsyncpa [#allocation3], 1
    %2601 = vsyncpa [#allocation5], 1

</llo_original>
